<compile_context>
chip_gen: v6e
topology: v6e:2x2x1
jax: 0.10.0
libtpu: 0.0.40
codegen_flags: <defaults>
</compile_context>

<pallas_src>
import functools
import math

import jax
import jax.numpy as jnp
from jax.experimental import pallas as pl
from jax.experimental.pallas import tpu as pltpu

_EPS = 1e-5
_LANE = 128


def _round_up(x, m):
    return (x + m - 1) // m * m


@functools.lru_cache(maxsize=None)
def _vmem_limit_bytes():
    """Generation-aware scoped-VMEM budget (v5e/v6e: 128 MiB phys, v7x: 64 MiB)."""
    try:
        cap = int(pltpu.get_tpu_info().vmem_capacity_bytes)
    except Exception:                       # unknown backend / interpret mode
        cap = 64 * 1024 * 1024
    if cap >= 100 * 1024 * 1024:            # v5e / v6e
        return 100 * 1024 * 1024
    return 44 * 1024 * 1024                 # v7x: leave headroom under 64 MiB


def _compiler_params(n_axes=1):
    return pltpu.CompilerParams(
        dimension_semantics=("parallel",) * n_axes,
        vmem_limit_bytes=_vmem_limit_bytes())


def _const_spec(arr):
    """Grid-invariant (weight/bias) spec: constant index_map, single-buffered."""
    shape = arr.shape
    idx = lambda *_: (0,) * len(shape)
    try:
        return pl.BlockSpec(shape, idx, pipeline_mode=pl.Buffered(1))
    except Exception:                       # fallback if pipeline_mode unsupported
        return pl.BlockSpec(shape, idx)


# ------------------------- in-kernel building blocks -------------------------

def _ln(x, g, b, eps=_EPS):
    """LayerNorm over last axis, f32 math, biased variance (matches PyTorch)."""
    mean = jnp.mean(x, axis=-1, keepdims=True)
    c = x - mean
    var = jnp.mean(c * c, axis=-1, keepdims=True)
    return c * jax.lax.rsqrt(var + eps) * g + b


def _mm(a, w_bf16, bias_f32=None):
    """bf16 x bf16 MXU matmul with f32 accumulation (+ optional f32 bias)."""
    y = jnp.dot(a.astype(jnp.bfloat16), w_bf16,
                preferred_element_type=jnp.float32)
    if bias_f32 is not None:
        y = y + bias_f32
    return y


def _sigmoid(x):
    return 0.5 * (jnp.tanh(0.5 * x) + 1.0)     # numerically stable, EUP tanh


def _attend_into(ctx_scr, q, k, v, *, bb, S, n_heads, dh_pad, q_rows_per_b):
    """Per-(batch, head) softmax(q k^T) v written into a VMEM f32 scratch.

    q: (bb*q_rows_per_b, H*dh_pad) bf16; k, v: (bb*S, H*dh_pad) bf16.
    The 1/sqrt(dh) scale is already folded into q.  All slices are 128-lane
    aligned (dh_pad multiple of 128), so they are free views and each head's
    result is stored directly at its aligned offset (no concat, no spills)."""
    for b in range(bb):                                   # static unroll
        qr = slice(b * q_rows_per_b, (b + 1) * q_rows_per_b)
        kr = slice(b * S, (b + 1) * S)
        for h in range(n_heads):
            cs = slice(h * dh_pad, (h + 1) * dh_pad)
            s = jax.lax.dot_general(q[qr, cs], k[kr, cs],
                                    (((1,), (1,)), ((), ())),
                                    preferred_element_type=jnp.float32)
            m = jnp.max(s, axis=-1, keepdims=True)
            p = jnp.exp(s - m)
            p = p * pl.reciprocal(jnp.sum(p, axis=-1, keepdims=True), approx=True)
            ctx_scr[qr, cs] = jnp.dot(p.astype(jnp.bfloat16), v[kr, cs],
                                      preferred_element_type=jnp.float32)


# --------------------------------- kernels -----------------------------------

def _linear_kernel(x_ref, w_ref, b_ref, o_ref):
    o_ref[...] = _mm(x_ref[...], w_ref[...], b_ref[...]).astype(o_ref.dtype)


def _encoder_layer_kernel(*refs, n_heads, dh_pad, bb, final_norm):
    if final_norm:
        (x_ref, wqkv, bqkv, wo, bo, g1, b1, w1, bf1, w2, bf2, g2, b2,
         gf, bff, o_ref, ctx_scr) = refs
    else:
        (x_ref, wqkv, bqkv, wo, bo, g1, b1, w1, bf1, w2, bf2, g2, b2,
         o_ref, ctx_scr) = refs
        gf = bff = None

    S, E = x_ref.shape[1], x_ref.shape[2]
    E_pad = n_heads * dh_pad
    rows = bb * S

    # bf16 activations in HBM; f32 math in VMEM.
    x = x_ref[...].reshape(rows, E).astype(jnp.float32)

    # Fused QKV projection: M = bb*S rows per weight load (scale folded in W_q).
    qkv = _mm(x, wqkv[...], bqkv[...])                       # (rows, 3*E_pad)
    q = qkv[:, :E_pad].astype(jnp.bfloat16)                  # 128-aligned splits
    k = qkv[:, E_pad:2 * E_pad].astype(jnp.bfloat16)
    v = qkv[:, 2 * E_pad:].astype(jnp.bfloat16)
    _attend_into(ctx_scr, q, k, v, bb=bb, S=S, n_heads=n_heads,
                 dh_pad=dh_pad, q_rows_per_b=S)

    attn = _mm(ctx_scr[...], wo[...], bo[...])               # (rows, E)
    h1 = _ln(x + attn, g1[...], b1[...])
    ff = jnp.maximum(_mm(h1, w1[...], bf1[...]), 0.0)
    ff = _mm(ff, w2[...], bf2[...])
    y = _ln(h1 + ff, g2[...], b2[...])
    if final_norm:                                           # encoder.norm
        y = _ln(y, gf[...], bff[...])
    o_ref[...] = y.reshape(bb, S, E).astype(o_ref.dtype)


def _decoder_stack_kernel(*refs, n_heads, dh_pad, bb, n_layers):
    n_w = 20 * n_layers
    mem_ref = refs[0]
    layer_w = refs[1:1 + n_w]
    dng, dnb, pw, pb = refs[1 + n_w:1 + n_w + 4]
    o_ref = refs[1 + n_w + 4]
    ctx_scr = refs[1 + n_w + 5]

    S, E = mem_ref.shape[1], mem_ref.shape[2]
    E_pad = n_heads * dh_pad
    mem = mem_ref[...].reshape(bb * S, E)                    # bf16, read once
    t = jnp.zeros((bb, E), jnp.float32)                      # torch.zeros tgt

    for l in range(n_layers):                                # fused decoder stack
        (wvs, bvs, wos, bos, g1, b1, wqc, bqc, wkvc, bkvc, woc, boc,
         g2, b2, w1, bf1, w2, bf2, g3, b3) = layer_w[l * 20:(l + 1) * 20]

        # Self-attention with tgt_len == 1: softmax over one key == 1.0 exactly,
        # so the attended value is just the value projection (then out-proj).
        sa = _mm(_mm(t, wvs[...], bvs[...]), wos[...], bos[...])
        t1 = _ln(t + sa, g1[...], b1[...])

        # Cross-attention vs encoder memory (scale folded into W_q); projections
        # run with M = bb (queries) / M = bb*S (keys/values) rows per weight load.
        q = _mm(t1, wqc[...], bqc[...]).astype(jnp.bfloat16)     # (bb, E_pad)
        kv = _mm(mem, wkvc[...], bkvc[...])                      # (bb*S, 2*E_pad)
        k = kv[:, :E_pad].astype(jnp.bfloat16)
        v = kv[:, E_pad:].astype(jnp.bfloat16)
        _attend_into(ctx_scr, q, k, v, bb=bb, S=S, n_heads=n_heads,
                     dh_pad=dh_pad, q_rows_per_b=1)
        ca = _mm(ctx_scr[...], woc[...], boc[...])               # (bb, E)
        t2 = _ln(t1 + ca, g2[...], b2[...])

        ff = jnp.maximum(_mm(t2, w1[...], bf1[...]), 0.0)
        ff = _mm(ff, w2[...], bf2[...])
        t = _ln(t2 + ff, g3[...], b3[...])

    # Final decoder LayerNorm + proj + sigmoid fused into the same kernel.
    h = _ln(t, dng[...], dnb[...])
    y = _mm(h, pw[...], pb[...])                                 # (bb, 1)
    o_ref[...] = _sigmoid(y).reshape(bb, 1, 1).astype(o_ref.dtype)


# ------------------------------ pallas wrappers -------------------------------

_ENC_KEYS = ("w_qkv", "b_qkv", "w_attn_out", "b_attn_out", "ln1_g", "ln1_b",
             "w_ff1", "b_ff1", "w_ff2", "b_ff2", "ln2_g", "ln2_b")
_DEC_KEYS = ("w_v_s", "b_v_s", "w_out_s", "b_out_s", "ln1_g", "ln1_b",
             "w_q_c", "b_q_c", "w_kv_c", "b_kv_c", "w_out_c", "b_out_c",
             "ln2_g", "ln2_b", "w_ff1", "b_ff1", "w_ff2", "b_ff2",
             "ln3_g", "ln3_b")


def _pick_bb(B, S, target_rows=256):
    """Batch-block size: feed >= ~target_rows rows per grid step to the MXU while
    keeping >= 2 'parallel' grid steps (both v7x TensorCores busy) when B > 1."""
    cap = max(1, target_rows // max(S, 1))
    cap = min(cap, max(1, B // 2))
    bb = 1
    for d in range(1, B + 1):
        if B % d == 0 and d <= cap:
            bb = d
    return bb


def pallas_embed(x, w, b):
    """x @ w + b over fixed 256-row tiles (zero-padded tail), bf16 output."""
    B, S, K = x.shape
    N = w.shape[1]
    M = B * S
    tm = 256 if M >= 256 else _round_up(M, 8)
    M_pad = _round_up(M, tm)
    x2 = x.reshape(M, K)
    if M_pad != M:
        x2 = jnp.pad(x2, ((0, M_pad - M), (0, 0)))
    y = pl.pallas_call(
        _linear_kernel,
        out_shape=jax.ShapeDtypeStruct((M_pad, N), jnp.bfloat16),
        grid=(M_pad // tm,),
        in_specs=[pl.BlockSpec((tm, K), lambda i: (i, 0)),
                  _const_spec(w), _const_spec(b)],
        out_specs=pl.BlockSpec((tm, N), lambda i: (i, 0)),
        compiler_params=_compiler_params(1),
    )(x2, w, b)
    return y[:M].reshape(B, S, N)


def encoder_layer(x, p, enc_norm, n_heads, dh_pad, bb, final_norm):
    B, S, E = x.shape
    weights = [p[kname] for kname in _ENC_KEYS]
    if final_norm:                       # enc_norm only shipped to the last layer
        weights += [enc_norm["g"], enc_norm["b"]]
    return pl.pallas_call(
        functools.partial(_encoder_layer_kernel, n_heads=n_heads, dh_pad=dh_pad,
                          bb=bb, final_norm=final_norm),
        out_shape=jax.ShapeDtypeStruct((B, S, E), jnp.bfloat16),
        grid=(B // bb,),
        in_specs=[pl.BlockSpec((bb, S, E), lambda i: (i, 0, 0))]
                 + [_const_spec(w) for w in weights],
        out_specs=pl.BlockSpec((bb, S, E), lambda i: (i, 0, 0)),
        scratch_shapes=[pltpu.VMEM((bb * S, n_heads * dh_pad), jnp.float32)],
        compiler_params=_compiler_params(1),
    )(x, *weights)


def decoder_stack(mem, dec_layers, dec_norm, proj, n_heads, dh_pad, bb):
    """All decoder layers + final LN + proj + sigmoid in one pallas_call; the
    encoder memory is read from HBM once per batch block (not once per layer)."""
    B, S, E = mem.shape
    weights = []
    for p in dec_layers:
        weights += [p[kname] for kname in _DEC_KEYS]
    weights += [dec_norm["g"], dec_norm["b"], proj["w"], proj["b"]]
    out = pl.pallas_call(
        functools.partial(_decoder_stack_kernel, n_heads=n_heads, dh_pad=dh_pad,
                          bb=bb, n_layers=len(dec_layers)),
        out_shape=jax.ShapeDtypeStruct((B, 1, 1), jnp.float32),
        grid=(B // bb,),
        in_specs=[pl.BlockSpec((bb, S, E), lambda i: (i, 0, 0))]
                 + [_const_spec(w) for w in weights],
        out_specs=pl.BlockSpec((bb, 1, 1), lambda i: (i, 0, 0)),
        scratch_shapes=[pltpu.VMEM((bb, n_heads * dh_pad), jnp.float32)],
        compiler_params=_compiler_params(1),
    )(mem, *weights)
    return out.reshape(B)


# ------------------------------- model forward --------------------------------

def unresolved_bert_forward(params, x, n_heads, dh_pad):
    B, S, _ = x.shape
    bb = _pick_bb(B, S)
    mem = pallas_embed(x, params["embedder"]["w"], params["embedder"]["b"])
    n_enc = len(params["enc_layers"])
    for i, p in enumerate(params["enc_layers"]):
        mem = encoder_layer(mem, p, params["enc_norm"], n_heads, dh_pad, bb,
                            final_norm=(i == n_enc - 1))
    return decoder_stack(mem, params["dec_layers"], params["dec_norm"],
                         params["proj"], n_heads, dh_pad, bb)


# --------------------- deterministic "kernel-ready" params ---------------------
# Weights are pre-transposed ((in, out) == PyTorch W.T) in bf16; biases / LN
# params stay f32.  Attention weights use the 128-lane-aligned padded per-head
# layout; the 1/sqrt(dh) scale is folded into W_q (and must be folded into the
# Q bias when porting a real checkpoint — here the attention biases are zero,
# matching PyTorch MultiheadAttention's constant-zero bias init).

def _uniform(key, shape, bound):
    return jax.random.uniform(key, shape, jnp.float32, -bound, bound)


def _pad_head_cols(w, n_heads, dh, dh_pad):
    """(in, H*dh) -> (in, H*dh_pad): zero pad columns per head (exact padding)."""
    if dh == dh_pad:
        return w
    i = w.shape[0]
    w = w.reshape(i, n_heads, dh)
    return jnp.pad(w, ((0, 0), (0, 0), (0, dh_pad - dh))).reshape(i, n_heads * dh_pad)


def _pad_head_rows(w, n_heads, dh, dh_pad):
    """(H*dh, out) -> (H*dh_pad, out): zero pad rows per head (exact padding)."""
    if dh == dh_pad:
        return w
    o = w.shape[1]
    w = w.reshape(n_heads, dh, o)
    return jnp.pad(w, ((0, 0), (0, dh_pad - dh), (0, 0))).reshape(n_heads * dh_pad, o)


def init_linear(key, in_dim, out_dim):
    kw, kb = jax.random.split(key)
    bound = 1.0 / math.sqrt(in_dim)
    return {"w": _uniform(kw, (in_dim, out_dim), bound).astype(jnp.bfloat16),
            "b": _uniform(kb, (1, out_dim), bound)}


def init_layernorm(E):
    return {"g": jnp.ones((1, E), jnp.float32),
            "b": jnp.zeros((1, E), jnp.float32)}


def init_encoder_layer(key, E, ff, n_heads, dh, dh_pad):
    kq, kk, kv, ko, kf1, kf2 = jax.random.split(key, 6)
    bound = 1.0 / math.sqrt(E)
    scale = 1.0 / math.sqrt(dh)                      # folded attention scale
    wq = _pad_head_cols(_uniform(kq, (E, E), bound) * scale, n_heads, dh, dh_pad)
    wk = _pad_head_cols(_uniform(kk, (E, E), bound), n_heads, dh, dh_pad)
    wv = _pad_head_cols(_uniform(kv, (E, E), bound), n_heads, dh, dh_pad)
    w_qkv = jnp.concatenate([wq, wk, wv], axis=1).astype(jnp.bfloat16)
    w_out = _pad_head_rows(_uniform(ko, (E, E), bound),
                           n_heads, dh, dh_pad).astype(jnp.bfloat16)
    lin1, lin2 = init_linear(kf1, E, ff), init_linear(kf2, ff, E)
    ln1, ln2 = init_layernorm(E), init_layernorm(E)
    E_pad = n_heads * dh_pad
    return {"w_qkv": w_qkv,
            "b_qkv": jnp.zeros((1, 3 * E_pad), jnp.float32),
            "w_attn_out": w_out, "b_attn_out": jnp.zeros((1, E), jnp.float32),
            "ln1_g": ln1["g"], "ln1_b": ln1["b"],
            "w_ff1": lin1["w"], "b_ff1": lin1["b"],
            "w_ff2": lin2["w"], "b_ff2": lin2["b"],
            "ln2_g": ln2["g"], "ln2_b": ln2["b"]}


def init_decoder_layer(key, E, ff, n_heads, dh, dh_pad):
    ks = jax.random.split(key, 8)
    bound = 1.0 / math.sqrt(E)
    scale = 1.0 / math.sqrt(dh)
    # self-attention with tgt_len == 1: only the V + out projections matter.
    w_v_s = _uniform(ks[0], (E, E), bound).astype(jnp.bfloat16)
    w_out_s = _uniform(ks[1], (E, E), bound).astype(jnp.bfloat16)
    # cross-attention: padded per-head layout, scale folded into W_q.
    w_q_c = _pad_head_cols(_uniform(ks[2], (E, E), bound) * scale,
                           n_heads, dh, dh_pad).astype(jnp.bfloat16)
    wk = _pad_head_cols(_uniform(ks[3], (E, E), bound), n_heads, dh, dh_pad)
    wv = _pad_head_cols(_uniform(ks[4], (E, E), bound), n_heads, dh, dh_pad)
    w_kv_c = jnp.concatenate([wk, wv], axis=1).astype(jnp.bfloat16)
    w_out_c = _pad_head_rows(_uniform(ks[5], (E, E), bound),
                             n_heads, dh, dh_pad).astype(jnp.bfloat16)
    lin1, lin2 = init_linear(ks[6], E, ff), init_linear(ks[7], ff, E)
    ln1, ln2, ln3 = init_layernorm(E), init_layernorm(E), init_layernorm(E)
    E_pad = n_heads * dh_pad
    return {"w_v_s": w_v_s, "b_v_s": jnp.zeros((1, E), jnp.float32),
            "w_out_s": w_out_s, "b_out_s": jnp.zeros((1, E), jnp.float32),
            "ln1_g": ln1["g"], "ln1_b": ln1["b"],
            "w_q_c": w_q_c, "b_q_c": jnp.zeros((1, E_pad), jnp.float32),
            "w_kv_c": w_kv_c, "b_kv_c": jnp.zeros((1, 2 * E_pad), jnp.float32),
            "w_out_c": w_out_c, "b_out_c": jnp.zeros((1, E), jnp.float32),
            "ln2_g": ln2["g"], "ln2_b": ln2["b"],
            "w_ff1": lin1["w"], "b_ff1": lin1["b"],
            "w_ff2": lin2["w"], "b_ff2": lin2["b"],
            "ln3_g": ln3["g"], "ln3_b": ln3["b"]}


def init_params(key, input_dim, E, n_layers, ff, n_heads, dh, dh_pad):
    keys = jax.random.split(key, 2 + 2 * n_layers)
    return {
        "embedder": init_linear(keys[0], input_dim, E),
        "proj": init_linear(keys[1], E, 1),
        "enc_layers": [init_encoder_layer(keys[2 + i], E, ff, n_heads, dh, dh_pad)
                       for i in range(n_layers)],
        "dec_layers": [init_decoder_layer(keys[2 + n_layers + i], E, ff,
                                          n_heads, dh, dh_pad)
                       for i in range(n_layers)],
        "enc_norm": init_layernorm(E),
        "dec_norm": init_layernorm(E),
    }


# ----------------------------- pure-JAX reference ------------------------------

def _reference_forward(params, x, n_heads, dh_pad):
    """f32 reference (exact reciprocal / sigmoid) of the same forward pass."""
    E_pad = n_heads * dh_pad
    f32 = jnp.float32

    def ln(v, g, b):
        m = jnp.mean(v, -1, keepdims=True)
        c = v - m
        return c * jax.lax.rsqrt(jnp.mean(c * c, -1, keepdims=True) + _EPS) * g + b

    def lin(v, w, b):
        return v.astype(f32) @ w.astype(f32) + b

    def sdpa(q, k, v):
        out = []
        for h in range(n_heads):
            sl = slice(h * dh_pad, (h + 1) * dh_pad)
            s = q[..., sl] @ jnp.swapaxes(k[..., sl], -1, -2)
            out.append(jax.nn.softmax(s, axis=-1) @ v[..., sl])
        return jnp.concatenate(out, -1)

    mem = lin(x, params["embedder"]["w"], params["embedder"]["b"])
    n_enc = len(params["enc_layers"])
    for i, p in enumerate(params["enc_layers"]):
        qkv = lin(mem, p["w_qkv"], p["b_qkv"])
        ctx = sdpa(qkv[..., :E_pad], qkv[..., E_pad:2 * E_pad], qkv[..., 2 * E_pad:])
        h1 = ln(mem + lin(ctx, p["w_attn_out"], p["b_attn_out"]),
                p["ln1_g"], p["ln1_b"])
        ff = lin(jnp.maximum(lin(h1, p["w_ff1"], p["b_ff1"]), 0.0),
                 p["w_ff2"], p["b_ff2"])
        mem = ln(h1 + ff, p["ln2_g"], p["ln2_b"])
        if i == n_enc - 1:
            mem = ln(mem, params["enc_norm"]["g"], params["enc_norm"]["b"])

    B = x.shape[0]
    E = params["embedder"]["w"].shape[1]
    t = jnp.zeros((B, 1, E), f32)
    for p in params["dec_layers"]:
        sa = lin(lin(t, p["w_v_s"], p["b_v_s"]), p["w_out_s"], p["b_out_s"])
        t1 = ln(t + sa, p["ln1_g"], p["ln1_b"])
        q = lin(t1, p["w_q_c"], p["b_q_c"])
        kv = lin(mem, p["w_kv_c"], p["b_kv_c"])
        ctx = sdpa(q, kv[..., :E_pad], kv[..., E_pad:])
        t2 = ln(t1 + lin(ctx, p["w_out_c"], p["b_out_c"]), p["ln2_g"], p["ln2_b"])
        ff = lin(jnp.maximum(lin(t2, p["w_ff1"], p["b_ff1"]), 0.0),
                 p["w_ff2"], p["b_ff2"])
        t = ln(t2 + ff, p["ln3_g"], p["ln3_b"])
    t = ln(t, params["dec_norm"]["g"], params["dec_norm"]["b"])
    logit = lin(t, params["proj"]["w"], params["proj"]["b"]).reshape(B)
    return jax.nn.sigmoid(logit)


# ----------------------------------- main --------------------------------------

if __name__ == "__main__":
    # Small but structurally faithful config (module defaults: n_heads=16,
    # n_layers=6, input_dim=384, hidden_dim=20, dim_feedforward=2048).
    n_heads = 4
    n_layers = 2
    input_dim = 64
    hidden_dim = 8                          # per-head dim
    dim_feedforward = 128
    E = hidden_dim * n_heads                # full_hidden_dim = 32
    dh_pad = _round_up(hidden_dim, _LANE)   # 128-lane-aligned per-head layout
    batch, seq = 2, 8

    key = jax.random.PRNGKey(0)
    pkey, xkey = jax.random.split(key)
    params = init_params(pkey, input_dim, E, n_layers, dim_feedforward,
                         n_heads, hidden_dim, dh_pad)
    x = jax.random.normal(xkey, (batch, seq, input_dim), jnp.float32)

    fwd = jax.jit(functools.partial(unresolved_bert_forward,
                                    n_heads=n_heads, dh_pad=dh_pad))
    out = jax.block_until_ready(fwd(params, x))

    assert out.shape == (batch,)
    assert bool(jnp.all(jnp.isfinite(out)))
    assert bool(jnp.all((out >= 0.0) & (out <= 1.0)))       # sigmoid range

    ref = _reference_forward(params, x, n_heads, dh_pad)
    max_err = float(jnp.max(jnp.abs(out - ref)))
    assert max_err < 5e-2, f"kernel vs reference mismatch: {max_err}"
    print("KERNEL_OK")
</pallas_src>

<mosaic_0001>
module attributes {stable_mosaic.version = 11 : i64} {
  func.func @_linear_kernel(%arg0: i32, %arg1: memref<16x64xf32, #tpu.memory_space<vmem>>, %arg2: memref<64x32xbf16, #tpu.memory_space<vmem>>, %arg3: memref<1x32xf32, #tpu.memory_space<vmem>>, %arg4: memref<16x32xbf16, #tpu.memory_space<vmem>>) attributes {dimension_semantics = [#tpu.dimension_semantics<parallel>], iteration_bounds = array<i64: 1>, scalar_prefetch = 0 : i64, scratch_operands = 0 : i64, tpu.core_type = #tpu.core_type<tc>, window_params = [{transform_indices = @transform_0, window_bounds = array<i64: 16, 64>}, {pipeline_mode = #tpu.pipeline_mode<synchronous>, transform_indices = @transform_1, window_bounds = array<i64: 64, 32>}, {pipeline_mode = #tpu.pipeline_mode<synchronous>, transform_indices = @transform_2, window_bounds = array<i64: 1, 32>}, {transform_indices = @transform_3, window_bounds = array<i64: 16, 32>}]} {
    %c0 = arith.constant 0 : index
    %c0_0 = arith.constant 0 : index
    %0 = vector.load %arg1[%c0, %c0_0] : memref<16x64xf32, #tpu.memory_space<vmem>>, vector<16x64xf32>
    %c0_1 = arith.constant 0 : index
    %c0_2 = arith.constant 0 : index
    %1 = vector.load %arg2[%c0_1, %c0_2] : memref<64x32xbf16, #tpu.memory_space<vmem>>, vector<64x32xbf16>
    %c0_3 = arith.constant 0 : index
    %c0_4 = arith.constant 0 : index
    %2 = vector.load %arg3[%c0_3, %c0_4] : memref<1x32xf32, #tpu.memory_space<vmem>>, vector<1x32xf32>
    %3 = arith.truncf %0 : vector<16x64xf32> to vector<16x64xbf16>
    %cst = arith.constant dense<0.000000e+00> : vector<16x32xf32>
    %4 = tpu.matmul %3, %1, %cst {dimension_numbers = #tpu.dot_dimension_numbers<[1], [0], [0], [1], [0, 0, 1, 1], [], []>} : vector<16x64xbf16>, vector<64x32xbf16>, vector<16x32xf32> -> vector<16x32xf32>
    %5 = vector.broadcast %2 : vector<1x32xf32> to vector<16x32xf32>
    %6 = arith.addf %4, %5 : vector<16x32xf32>
    %7 = arith.truncf %6 : vector<16x32xf32> to vector<16x32xbf16>
    %c0_5 = arith.constant 0 : index
    %c0_6 = arith.constant 0 : index
    %8 = vector.load %arg4[%c0_5, %c0_6] : memref<16x32xbf16, #tpu.memory_space<vmem>>, vector<16x32xbf16>
    tpu.vector_store %arg4[%c0_5, %c0_6], %7 {strides = array<i32>} : memref<16x32xbf16, #tpu.memory_space<vmem>>, vector<16x32xbf16>,
    return
  }
  func.func @transform_0(%arg0: i32) -> (i32, i32) {
    %c0_i32 = arith.constant 0 : i32
    %c0_i32_0 = arith.constant 0 : i32
    return %arg0, %c0_i32 : i32, i32
  }
  func.func @transform_1(%arg0: i32) -> (i32, i32) {
    %c0_i32 = arith.constant 0 : i32
    %c0_i32_0 = arith.constant 0 : i32
    %c0_i32_1 = arith.constant 0 : i32
    return %c0_i32, %c0_i32_0 : i32, i32
  }
  func.func @transform_2(%arg0: i32) -> (i32, i32) {
    %c0_i32 = arith.constant 0 : i32
    %c0_i32_0 = arith.constant 0 : i32
    %c0_i32_1 = arith.constant 0 : i32
    return %c0_i32, %c0_i32_0 : i32, i32
  }
  func.func @transform_3(%arg0: i32) -> (i32, i32) {
    %c0_i32 = arith.constant 0 : i32
    %c0_i32_0 = arith.constant 0 : i32
    return %arg0, %c0_i32 : i32, i32
  }
}

module attributes {stable_mosaic.version = 11 : i64} {
  func.func @_encoder_layer_kernel(%arg0: i32, %arg1: memref<1x8x32xbf16, #tpu.memory_space<vmem>>, %arg2: memref<32x1536xbf16, #tpu.memory_space<vmem>>, %arg3: memref<1x1536xf32, #tpu.memory_space<vmem>>, %arg4: memref<512x32xbf16, #tpu.memory_space<vmem>>, %arg5: memref<1x32xf32, #tpu.memory_space<vmem>>, %arg6: memref<1x32xf32, #tpu.memory_space<vmem>>, %arg7: memref<1x32xf32, #tpu.memory_space<vmem>>, %arg8: memref<32x128xbf16, #tpu.memory_space<vmem>>, %arg9: memref<1x128xf32, #tpu.memory_space<vmem>>, %arg10: memref<128x32xbf16, #tpu.memory_space<vmem>>, %arg11: memref<1x32xf32, #tpu.memory_space<vmem>>, %arg12: memref<1x32xf32, #tpu.memory_space<vmem>>, %arg13: memref<1x32xf32, #tpu.memory_space<vmem>>, %arg14: memref<1x32xf32, #tpu.memory_space<vmem>>, %arg15: memref<1x32xf32, #tpu.memory_space<vmem>>, %arg16: memref<1x8x32xbf16, #tpu.memory_space<vmem>>, %arg17: memref<8x512xf32, #tpu.memory_space<vmem>>) attributes {dimension_semantics = [#tpu.dimension_semantics<parallel>], iteration_bounds = array<i64: 2>, scalar_prefetch = 0 : i64, scratch_operands = 1 : i64, tpu.core_type = #tpu.core_type<tc>, window_params = [{transform_indices = @transform_0, window_bounds = array<i64: 1, 8, 32>}, {pipeline_mode = #tpu.pipeline_mode<synchronous>, transform_indices = @transform_1, window_bounds = array<i64: 32, 1536>}, {pipeline_mode = #tpu.pipeline_mode<synchronous>, transform_indices = @transform_2, window_bounds = array<i64: 1, 1536>}, {pipeline_mode = #tpu.pipeline_mode<synchronous>, transform_indices = @transform_3, window_bounds = array<i64: 512, 32>}, {pipeline_mode = #tpu.pipeline_mode<synchronous>, transform_indices = @transform_4, window_bounds = array<i64: 1, 32>}, {pipeline_mode = #tpu.pipeline_mode<synchronous>, transform_indices = @transform_5, window_bounds = array<i64: 1, 32>}, {pipeline_mode = #tpu.pipeline_mode<synchronous>, transform_indices = @transform_6, window_bounds = array<i64: 1, 32>}, {pipeline_mode = #tpu.pipeline_mode<synchronous>, transform_indices = @transform_7, window_bounds = array<i64: 32, 128>}, {pipeline_mode = #tpu.pipeline_mode<synchronous>, transform_indices = @transform_8, window_bounds = array<i64: 1, 128>}, {pipeline_mode = #tpu.pipeline_mode<synchronous>, transform_indices = @transform_9, window_bounds = array<i64: 128, 32>}, {pipeline_mode = #tpu.pipeline_mode<synchronous>, transform_indices = @transform_10, window_bounds = array<i64: 1, 32>}, {pipeline_mode = #tpu.pipeline_mode<synchronous>, transform_indices = @transform_11, window_bounds = array<i64: 1, 32>}, {pipeline_mode = #tpu.pipeline_mode<synchronous>, transform_indices = @transform_12, window_bounds = array<i64: 1, 32>}, {pipeline_mode = #tpu.pipeline_mode<synchronous>, transform_indices = @transform_13, window_bounds = array<i64: 1, 32>}, {pipeline_mode = #tpu.pipeline_mode<synchronous>, transform_indices = @transform_14, window_bounds = array<i64: 1, 32>}, {transform_indices = @transform_15, window_bounds = array<i64: 1, 8, 32>}]} {
    %c0 = arith.constant 0 : index
    %c0_0 = arith.constant 0 : index
    %c0_1 = arith.constant 0 : index
    %0 = vector.load %arg1[%c0, %c0_0, %c0_1] : memref<1x8x32xbf16, #tpu.memory_space<vmem>>, vector<1x8x32xbf16>
    %1 = vector.shape_cast %0 : vector<1x8x32xbf16> to vector<8x32xbf16>
    %2 = arith.extf %1 : vector<8x32xbf16> to vector<8x32xf32>
    %c0_2 = arith.constant 0 : index
    %c0_3 = arith.constant 0 : index
    %3 = vector.load %arg2[%c0_2, %c0_3] : memref<32x1536xbf16, #tpu.memory_space<vmem>>, vector<32x1536xbf16>
    %c0_4 = arith.constant 0 : index
    %c0_5 = arith.constant 0 : index
    %4 = vector.load %arg3[%c0_4, %c0_5] : memref<1x1536xf32, #tpu.memory_space<vmem>>, vector<1x1536xf32>
    %5 = arith.truncf %2 : vector<8x32xf32> to vector<8x32xbf16>
    %cst = arith.constant dense<0.000000e+00> : vector<8x1536xf32>
    %6 = tpu.matmul %5, %3, %cst {dimension_numbers = #tpu.dot_dimension_numbers<[1], [0], [0], [1], [0, 0, 1, 1], [], []>} : vector<8x32xbf16>, vector<32x1536xbf16>, vector<8x1536xf32> -> vector<8x1536xf32>
    %7 = vector.broadcast %4 : vector<1x1536xf32> to vector<8x1536xf32>
    %8 = arith.addf %6, %7 : vector<8x1536xf32>
    %9 = vector.extract_strided_slice %8 {offsets = [0, 0], sizes = [8, 512], strides = [1, 1]} : vector<8x1536xf32> to vector<8x512xf32>
    %10 = arith.truncf %9 : vector<8x512xf32> to vector<8x512xbf16>
    %11 = vector.extract_strided_slice %8 {offsets = [0, 512], sizes = [8, 512], strides = [1, 1]} : vector<8x1536xf32> to vector<8x512xf32>
    %12 = arith.truncf %11 : vector<8x512xf32> to vector<8x512xbf16>
    %13 = vector.extract_strided_slice %8 {offsets = [0, 1024], sizes = [8, 512], strides = [1, 1]} : vector<8x1536xf32> to vector<8x512xf32>
    %14 = arith.truncf %13 : vector<8x512xf32> to vector<8x512xbf16>
    %15 = vector.extract_strided_slice %10 {offsets = [0, 0], sizes = [8, 128], strides = [1, 1]} : vector<8x512xbf16> to vector<8x128xbf16>
    %16 = vector.extract_strided_slice %12 {offsets = [0, 0], sizes = [8, 128], strides = [1, 1]} : vector<8x512xbf16> to vector<8x128xbf16>
    %cst_6 = arith.constant dense<0.000000e+00> : vector<8x8xf32>
    %17 = tpu.matmul %15, %16, %cst_6 {dimension_numbers = #tpu.dot_dimension_numbers<[1], [1], [0], [0], [0, 0, 1, 0], [], []>} : vector<8x128xbf16>, vector<8x128xbf16>, vector<8x8xf32> -> vector<8x8xf32>
    %cst_7 = arith.constant dense<0xFF800000> : vector<8xf32>
    %18 = vector.multi_reduction <maximumf>, %17, %cst_7 [1] : vector<8x8xf32> to vector<8xf32>
    %19 = vector.shape_cast %18 : vector<8xf32> to vector<8x1xf32>
    %20 = vector.broadcast %19 : vector<8x1xf32> to vector<8x8xf32>
    %21 = arith.subf %17, %20 : vector<8x8xf32>
    %22 = math.exp %21 : vector<8x8xf32>
    %cst_8 = arith.constant dense<0.000000e+00> : vector<8xf32>
    %23 = vector.multi_reduction <add>, %22, %cst_8 [1] : vector<8x8xf32> to vector<8xf32>
    %24 = vector.shape_cast %23 : vector<8xf32> to vector<8x1xf32>
    %25 = tpu.reciprocal %24 {approx = true} : vector<8x1xf32> -> vector<8x1xf32>
    %26 = vector.broadcast %25 : vector<8x1xf32> to vector<8x8xf32>
    %27 = arith.mulf %22, %26 : vector<8x8xf32>
    %28 = arith.truncf %27 : vector<8x8xf32> to vector<8x8xbf16>
    %29 = vector.extract_strided_slice %14 {offsets = [0, 0], sizes = [8, 128], strides = [1, 1]} : vector<8x512xbf16> to vector<8x128xbf16>
    %cst_9 = arith.constant dense<0.000000e+00> : vector<8x128xf32>
    %30 = tpu.matmul %28, %29, %cst_9 {dimension_numbers = #tpu.dot_dimension_numbers<[1], [0], [0], [1], [0, 0, 1, 1], [], []>} : vector<8x8xbf16>, vector<8x128xbf16>, vector<8x128xf32> -> vector<8x128xf32>
    %c0_10 = arith.constant 0 : index
    %c0_11 = arith.constant 0 : index
    %31 = vector.load %arg17[%c0_10, %c0_11] : memref<8x512xf32, #tpu.memory_space<vmem>>, vector<8x128xf32>
    tpu.vector_store %arg17[%c0_10, %c0_11], %30 {strides = array<i32>} : memref<8x512xf32, #tpu.memory_space<vmem>>, vector<8x128xf32>,
    %32 = vector.extract_strided_slice %10 {offsets = [0, 128], sizes = [8, 128], strides = [1, 1]} : vector<8x512xbf16> to vector<8x128xbf16>
    %33 = vector.extract_strided_slice %12 {offsets = [0, 128], sizes = [8, 128], strides = [1, 1]} : vector<8x512xbf16> to vector<8x128xbf16>
    %cst_12 = arith.constant dense<0.000000e+00> : vector<8x8xf32>
    %34 = tpu.matmul %32, %33, %cst_12 {dimension_numbers = #tpu.dot_dimension_numbers<[1], [1], [0], [0], [0, 0, 1, 0], [], []>} : vector<8x128xbf16>, vector<8x128xbf16>, vector<8x8xf32> -> vector<8x8xf32>
    %cst_13 = arith.constant dense<0xFF800000> : vector<8xf32>
    %35 = vector.multi_reduction <maximumf>, %34, %cst_13 [1] : vector<8x8xf32> to vector<8xf32>
    %36 = vector.shape_cast %35 : vector<8xf32> to vector<8x1xf32>
    %37 = vector.broadcast %36 : vector<8x1xf32> to vector<8x8xf32>
    %38 = arith.subf %34, %37 : vector<8x8xf32>
    %39 = math.exp %38 : vector<8x8xf32>
    %cst_14 = arith.constant dense<0.000000e+00> : vector<8xf32>
    %40 = vector.multi_reduction <add>, %39, %cst_14 [1] : vector<8x8xf32> to vector<8xf32>
    %41 = vector.shape_cast %40 : vector<8xf32> to vector<8x1xf32>
    %42 = tpu.reciprocal %41 {approx = true} : vector<8x1xf32> -> vector<8x1xf32>
    %43 = vector.broadcast %42 : vector<8x1xf32> to vector<8x8xf32>
    %44 = arith.mulf %39, %43 : vector<8x8xf32>
    %45 = arith.truncf %44 : vector<8x8xf32> to vector<8x8xbf16>
    %46 = vector.extract_strided_slice %14 {offsets = [0, 128], sizes = [8, 128], strides = [1, 1]} : vector<8x512xbf16> to vector<8x128xbf16>
    %cst_15 = arith.constant dense<0.000000e+00> : vector<8x128xf32>
    %47 = tpu.matmul %45, %46, %cst_15 {dimension_numbers = #tpu.dot_dimension_numbers<[1], [0], [0], [1], [0, 0, 1, 1], [], []>} : vector<8x8xbf16>, vector<8x128xbf16>, vector<8x128xf32> -> vector<8x128xf32>
    %c0_16 = arith.constant 0 : index
    %c128 = arith.constant 128 : index
    %48 = vector.load %arg17[%c0_16, %c128] : memref<8x512xf32, #tpu.memory_space<vmem>>, vector<8x128xf32>
    tpu.vector_store %arg17[%c0_16, %c128], %47 {strides = array<i32>} : memref<8x512xf32, #tpu.memory_space<vmem>>, vector<8x128xf32>,
    %49 = vector.extract_strided_slice %10 {offsets = [0, 256], sizes = [8, 128], strides = [1, 1]} : vector<8x512xbf16> to vector<8x128xbf16>
    %50 = vector.extract_strided_slice %12 {offsets = [0, 256], sizes = [8, 128], strides = [1, 1]} : vector<8x512xbf16> to vector<8x128xbf16>
    %cst_17 = arith.constant dense<0.000000e+00> : vector<8x8xf32>
    %51 = tpu.matmul %49, %50, %cst_17 {dimension_numbers = #tpu.dot_dimension_numbers<[1], [1], [0], [0], [0, 0, 1, 0], [], []>} : vector<8x128xbf16>, vector<8x128xbf16>, vector<8x8xf32> -> vector<8x8xf32>
    %cst_18 = arith.constant dense<0xFF800000> : vector<8xf32>
    %52 = vector.multi_reduction <maximumf>, %51, %cst_18 [1] : vector<8x8xf32> to vector<8xf32>
    %53 = vector.shape_cast %52 : vector<8xf32> to vector<8x1xf32>
    %54 = vector.broadcast %53 : vector<8x1xf32> to vector<8x8xf32>
    %55 = arith.subf %51, %54 : vector<8x8xf32>
    %56 = math.exp %55 : vector<8x8xf32>
    %cst_19 = arith.constant dense<0.000000e+00> : vector<8xf32>
    %57 = vector.multi_reduction <add>, %56, %cst_19 [1] : vector<8x8xf32> to vector<8xf32>
    %58 = vector.shape_cast %57 : vector<8xf32> to vector<8x1xf32>
    %59 = tpu.reciprocal %58 {approx = true} : vector<8x1xf32> -> vector<8x1xf32>
    %60 = vector.broadcast %59 : vector<8x1xf32> to vector<8x8xf32>
    %61 = arith.mulf %56, %60 : vector<8x8xf32>
    %62 = arith.truncf %61 : vector<8x8xf32> to vector<8x8xbf16>
    %63 = vector.extract_strided_slice %14 {offsets = [0, 256], sizes = [8, 128], strides = [1, 1]} : vector<8x512xbf16> to vector<8x128xbf16>
    %cst_20 = arith.constant dense<0.000000e+00> : vector<8x128xf32>
    %64 = tpu.matmul %62, %63, %cst_20 {dimension_numbers = #tpu.dot_dimension_numbers<[1], [0], [0], [1], [0, 0, 1, 1], [], []>} : vector<8x8xbf16>, vector<8x128xbf16>, vector<8x128xf32> -> vector<8x128xf32>
    %c0_21 = arith.constant 0 : index
    %c256 = arith.constant 256 : index
    %65 = vector.load %arg17[%c0_21, %c256] : memref<8x512xf32, #tpu.memory_space<vmem>>, vector<8x128xf32>
    tpu.vector_store %arg17[%c0_21, %c256], %64 {strides = array<i32>} : memref<8x512xf32, #tpu.memory_space<vmem>>, vector<8x128xf32>,
    %66 = vector.extract_strided_slice %10 {offsets = [0, 384], sizes = [8, 128], strides = [1, 1]} : vector<8x512xbf16> to vector<8x128xbf16>
    %67 = vector.extract_strided_slice %12 {offsets = [0, 384], sizes = [8, 128], strides = [1, 1]} : vector<8x512xbf16> to vector<8x128xbf16>
    %cst_22 = arith.constant dense<0.000000e+00> : vector<8x8xf32>
    %68 = tpu.matmul %66, %67, %cst_22 {dimension_numbers = #tpu.dot_dimension_numbers<[1], [1], [0], [0], [0, 0, 1, 0], [], []>} : vector<8x128xbf16>, vector<8x128xbf16>, vector<8x8xf32> -> vector<8x8xf32>
    %cst_23 = arith.constant dense<0xFF800000> : vector<8xf32>
    %69 = vector.multi_reduction <maximumf>, %68, %cst_23 [1] : vector<8x8xf32> to vector<8xf32>
    %70 = vector.shape_cast %69 : vector<8xf32> to vector<8x1xf32>
    %71 = vector.broadcast %70 : vector<8x1xf32> to vector<8x8xf32>
    %72 = arith.subf %68, %71 : vector<8x8xf32>
    %73 = math.exp %72 : vector<8x8xf32>
    %cst_24 = arith.constant dense<0.000000e+00> : vector<8xf32>
    %74 = vector.multi_reduction <add>, %73, %cst_24 [1] : vector<8x8xf32> to vector<8xf32>
    %75 = vector.shape_cast %74 : vector<8xf32> to vector<8x1xf32>
    %76 = tpu.reciprocal %75 {approx = true} : vector<8x1xf32> -> vector<8x1xf32>
    %77 = vector.broadcast %76 : vector<8x1xf32> to vector<8x8xf32>
    %78 = arith.mulf %73, %77 : vector<8x8xf32>
    %79 = arith.truncf %78 : vector<8x8xf32> to vector<8x8xbf16>
    %80 = vector.extract_strided_slice %14 {offsets = [0, 384], sizes = [8, 128], strides = [1, 1]} : vector<8x512xbf16> to vector<8x128xbf16>
    %cst_25 = arith.constant dense<0.000000e+00> : vector<8x128xf32>
    %81 = tpu.matmul %79, %80, %cst_25 {dimension_numbers = #tpu.dot_dimension_numbers<[1], [0], [0], [1], [0, 0, 1, 1], [], []>} : vector<8x8xbf16>, vector<8x128xbf16>, vector<8x128xf32> -> vector<8x128xf32>
    %c0_26 = arith.constant 0 : index
    %c384 = arith.constant 384 : index
    %82 = vector.load %arg17[%c0_26, %c384] : memref<8x512xf32, #tpu.memory_space<vmem>>, vector<8x128xf32>
    tpu.vector_store %arg17[%c0_26, %c384], %81 {strides = array<i32>} : memref<8x512xf32, #tpu.memory_space<vmem>>, vector<8x128xf32>,
    %c0_27 = arith.constant 0 : index
    %c0_28 = arith.constant 0 : index
    %83 = vector.load %arg17[%c0_27, %c0_28] : memref<8x512xf32, #tpu.memory_space<vmem>>, vector<8x512xf32>
    %c0_29 = arith.constant 0 : index
    %c0_30 = arith.constant 0 : index
    %84 = vector.load %arg4[%c0_29, %c0_30] : memref<512x32xbf16, #tpu.memory_space<vmem>>, vector<512x32xbf16>
    %c0_31 = arith.constant 0 : index
    %c0_32 = arith.constant 0 : index
    %85 = vector.load %arg5[%c0_31, %c0_32] : memref<1x32xf32, #tpu.memory_space<vmem>>, vector<1x32xf32>
    %86 = arith.truncf %83 : vector<8x512xf32> to vector<8x512xbf16>
    %cst_33 = arith.constant dense<0.000000e+00> : vector<8x32xf32>
    %87 = tpu.matmul %86, %84, %cst_33 {dimension_numbers = #tpu.dot_dimension_numbers<[1], [0], [0], [1], [0, 0, 1, 1], [], []>} : vector<8x512xbf16>, vector<512x32xbf16>, vector<8x32xf32> -> vector<8x32xf32>
    %88 = vector.broadcast %85 : vector<1x32xf32> to vector<8x32xf32>
    %89 = arith.addf %87, %88 : vector<8x32xf32>
    %90 = arith.addf %2, %89 : vector<8x32xf32>
    %c0_34 = arith.constant 0 : index
    %c0_35 = arith.constant 0 : index
    %91 = vector.load %arg6[%c0_34, %c0_35] : memref<1x32xf32, #tpu.memory_space<vmem>>, vector<1x32xf32>
    %c0_36 = arith.constant 0 : index
    %c0_37 = arith.constant 0 : index
    %92 = vector.load %arg7[%c0_36, %c0_37] : memref<1x32xf32, #tpu.memory_space<vmem>>, vector<1x32xf32>
    %cst_38 = arith.constant dense<0.000000e+00> : vector<8xf32>
    %93 = vector.multi_reduction <add>, %90, %cst_38 [1] : vector<8x32xf32> to vector<8xf32>
    %94 = vector.shape_cast %93 : vector<8xf32> to vector<8x1xf32>
    %cst_39 = arith.constant 3.200000e+01 : f32
    %95 = vector.broadcast %cst_39 : f32 to vector<8x1xf32>
    %96 = arith.divf %94, %95 : vector<8x1xf32>
    %97 = vector.broadcast %96 : vector<8x1xf32> to vector<8x32xf32>
    %98 = arith.subf %90, %97 : vector<8x32xf32>
    %99 = arith.mulf %98, %98 : vector<8x32xf32>
    %cst_40 = arith.constant dense<0.000000e+00> : vector<8xf32>
    %100 = vector.multi_reduction <add>, %99, %cst_40 [1] : vector<8x32xf32> to vector<8xf32>
    %101 = vector.shape_cast %100 : vector<8xf32> to vector<8x1xf32>
    %cst_41 = arith.constant 3.200000e+01 : f32
    %102 = vector.broadcast %cst_41 : f32 to vector<8x1xf32>
    %103 = arith.divf %101, %102 : vector<8x1xf32>
    %cst_42 = arith.constant 9.99999974E-6 : f32
    %104 = vector.broadcast %cst_42 : f32 to vector<8x1xf32>
    %105 = arith.addf %103, %104 : vector<8x1xf32>
    %106 = math.rsqrt %105 : vector<8x1xf32>
    %107 = vector.broadcast %106 : vector<8x1xf32> to vector<8x32xf32>
    %108 = arith.mulf %98, %107 : vector<8x32xf32>
    %109 = vector.broadcast %91 : vector<1x32xf32> to vector<8x32xf32>
    %110 = arith.mulf %108, %109 : vector<8x32xf32>
    %111 = vector.broadcast %92 : vector<1x32xf32> to vector<8x32xf32>
    %112 = arith.addf %110, %111 : vector<8x32xf32>
    %c0_43 = arith.constant 0 : index
    %c0_44 = arith.constant 0 : index
    %113 = vector.load %arg8[%c0_43, %c0_44] : memref<32x128xbf16, #tpu.memory_space<vmem>>, vector<32x128xbf16>
    %c0_45 = arith.constant 0 : index
    %c0_46 = arith.constant 0 : index
    %114 = vector.load %arg9[%c0_45, %c0_46] : memref<1x128xf32, #tpu.memory_space<vmem>>, vector<1x128xf32>
    %115 = arith.truncf %112 : vector<8x32xf32> to vector<8x32xbf16>
    %cst_47 = arith.constant dense<0.000000e+00> : vector<8x128xf32>
    %116 = tpu.matmul %115, %113, %cst_47 {dimension_numbers = #tpu.dot_dimension_numbers<[1], [0], [0], [1], [0, 0, 1, 1], [], []>} : vector<8x32xbf16>, vector<32x128xbf16>, vector<8x128xf32> -> vector<8x128xf32>
    %117 = vector.broadcast %114 : vector<1x128xf32> to vector<8x128xf32>
    %118 = arith.addf %116, %117 : vector<8x128xf32>
    %cst_48 = arith.constant 0.000000e+00 : f32
    %119 = vector.broadcast %cst_48 : f32 to vector<8x128xf32>
    %120 = arith.maximumf %118, %119 : vector<8x128xf32>
    %c0_49 = arith.constant 0 : index
    %c0_50 = arith.constant 0 : index
    %121 = vector.load %arg10[%c0_49, %c0_50] : memref<128x32xbf16, #tpu.memory_space<vmem>>, vector<128x32xbf16>
    %c0_51 = arith.constant 0 : index
    %c0_52 = arith.constant 0 : index
    %122 = vector.load %arg11[%c0_51, %c0_52] : memref<1x32xf32, #tpu.memory_space<vmem>>, vector<1x32xf32>
    %123 = arith.truncf %120 : vector<8x128xf32> to vector<8x128xbf16>
    %cst_53 = arith.constant dense<0.000000e+00> : vector<8x32xf32>
    %124 = tpu.matmul %123, %121, %cst_53 {dimension_numbers = #tpu.dot_dimension_numbers<[1], [0], [0], [1], [0, 0, 1, 1], [], []>} : vector<8x128xbf16>, vector<128x32xbf16>, vector<8x32xf32> -> vector<8x32xf32>
    %125 = vector.broadcast %122 : vector<1x32xf32> to vector<8x32xf32>
    %126 = arith.addf %124, %125 : vector<8x32xf32>
    %127 = arith.addf %112, %126 : vector<8x32xf32>
    %c0_54 = arith.constant 0 : index
    %c0_55 = arith.constant 0 : index
    %128 = vector.load %arg12[%c0_54, %c0_55] : memref<1x32xf32, #tpu.memory_space<vmem>>, vector<1x32xf32>
    %c0_56 = arith.constant 0 : index
    %c0_57 = arith.constant 0 : index
    %129 = vector.load %arg13[%c0_56, %c0_57] : memref<1x32xf32, #tpu.memory_space<vmem>>, vector<1x32xf32>
    %cst_58 = arith.constant dense<0.000000e+00> : vector<8xf32>
    %130 = vector.multi_reduction <add>, %127, %cst_58 [1] : vector<8x32xf32> to vector<8xf32>
    %131 = vector.shape_cast %130 : vector<8xf32> to vector<8x1xf32>
    %cst_59 = arith.constant 3.200000e+01 : f32
    %132 = vector.broadcast %cst_59 : f32 to vector<8x1xf32>
    %133 = arith.divf %131, %132 : vector<8x1xf32>
    %134 = vector.broadcast %133 : vector<8x1xf32> to vector<8x32xf32>
    %135 = arith.subf %127, %134 : vector<8x32xf32>
    %136 = arith.mulf %135, %135 : vector<8x32xf32>
    %cst_60 = arith.constant dense<0.000000e+00> : vector<8xf32>
    %137 = vector.multi_reduction <add>, %136, %cst_60 [1] : vector<8x32xf32> to vector<8xf32>
    %138 = vector.shape_cast %137 : vector<8xf32> to vector<8x1xf32>
    %cst_61 = arith.constant 3.200000e+01 : f32
    %139 = vector.broadcast %cst_61 : f32 to vector<8x1xf32>
    %140 = arith.divf %138, %139 : vector<8x1xf32>
    %cst_62 = arith.constant 9.99999974E-6 : f32
    %141 = vector.broadcast %cst_62 : f32 to vector<8x1xf32>
    %142 = arith.addf %140, %141 : vector<8x1xf32>
    %143 = math.rsqrt %142 : vector<8x1xf32>
    %144 = vector.broadcast %143 : vector<8x1xf32> to vector<8x32xf32>
    %145 = arith.mulf %135, %144 : vector<8x32xf32>
    %146 = vector.broadcast %128 : vector<1x32xf32> to vector<8x32xf32>
    %147 = arith.mulf %145, %146 : vector<8x32xf32>
    %148 = vector.broadcast %129 : vector<1x32xf32> to vector<8x32xf32>
    %149 = arith.addf %147, %148 : vector<8x32xf32>
    %c0_63 = arith.constant 0 : index
    %c0_64 = arith.constant 0 : index
    %150 = vector.load %arg14[%c0_63, %c0_64] : memref<1x32xf32, #tpu.memory_space<vmem>>, vector<1x32xf32>
    %c0_65 = arith.constant 0 : index
    %c0_66 = arith.constant 0 : index
    %151 = vector.load %arg15[%c0_65, %c0_66] : memref<1x32xf32, #tpu.memory_space<vmem>>, vector<1x32xf32>
    %cst_67 = arith.constant dense<0.000000e+00> : vector<8xf32>
    %152 = vector.multi_reduction <add>, %149, %cst_67 [1] : vector<8x32xf32> to vector<8xf32>
    %153 = vector.shape_cast %152 : vector<8xf32> to vector<8x1xf32>
    %cst_68 = arith.constant 3.200000e+01 : f32
    %154 = vector.broadcast %cst_68 : f32 to vector<8x1xf32>
    %155 = arith.divf %153, %154 : vector<8x1xf32>
    %156 = vector.broadcast %155 : vector<8x1xf32> to vector<8x32xf32>
    %157 = arith.subf %149, %156 : vector<8x32xf32>
    %158 = arith.mulf %157, %157 : vector<8x32xf32>
    %cst_69 = arith.constant dense<0.000000e+00> : vector<8xf32>
    %159 = vector.multi_reduction <add>, %158, %cst_69 [1] : vector<8x32xf32> to vector<8xf32>
    %160 = vector.shape_cast %159 : vector<8xf32> to vector<8x1xf32>
    %cst_70 = arith.constant 3.200000e+01 : f32
    %161 = vector.broadcast %cst_70 : f32 to vector<8x1xf32>
    %162 = arith.divf %160, %161 : vector<8x1xf32>
    %cst_71 = arith.constant 9.99999974E-6 : f32
    %163 = vector.broadcast %cst_71 : f32 to vector<8x1xf32>
    %164 = arith.addf %162, %163 : vector<8x1xf32>
    %165 = math.rsqrt %164 : vector<8x1xf32>
    %166 = vector.broadcast %165 : vector<8x1xf32> to vector<8x32xf32>
    %167 = arith.mulf %157, %166 : vector<8x32xf32>
    %168 = vector.broadcast %150 : vector<1x32xf32> to vector<8x32xf32>
    %169 = arith.mulf %167, %168 : vector<8x32xf32>
    %170 = vector.broadcast %151 : vector<1x32xf32> to vector<8x32xf32>
    %171 = arith.addf %169, %170 : vector<8x32xf32>
    %172 = vector.shape_cast %171 : vector<8x32xf32> to vector<1x8x32xf32>
    %173 = arith.truncf %172 : vector<1x8x32xf32> to vector<1x8x32xbf16>
    %c0_72 = arith.constant 0 : index
    %c0_73 = arith.constant 0 : index
    %c0_74 = arith.constant 0 : index
    %174 = vector.load %arg16[%c0_72, %c0_73, %c0_74] : memref<1x8x32xbf16, #tpu.memory_space<vmem>>, vector<1x8x32xbf16>
    tpu.vector_store %arg16[%c0_72, %c0_73, %c0_74], %173 {strides = array<i32>} : memref<1x8x32xbf16, #tpu.memory_space<vmem>>, vector<1x8x32xbf16>,
    return
  }
  func.func @transform_0(%arg0: i32) -> (i32, i32, i32) {
    %c0_i32 = arith.constant 0 : i32
    %c0_i32_0 = arith.constant 0 : i32
    %c0_i32_1 = arith.constant 0 : i32
    return %arg0, %c0_i32, %c0_i32_0 : i32, i32, i32
  }
  func.func @transform_1(%arg0: i32) -> (i32, i32) {
    %c0_i32 = arith.constant 0 : i32
    %c0_i32_0 = arith.constant 0 : i32
    %c0_i32_1 = arith.constant 0 : i32
    return %c0_i32, %c0_i32_0 : i32, i32
  }
  func.func @transform_2(%arg0: i32) -> (i32, i32) {
    %c0_i32 = arith.constant 0 : i32
    %c0_i32_0 = arith.constant 0 : i32
    %c0_i32_1 = arith.constant 0 : i32
    return %c0_i32, %c0_i32_0 : i32, i32
  }
  func.func @transform_3(%arg0: i32) -> (i32, i32) {
    %c0_i32 = arith.constant 0 : i32
    %c0_i32_0 = arith.constant 0 : i32
    %c0_i32_1 = arith.constant 0 : i32
    return %c0_i32, %c0_i32_0 : i32, i32
  }
  func.func @transform_4(%arg0: i32) -> (i32, i32) {
    %c0_i32 = arith.constant 0 : i32
    %c0_i32_0 = arith.constant 0 : i32
    %c0_i32_1 = arith.constant 0 : i32
    return %c0_i32, %c0_i32_0 : i32, i32
  }
  func.func @transform_5(%arg0: i32) -> (i32, i32) {
    %c0_i32 = arith.constant 0 : i32
    %c0_i32_0 = arith.constant 0 : i32
    %c0_i32_1 = arith.constant 0 : i32
    return %c0_i32, %c0_i32_0 : i32, i32
  }
  func.func @transform_6(%arg0: i32) -> (i32, i32) {
    %c0_i32 = arith.constant 0 : i32
    %c0_i32_0 = arith.constant 0 : i32
    %c0_i32_1 = arith.constant 0 : i32
    return %c0_i32, %c0_i32_0 : i32, i32
  }
  func.func @transform_7(%arg0: i32) -> (i32, i32) {
    %c0_i32 = arith.constant 0 : i32
    %c0_i32_0 = arith.constant 0 : i32
    %c0_i32_1 = arith.constant 0 : i32
    return %c0_i32, %c0_i32_0 : i32, i32
  }
  func.func @transform_8(%arg0: i32) -> (i32, i32) {
    %c0_i32 = arith.constant 0 : i32
    %c0_i32_0 = arith.constant 0 : i32
    %c0_i32_1 = arith.constant 0 : i32
    return %c0_i32, %c0_i32_0 : i32, i32
  }
  func.func @transform_9(%arg0: i32) -> (i32, i32) {
    %c0_i32 = arith.constant 0 : i32
    %c0_i32_0 = arith.constant 0 : i32
    %c0_i32_1 = arith.constant 0 : i32
    return %c0_i32, %c0_i32_0 : i32, i32
  }
  func.func @transform_10(%arg0: i32) -> (i32, i32) {
    %c0_i32 = arith.constant 0 : i32
    %c0_i32_0 = arith.constant 0 : i32
    %c0_i32_1 = arith.constant 0 : i32
    return %c0_i32, %c0_i32_0 : i32, i32
  }
  func.func @transform_11(%arg0: i32) -> (i32, i32) {
    %c0_i32 = arith.constant 0 : i32
    %c0_i32_0 = arith.constant 0 : i32
    %c0_i32_1 = arith.constant 0 : i32
    return %c0_i32, %c0_i32_0 : i32, i32
  }
  func.func @transform_12(%arg0: i32) -> (i32, i32) {
    %c0_i32 = arith.constant 0 : i32
    %c0_i32_0 = arith.constant 0 : i32
    %c0_i32_1 = arith.constant 0 : i32
    return %c0_i32, %c0_i32_0 : i32, i32
  }
  func.func @transform_13(%arg0: i32) -> (i32, i32) {
    %c0_i32 = arith.constant 0 : i32
    %c0_i32_0 = arith.constant 0 : i32
    %c0_i32_1 = arith.constant 0 : i32
    return %c0_i32, %c0_i32_0 : i32, i32
  }
  func.func @transform_14(%arg0: i32) -> (i32, i32) {
    %c0_i32 = arith.constant 0 : i32
    %c0_i32_0 = arith.constant 0 : i32
    %c0_i32_1 = arith.constant 0 : i32
    return %c0_i32, %c0_i32_0 : i32, i32
  }
  func.func @transform_15(%arg0: i32) -> (i32, i32, i32) {
    %c0_i32 = arith.constant 0 : i32
    %c0_i32_0 = arith.constant 0 : i32
    %c0_i32_1 = arith.constant 0 : i32
    return %arg0, %c0_i32, %c0_i32_0 : i32, i32, i32
  }
}

module attributes {stable_mosaic.version = 11 : i64} {
  func.func @_encoder_layer_kernel(%arg0: i32, %arg1: memref<1x8x32xbf16, #tpu.memory_space<vmem>>, %arg2: memref<32x1536xbf16, #tpu.memory_space<vmem>>, %arg3: memref<1x1536xf32, #tpu.memory_space<vmem>>, %arg4: memref<512x32xbf16, #tpu.memory_space<vmem>>, %arg5: memref<1x32xf32, #tpu.memory_space<vmem>>, %arg6: memref<1x32xf32, #tpu.memory_space<vmem>>, %arg7: memref<1x32xf32, #tpu.memory_space<vmem>>, %arg8: memref<32x128xbf16, #tpu.memory_space<vmem>>, %arg9: memref<1x128xf32, #tpu.memory_space<vmem>>, %arg10: memref<128x32xbf16, #tpu.memory_space<vmem>>, %arg11: memref<1x32xf32, #tpu.memory_space<vmem>>, %arg12: memref<1x32xf32, #tpu.memory_space<vmem>>, %arg13: memref<1x32xf32, #tpu.memory_space<vmem>>, %arg14: memref<1x8x32xbf16, #tpu.memory_space<vmem>>, %arg15: memref<8x512xf32, #tpu.memory_space<vmem>>) attributes {dimension_semantics = [#tpu.dimension_semantics<parallel>], iteration_bounds = array<i64: 2>, scalar_prefetch = 0 : i64, scratch_operands = 1 : i64, tpu.core_type = #tpu.core_type<tc>, window_params = [{transform_indices = @transform_0, window_bounds = array<i64: 1, 8, 32>}, {pipeline_mode = #tpu.pipeline_mode<synchronous>, transform_indices = @transform_1, window_bounds = array<i64: 32, 1536>}, {pipeline_mode = #tpu.pipeline_mode<synchronous>, transform_indices = @transform_2, window_bounds = array<i64: 1, 1536>}, {pipeline_mode = #tpu.pipeline_mode<synchronous>, transform_indices = @transform_3, window_bounds = array<i64: 512, 32>}, {pipeline_mode = #tpu.pipeline_mode<synchronous>, transform_indices = @transform_4, window_bounds = array<i64: 1, 32>}, {pipeline_mode = #tpu.pipeline_mode<synchronous>, transform_indices = @transform_5, window_bounds = array<i64: 1, 32>}, {pipeline_mode = #tpu.pipeline_mode<synchronous>, transform_indices = @transform_6, window_bounds = array<i64: 1, 32>}, {pipeline_mode = #tpu.pipeline_mode<synchronous>, transform_indices = @transform_7, window_bounds = array<i64: 32, 128>}, {pipeline_mode = #tpu.pipeline_mode<synchronous>, transform_indices = @transform_8, window_bounds = array<i64: 1, 128>}, {pipeline_mode = #tpu.pipeline_mode<synchronous>, transform_indices = @transform_9, window_bounds = array<i64: 128, 32>}, {pipeline_mode = #tpu.pipeline_mode<synchronous>, transform_indices = @transform_10, window_bounds = array<i64: 1, 32>}, {pipeline_mode = #tpu.pipeline_mode<synchronous>, transform_indices = @transform_11, window_bounds = array<i64: 1, 32>}, {pipeline_mode = #tpu.pipeline_mode<synchronous>, transform_indices = @transform_12, window_bounds = array<i64: 1, 32>}, {transform_indices = @transform_13, window_bounds = array<i64: 1, 8, 32>}]} {
    %c0 = arith.constant 0 : index
    %c0_0 = arith.constant 0 : index
    %c0_1 = arith.constant 0 : index
    %0 = vector.load %arg1[%c0, %c0_0, %c0_1] : memref<1x8x32xbf16, #tpu.memory_space<vmem>>, vector<1x8x32xbf16>
    %1 = vector.shape_cast %0 : vector<1x8x32xbf16> to vector<8x32xbf16>
    %2 = arith.extf %1 : vector<8x32xbf16> to vector<8x32xf32>
    %c0_2 = arith.constant 0 : index
    %c0_3 = arith.constant 0 : index
    %3 = vector.load %arg2[%c0_2, %c0_3] : memref<32x1536xbf16, #tpu.memory_space<vmem>>, vector<32x1536xbf16>
    %c0_4 = arith.constant 0 : index
    %c0_5 = arith.constant 0 : index
    %4 = vector.load %arg3[%c0_4, %c0_5] : memref<1x1536xf32, #tpu.memory_space<vmem>>, vector<1x1536xf32>
    %5 = arith.truncf %2 : vector<8x32xf32> to vector<8x32xbf16>
    %cst = arith.constant dense<0.000000e+00> : vector<8x1536xf32>
    %6 = tpu.matmul %5, %3, %cst {dimension_numbers = #tpu.dot_dimension_numbers<[1], [0], [0], [1], [0, 0, 1, 1], [], []>} : vector<8x32xbf16>, vector<32x1536xbf16>, vector<8x1536xf32> -> vector<8x1536xf32>
    %7 = vector.broadcast %4 : vector<1x1536xf32> to vector<8x1536xf32>
    %8 = arith.addf %6, %7 : vector<8x1536xf32>
    %9 = vector.extract_strided_slice %8 {offsets = [0, 0], sizes = [8, 512], strides = [1, 1]} : vector<8x1536xf32> to vector<8x512xf32>
    %10 = arith.truncf %9 : vector<8x512xf32> to vector<8x512xbf16>
    %11 = vector.extract_strided_slice %8 {offsets = [0, 512], sizes = [8, 512], strides = [1, 1]} : vector<8x1536xf32> to vector<8x512xf32>
    %12 = arith.truncf %11 : vector<8x512xf32> to vector<8x512xbf16>
    %13 = vector.extract_strided_slice %8 {offsets = [0, 1024], sizes = [8, 512], strides = [1, 1]} : vector<8x1536xf32> to vector<8x512xf32>
    %14 = arith.truncf %13 : vector<8x512xf32> to vector<8x512xbf16>
    %15 = vector.extract_strided_slice %10 {offsets = [0, 0], sizes = [8, 128], strides = [1, 1]} : vector<8x512xbf16> to vector<8x128xbf16>
    %16 = vector.extract_strided_slice %12 {offsets = [0, 0], sizes = [8, 128], strides = [1, 1]} : vector<8x512xbf16> to vector<8x128xbf16>
    %cst_6 = arith.constant dense<0.000000e+00> : vector<8x8xf32>
    %17 = tpu.matmul %15, %16, %cst_6 {dimension_numbers = #tpu.dot_dimension_numbers<[1], [1], [0], [0], [0, 0, 1, 0], [], []>} : vector<8x128xbf16>, vector<8x128xbf16>, vector<8x8xf32> -> vector<8x8xf32>
    %cst_7 = arith.constant dense<0xFF800000> : vector<8xf32>
    %18 = vector.multi_reduction <maximumf>, %17, %cst_7 [1] : vector<8x8xf32> to vector<8xf32>
    %19 = vector.shape_cast %18 : vector<8xf32> to vector<8x1xf32>
    %20 = vector.broadcast %19 : vector<8x1xf32> to vector<8x8xf32>
    %21 = arith.subf %17, %20 : vector<8x8xf32>
    %22 = math.exp %21 : vector<8x8xf32>
    %cst_8 = arith.constant dense<0.000000e+00> : vector<8xf32>
    %23 = vector.multi_reduction <add>, %22, %cst_8 [1] : vector<8x8xf32> to vector<8xf32>
    %24 = vector.shape_cast %23 : vector<8xf32> to vector<8x1xf32>
    %25 = tpu.reciprocal %24 {approx = true} : vector<8x1xf32> -> vector<8x1xf32>
    %26 = vector.broadcast %25 : vector<8x1xf32> to vector<8x8xf32>
    %27 = arith.mulf %22, %26 : vector<8x8xf32>
    %28 = arith.truncf %27 : vector<8x8xf32> to vector<8x8xbf16>
    %29 = vector.extract_strided_slice %14 {offsets = [0, 0], sizes = [8, 128], strides = [1, 1]} : vector<8x512xbf16> to vector<8x128xbf16>
    %cst_9 = arith.constant dense<0.000000e+00> : vector<8x128xf32>
    %30 = tpu.matmul %28, %29, %cst_9 {dimension_numbers = #tpu.dot_dimension_numbers<[1], [0], [0], [1], [0, 0, 1, 1], [], []>} : vector<8x8xbf16>, vector<8x128xbf16>, vector<8x128xf32> -> vector<8x128xf32>
    %c0_10 = arith.constant 0 : index
    %c0_11 = arith.constant 0 : index
    %31 = vector.load %arg15[%c0_10, %c0_11] : memref<8x512xf32, #tpu.memory_space<vmem>>, vector<8x128xf32>
    tpu.vector_store %arg15[%c0_10, %c0_11], %30 {strides = array<i32>} : memref<8x512xf32, #tpu.memory_space<vmem>>, vector<8x128xf32>,
    %32 = vector.extract_strided_slice %10 {offsets = [0, 128], sizes = [8, 128], strides = [1, 1]} : vector<8x512xbf16> to vector<8x128xbf16>
    %33 = vector.extract_strided_slice %12 {offsets = [0, 128], sizes = [8, 128], strides = [1, 1]} : vector<8x512xbf16> to vector<8x128xbf16>
    %cst_12 = arith.constant dense<0.000000e+00> : vector<8x8xf32>
    %34 = tpu.matmul %32, %33, %cst_12 {dimension_numbers = #tpu.dot_dimension_numbers<[1], [1], [0], [0], [0, 0, 1, 0], [], []>} : vector<8x128xbf16>, vector<8x128xbf16>, vector<8x8xf32> -> vector<8x8xf32>
    %cst_13 = arith.constant dense<0xFF800000> : vector<8xf32>
    %35 = vector.multi_reduction <maximumf>, %34, %cst_13 [1] : vector<8x8xf32> to vector<8xf32>
    %36 = vector.shape_cast %35 : vector<8xf32> to vector<8x1xf32>
    %37 = vector.broadcast %36 : vector<8x1xf32> to vector<8x8xf32>
    %38 = arith.subf %34, %37 : vector<8x8xf32>
    %39 = math.exp %38 : vector<8x8xf32>
    %cst_14 = arith.constant dense<0.000000e+00> : vector<8xf32>
    %40 = vector.multi_reduction <add>, %39, %cst_14 [1] : vector<8x8xf32> to vector<8xf32>
    %41 = vector.shape_cast %40 : vector<8xf32> to vector<8x1xf32>
    %42 = tpu.reciprocal %41 {approx = true} : vector<8x1xf32> -> vector<8x1xf32>
    %43 = vector.broadcast %42 : vector<8x1xf32> to vector<8x8xf32>
    %44 = arith.mulf %39, %43 : vector<8x8xf32>
    %45 = arith.truncf %44 : vector<8x8xf32> to vector<8x8xbf16>
    %46 = vector.extract_strided_slice %14 {offsets = [0, 128], sizes = [8, 128], strides = [1, 1]} : vector<8x512xbf16> to vector<8x128xbf16>
    %cst_15 = arith.constant dense<0.000000e+00> : vector<8x128xf32>
    %47 = tpu.matmul %45, %46, %cst_15 {dimension_numbers = #tpu.dot_dimension_numbers<[1], [0], [0], [1], [0, 0, 1, 1], [], []>} : vector<8x8xbf16>, vector<8x128xbf16>, vector<8x128xf32> -> vector<8x128xf32>
    %c0_16 = arith.constant 0 : index
    %c128 = arith.constant 128 : index
    %48 = vector.load %arg15[%c0_16, %c128] : memref<8x512xf32, #tpu.memory_space<vmem>>, vector<8x128xf32>
    tpu.vector_store %arg15[%c0_16, %c128], %47 {strides = array<i32>} : memref<8x512xf32, #tpu.memory_space<vmem>>, vector<8x128xf32>,
    %49 = vector.extract_strided_slice %10 {offsets = [0, 256], sizes = [8, 128], strides = [1, 1]} : vector<8x512xbf16> to vector<8x128xbf16>
    %50 = vector.extract_strided_slice %12 {offsets = [0, 256], sizes = [8, 128], strides = [1, 1]} : vector<8x512xbf16> to vector<8x128xbf16>
    %cst_17 = arith.constant dense<0.000000e+00> : vector<8x8xf32>
    %51 = tpu.matmul %49, %50, %cst_17 {dimension_numbers = #tpu.dot_dimension_numbers<[1], [1], [0], [0], [0, 0, 1, 0], [], []>} : vector<8x128xbf16>, vector<8x128xbf16>, vector<8x8xf32> -> vector<8x8xf32>
    %cst_18 = arith.constant dense<0xFF800000> : vector<8xf32>
    %52 = vector.multi_reduction <maximumf>, %51, %cst_18 [1] : vector<8x8xf32> to vector<8xf32>
    %53 = vector.shape_cast %52 : vector<8xf32> to vector<8x1xf32>
    %54 = vector.broadcast %53 : vector<8x1xf32> to vector<8x8xf32>
    %55 = arith.subf %51, %54 : vector<8x8xf32>
    %56 = math.exp %55 : vector<8x8xf32>
    %cst_19 = arith.constant dense<0.000000e+00> : vector<8xf32>
    %57 = vector.multi_reduction <add>, %56, %cst_19 [1] : vector<8x8xf32> to vector<8xf32>
    %58 = vector.shape_cast %57 : vector<8xf32> to vector<8x1xf32>
    %59 = tpu.reciprocal %58 {approx = true} : vector<8x1xf32> -> vector<8x1xf32>
    %60 = vector.broadcast %59 : vector<8x1xf32> to vector<8x8xf32>
    %61 = arith.mulf %56, %60 : vector<8x8xf32>
    %62 = arith.truncf %61 : vector<8x8xf32> to vector<8x8xbf16>
    %63 = vector.extract_strided_slice %14 {offsets = [0, 256], sizes = [8, 128], strides = [1, 1]} : vector<8x512xbf16> to vector<8x128xbf16>
    %cst_20 = arith.constant dense<0.000000e+00> : vector<8x128xf32>
    %64 = tpu.matmul %62, %63, %cst_20 {dimension_numbers = #tpu.dot_dimension_numbers<[1], [0], [0], [1], [0, 0, 1, 1], [], []>} : vector<8x8xbf16>, vector<8x128xbf16>, vector<8x128xf32> -> vector<8x128xf32>
    %c0_21 = arith.constant 0 : index
    %c256 = arith.constant 256 : index
    %65 = vector.load %arg15[%c0_21, %c256] : memref<8x512xf32, #tpu.memory_space<vmem>>, vector<8x128xf32>
    tpu.vector_store %arg15[%c0_21, %c256], %64 {strides = array<i32>} : memref<8x512xf32, #tpu.memory_space<vmem>>, vector<8x128xf32>,
    %66 = vector.extract_strided_slice %10 {offsets = [0, 384], sizes = [8, 128], strides = [1, 1]} : vector<8x512xbf16> to vector<8x128xbf16>
    %67 = vector.extract_strided_slice %12 {offsets = [0, 384], sizes = [8, 128], strides = [1, 1]} : vector<8x512xbf16> to vector<8x128xbf16>
    %cst_22 = arith.constant dense<0.000000e+00> : vector<8x8xf32>
    %68 = tpu.matmul %66, %67, %cst_22 {dimension_numbers = #tpu.dot_dimension_numbers<[1], [1], [0], [0], [0, 0, 1, 0], [], []>} : vector<8x128xbf16>, vector<8x128xbf16>, vector<8x8xf32> -> vector<8x8xf32>
    %cst_23 = arith.constant dense<0xFF800000> : vector<8xf32>
    %69 = vector.multi_reduction <maximumf>, %68, %cst_23 [1] : vector<8x8xf32> to vector<8xf32>
    %70 = vector.shape_cast %69 : vector<8xf32> to vector<8x1xf32>
    %71 = vector.broadcast %70 : vector<8x1xf32> to vector<8x8xf32>
    %72 = arith.subf %68, %71 : vector<8x8xf32>
    %73 = math.exp %72 : vector<8x8xf32>
    %cst_24 = arith.constant dense<0.000000e+00> : vector<8xf32>
    %74 = vector.multi_reduction <add>, %73, %cst_24 [1] : vector<8x8xf32> to vector<8xf32>
    %75 = vector.shape_cast %74 : vector<8xf32> to vector<8x1xf32>
    %76 = tpu.reciprocal %75 {approx = true} : vector<8x1xf32> -> vector<8x1xf32>
    %77 = vector.broadcast %76 : vector<8x1xf32> to vector<8x8xf32>
    %78 = arith.mulf %73, %77 : vector<8x8xf32>
    %79 = arith.truncf %78 : vector<8x8xf32> to vector<8x8xbf16>
    %80 = vector.extract_strided_slice %14 {offsets = [0, 384], sizes = [8, 128], strides = [1, 1]} : vector<8x512xbf16> to vector<8x128xbf16>
    %cst_25 = arith.constant dense<0.000000e+00> : vector<8x128xf32>
    %81 = tpu.matmul %79, %80, %cst_25 {dimension_numbers = #tpu.dot_dimension_numbers<[1], [0], [0], [1], [0, 0, 1, 1], [], []>} : vector<8x8xbf16>, vector<8x128xbf16>, vector<8x128xf32> -> vector<8x128xf32>
    %c0_26 = arith.constant 0 : index
    %c384 = arith.constant 384 : index
    %82 = vector.load %arg15[%c0_26, %c384] : memref<8x512xf32, #tpu.memory_space<vmem>>, vector<8x128xf32>
    tpu.vector_store %arg15[%c0_26, %c384], %81 {strides = array<i32>} : memref<8x512xf32, #tpu.memory_space<vmem>>, vector<8x128xf32>,
    %c0_27 = arith.constant 0 : index
    %c0_28 = arith.constant 0 : index
    %83 = vector.load %arg15[%c0_27, %c0_28] : memref<8x512xf32, #tpu.memory_space<vmem>>, vector<8x512xf32>
    %c0_29 = arith.constant 0 : index
    %c0_30 = arith.constant 0 : index
    %84 = vector.load %arg4[%c0_29, %c0_30] : memref<512x32xbf16, #tpu.memory_space<vmem>>, vector<512x32xbf16>
    %c0_31 = arith.constant 0 : index
    %c0_32 = arith.constant 0 : index
    %85 = vector.load %arg5[%c0_31, %c0_32] : memref<1x32xf32, #tpu.memory_space<vmem>>, vector<1x32xf32>
    %86 = arith.truncf %83 : vector<8x512xf32> to vector<8x512xbf16>
    %cst_33 = arith.constant dense<0.000000e+00> : vector<8x32xf32>
    %87 = tpu.matmul %86, %84, %cst_33 {dimension_numbers = #tpu.dot_dimension_numbers<[1], [0], [0], [1], [0, 0, 1, 1], [], []>} : vector<8x512xbf16>, vector<512x32xbf16>, vector<8x32xf32> -> vector<8x32xf32>
    %88 = vector.broadcast %85 : vector<1x32xf32> to vector<8x32xf32>
    %89 = arith.addf %87, %88 : vector<8x32xf32>
    %90 = arith.addf %2, %89 : vector<8x32xf32>
    %c0_34 = arith.constant 0 : index
    %c0_35 = arith.constant 0 : index
    %91 = vector.load %arg6[%c0_34, %c0_35] : memref<1x32xf32, #tpu.memory_space<vmem>>, vector<1x32xf32>
    %c0_36 = arith.constant 0 : index
    %c0_37 = arith.constant 0 : index
    %92 = vector.load %arg7[%c0_36, %c0_37] : memref<1x32xf32, #tpu.memory_space<vmem>>, vector<1x32xf32>
    %cst_38 = arith.constant dense<0.000000e+00> : vector<8xf32>
    %93 = vector.multi_reduction <add>, %90, %cst_38 [1] : vector<8x32xf32> to vector<8xf32>
    %94 = vector.shape_cast %93 : vector<8xf32> to vector<8x1xf32>
    %cst_39 = arith.constant 3.200000e+01 : f32
    %95 = vector.broadcast %cst_39 : f32 to vector<8x1xf32>
    %96 = arith.divf %94, %95 : vector<8x1xf32>
    %97 = vector.broadcast %96 : vector<8x1xf32> to vector<8x32xf32>
    %98 = arith.subf %90, %97 : vector<8x32xf32>
    %99 = arith.mulf %98, %98 : vector<8x32xf32>
    %cst_40 = arith.constant dense<0.000000e+00> : vector<8xf32>
    %100 = vector.multi_reduction <add>, %99, %cst_40 [1] : vector<8x32xf32> to vector<8xf32>
    %101 = vector.shape_cast %100 : vector<8xf32> to vector<8x1xf32>
    %cst_41 = arith.constant 3.200000e+01 : f32
    %102 = vector.broadcast %cst_41 : f32 to vector<8x1xf32>
    %103 = arith.divf %101, %102 : vector<8x1xf32>
    %cst_42 = arith.constant 9.99999974E-6 : f32
    %104 = vector.broadcast %cst_42 : f32 to vector<8x1xf32>
    %105 = arith.addf %103, %104 : vector<8x1xf32>
    %106 = math.rsqrt %105 : vector<8x1xf32>
    %107 = vector.broadcast %106 : vector<8x1xf32> to vector<8x32xf32>
    %108 = arith.mulf %98, %107 : vector<8x32xf32>
    %109 = vector.broadcast %91 : vector<1x32xf32> to vector<8x32xf32>
    %110 = arith.mulf %108, %109 : vector<8x32xf32>
    %111 = vector.broadcast %92 : vector<1x32xf32> to vector<8x32xf32>
    %112 = arith.addf %110, %111 : vector<8x32xf32>
    %c0_43 = arith.constant 0 : index
    %c0_44 = arith.constant 0 : index
    %113 = vector.load %arg8[%c0_43, %c0_44] : memref<32x128xbf16, #tpu.memory_space<vmem>>, vector<32x128xbf16>
    %c0_45 = arith.constant 0 : index
    %c0_46 = arith.constant 0 : index
    %114 = vector.load %arg9[%c0_45, %c0_46] : memref<1x128xf32, #tpu.memory_space<vmem>>, vector<1x128xf32>
    %115 = arith.truncf %112 : vector<8x32xf32> to vector<8x32xbf16>
    %cst_47 = arith.constant dense<0.000000e+00> : vector<8x128xf32>
    %116 = tpu.matmul %115, %113, %cst_47 {dimension_numbers = #tpu.dot_dimension_numbers<[1], [0], [0], [1], [0, 0, 1, 1], [], []>} : vector<8x32xbf16>, vector<32x128xbf16>, vector<8x128xf32> -> vector<8x128xf32>
    %117 = vector.broadcast %114 : vector<1x128xf32> to vector<8x128xf32>
    %118 = arith.addf %116, %117 : vector<8x128xf32>
    %cst_48 = arith.constant 0.000000e+00 : f32
    %119 = vector.broadcast %cst_48 : f32 to vector<8x128xf32>
    %120 = arith.maximumf %118, %119 : vector<8x128xf32>
    %c0_49 = arith.constant 0 : index
    %c0_50 = arith.constant 0 : index
    %121 = vector.load %arg10[%c0_49, %c0_50] : memref<128x32xbf16, #tpu.memory_space<vmem>>, vector<128x32xbf16>
    %c0_51 = arith.constant 0 : index
    %c0_52 = arith.constant 0 : index
    %122 = vector.load %arg11[%c0_51, %c0_52] : memref<1x32xf32, #tpu.memory_space<vmem>>, vector<1x32xf32>
    %123 = arith.truncf %120 : vector<8x128xf32> to vector<8x128xbf16>
    %cst_53 = arith.constant dense<0.000000e+00> : vector<8x32xf32>
    %124 = tpu.matmul %123, %121, %cst_53 {dimension_numbers = #tpu.dot_dimension_numbers<[1], [0], [0], [1], [0, 0, 1, 1], [], []>} : vector<8x128xbf16>, vector<128x32xbf16>, vector<8x32xf32> -> vector<8x32xf32>
    %125 = vector.broadcast %122 : vector<1x32xf32> to vector<8x32xf32>
    %126 = arith.addf %124, %125 : vector<8x32xf32>
    %127 = arith.addf %112, %126 : vector<8x32xf32>
    %c0_54 = arith.constant 0 : index
    %c0_55 = arith.constant 0 : index
    %128 = vector.load %arg12[%c0_54, %c0_55] : memref<1x32xf32, #tpu.memory_space<vmem>>, vector<1x32xf32>
    %c0_56 = arith.constant 0 : index
    %c0_57 = arith.constant 0 : index
    %129 = vector.load %arg13[%c0_56, %c0_57] : memref<1x32xf32, #tpu.memory_space<vmem>>, vector<1x32xf32>
    %cst_58 = arith.constant dense<0.000000e+00> : vector<8xf32>
    %130 = vector.multi_reduction <add>, %127, %cst_58 [1] : vector<8x32xf32> to vector<8xf32>
    %131 = vector.shape_cast %130 : vector<8xf32> to vector<8x1xf32>
    %cst_59 = arith.constant 3.200000e+01 : f32
    %132 = vector.broadcast %cst_59 : f32 to vector<8x1xf32>
    %133 = arith.divf %131, %132 : vector<8x1xf32>
    %134 = vector.broadcast %133 : vector<8x1xf32> to vector<8x32xf32>
    %135 = arith.subf %127, %134 : vector<8x32xf32>
    %136 = arith.mulf %135, %135 : vector<8x32xf32>
    %cst_60 = arith.constant dense<0.000000e+00> : vector<8xf32>
    %137 = vector.multi_reduction <add>, %136, %cst_60 [1] : vector<8x32xf32> to vector<8xf32>
    %138 = vector.shape_cast %137 : vector<8xf32> to vector<8x1xf32>
    %cst_61 = arith.constant 3.200000e+01 : f32
    %139 = vector.broadcast %cst_61 : f32 to vector<8x1xf32>
    %140 = arith.divf %138, %139 : vector<8x1xf32>
    %cst_62 = arith.constant 9.99999974E-6 : f32
    %141 = vector.broadcast %cst_62 : f32 to vector<8x1xf32>
    %142 = arith.addf %140, %141 : vector<8x1xf32>
    %143 = math.rsqrt %142 : vector<8x1xf32>
    %144 = vector.broadcast %143 : vector<8x1xf32> to vector<8x32xf32>
    %145 = arith.mulf %135, %144 : vector<8x32xf32>
    %146 = vector.broadcast %128 : vector<1x32xf32> to vector<8x32xf32>
    %147 = arith.mulf %145, %146 : vector<8x32xf32>
    %148 = vector.broadcast %129 : vector<1x32xf32> to vector<8x32xf32>
    %149 = arith.addf %147, %148 : vector<8x32xf32>
    %150 = vector.shape_cast %149 : vector<8x32xf32> to vector<1x8x32xf32>
    %151 = arith.truncf %150 : vector<1x8x32xf32> to vector<1x8x32xbf16>
    %c0_63 = arith.constant 0 : index
    %c0_64 = arith.constant 0 : index
    %c0_65 = arith.constant 0 : index
    %152 = vector.load %arg14[%c0_63, %c0_64, %c0_65] : memref<1x8x32xbf16, #tpu.memory_space<vmem>>, vector<1x8x32xbf16>
    tpu.vector_store %arg14[%c0_63, %c0_64, %c0_65], %151 {strides = array<i32>} : memref<1x8x32xbf16, #tpu.memory_space<vmem>>, vector<1x8x32xbf16>,
    return
  }
  func.func @transform_0(%arg0: i32) -> (i32, i32, i32) {
    %c0_i32 = arith.constant 0 : i32
    %c0_i32_0 = arith.constant 0 : i32
    %c0_i32_1 = arith.constant 0 : i32
    return %arg0, %c0_i32, %c0_i32_0 : i32, i32, i32
  }
  func.func @transform_1(%arg0: i32) -> (i32, i32) {
    %c0_i32 = arith.constant 0 : i32
    %c0_i32_0 = arith.constant 0 : i32
    %c0_i32_1 = arith.constant 0 : i32
    return %c0_i32, %c0_i32_0 : i32, i32
  }
  func.func @transform_2(%arg0: i32) -> (i32, i32) {
    %c0_i32 = arith.constant 0 : i32
    %c0_i32_0 = arith.constant 0 : i32
    %c0_i32_1 = arith.constant 0 : i32
    return %c0_i32, %c0_i32_0 : i32, i32
  }
  func.func @transform_3(%arg0: i32) -> (i32, i32) {
    %c0_i32 = arith.constant 0 : i32
    %c0_i32_0 = arith.constant 0 : i32
    %c0_i32_1 = arith.constant 0 : i32
    return %c0_i32, %c0_i32_0 : i32, i32
  }
  func.func @transform_4(%arg0: i32) -> (i32, i32) {
    %c0_i32 = arith.constant 0 : i32
    %c0_i32_0 = arith.constant 0 : i32
    %c0_i32_1 = arith.constant 0 : i32
    return %c0_i32, %c0_i32_0 : i32, i32
  }
  func.func @transform_5(%arg0: i32) -> (i32, i32) {
    %c0_i32 = arith.constant 0 : i32
    %c0_i32_0 = arith.constant 0 : i32
    %c0_i32_1 = arith.constant 0 : i32
    return %c0_i32, %c0_i32_0 : i32, i32
  }
  func.func @transform_6(%arg0: i32) -> (i32, i32) {
    %c0_i32 = arith.constant 0 : i32
    %c0_i32_0 = arith.constant 0 : i32
    %c0_i32_1 = arith.constant 0 : i32
    return %c0_i32, %c0_i32_0 : i32, i32
  }
  func.func @transform_7(%arg0: i32) -> (i32, i32) {
    %c0_i32 = arith.constant 0 : i32
    %c0_i32_0 = arith.constant 0 : i32
    %c0_i32_1 = arith.constant 0 : i32
    return %c0_i32, %c0_i32_0 : i32, i32
  }
  func.func @transform_8(%arg0: i32) -> (i32, i32) {
    %c0_i32 = arith.constant 0 : i32
    %c0_i32_0 = arith.constant 0 : i32
    %c0_i32_1 = arith.constant 0 : i32
    return %c0_i32, %c0_i32_0 : i32, i32
  }
  func.func @transform_9(%arg0: i32) -> (i32, i32) {
    %c0_i32 = arith.constant 0 : i32
    %c0_i32_0 = arith.constant 0 : i32
    %c0_i32_1 = arith.constant 0 : i32
    return %c0_i32, %c0_i32_0 : i32, i32
  }
  func.func @transform_10(%arg0: i32) -> (i32, i32) {
    %c0_i32 = arith.constant 0 : i32
    %c0_i32_0 = arith.constant 0 : i32
    %c0_i32_1 = arith.constant 0 : i32
    return %c0_i32, %c0_i32_0 : i32, i32
  }
  func.func @transform_11(%arg0: i32) -> (i32, i32) {
    %c0_i32 = arith.constant 0 : i32
    %c0_i32_0 = arith.constant 0 : i32
    %c0_i32_1 = arith.constant 0 : i32
    return %c0_i32, %c0_i32_0 : i32, i32
  }
  func.func @transform_12(%arg0: i32) -> (i32, i32) {
    %c0_i32 = arith.constant 0 : i32
    %c0_i32_0 = arith.constant 0 : i32
    %c0_i32_1 = arith.constant 0 : i32
    return %c0_i32, %c0_i32_0 : i32, i32
  }
  func.func @transform_13(%arg0: i32) -> (i32, i32, i32) {
    %c0_i32 = arith.constant 0 : i32
    %c0_i32_0 = arith.constant 0 : i32
    %c0_i32_1 = arith.constant 0 : i32
    return %arg0, %c0_i32, %c0_i32_0 : i32, i32, i32
  }
}

module attributes {stable_mosaic.version = 11 : i64} {
  func.func @_decoder_stack_kernel(%arg0: i32, %arg1: memref<1x8x32xbf16, #tpu.memory_space<vmem>>, %arg2: memref<32x32xbf16, #tpu.memory_space<vmem>>, %arg3: memref<1x32xf32, #tpu.memory_space<vmem>>, %arg4: memref<32x32xbf16, #tpu.memory_space<vmem>>, %arg5: memref<1x32xf32, #tpu.memory_space<vmem>>, %arg6: memref<1x32xf32, #tpu.memory_space<vmem>>, %arg7: memref<1x32xf32, #tpu.memory_space<vmem>>, %arg8: memref<32x512xbf16, #tpu.memory_space<vmem>>, %arg9: memref<1x512xf32, #tpu.memory_space<vmem>>, %arg10: memref<32x1024xbf16, #tpu.memory_space<vmem>>, %arg11: memref<1x1024xf32, #tpu.memory_space<vmem>>, %arg12: memref<512x32xbf16, #tpu.memory_space<vmem>>, %arg13: memref<1x32xf32, #tpu.memory_space<vmem>>, %arg14: memref<1x32xf32, #tpu.memory_space<vmem>>, %arg15: memref<1x32xf32, #tpu.memory_space<vmem>>, %arg16: memref<32x128xbf16, #tpu.memory_space<vmem>>, %arg17: memref<1x128xf32, #tpu.memory_space<vmem>>, %arg18: memref<128x32xbf16, #tpu.memory_space<vmem>>, %arg19: memref<1x32xf32, #tpu.memory_space<vmem>>, %arg20: memref<1x32xf32, #tpu.memory_space<vmem>>, %arg21: memref<1x32xf32, #tpu.memory_space<vmem>>, %arg22: memref<32x32xbf16, #tpu.memory_space<vmem>>, %arg23: memref<1x32xf32, #tpu.memory_space<vmem>>, %arg24: memref<32x32xbf16, #tpu.memory_space<vmem>>, %arg25: memref<1x32xf32, #tpu.memory_space<vmem>>, %arg26: memref<1x32xf32, #tpu.memory_space<vmem>>, %arg27: memref<1x32xf32, #tpu.memory_space<vmem>>, %arg28: memref<32x512xbf16, #tpu.memory_space<vmem>>, %arg29: memref<1x512xf32, #tpu.memory_space<vmem>>, %arg30: memref<32x1024xbf16, #tpu.memory_space<vmem>>, %arg31: memref<1x1024xf32, #tpu.memory_space<vmem>>, %arg32: memref<512x32xbf16, #tpu.memory_space<vmem>>, %arg33: memref<1x32xf32, #tpu.memory_space<vmem>>, %arg34: memref<1x32xf32, #tpu.memory_space<vmem>>, %arg35: memref<1x32xf32, #tpu.memory_space<vmem>>, %arg36: memref<32x128xbf16, #tpu.memory_space<vmem>>, %arg37: memref<1x128xf32, #tpu.memory_space<vmem>>, %arg38: memref<128x32xbf16, #tpu.memory_space<vmem>>, %arg39: memref<1x32xf32, #tpu.memory_space<vmem>>, %arg40: memref<1x32xf32, #tpu.memory_space<vmem>>, %arg41: memref<1x32xf32, #tpu.memory_space<vmem>>, %arg42: memref<1x32xf32, #tpu.memory_space<vmem>>, %arg43: memref<1x32xf32, #tpu.memory_space<vmem>>, %arg44: memref<32x1xbf16, #tpu.memory_space<vmem>>, %arg45: memref<1x1xf32, #tpu.memory_space<vmem>>, %arg46: memref<1x1x1xf32, #tpu.memory_space<vmem>>, %arg47: memref<1x512xf32, #tpu.memory_space<vmem>>) attributes {dimension_semantics = [#tpu.dimension_semantics<parallel>], iteration_bounds = array<i64: 2>, scalar_prefetch = 0 : i64, scratch_operands = 1 : i64, tpu.core_type = #tpu.core_type<tc>, window_params = [{transform_indices = @transform_0, window_bounds = array<i64: 1, 8, 32>}, {pipeline_mode = #tpu.pipeline_mode<synchronous>, transform_indices = @transform_1, window_bounds = array<i64: 32, 32>}, {pipeline_mode = #tpu.pipeline_mode<synchronous>, transform_indices = @transform_2, window_bounds = array<i64: 1, 32>}, {pipeline_mode = #tpu.pipeline_mode<synchronous>, transform_indices = @transform_3, window_bounds = array<i64: 32, 32>}, {pipeline_mode = #tpu.pipeline_mode<synchronous>, transform_indices = @transform_4, window_bounds = array<i64: 1, 32>}, {pipeline_mode = #tpu.pipeline_mode<synchronous>, transform_indices = @transform_5, window_bounds = array<i64: 1, 32>}, {pipeline_mode = #tpu.pipeline_mode<synchronous>, transform_indices = @transform_6, window_bounds = array<i64: 1, 32>}, {pipeline_mode = #tpu.pipeline_mode<synchronous>, transform_indices = @transform_7, window_bounds = array<i64: 32, 512>}, {pipeline_mode = #tpu.pipeline_mode<synchronous>, transform_indices = @transform_8, window_bounds = array<i64: 1, 512>}, {pipeline_mode = #tpu.pipeline_mode<synchronous>, transform_indices = @transform_9, window_bounds = array<i64: 32, 1024>}, {pipeline_mode = #tpu.pipeline_mode<synchronous>, transform_indices = @transform_10, window_bounds = array<i64: 1, 1024>}, {pipeline_mode = #tpu.pipeline_mode<synchronous>, transform_indices = @transform_11, window_bounds = array<i64: 512, 32>}, {pipeline_mode = #tpu.pipeline_mode<synchronous>, transform_indices = @transform_12, window_bounds = array<i64: 1, 32>}, {pipeline_mode = #tpu.pipeline_mode<synchronous>, transform_indices = @transform_13, window_bounds = array<i64: 1, 32>}, {pipeline_mode = #tpu.pipeline_mode<synchronous>, transform_indices = @transform_14, window_bounds = array<i64: 1, 32>}, {pipeline_mode = #tpu.pipeline_mode<synchronous>, transform_indices = @transform_15, window_bounds = array<i64: 32, 128>}, {pipeline_mode = #tpu.pipeline_mode<synchronous>, transform_indices = @transform_16, window_bounds = array<i64: 1, 128>}, {pipeline_mode = #tpu.pipeline_mode<synchronous>, transform_indices = @transform_17, window_bounds = array<i64: 128, 32>}, {pipeline_mode = #tpu.pipeline_mode<synchronous>, transform_indices = @transform_18, window_bounds = array<i64: 1, 32>}, {pipeline_mode = #tpu.pipeline_mode<synchronous>, transform_indices = @transform_19, window_bounds = array<i64: 1, 32>}, {pipeline_mode = #tpu.pipeline_mode<synchronous>, transform_indices = @transform_20, window_bounds = array<i64: 1, 32>}, {pipeline_mode = #tpu.pipeline_mode<synchronous>, transform_indices = @transform_21, window_bounds = array<i64: 32, 32>}, {pipeline_mode = #tpu.pipeline_mode<synchronous>, transform_indices = @transform_22, window_bounds = array<i64: 1, 32>}, {pipeline_mode = #tpu.pipeline_mode<synchronous>, transform_indices = @transform_23, window_bounds = array<i64: 32, 32>}, {pipeline_mode = #tpu.pipeline_mode<synchronous>, transform_indices = @transform_24, window_bounds = array<i64: 1, 32>}, {pipeline_mode = #tpu.pipeline_mode<synchronous>, transform_indices = @transform_25, window_bounds = array<i64: 1, 32>}, {pipeline_mode = #tpu.pipeline_mode<synchronous>, transform_indices = @transform_26, window_bounds = array<i64: 1, 32>}, {pipeline_mode = #tpu.pipeline_mode<synchronous>, transform_indices = @transform_27, window_bounds = array<i64: 32, 512>}, {pipeline_mode = #tpu.pipeline_mode<synchronous>, transform_indices = @transform_28, window_bounds = array<i64: 1, 512>}, {pipeline_mode = #tpu.pipeline_mode<synchronous>, transform_indices = @transform_29, window_bounds = array<i64: 32, 1024>}, {pipeline_mode = #tpu.pipeline_mode<synchronous>, transform_indices = @transform_30, window_bounds = array<i64: 1, 1024>}, {pipeline_mode = #tpu.pipeline_mode<synchronous>, transform_indices = @transform_31, window_bounds = array<i64: 512, 32>}, {pipeline_mode = #tpu.pipeline_mode<synchronous>, transform_indices = @transform_32, window_bounds = array<i64: 1, 32>}, {pipeline_mode = #tpu.pipeline_mode<synchronous>, transform_indices = @transform_33, window_bounds = array<i64: 1, 32>}, {pipeline_mode = #tpu.pipeline_mode<synchronous>, transform_indices = @transform_34, window_bounds = array<i64: 1, 32>}, {pipeline_mode = #tpu.pipeline_mode<synchronous>, transform_indices = @transform_35, window_bounds = array<i64: 32, 128>}, {pipeline_mode = #tpu.pipeline_mode<synchronous>, transform_indices = @transform_36, window_bounds = array<i64: 1, 128>}, {pipeline_mode = #tpu.pipeline_mode<synchronous>, transform_indices = @transform_37, window_bounds = array<i64: 128, 32>}, {pipeline_mode = #tpu.pipeline_mode<synchronous>, transform_indices = @transform_38, window_bounds = array<i64: 1, 32>}, {pipeline_mode = #tpu.pipeline_mode<synchronous>, transform_indices = @transform_39, window_bounds = array<i64: 1, 32>}, {pipeline_mode = #tpu.pipeline_mode<synchronous>, transform_indices = @transform_40, window_bounds = array<i64: 1, 32>}, {pipeline_mode = #tpu.pipeline_mode<synchronous>, transform_indices = @transform_41, window_bounds = array<i64: 1, 32>}, {pipeline_mode = #tpu.pipeline_mode<synchronous>, transform_indices = @transform_42, window_bounds = array<i64: 1, 32>}, {pipeline_mode = #tpu.pipeline_mode<synchronous>, transform_indices = @transform_43, window_bounds = array<i64: 32, 1>}, {pipeline_mode = #tpu.pipeline_mode<synchronous>, transform_indices = @transform_44, window_bounds = array<i64: 1, 1>}, {transform_indices = @transform_45, window_bounds = array<i64: 1, 1, 1>}]} {
    %c0 = arith.constant 0 : index
    %c0_0 = arith.constant 0 : index
    %c0_1 = arith.constant 0 : index
    %0 = vector.load %arg1[%c0, %c0_0, %c0_1] : memref<1x8x32xbf16, #tpu.memory_space<vmem>>, vector<1x8x32xbf16>
    %1 = vector.shape_cast %0 : vector<1x8x32xbf16> to vector<8x32xbf16>
    %cst = arith.constant 0.000000e+00 : f32
    %2 = vector.broadcast %cst : f32 to vector<1x32xf32>
    %c0_2 = arith.constant 0 : index
    %c0_3 = arith.constant 0 : index
    %3 = vector.load %arg2[%c0_2, %c0_3] : memref<32x32xbf16, #tpu.memory_space<vmem>>, vector<32x32xbf16>
    %c0_4 = arith.constant 0 : index
    %c0_5 = arith.constant 0 : index
    %4 = vector.load %arg3[%c0_4, %c0_5] : memref<1x32xf32, #tpu.memory_space<vmem>>, vector<1x32xf32>
    %5 = arith.truncf %2 : vector<1x32xf32> to vector<1x32xbf16>
    %cst_6 = arith.constant dense<0.000000e+00> : vector<1x32xf32>
    %6 = tpu.matmul %5, %3, %cst_6 {dimension_numbers = #tpu.dot_dimension_numbers<[1], [0], [0], [1], [0, 0, 1, 1], [], []>} : vector<1x32xbf16>, vector<32x32xbf16>, vector<1x32xf32> -> vector<1x32xf32>
    %7 = arith.addf %6, %4 : vector<1x32xf32>
    %c0_7 = arith.constant 0 : index
    %c0_8 = arith.constant 0 : index
    %8 = vector.load %arg4[%c0_7, %c0_8] : memref<32x32xbf16, #tpu.memory_space<vmem>>, vector<32x32xbf16>
    %c0_9 = arith.constant 0 : index
    %c0_10 = arith.constant 0 : index
    %9 = vector.load %arg5[%c0_9, %c0_10] : memref<1x32xf32, #tpu.memory_space<vmem>>, vector<1x32xf32>
    %10 = arith.truncf %7 : vector<1x32xf32> to vector<1x32xbf16>
    %cst_11 = arith.constant dense<0.000000e+00> : vector<1x32xf32>
    %11 = tpu.matmul %10, %8, %cst_11 {dimension_numbers = #tpu.dot_dimension_numbers<[1], [0], [0], [1], [0, 0, 1, 1], [], []>} : vector<1x32xbf16>, vector<32x32xbf16>, vector<1x32xf32> -> vector<1x32xf32>
    %12 = arith.addf %11, %9 : vector<1x32xf32>
    %13 = arith.addf %2, %12 : vector<1x32xf32>
    %c0_12 = arith.constant 0 : index
    %c0_13 = arith.constant 0 : index
    %14 = vector.load %arg6[%c0_12, %c0_13] : memref<1x32xf32, #tpu.memory_space<vmem>>, vector<1x32xf32>
    %c0_14 = arith.constant 0 : index
    %c0_15 = arith.constant 0 : index
    %15 = vector.load %arg7[%c0_14, %c0_15] : memref<1x32xf32, #tpu.memory_space<vmem>>, vector<1x32xf32>
    %cst_16 = arith.constant dense<0.000000e+00> : vector<1xf32>
    %16 = vector.multi_reduction <add>, %13, %cst_16 [1] : vector<1x32xf32> to vector<1xf32>
    %17 = vector.shape_cast %16 : vector<1xf32> to vector<1x1xf32>
    %cst_17 = arith.constant 3.200000e+01 : f32
    %18 = vector.broadcast %cst_17 : f32 to vector<1x1xf32>
    %19 = arith.divf %17, %18 : vector<1x1xf32>
    %20 = vector.broadcast %19 : vector<1x1xf32> to vector<1x32xf32>
    %21 = arith.subf %13, %20 : vector<1x32xf32>
    %22 = arith.mulf %21, %21 : vector<1x32xf32>
    %cst_18 = arith.constant dense<0.000000e+00> : vector<1xf32>
    %23 = vector.multi_reduction <add>, %22, %cst_18 [1] : vector<1x32xf32> to vector<1xf32>
    %24 = vector.shape_cast %23 : vector<1xf32> to vector<1x1xf32>
    %cst_19 = arith.constant 3.200000e+01 : f32
    %25 = vector.broadcast %cst_19 : f32 to vector<1x1xf32>
    %26 = arith.divf %24, %25 : vector<1x1xf32>
    %cst_20 = arith.constant 9.99999974E-6 : f32
    %27 = vector.broadcast %cst_20 : f32 to vector<1x1xf32>
    %28 = arith.addf %26, %27 : vector<1x1xf32>
    %29 = math.rsqrt %28 : vector<1x1xf32>
    %30 = vector.broadcast %29 : vector<1x1xf32> to vector<1x32xf32>
    %31 = arith.mulf %21, %30 : vector<1x32xf32>
    %32 = arith.mulf %31, %14 : vector<1x32xf32>
    %33 = arith.addf %32, %15 : vector<1x32xf32>
    %c0_21 = arith.constant 0 : index
    %c0_22 = arith.constant 0 : index
    %34 = vector.load %arg8[%c0_21, %c0_22] : memref<32x512xbf16, #tpu.memory_space<vmem>>, vector<32x512xbf16>
    %c0_23 = arith.constant 0 : index
    %c0_24 = arith.constant 0 : index
    %35 = vector.load %arg9[%c0_23, %c0_24] : memref<1x512xf32, #tpu.memory_space<vmem>>, vector<1x512xf32>
    %36 = arith.truncf %33 : vector<1x32xf32> to vector<1x32xbf16>
    %cst_25 = arith.constant dense<0.000000e+00> : vector<1x512xf32>
    %37 = tpu.matmul %36, %34, %cst_25 {dimension_numbers = #tpu.dot_dimension_numbers<[1], [0], [0], [1], [0, 0, 1, 1], [], []>} : vector<1x32xbf16>, vector<32x512xbf16>, vector<1x512xf32> -> vector<1x512xf32>
    %38 = arith.addf %37, %35 : vector<1x512xf32>
    %39 = arith.truncf %38 : vector<1x512xf32> to vector<1x512xbf16>
    %c0_26 = arith.constant 0 : index
    %c0_27 = arith.constant 0 : index
    %40 = vector.load %arg10[%c0_26, %c0_27] : memref<32x1024xbf16, #tpu.memory_space<vmem>>, vector<32x1024xbf16>
    %c0_28 = arith.constant 0 : index
    %c0_29 = arith.constant 0 : index
    %41 = vector.load %arg11[%c0_28, %c0_29] : memref<1x1024xf32, #tpu.memory_space<vmem>>, vector<1x1024xf32>
    %cst_30 = arith.constant dense<0.000000e+00> : vector<8x1024xf32>
    %42 = tpu.matmul %1, %40, %cst_30 {dimension_numbers = #tpu.dot_dimension_numbers<[1], [0], [0], [1], [0, 0, 1, 1], [], []>} : vector<8x32xbf16>, vector<32x1024xbf16>, vector<8x1024xf32> -> vector<8x1024xf32>
    %43 = vector.broadcast %41 : vector<1x1024xf32> to vector<8x1024xf32>
    %44 = arith.addf %42, %43 : vector<8x1024xf32>
    %45 = vector.extract_strided_slice %44 {offsets = [0, 0], sizes = [8, 512], strides = [1, 1]} : vector<8x1024xf32> to vector<8x512xf32>
    %46 = arith.truncf %45 : vector<8x512xf32> to vector<8x512xbf16>
    %47 = vector.extract_strided_slice %44 {offsets = [0, 512], sizes = [8, 512], strides = [1, 1]} : vector<8x1024xf32> to vector<8x512xf32>
    %48 = arith.truncf %47 : vector<8x512xf32> to vector<8x512xbf16>
    %49 = vector.extract_strided_slice %39 {offsets = [0, 0], sizes = [1, 128], strides = [1, 1]} : vector<1x512xbf16> to vector<1x128xbf16>
    %50 = vector.extract_strided_slice %46 {offsets = [0, 0], sizes = [8, 128], strides = [1, 1]} : vector<8x512xbf16> to vector<8x128xbf16>
    %cst_31 = arith.constant dense<0.000000e+00> : vector<1x8xf32>
    %51 = tpu.matmul %49, %50, %cst_31 {dimension_numbers = #tpu.dot_dimension_numbers<[1], [1], [0], [0], [0, 0, 1, 0], [], []>} : vector<1x128xbf16>, vector<8x128xbf16>, vector<1x8xf32> -> vector<1x8xf32>
    %cst_32 = arith.constant dense<0xFF800000> : vector<1xf32>
    %52 = vector.multi_reduction <maximumf>, %51, %cst_32 [1] : vector<1x8xf32> to vector<1xf32>
    %53 = vector.shape_cast %52 : vector<1xf32> to vector<1x1xf32>
    %54 = vector.broadcast %53 : vector<1x1xf32> to vector<1x8xf32>
    %55 = arith.subf %51, %54 : vector<1x8xf32>
    %56 = math.exp %55 : vector<1x8xf32>
    %cst_33 = arith.constant dense<0.000000e+00> : vector<1xf32>
    %57 = vector.multi_reduction <add>, %56, %cst_33 [1] : vector<1x8xf32> to vector<1xf32>
    %58 = vector.shape_cast %57 : vector<1xf32> to vector<1x1xf32>
    %59 = tpu.reciprocal %58 {approx = true} : vector<1x1xf32> -> vector<1x1xf32>
    %60 = vector.broadcast %59 : vector<1x1xf32> to vector<1x8xf32>
    %61 = arith.mulf %56, %60 : vector<1x8xf32>
    %62 = arith.truncf %61 : vector<1x8xf32> to vector<1x8xbf16>
    %63 = vector.extract_strided_slice %48 {offsets = [0, 0], sizes = [8, 128], strides = [1, 1]} : vector<8x512xbf16> to vector<8x128xbf16>
    %cst_34 = arith.constant dense<0.000000e+00> : vector<1x128xf32>
    %64 = tpu.matmul %62, %63, %cst_34 {dimension_numbers = #tpu.dot_dimension_numbers<[1], [0], [0], [1], [0, 0, 1, 1], [], []>} : vector<1x8xbf16>, vector<8x128xbf16>, vector<1x128xf32> -> vector<1x128xf32>
    %c0_35 = arith.constant 0 : index
    %c0_36 = arith.constant 0 : index
    %65 = vector.load %arg47[%c0_35, %c0_36] : memref<1x512xf32, #tpu.memory_space<vmem>>, vector<1x128xf32>
    tpu.vector_store %arg47[%c0_35, %c0_36], %64 {strides = array<i32>} : memref<1x512xf32, #tpu.memory_space<vmem>>, vector<1x128xf32>,
    %66 = vector.extract_strided_slice %39 {offsets = [0, 128], sizes = [1, 128], strides = [1, 1]} : vector<1x512xbf16> to vector<1x128xbf16>
    %67 = vector.extract_strided_slice %46 {offsets = [0, 128], sizes = [8, 128], strides = [1, 1]} : vector<8x512xbf16> to vector<8x128xbf16>
    %cst_37 = arith.constant dense<0.000000e+00> : vector<1x8xf32>
    %68 = tpu.matmul %66, %67, %cst_37 {dimension_numbers = #tpu.dot_dimension_numbers<[1], [1], [0], [0], [0, 0, 1, 0], [], []>} : vector<1x128xbf16>, vector<8x128xbf16>, vector<1x8xf32> -> vector<1x8xf32>
    %cst_38 = arith.constant dense<0xFF800000> : vector<1xf32>
    %69 = vector.multi_reduction <maximumf>, %68, %cst_38 [1] : vector<1x8xf32> to vector<1xf32>
    %70 = vector.shape_cast %69 : vector<1xf32> to vector<1x1xf32>
    %71 = vector.broadcast %70 : vector<1x1xf32> to vector<1x8xf32>
    %72 = arith.subf %68, %71 : vector<1x8xf32>
    %73 = math.exp %72 : vector<1x8xf32>
    %cst_39 = arith.constant dense<0.000000e+00> : vector<1xf32>
    %74 = vector.multi_reduction <add>, %73, %cst_39 [1] : vector<1x8xf32> to vector<1xf32>
    %75 = vector.shape_cast %74 : vector<1xf32> to vector<1x1xf32>
    %76 = tpu.reciprocal %75 {approx = true} : vector<1x1xf32> -> vector<1x1xf32>
    %77 = vector.broadcast %76 : vector<1x1xf32> to vector<1x8xf32>
    %78 = arith.mulf %73, %77 : vector<1x8xf32>
    %79 = arith.truncf %78 : vector<1x8xf32> to vector<1x8xbf16>
    %80 = vector.extract_strided_slice %48 {offsets = [0, 128], sizes = [8, 128], strides = [1, 1]} : vector<8x512xbf16> to vector<8x128xbf16>
    %cst_40 = arith.constant dense<0.000000e+00> : vector<1x128xf32>
    %81 = tpu.matmul %79, %80, %cst_40 {dimension_numbers = #tpu.dot_dimension_numbers<[1], [0], [0], [1], [0, 0, 1, 1], [], []>} : vector<1x8xbf16>, vector<8x128xbf16>, vector<1x128xf32> -> vector<1x128xf32>
    %c0_41 = arith.constant 0 : index
    %c128 = arith.constant 128 : index
    %82 = vector.load %arg47[%c0_41, %c128] : memref<1x512xf32, #tpu.memory_space<vmem>>, vector<1x128xf32>
    tpu.vector_store %arg47[%c0_41, %c128], %81 {strides = array<i32>} : memref<1x512xf32, #tpu.memory_space<vmem>>, vector<1x128xf32>,
    %83 = vector.extract_strided_slice %39 {offsets = [0, 256], sizes = [1, 128], strides = [1, 1]} : vector<1x512xbf16> to vector<1x128xbf16>
    %84 = vector.extract_strided_slice %46 {offsets = [0, 256], sizes = [8, 128], strides = [1, 1]} : vector<8x512xbf16> to vector<8x128xbf16>
    %cst_42 = arith.constant dense<0.000000e+00> : vector<1x8xf32>
    %85 = tpu.matmul %83, %84, %cst_42 {dimension_numbers = #tpu.dot_dimension_numbers<[1], [1], [0], [0], [0, 0, 1, 0], [], []>} : vector<1x128xbf16>, vector<8x128xbf16>, vector<1x8xf32> -> vector<1x8xf32>
    %cst_43 = arith.constant dense<0xFF800000> : vector<1xf32>
    %86 = vector.multi_reduction <maximumf>, %85, %cst_43 [1] : vector<1x8xf32> to vector<1xf32>
    %87 = vector.shape_cast %86 : vector<1xf32> to vector<1x1xf32>
    %88 = vector.broadcast %87 : vector<1x1xf32> to vector<1x8xf32>
    %89 = arith.subf %85, %88 : vector<1x8xf32>
    %90 = math.exp %89 : vector<1x8xf32>
    %cst_44 = arith.constant dense<0.000000e+00> : vector<1xf32>
    %91 = vector.multi_reduction <add>, %90, %cst_44 [1] : vector<1x8xf32> to vector<1xf32>
    %92 = vector.shape_cast %91 : vector<1xf32> to vector<1x1xf32>
    %93 = tpu.reciprocal %92 {approx = true} : vector<1x1xf32> -> vector<1x1xf32>
    %94 = vector.broadcast %93 : vector<1x1xf32> to vector<1x8xf32>
    %95 = arith.mulf %90, %94 : vector<1x8xf32>
    %96 = arith.truncf %95 : vector<1x8xf32> to vector<1x8xbf16>
    %97 = vector.extract_strided_slice %48 {offsets = [0, 256], sizes = [8, 128], strides = [1, 1]} : vector<8x512xbf16> to vector<8x128xbf16>
    %cst_45 = arith.constant dense<0.000000e+00> : vector<1x128xf32>
    %98 = tpu.matmul %96, %97, %cst_45 {dimension_numbers = #tpu.dot_dimension_numbers<[1], [0], [0], [1], [0, 0, 1, 1], [], []>} : vector<1x8xbf16>, vector<8x128xbf16>, vector<1x128xf32> -> vector<1x128xf32>
    %c0_46 = arith.constant 0 : index
    %c256 = arith.constant 256 : index
    %99 = vector.load %arg47[%c0_46, %c256] : memref<1x512xf32, #tpu.memory_space<vmem>>, vector<1x128xf32>
    tpu.vector_store %arg47[%c0_46, %c256], %98 {strides = array<i32>} : memref<1x512xf32, #tpu.memory_space<vmem>>, vector<1x128xf32>,
    %100 = vector.extract_strided_slice %39 {offsets = [0, 384], sizes = [1, 128], strides = [1, 1]} : vector<1x512xbf16> to vector<1x128xbf16>
    %101 = vector.extract_strided_slice %46 {offsets = [0, 384], sizes = [8, 128], strides = [1, 1]} : vector<8x512xbf16> to vector<8x128xbf16>
    %cst_47 = arith.constant dense<0.000000e+00> : vector<1x8xf32>
    %102 = tpu.matmul %100, %101, %cst_47 {dimension_numbers = #tpu.dot_dimension_numbers<[1], [1], [0], [0], [0, 0, 1, 0], [], []>} : vector<1x128xbf16>, vector<8x128xbf16>, vector<1x8xf32> -> vector<1x8xf32>
    %cst_48 = arith.constant dense<0xFF800000> : vector<1xf32>
    %103 = vector.multi_reduction <maximumf>, %102, %cst_48 [1] : vector<1x8xf32> to vector<1xf32>
    %104 = vector.shape_cast %103 : vector<1xf32> to vector<1x1xf32>
    %105 = vector.broadcast %104 : vector<1x1xf32> to vector<1x8xf32>
    %106 = arith.subf %102, %105 : vector<1x8xf32>
    %107 = math.exp %106 : vector<1x8xf32>
    %cst_49 = arith.constant dense<0.000000e+00> : vector<1xf32>
    %108 = vector.multi_reduction <add>, %107, %cst_49 [1] : vector<1x8xf32> to vector<1xf32>
    %109 = vector.shape_cast %108 : vector<1xf32> to vector<1x1xf32>
    %110 = tpu.reciprocal %109 {approx = true} : vector<1x1xf32> -> vector<1x1xf32>
    %111 = vector.broadcast %110 : vector<1x1xf32> to vector<1x8xf32>
    %112 = arith.mulf %107, %111 : vector<1x8xf32>
    %113 = arith.truncf %112 : vector<1x8xf32> to vector<1x8xbf16>
    %114 = vector.extract_strided_slice %48 {offsets = [0, 384], sizes = [8, 128], strides = [1, 1]} : vector<8x512xbf16> to vector<8x128xbf16>
    %cst_50 = arith.constant dense<0.000000e+00> : vector<1x128xf32>
    %115 = tpu.matmul %113, %114, %cst_50 {dimension_numbers = #tpu.dot_dimension_numbers<[1], [0], [0], [1], [0, 0, 1, 1], [], []>} : vector<1x8xbf16>, vector<8x128xbf16>, vector<1x128xf32> -> vector<1x128xf32>
    %c0_51 = arith.constant 0 : index
    %c384 = arith.constant 384 : index
    %116 = vector.load %arg47[%c0_51, %c384] : memref<1x512xf32, #tpu.memory_space<vmem>>, vector<1x128xf32>
    tpu.vector_store %arg47[%c0_51, %c384], %115 {strides = array<i32>} : memref<1x512xf32, #tpu.memory_space<vmem>>, vector<1x128xf32>,
    %c0_52 = arith.constant 0 : index
    %c0_53 = arith.constant 0 : index
    %117 = vector.load %arg47[%c0_52, %c0_53] : memref<1x512xf32, #tpu.memory_space<vmem>>, vector<1x512xf32>
    %c0_54 = arith.constant 0 : index
    %c0_55 = arith.constant 0 : index
    %118 = vector.load %arg12[%c0_54, %c0_55] : memref<512x32xbf16, #tpu.memory_space<vmem>>, vector<512x32xbf16>
    %c0_56 = arith.constant 0 : index
    %c0_57 = arith.constant 0 : index
    %119 = vector.load %arg13[%c0_56, %c0_57] : memref<1x32xf32, #tpu.memory_space<vmem>>, vector<1x32xf32>
    %120 = arith.truncf %117 : vector<1x512xf32> to vector<1x512xbf16>
    %cst_58 = arith.constant dense<0.000000e+00> : vector<1x32xf32>
    %121 = tpu.matmul %120, %118, %cst_58 {dimension_numbers = #tpu.dot_dimension_numbers<[1], [0], [0], [1], [0, 0, 1, 1], [], []>} : vector<1x512xbf16>, vector<512x32xbf16>, vector<1x32xf32> -> vector<1x32xf32>
    %122 = arith.addf %121, %119 : vector<1x32xf32>
    %123 = arith.addf %33, %122 : vector<1x32xf32>
    %c0_59 = arith.constant 0 : index
    %c0_60 = arith.constant 0 : index
    %124 = vector.load %arg14[%c0_59, %c0_60] : memref<1x32xf32, #tpu.memory_space<vmem>>, vector<1x32xf32>
    %c0_61 = arith.constant 0 : index
    %c0_62 = arith.constant 0 : index
    %125 = vector.load %arg15[%c0_61, %c0_62] : memref<1x32xf32, #tpu.memory_space<vmem>>, vector<1x32xf32>
    %cst_63 = arith.constant dense<0.000000e+00> : vector<1xf32>
    %126 = vector.multi_reduction <add>, %123, %cst_63 [1] : vector<1x32xf32> to vector<1xf32>
    %127 = vector.shape_cast %126 : vector<1xf32> to vector<1x1xf32>
    %cst_64 = arith.constant 3.200000e+01 : f32
    %128 = vector.broadcast %cst_64 : f32 to vector<1x1xf32>
    %129 = arith.divf %127, %128 : vector<1x1xf32>
    %130 = vector.broadcast %129 : vector<1x1xf32> to vector<1x32xf32>
    %131 = arith.subf %123, %130 : vector<1x32xf32>
    %132 = arith.mulf %131, %131 : vector<1x32xf32>
    %cst_65 = arith.constant dense<0.000000e+00> : vector<1xf32>
    %133 = vector.multi_reduction <add>, %132, %cst_65 [1] : vector<1x32xf32> to vector<1xf32>
    %134 = vector.shape_cast %133 : vector<1xf32> to vector<1x1xf32>
    %cst_66 = arith.constant 3.200000e+01 : f32
    %135 = vector.broadcast %cst_66 : f32 to vector<1x1xf32>
    %136 = arith.divf %134, %135 : vector<1x1xf32>
    %cst_67 = arith.constant 9.99999974E-6 : f32
    %137 = vector.broadcast %cst_67 : f32 to vector<1x1xf32>
    %138 = arith.addf %136, %137 : vector<1x1xf32>
    %139 = math.rsqrt %138 : vector<1x1xf32>
    %140 = vector.broadcast %139 : vector<1x1xf32> to vector<1x32xf32>
    %141 = arith.mulf %131, %140 : vector<1x32xf32>
    %142 = arith.mulf %141, %124 : vector<1x32xf32>
    %143 = arith.addf %142, %125 : vector<1x32xf32>
    %c0_68 = arith.constant 0 : index
    %c0_69 = arith.constant 0 : index
    %144 = vector.load %arg16[%c0_68, %c0_69] : memref<32x128xbf16, #tpu.memory_space<vmem>>, vector<32x128xbf16>
    %c0_70 = arith.constant 0 : index
    %c0_71 = arith.constant 0 : index
    %145 = vector.load %arg17[%c0_70, %c0_71] : memref<1x128xf32, #tpu.memory_space<vmem>>, vector<1x128xf32>
    %146 = arith.truncf %143 : vector<1x32xf32> to vector<1x32xbf16>
    %cst_72 = arith.constant dense<0.000000e+00> : vector<1x128xf32>
    %147 = tpu.matmul %146, %144, %cst_72 {dimension_numbers = #tpu.dot_dimension_numbers<[1], [0], [0], [1], [0, 0, 1, 1], [], []>} : vector<1x32xbf16>, vector<32x128xbf16>, vector<1x128xf32> -> vector<1x128xf32>
    %148 = arith.addf %147, %145 : vector<1x128xf32>
    %cst_73 = arith.constant 0.000000e+00 : f32
    %149 = vector.broadcast %cst_73 : f32 to vector<1x128xf32>
    %150 = arith.maximumf %148, %149 : vector<1x128xf32>
    %c0_74 = arith.constant 0 : index
    %c0_75 = arith.constant 0 : index
    %151 = vector.load %arg18[%c0_74, %c0_75] : memref<128x32xbf16, #tpu.memory_space<vmem>>, vector<128x32xbf16>
    %c0_76 = arith.constant 0 : index
    %c0_77 = arith.constant 0 : index
    %152 = vector.load %arg19[%c0_76, %c0_77] : memref<1x32xf32, #tpu.memory_space<vmem>>, vector<1x32xf32>
    %153 = arith.truncf %150 : vector<1x128xf32> to vector<1x128xbf16>
    %cst_78 = arith.constant dense<0.000000e+00> : vector<1x32xf32>
    %154 = tpu.matmul %153, %151, %cst_78 {dimension_numbers = #tpu.dot_dimension_numbers<[1], [0], [0], [1], [0, 0, 1, 1], [], []>} : vector<1x128xbf16>, vector<128x32xbf16>, vector<1x32xf32> -> vector<1x32xf32>
    %155 = arith.addf %154, %152 : vector<1x32xf32>
    %156 = arith.addf %143, %155 : vector<1x32xf32>
    %c0_79 = arith.constant 0 : index
    %c0_80 = arith.constant 0 : index
    %157 = vector.load %arg20[%c0_79, %c0_80] : memref<1x32xf32, #tpu.memory_space<vmem>>, vector<1x32xf32>
    %c0_81 = arith.constant 0 : index
    %c0_82 = arith.constant 0 : index
    %158 = vector.load %arg21[%c0_81, %c0_82] : memref<1x32xf32, #tpu.memory_space<vmem>>, vector<1x32xf32>
    %cst_83 = arith.constant dense<0.000000e+00> : vector<1xf32>
    %159 = vector.multi_reduction <add>, %156, %cst_83 [1] : vector<1x32xf32> to vector<1xf32>
    %160 = vector.shape_cast %159 : vector<1xf32> to vector<1x1xf32>
    %cst_84 = arith.constant 3.200000e+01 : f32
    %161 = vector.broadcast %cst_84 : f32 to vector<1x1xf32>
    %162 = arith.divf %160, %161 : vector<1x1xf32>
    %163 = vector.broadcast %162 : vector<1x1xf32> to vector<1x32xf32>
    %164 = arith.subf %156, %163 : vector<1x32xf32>
    %165 = arith.mulf %164, %164 : vector<1x32xf32>
    %cst_85 = arith.constant dense<0.000000e+00> : vector<1xf32>
    %166 = vector.multi_reduction <add>, %165, %cst_85 [1] : vector<1x32xf32> to vector<1xf32>
    %167 = vector.shape_cast %166 : vector<1xf32> to vector<1x1xf32>
    %cst_86 = arith.constant 3.200000e+01 : f32
    %168 = vector.broadcast %cst_86 : f32 to vector<1x1xf32>
    %169 = arith.divf %167, %168 : vector<1x1xf32>
    %cst_87 = arith.constant 9.99999974E-6 : f32
    %170 = vector.broadcast %cst_87 : f32 to vector<1x1xf32>
    %171 = arith.addf %169, %170 : vector<1x1xf32>
    %172 = math.rsqrt %171 : vector<1x1xf32>
    %173 = vector.broadcast %172 : vector<1x1xf32> to vector<1x32xf32>
    %174 = arith.mulf %164, %173 : vector<1x32xf32>
    %175 = arith.mulf %174, %157 : vector<1x32xf32>
    %176 = arith.addf %175, %158 : vector<1x32xf32>
    %c0_88 = arith.constant 0 : index
    %c0_89 = arith.constant 0 : index
    %177 = vector.load %arg22[%c0_88, %c0_89] : memref<32x32xbf16, #tpu.memory_space<vmem>>, vector<32x32xbf16>
    %c0_90 = arith.constant 0 : index
    %c0_91 = arith.constant 0 : index
    %178 = vector.load %arg23[%c0_90, %c0_91] : memref<1x32xf32, #tpu.memory_space<vmem>>, vector<1x32xf32>
    %179 = arith.truncf %176 : vector<1x32xf32> to vector<1x32xbf16>
    %cst_92 = arith.constant dense<0.000000e+00> : vector<1x32xf32>
    %180 = tpu.matmul %179, %177, %cst_92 {dimension_numbers = #tpu.dot_dimension_numbers<[1], [0], [0], [1], [0, 0, 1, 1], [], []>} : vector<1x32xbf16>, vector<32x32xbf16>, vector<1x32xf32> -> vector<1x32xf32>
    %181 = arith.addf %180, %178 : vector<1x32xf32>
    %c0_93 = arith.constant 0 : index
    %c0_94 = arith.constant 0 : index
    %182 = vector.load %arg24[%c0_93, %c0_94] : memref<32x32xbf16, #tpu.memory_space<vmem>>, vector<32x32xbf16>
    %c0_95 = arith.constant 0 : index
    %c0_96 = arith.constant 0 : index
    %183 = vector.load %arg25[%c0_95, %c0_96] : memref<1x32xf32, #tpu.memory_space<vmem>>, vector<1x32xf32>
    %184 = arith.truncf %181 : vector<1x32xf32> to vector<1x32xbf16>
    %cst_97 = arith.constant dense<0.000000e+00> : vector<1x32xf32>
    %185 = tpu.matmul %184, %182, %cst_97 {dimension_numbers = #tpu.dot_dimension_numbers<[1], [0], [0], [1], [0, 0, 1, 1], [], []>} : vector<1x32xbf16>, vector<32x32xbf16>, vector<1x32xf32> -> vector<1x32xf32>
    %186 = arith.addf %185, %183 : vector<1x32xf32>
    %187 = arith.addf %176, %186 : vector<1x32xf32>
    %c0_98 = arith.constant 0 : index
    %c0_99 = arith.constant 0 : index
    %188 = vector.load %arg26[%c0_98, %c0_99] : memref<1x32xf32, #tpu.memory_space<vmem>>, vector<1x32xf32>
    %c0_100 = arith.constant 0 : index
    %c0_101 = arith.constant 0 : index
    %189 = vector.load %arg27[%c0_100, %c0_101] : memref<1x32xf32, #tpu.memory_space<vmem>>, vector<1x32xf32>
    %cst_102 = arith.constant dense<0.000000e+00> : vector<1xf32>
    %190 = vector.multi_reduction <add>, %187, %cst_102 [1] : vector<1x32xf32> to vector<1xf32>
    %191 = vector.shape_cast %190 : vector<1xf32> to vector<1x1xf32>
    %cst_103 = arith.constant 3.200000e+01 : f32
    %192 = vector.broadcast %cst_103 : f32 to vector<1x1xf32>
    %193 = arith.divf %191, %192 : vector<1x1xf32>
    %194 = vector.broadcast %193 : vector<1x1xf32> to vector<1x32xf32>
    %195 = arith.subf %187, %194 : vector<1x32xf32>
    %196 = arith.mulf %195, %195 : vector<1x32xf32>
    %cst_104 = arith.constant dense<0.000000e+00> : vector<1xf32>
    %197 = vector.multi_reduction <add>, %196, %cst_104 [1] : vector<1x32xf32> to vector<1xf32>
    %198 = vector.shape_cast %197 : vector<1xf32> to vector<1x1xf32>
    %cst_105 = arith.constant 3.200000e+01 : f32
    %199 = vector.broadcast %cst_105 : f32 to vector<1x1xf32>
    %200 = arith.divf %198, %199 : vector<1x1xf32>
    %cst_106 = arith.constant 9.99999974E-6 : f32
    %201 = vector.broadcast %cst_106 : f32 to vector<1x1xf32>
    %202 = arith.addf %200, %201 : vector<1x1xf32>
    %203 = math.rsqrt %202 : vector<1x1xf32>
    %204 = vector.broadcast %203 : vector<1x1xf32> to vector<1x32xf32>
    %205 = arith.mulf %195, %204 : vector<1x32xf32>
    %206 = arith.mulf %205, %188 : vector<1x32xf32>
    %207 = arith.addf %206, %189 : vector<1x32xf32>
    %c0_107 = arith.constant 0 : index
    %c0_108 = arith.constant 0 : index
    %208 = vector.load %arg28[%c0_107, %c0_108] : memref<32x512xbf16, #tpu.memory_space<vmem>>, vector<32x512xbf16>
    %c0_109 = arith.constant 0 : index
    %c0_110 = arith.constant 0 : index
    %209 = vector.load %arg29[%c0_109, %c0_110] : memref<1x512xf32, #tpu.memory_space<vmem>>, vector<1x512xf32>
    %210 = arith.truncf %207 : vector<1x32xf32> to vector<1x32xbf16>
    %cst_111 = arith.constant dense<0.000000e+00> : vector<1x512xf32>
    %211 = tpu.matmul %210, %208, %cst_111 {dimension_numbers = #tpu.dot_dimension_numbers<[1], [0], [0], [1], [0, 0, 1, 1], [], []>} : vector<1x32xbf16>, vector<32x512xbf16>, vector<1x512xf32> -> vector<1x512xf32>
    %212 = arith.addf %211, %209 : vector<1x512xf32>
    %213 = arith.truncf %212 : vector<1x512xf32> to vector<1x512xbf16>
    %c0_112 = arith.constant 0 : index
    %c0_113 = arith.constant 0 : index
    %214 = vector.load %arg30[%c0_112, %c0_113] : memref<32x1024xbf16, #tpu.memory_space<vmem>>, vector<32x1024xbf16>
    %c0_114 = arith.constant 0 : index
    %c0_115 = arith.constant 0 : index
    %215 = vector.load %arg31[%c0_114, %c0_115] : memref<1x1024xf32, #tpu.memory_space<vmem>>, vector<1x1024xf32>
    %cst_116 = arith.constant dense<0.000000e+00> : vector<8x1024xf32>
    %216 = tpu.matmul %1, %214, %cst_116 {dimension_numbers = #tpu.dot_dimension_numbers<[1], [0], [0], [1], [0, 0, 1, 1], [], []>} : vector<8x32xbf16>, vector<32x1024xbf16>, vector<8x1024xf32> -> vector<8x1024xf32>
    %217 = vector.broadcast %215 : vector<1x1024xf32> to vector<8x1024xf32>
    %218 = arith.addf %216, %217 : vector<8x1024xf32>
    %219 = vector.extract_strided_slice %218 {offsets = [0, 0], sizes = [8, 512], strides = [1, 1]} : vector<8x1024xf32> to vector<8x512xf32>
    %220 = arith.truncf %219 : vector<8x512xf32> to vector<8x512xbf16>
    %221 = vector.extract_strided_slice %218 {offsets = [0, 512], sizes = [8, 512], strides = [1, 1]} : vector<8x1024xf32> to vector<8x512xf32>
    %222 = arith.truncf %221 : vector<8x512xf32> to vector<8x512xbf16>
    %223 = vector.extract_strided_slice %213 {offsets = [0, 0], sizes = [1, 128], strides = [1, 1]} : vector<1x512xbf16> to vector<1x128xbf16>
    %224 = vector.extract_strided_slice %220 {offsets = [0, 0], sizes = [8, 128], strides = [1, 1]} : vector<8x512xbf16> to vector<8x128xbf16>
    %cst_117 = arith.constant dense<0.000000e+00> : vector<1x8xf32>
    %225 = tpu.matmul %223, %224, %cst_117 {dimension_numbers = #tpu.dot_dimension_numbers<[1], [1], [0], [0], [0, 0, 1, 0], [], []>} : vector<1x128xbf16>, vector<8x128xbf16>, vector<1x8xf32> -> vector<1x8xf32>
    %cst_118 = arith.constant dense<0xFF800000> : vector<1xf32>
    %226 = vector.multi_reduction <maximumf>, %225, %cst_118 [1] : vector<1x8xf32> to vector<1xf32>
    %227 = vector.shape_cast %226 : vector<1xf32> to vector<1x1xf32>
    %228 = vector.broadcast %227 : vector<1x1xf32> to vector<1x8xf32>
    %229 = arith.subf %225, %228 : vector<1x8xf32>
    %230 = math.exp %229 : vector<1x8xf32>
    %cst_119 = arith.constant dense<0.000000e+00> : vector<1xf32>
    %231 = vector.multi_reduction <add>, %230, %cst_119 [1] : vector<1x8xf32> to vector<1xf32>
    %232 = vector.shape_cast %231 : vector<1xf32> to vector<1x1xf32>
    %233 = tpu.reciprocal %232 {approx = true} : vector<1x1xf32> -> vector<1x1xf32>
    %234 = vector.broadcast %233 : vector<1x1xf32> to vector<1x8xf32>
    %235 = arith.mulf %230, %234 : vector<1x8xf32>
    %236 = arith.truncf %235 : vector<1x8xf32> to vector<1x8xbf16>
    %237 = vector.extract_strided_slice %222 {offsets = [0, 0], sizes = [8, 128], strides = [1, 1]} : vector<8x512xbf16> to vector<8x128xbf16>
    %cst_120 = arith.constant dense<0.000000e+00> : vector<1x128xf32>
    %238 = tpu.matmul %236, %237, %cst_120 {dimension_numbers = #tpu.dot_dimension_numbers<[1], [0], [0], [1], [0, 0, 1, 1], [], []>} : vector<1x8xbf16>, vector<8x128xbf16>, vector<1x128xf32> -> vector<1x128xf32>
    %c0_121 = arith.constant 0 : index
    %c0_122 = arith.constant 0 : index
    %239 = vector.load %arg47[%c0_121, %c0_122] : memref<1x512xf32, #tpu.memory_space<vmem>>, vector<1x128xf32>
    tpu.vector_store %arg47[%c0_121, %c0_122], %238 {strides = array<i32>} : memref<1x512xf32, #tpu.memory_space<vmem>>, vector<1x128xf32>,
    %240 = vector.extract_strided_slice %213 {offsets = [0, 128], sizes = [1, 128], strides = [1, 1]} : vector<1x512xbf16> to vector<1x128xbf16>
    %241 = vector.extract_strided_slice %220 {offsets = [0, 128], sizes = [8, 128], strides = [1, 1]} : vector<8x512xbf16> to vector<8x128xbf16>
    %cst_123 = arith.constant dense<0.000000e+00> : vector<1x8xf32>
    %242 = tpu.matmul %240, %241, %cst_123 {dimension_numbers = #tpu.dot_dimension_numbers<[1], [1], [0], [0], [0, 0, 1, 0], [], []>} : vector<1x128xbf16>, vector<8x128xbf16>, vector<1x8xf32> -> vector<1x8xf32>
    %cst_124 = arith.constant dense<0xFF800000> : vector<1xf32>
    %243 = vector.multi_reduction <maximumf>, %242, %cst_124 [1] : vector<1x8xf32> to vector<1xf32>
    %244 = vector.shape_cast %243 : vector<1xf32> to vector<1x1xf32>
    %245 = vector.broadcast %244 : vector<1x1xf32> to vector<1x8xf32>
    %246 = arith.subf %242, %245 : vector<1x8xf32>
    %247 = math.exp %246 : vector<1x8xf32>
    %cst_125 = arith.constant dense<0.000000e+00> : vector<1xf32>
    %248 = vector.multi_reduction <add>, %247, %cst_125 [1] : vector<1x8xf32> to vector<1xf32>
    %249 = vector.shape_cast %248 : vector<1xf32> to vector<1x1xf32>
    %250 = tpu.reciprocal %249 {approx = true} : vector<1x1xf32> -> vector<1x1xf32>
    %251 = vector.broadcast %250 : vector<1x1xf32> to vector<1x8xf32>
    %252 = arith.mulf %247, %251 : vector<1x8xf32>
    %253 = arith.truncf %252 : vector<1x8xf32> to vector<1x8xbf16>
    %254 = vector.extract_strided_slice %222 {offsets = [0, 128], sizes = [8, 128], strides = [1, 1]} : vector<8x512xbf16> to vector<8x128xbf16>
    %cst_126 = arith.constant dense<0.000000e+00> : vector<1x128xf32>
    %255 = tpu.matmul %253, %254, %cst_126 {dimension_numbers = #tpu.dot_dimension_numbers<[1], [0], [0], [1], [0, 0, 1, 1], [], []>} : vector<1x8xbf16>, vector<8x128xbf16>, vector<1x128xf32> -> vector<1x128xf32>
    %c0_127 = arith.constant 0 : index
    %c128_128 = arith.constant 128 : index
    %256 = vector.load %arg47[%c0_127, %c128_128] : memref<1x512xf32, #tpu.memory_space<vmem>>, vector<1x128xf32>
    tpu.vector_store %arg47[%c0_127, %c128_128], %255 {strides = array<i32>} : memref<1x512xf32, #tpu.memory_space<vmem>>, vector<1x128xf32>,
    %257 = vector.extract_strided_slice %213 {offsets = [0, 256], sizes = [1, 128], strides = [1, 1]} : vector<1x512xbf16> to vector<1x128xbf16>
    %258 = vector.extract_strided_slice %220 {offsets = [0, 256], sizes = [8, 128], strides = [1, 1]} : vector<8x512xbf16> to vector<8x128xbf16>
    %cst_129 = arith.constant dense<0.000000e+00> : vector<1x8xf32>
    %259 = tpu.matmul %257, %258, %cst_129 {dimension_numbers = #tpu.dot_dimension_numbers<[1], [1], [0], [0], [0, 0, 1, 0], [], []>} : vector<1x128xbf16>, vector<8x128xbf16>, vector<1x8xf32> -> vector<1x8xf32>
    %cst_130 = arith.constant dense<0xFF800000> : vector<1xf32>
    %260 = vector.multi_reduction <maximumf>, %259, %cst_130 [1] : vector<1x8xf32> to vector<1xf32>
    %261 = vector.shape_cast %260 : vector<1xf32> to vector<1x1xf32>
    %262 = vector.broadcast %261 : vector<1x1xf32> to vector<1x8xf32>
    %263 = arith.subf %259, %262 : vector<1x8xf32>
    %264 = math.exp %263 : vector<1x8xf32>
    %cst_131 = arith.constant dense<0.000000e+00> : vector<1xf32>
    %265 = vector.multi_reduction <add>, %264, %cst_131 [1] : vector<1x8xf32> to vector<1xf32>
    %266 = vector.shape_cast %265 : vector<1xf32> to vector<1x1xf32>
    %267 = tpu.reciprocal %266 {approx = true} : vector<1x1xf32> -> vector<1x1xf32>
    %268 = vector.broadcast %267 : vector<1x1xf32> to vector<1x8xf32>
    %269 = arith.mulf %264, %268 : vector<1x8xf32>
    %270 = arith.truncf %269 : vector<1x8xf32> to vector<1x8xbf16>
    %271 = vector.extract_strided_slice %222 {offsets = [0, 256], sizes = [8, 128], strides = [1, 1]} : vector<8x512xbf16> to vector<8x128xbf16>
    %cst_132 = arith.constant dense<0.000000e+00> : vector<1x128xf32>
    %272 = tpu.matmul %270, %271, %cst_132 {dimension_numbers = #tpu.dot_dimension_numbers<[1], [0], [0], [1], [0, 0, 1, 1], [], []>} : vector<1x8xbf16>, vector<8x128xbf16>, vector<1x128xf32> -> vector<1x128xf32>
    %c0_133 = arith.constant 0 : index
    %c256_134 = arith.constant 256 : index
    %273 = vector.load %arg47[%c0_133, %c256_134] : memref<1x512xf32, #tpu.memory_space<vmem>>, vector<1x128xf32>
    tpu.vector_store %arg47[%c0_133, %c256_134], %272 {strides = array<i32>} : memref<1x512xf32, #tpu.memory_space<vmem>>, vector<1x128xf32>,
    %274 = vector.extract_strided_slice %213 {offsets = [0, 384], sizes = [1, 128], strides = [1, 1]} : vector<1x512xbf16> to vector<1x128xbf16>
    %275 = vector.extract_strided_slice %220 {offsets = [0, 384], sizes = [8, 128], strides = [1, 1]} : vector<8x512xbf16> to vector<8x128xbf16>
    %cst_135 = arith.constant dense<0.000000e+00> : vector<1x8xf32>
    %276 = tpu.matmul %274, %275, %cst_135 {dimension_numbers = #tpu.dot_dimension_numbers<[1], [1], [0], [0], [0, 0, 1, 0], [], []>} : vector<1x128xbf16>, vector<8x128xbf16>, vector<1x8xf32> -> vector<1x8xf32>
    %cst_136 = arith.constant dense<0xFF800000> : vector<1xf32>
    %277 = vector.multi_reduction <maximumf>, %276, %cst_136 [1] : vector<1x8xf32> to vector<1xf32>
    %278 = vector.shape_cast %277 : vector<1xf32> to vector<1x1xf32>
    %279 = vector.broadcast %278 : vector<1x1xf32> to vector<1x8xf32>
    %280 = arith.subf %276, %279 : vector<1x8xf32>
    %281 = math.exp %280 : vector<1x8xf32>
    %cst_137 = arith.constant dense<0.000000e+00> : vector<1xf32>
    %282 = vector.multi_reduction <add>, %281, %cst_137 [1] : vector<1x8xf32> to vector<1xf32>
    %283 = vector.shape_cast %282 : vector<1xf32> to vector<1x1xf32>
    %284 = tpu.reciprocal %283 {approx = true} : vector<1x1xf32> -> vector<1x1xf32>
    %285 = vector.broadcast %284 : vector<1x1xf32> to vector<1x8xf32>
    %286 = arith.mulf %281, %285 : vector<1x8xf32>
    %287 = arith.truncf %286 : vector<1x8xf32> to vector<1x8xbf16>
    %288 = vector.extract_strided_slice %222 {offsets = [0, 384], sizes = [8, 128], strides = [1, 1]} : vector<8x512xbf16> to vector<8x128xbf16>
    %cst_138 = arith.constant dense<0.000000e+00> : vector<1x128xf32>
    %289 = tpu.matmul %287, %288, %cst_138 {dimension_numbers = #tpu.dot_dimension_numbers<[1], [0], [0], [1], [0, 0, 1, 1], [], []>} : vector<1x8xbf16>, vector<8x128xbf16>, vector<1x128xf32> -> vector<1x128xf32>
    %c0_139 = arith.constant 0 : index
    %c384_140 = arith.constant 384 : index
    %290 = vector.load %arg47[%c0_139, %c384_140] : memref<1x512xf32, #tpu.memory_space<vmem>>, vector<1x128xf32>
    tpu.vector_store %arg47[%c0_139, %c384_140], %289 {strides = array<i32>} : memref<1x512xf32, #tpu.memory_space<vmem>>, vector<1x128xf32>,
    %c0_141 = arith.constant 0 : index
    %c0_142 = arith.constant 0 : index
    %291 = vector.load %arg47[%c0_141, %c0_142] : memref<1x512xf32, #tpu.memory_space<vmem>>, vector<1x512xf32>
    %c0_143 = arith.constant 0 : index
    %c0_144 = arith.constant 0 : index
    %292 = vector.load %arg32[%c0_143, %c0_144] : memref<512x32xbf16, #tpu.memory_space<vmem>>, vector<512x32xbf16>
    %c0_145 = arith.constant 0 : index
    %c0_146 = arith.constant 0 : index
    %293 = vector.load %arg33[%c0_145, %c0_146] : memref<1x32xf32, #tpu.memory_space<vmem>>, vector<1x32xf32>
    %294 = arith.truncf %291 : vector<1x512xf32> to vector<1x512xbf16>
    %cst_147 = arith.constant dense<0.000000e+00> : vector<1x32xf32>
    %295 = tpu.matmul %294, %292, %cst_147 {dimension_numbers = #tpu.dot_dimension_numbers<[1], [0], [0], [1], [0, 0, 1, 1], [], []>} : vector<1x512xbf16>, vector<512x32xbf16>, vector<1x32xf32> -> vector<1x32xf32>
    %296 = arith.addf %295, %293 : vector<1x32xf32>
    %297 = arith.addf %207, %296 : vector<1x32xf32>
    %c0_148 = arith.constant 0 : index
    %c0_149 = arith.constant 0 : index
    %298 = vector.load %arg34[%c0_148, %c0_149] : memref<1x32xf32, #tpu.memory_space<vmem>>, vector<1x32xf32>
    %c0_150 = arith.constant 0 : index
    %c0_151 = arith.constant 0 : index
    %299 = vector.load %arg35[%c0_150, %c0_151] : memref<1x32xf32, #tpu.memory_space<vmem>>, vector<1x32xf32>
    %cst_152 = arith.constant dense<0.000000e+00> : vector<1xf32>
    %300 = vector.multi_reduction <add>, %297, %cst_152 [1] : vector<1x32xf32> to vector<1xf32>
    %301 = vector.shape_cast %300 : vector<1xf32> to vector<1x1xf32>
    %cst_153 = arith.constant 3.200000e+01 : f32
    %302 = vector.broadcast %cst_153 : f32 to vector<1x1xf32>
    %303 = arith.divf %301, %302 : vector<1x1xf32>
    %304 = vector.broadcast %303 : vector<1x1xf32> to vector<1x32xf32>
    %305 = arith.subf %297, %304 : vector<1x32xf32>
    %306 = arith.mulf %305, %305 : vector<1x32xf32>
    %cst_154 = arith.constant dense<0.000000e+00> : vector<1xf32>
    %307 = vector.multi_reduction <add>, %306, %cst_154 [1] : vector<1x32xf32> to vector<1xf32>
    %308 = vector.shape_cast %307 : vector<1xf32> to vector<1x1xf32>
    %cst_155 = arith.constant 3.200000e+01 : f32
    %309 = vector.broadcast %cst_155 : f32 to vector<1x1xf32>
    %310 = arith.divf %308, %309 : vector<1x1xf32>
    %cst_156 = arith.constant 9.99999974E-6 : f32
    %311 = vector.broadcast %cst_156 : f32 to vector<1x1xf32>
    %312 = arith.addf %310, %311 : vector<1x1xf32>
    %313 = math.rsqrt %312 : vector<1x1xf32>
    %314 = vector.broadcast %313 : vector<1x1xf32> to vector<1x32xf32>
    %315 = arith.mulf %305, %314 : vector<1x32xf32>
    %316 = arith.mulf %315, %298 : vector<1x32xf32>
    %317 = arith.addf %316, %299 : vector<1x32xf32>
    %c0_157 = arith.constant 0 : index
    %c0_158 = arith.constant 0 : index
    %318 = vector.load %arg36[%c0_157, %c0_158] : memref<32x128xbf16, #tpu.memory_space<vmem>>, vector<32x128xbf16>
    %c0_159 = arith.constant 0 : index
    %c0_160 = arith.constant 0 : index
    %319 = vector.load %arg37[%c0_159, %c0_160] : memref<1x128xf32, #tpu.memory_space<vmem>>, vector<1x128xf32>
    %320 = arith.truncf %317 : vector<1x32xf32> to vector<1x32xbf16>
    %cst_161 = arith.constant dense<0.000000e+00> : vector<1x128xf32>
    %321 = tpu.matmul %320, %318, %cst_161 {dimension_numbers = #tpu.dot_dimension_numbers<[1], [0], [0], [1], [0, 0, 1, 1], [], []>} : vector<1x32xbf16>, vector<32x128xbf16>, vector<1x128xf32> -> vector<1x128xf32>
    %322 = arith.addf %321, %319 : vector<1x128xf32>
    %cst_162 = arith.constant 0.000000e+00 : f32
    %323 = vector.broadcast %cst_162 : f32 to vector<1x128xf32>
    %324 = arith.maximumf %322, %323 : vector<1x128xf32>
    %c0_163 = arith.constant 0 : index
    %c0_164 = arith.constant 0 : index
    %325 = vector.load %arg38[%c0_163, %c0_164] : memref<128x32xbf16, #tpu.memory_space<vmem>>, vector<128x32xbf16>
    %c0_165 = arith.constant 0 : index
    %c0_166 = arith.constant 0 : index
    %326 = vector.load %arg39[%c0_165, %c0_166] : memref<1x32xf32, #tpu.memory_space<vmem>>, vector<1x32xf32>
    %327 = arith.truncf %324 : vector<1x128xf32> to vector<1x128xbf16>
    %cst_167 = arith.constant dense<0.000000e+00> : vector<1x32xf32>
    %328 = tpu.matmul %327, %325, %cst_167 {dimension_numbers = #tpu.dot_dimension_numbers<[1], [0], [0], [1], [0, 0, 1, 1], [], []>} : vector<1x128xbf16>, vector<128x32xbf16>, vector<1x32xf32> -> vector<1x32xf32>
    %329 = arith.addf %328, %326 : vector<1x32xf32>
    %330 = arith.addf %317, %329 : vector<1x32xf32>
    %c0_168 = arith.constant 0 : index
    %c0_169 = arith.constant 0 : index
    %331 = vector.load %arg40[%c0_168, %c0_169] : memref<1x32xf32, #tpu.memory_space<vmem>>, vector<1x32xf32>
    %c0_170 = arith.constant 0 : index
    %c0_171 = arith.constant 0 : index
    %332 = vector.load %arg41[%c0_170, %c0_171] : memref<1x32xf32, #tpu.memory_space<vmem>>, vector<1x32xf32>
    %cst_172 = arith.constant dense<0.000000e+00> : vector<1xf32>
    %333 = vector.multi_reduction <add>, %330, %cst_172 [1] : vector<1x32xf32> to vector<1xf32>
    %334 = vector.shape_cast %333 : vector<1xf32> to vector<1x1xf32>
    %cst_173 = arith.constant 3.200000e+01 : f32
    %335 = vector.broadcast %cst_173 : f32 to vector<1x1xf32>
    %336 = arith.divf %334, %335 : vector<1x1xf32>
    %337 = vector.broadcast %336 : vector<1x1xf32> to vector<1x32xf32>
    %338 = arith.subf %330, %337 : vector<1x32xf32>
    %339 = arith.mulf %338, %338 : vector<1x32xf32>
    %cst_174 = arith.constant dense<0.000000e+00> : vector<1xf32>
    %340 = vector.multi_reduction <add>, %339, %cst_174 [1] : vector<1x32xf32> to vector<1xf32>
    %341 = vector.shape_cast %340 : vector<1xf32> to vector<1x1xf32>
    %cst_175 = arith.constant 3.200000e+01 : f32
    %342 = vector.broadcast %cst_175 : f32 to vector<1x1xf32>
    %343 = arith.divf %341, %342 : vector<1x1xf32>
    %cst_176 = arith.constant 9.99999974E-6 : f32
    %344 = vector.broadcast %cst_176 : f32 to vector<1x1xf32>
    %345 = arith.addf %343, %344 : vector<1x1xf32>
    %346 = math.rsqrt %345 : vector<1x1xf32>
    %347 = vector.broadcast %346 : vector<1x1xf32> to vector<1x32xf32>
    %348 = arith.mulf %338, %347 : vector<1x32xf32>
    %349 = arith.mulf %348, %331 : vector<1x32xf32>
    %350 = arith.addf %349, %332 : vector<1x32xf32>
    %c0_177 = arith.constant 0 : index
    %c0_178 = arith.constant 0 : index
    %351 = vector.load %arg42[%c0_177, %c0_178] : memref<1x32xf32, #tpu.memory_space<vmem>>, vector<1x32xf32>
    %c0_179 = arith.constant 0 : index
    %c0_180 = arith.constant 0 : index
    %352 = vector.load %arg43[%c0_179, %c0_180] : memref<1x32xf32, #tpu.memory_space<vmem>>, vector<1x32xf32>
    %cst_181 = arith.constant dense<0.000000e+00> : vector<1xf32>
    %353 = vector.multi_reduction <add>, %350, %cst_181 [1] : vector<1x32xf32> to vector<1xf32>
    %354 = vector.shape_cast %353 : vector<1xf32> to vector<1x1xf32>
    %cst_182 = arith.constant 3.200000e+01 : f32
    %355 = vector.broadcast %cst_182 : f32 to vector<1x1xf32>
    %356 = arith.divf %354, %355 : vector<1x1xf32>
    %357 = vector.broadcast %356 : vector<1x1xf32> to vector<1x32xf32>
    %358 = arith.subf %350, %357 : vector<1x32xf32>
    %359 = arith.mulf %358, %358 : vector<1x32xf32>
    %cst_183 = arith.constant dense<0.000000e+00> : vector<1xf32>
    %360 = vector.multi_reduction <add>, %359, %cst_183 [1] : vector<1x32xf32> to vector<1xf32>
    %361 = vector.shape_cast %360 : vector<1xf32> to vector<1x1xf32>
    %cst_184 = arith.constant 3.200000e+01 : f32
    %362 = vector.broadcast %cst_184 : f32 to vector<1x1xf32>
    %363 = arith.divf %361, %362 : vector<1x1xf32>
    %cst_185 = arith.constant 9.99999974E-6 : f32
    %364 = vector.broadcast %cst_185 : f32 to vector<1x1xf32>
    %365 = arith.addf %363, %364 : vector<1x1xf32>
    %366 = math.rsqrt %365 : vector<1x1xf32>
    %367 = vector.broadcast %366 : vector<1x1xf32> to vector<1x32xf32>
    %368 = arith.mulf %358, %367 : vector<1x32xf32>
    %369 = arith.mulf %368, %351 : vector<1x32xf32>
    %370 = arith.addf %369, %352 : vector<1x32xf32>
    %c0_186 = arith.constant 0 : index
    %c0_187 = arith.constant 0 : index
    %371 = vector.load %arg44[%c0_186, %c0_187] : memref<32x1xbf16, #tpu.memory_space<vmem>>, vector<32x1xbf16>
    %c0_188 = arith.constant 0 : index
    %c0_189 = arith.constant 0 : index
    %372 = vector.load %arg45[%c0_188, %c0_189] : memref<1x1xf32, #tpu.memory_space<vmem>>, vector<1x1xf32>
    %373 = arith.truncf %370 : vector<1x32xf32> to vector<1x32xbf16>
    %cst_190 = arith.constant dense<0.000000e+00> : vector<1x1xf32>
    %374 = tpu.matmul %373, %371, %cst_190 {dimension_numbers = #tpu.dot_dimension_numbers<[1], [0], [0], [1], [0, 0, 1, 1], [], []>} : vector<1x32xbf16>, vector<32x1xbf16>, vector<1x1xf32> -> vector<1x1xf32>
    %375 = arith.addf %374, %372 : vector<1x1xf32>
    %cst_191 = arith.constant 5.000000e-01 : f32
    %376 = vector.broadcast %cst_191 : f32 to vector<1x1xf32>
    %377 = arith.mulf %376, %375 : vector<1x1xf32>
    %378 = math.tanh %377 : vector<1x1xf32>
    %cst_192 = arith.constant 1.000000e+00 : f32
    %379 = vector.broadcast %cst_192 : f32 to vector<1x1xf32>
    %380 = arith.addf %378, %379 : vector<1x1xf32>
    %cst_193 = arith.constant 5.000000e-01 : f32
    %381 = vector.broadcast %cst_193 : f32 to vector<1x1xf32>
    %382 = arith.mulf %381, %380 : vector<1x1xf32>
    %383 = vector.shape_cast %382 : vector<1x1xf32> to vector<1x1x1xf32>
    %c0_194 = arith.constant 0 : index
    %c0_195 = arith.constant 0 : index
    %c0_196 = arith.constant 0 : index
    %384 = vector.load %arg46[%c0_194, %c0_195, %c0_196] : memref<1x1x1xf32, #tpu.memory_space<vmem>>, vector<1x1x1xf32>
    tpu.vector_store %arg46[%c0_194, %c0_195, %c0_196], %383 {strides = array<i32>} : memref<1x1x1xf32, #tpu.memory_space<vmem>>, vector<1x1x1xf32>,
    return
  }
  func.func @transform_0(%arg0: i32) -> (i32, i32, i32) {
    %c0_i32 = arith.constant 0 : i32
    %c0_i32_0 = arith.constant 0 : i32
    %c0_i32_1 = arith.constant 0 : i32
    return %arg0, %c0_i32, %c0_i32_0 : i32, i32, i32
  }
  func.func @transform_1(%arg0: i32) -> (i32, i32) {
    %c0_i32 = arith.constant 0 : i32
    %c0_i32_0 = arith.constant 0 : i32
    %c0_i32_1 = arith.constant 0 : i32
    return %c0_i32, %c0_i32_0 : i32, i32
  }
  func.func @transform_2(%arg0: i32) -> (i32, i32) {
    %c0_i32 = arith.constant 0 : i32
    %c0_i32_0 = arith.constant 0 : i32
    %c0_i32_1 = arith.constant 0 : i32
    return %c0_i32, %c0_i32_0 : i32, i32
  }
  func.func @transform_3(%arg0: i32) -> (i32, i32) {
    %c0_i32 = arith.constant 0 : i32
    %c0_i32_0 = arith.constant 0 : i32
    %c0_i32_1 = arith.constant 0 : i32
    return %c0_i32, %c0_i32_0 : i32, i32
  }
  func.func @transform_4(%arg0: i32) -> (i32, i32) {
    %c0_i32 = arith.constant 0 : i32
    %c0_i32_0 = arith.constant 0 : i32
    %c0_i32_1 = arith.constant 0 : i32
    return %c0_i32, %c0_i32_0 : i32, i32
  }
  func.func @transform_5(%arg0: i32) -> (i32, i32) {
    %c0_i32 = arith.constant 0 : i32
    %c0_i32_0 = arith.constant 0 : i32
    %c0_i32_1 = arith.constant 0 : i32
    return %c0_i32, %c0_i32_0 : i32, i32
  }
  func.func @transform_6(%arg0: i32) -> (i32, i32) {
    %c0_i32 = arith.constant 0 : i32
    %c0_i32_0 = arith.constant 0 : i32
    %c0_i32_1 = arith.constant 0 : i32
    return %c0_i32, %c0_i32_0 : i32, i32
  }
  func.func @transform_7(%arg0: i32) -> (i32, i32) {
    %c0_i32 = arith.constant 0 : i32
    %c0_i32_0 = arith.constant 0 : i32
    %c0_i32_1 = arith.constant 0 : i32
    return %c0_i32, %c0_i32_0 : i32, i32
  }
  func.func @transform_8(%arg0: i32) -> (i32, i32) {
    %c0_i32 = arith.constant 0 : i32
    %c0_i32_0 = arith.constant 0 : i32
    %c0_i32_1 = arith.constant 0 : i32
    return %c0_i32, %c0_i32_0 : i32, i32
  }
  func.func @transform_9(%arg0: i32) -> (i32, i32) {
    %c0_i32 = arith.constant 0 : i32
    %c0_i32_0 = arith.constant 0 : i32
    %c0_i32_1 = arith.constant 0 : i32
    return %c0_i32, %c0_i32_0 : i32, i32
  }
  func.func @transform_10(%arg0: i32) -> (i32, i32) {
    %c0_i32 = arith.constant 0 : i32
    %c0_i32_0 = arith.constant 0 : i32
    %c0_i32_1 = arith.constant 0 : i32
    return %c0_i32, %c0_i32_0 : i32, i32
  }
  func.func @transform_11(%arg0: i32) -> (i32, i32) {
    %c0_i32 = arith.constant 0 : i32
    %c0_i32_0 = arith.constant 0 : i32
    %c0_i32_1 = arith.constant 0 : i32
    return %c0_i32, %c0_i32_0 : i32, i32
  }
  func.func @transform_12(%arg0: i32) -> (i32, i32) {
    %c0_i32 = arith.constant 0 : i32
    %c0_i32_0 = arith.constant 0 : i32
    %c0_i32_1 = arith.constant 0 : i32
    return %c0_i32, %c0_i32_0 : i32, i32
  }
  func.func @transform_13(%arg0: i32) -> (i32, i32) {
    %c0_i32 = arith.constant 0 : i32
    %c0_i32_0 = arith.constant 0 : i32
    %c0_i32_1 = arith.constant 0 : i32
    return %c0_i32, %c0_i32_0 : i32, i32
  }
  func.func @transform_14(%arg0: i32) -> (i32, i32) {
    %c0_i32 = arith.constant 0 : i32
    %c0_i32_0 = arith.constant 0 : i32
    %c0_i32_1 = arith.constant 0 : i32
    return %c0_i32, %c0_i32_0 : i32, i32
  }
  func.func @transform_15(%arg0: i32) -> (i32, i32) {
    %c0_i32 = arith.constant 0 : i32
    %c0_i32_0 = arith.constant 0 : i32
    %c0_i32_1 = arith.constant 0 : i32
    return %c0_i32, %c0_i32_0 : i32, i32
  }
  func.func @transform_16(%arg0: i32) -> (i32, i32) {
    %c0_i32 = arith.constant 0 : i32
    %c0_i32_0 = arith.constant 0 : i32
    %c0_i32_1 = arith.constant 0 : i32
    return %c0_i32, %c0_i32_0 : i32, i32
  }
  func.func @transform_17(%arg0: i32) -> (i32, i32) {
    %c0_i32 = arith.constant 0 : i32
    %c0_i32_0 = arith.constant 0 : i32
    %c0_i32_1 = arith.constant 0 : i32
    return %c0_i32, %c0_i32_0 : i32, i32
  }
  func.func @transform_18(%arg0: i32) -> (i32, i32) {
    %c0_i32 = arith.constant 0 : i32
    %c0_i32_0 = arith.constant 0 : i32
    %c0_i32_1 = arith.constant 0 : i32
    return %c0_i32, %c0_i32_0 : i32, i32
  }
  func.func @transform_19(%arg0: i32) -> (i32, i32) {
    %c0_i32 = arith.constant 0 : i32
    %c0_i32_0 = arith.constant 0 : i32
    %c0_i32_1 = arith.constant 0 : i32
    return %c0_i32, %c0_i32_0 : i32, i32
  }
  func.func @transform_20(%arg0: i32) -> (i32, i32) {
    %c0_i32 = arith.constant 0 : i32
    %c0_i32_0 = arith.constant 0 : i32
    %c0_i32_1 = arith.constant 0 : i32
    return %c0_i32, %c0_i32_0 : i32, i32
  }
  func.func @transform_21(%arg0: i32) -> (i32, i32) {
    %c0_i32 = arith.constant 0 : i32
    %c0_i32_0 = arith.constant 0 : i32
    %c0_i32_1 = arith.constant 0 : i32
    return %c0_i32, %c0_i32_0 : i32, i32
  }
  func.func @transform_22(%arg0: i32) -> (i32, i32) {
    %c0_i32 = arith.constant 0 : i32
    %c0_i32_0 = arith.constant 0 : i32
    %c0_i32_1 = arith.constant 0 : i32
    return %c0_i32, %c0_i32_0 : i32, i32
  }
  func.func @transform_23(%arg0: i32) -> (i32, i32) {
    %c0_i32 = arith.constant 0 : i32
    %c0_i32_0 = arith.constant 0 : i32
    %c0_i32_1 = arith.constant 0 : i32
    return %c0_i32, %c0_i32_0 : i32, i32
  }
  func.func @transform_24(%arg0: i32) -> (i32, i32) {
    %c0_i32 = arith.constant 0 : i32
    %c0_i32_0 = arith.constant 0 : i32
    %c0_i32_1 = arith.constant 0 : i32
    return %c0_i32, %c0_i32_0 : i32, i32
  }
  func.func @transform_25(%arg0: i32) -> (i32, i32) {
    %c0_i32 = arith.constant 0 : i32
    %c0_i32_0 = arith.constant 0 : i32
    %c0_i32_1 = arith.constant 0 : i32
    return %c0_i32, %c0_i32_0 : i32, i32
  }
  func.func @transform_26(%arg0: i32) -> (i32, i32) {
    %c0_i32 = arith.constant 0 : i32
    %c0_i32_0 = arith.constant 0 : i32
    %c0_i32_1 = arith.constant 0 : i32
    return %c0_i32, %c0_i32_0 : i32, i32
  }
  func.func @transform_27(%arg0: i32) -> (i32, i32) {
    %c0_i32 = arith.constant 0 : i32
    %c0_i32_0 = arith.constant 0 : i32
    %c0_i32_1 = arith.constant 0 : i32
    return %c0_i32, %c0_i32_0 : i32, i32
  }
  func.func @transform_28(%arg0: i32) -> (i32, i32) {
    %c0_i32 = arith.constant 0 : i32
    %c0_i32_0 = arith.constant 0 : i32
    %c0_i32_1 = arith.constant 0 : i32
    return %c0_i32, %c0_i32_0 : i32, i32
  }
  func.func @transform_29(%arg0: i32) -> (i32, i32) {
    %c0_i32 = arith.constant 0 : i32
    %c0_i32_0 = arith.constant 0 : i32
    %c0_i32_1 = arith.constant 0 : i32
    return %c0_i32, %c0_i32_0 : i32, i32
  }
  func.func @transform_30(%arg0: i32) -> (i32, i32) {
    %c0_i32 = arith.constant 0 : i32
    %c0_i32_0 = arith.constant 0 : i32
    %c0_i32_1 = arith.constant 0 : i32
    return %c0_i32, %c0_i32_0 : i32, i32
  }
  func.func @transform_31(%arg0: i32) -> (i32, i32) {
    %c0_i32 = arith.constant 0 : i32
    %c0_i32_0 = arith.constant 0 : i32
    %c0_i32_1 = arith.constant 0 : i32
    return %c0_i32, %c0_i32_0 : i32, i32
  }
  func.func @transform_32(%arg0: i32) -> (i32, i32) {
    %c0_i32 = arith.constant 0 : i32
    %c0_i32_0 = arith.constant 0 : i32
    %c0_i32_1 = arith.constant 0 : i32
    return %c0_i32, %c0_i32_0 : i32, i32
  }
  func.func @transform_33(%arg0: i32) -> (i32, i32) {
    %c0_i32 = arith.constant 0 : i32
    %c0_i32_0 = arith.constant 0 : i32
    %c0_i32_1 = arith.constant 0 : i32
    return %c0_i32, %c0_i32_0 : i32, i32
  }
  func.func @transform_34(%arg0: i32) -> (i32, i32) {
    %c0_i32 = arith.constant 0 : i32
    %c0_i32_0 = arith.constant 0 : i32
    %c0_i32_1 = arith.constant 0 : i32
    return %c0_i32, %c0_i32_0 : i32, i32
  }
  func.func @transform_35(%arg0: i32) -> (i32, i32) {
    %c0_i32 = arith.constant 0 : i32
    %c0_i32_0 = arith.constant 0 : i32
    %c0_i32_1 = arith.constant 0 : i32
    return %c0_i32, %c0_i32_0 : i32, i32
  }
  func.func @transform_36(%arg0: i32) -> (i32, i32) {
    %c0_i32 = arith.constant 0 : i32
    %c0_i32_0 = arith.constant 0 : i32
    %c0_i32_1 = arith.constant 0 : i32
    return %c0_i32, %c0_i32_0 : i32, i32
  }
  func.func @transform_37(%arg0: i32) -> (i32, i32) {
    %c0_i32 = arith.constant 0 : i32
    %c0_i32_0 = arith.constant 0 : i32
    %c0_i32_1 = arith.constant 0 : i32
    return %c0_i32, %c0_i32_0 : i32, i32
  }
  func.func @transform_38(%arg0: i32) -> (i32, i32) {
    %c0_i32 = arith.constant 0 : i32
    %c0_i32_0 = arith.constant 0 : i32
    %c0_i32_1 = arith.constant 0 : i32
    return %c0_i32, %c0_i32_0 : i32, i32
  }
  func.func @transform_39(%arg0: i32) -> (i32, i32) {
    %c0_i32 = arith.constant 0 : i32
    %c0_i32_0 = arith.constant 0 : i32
    %c0_i32_1 = arith.constant 0 : i32
    return %c0_i32, %c0_i32_0 : i32, i32
  }
  func.func @transform_40(%arg0: i32) -> (i32, i32) {
    %c0_i32 = arith.constant 0 : i32
    %c0_i32_0 = arith.constant 0 : i32
    %c0_i32_1 = arith.constant 0 : i32
    return %c0_i32, %c0_i32_0 : i32, i32
  }
  func.func @transform_41(%arg0: i32) -> (i32, i32) {
    %c0_i32 = arith.constant 0 : i32
    %c0_i32_0 = arith.constant 0 : i32
    %c0_i32_1 = arith.constant 0 : i32
    return %c0_i32, %c0_i32_0 : i32, i32
  }
  func.func @transform_42(%arg0: i32) -> (i32, i32) {
    %c0_i32 = arith.constant 0 : i32
    %c0_i32_0 = arith.constant 0 : i32
    %c0_i32_1 = arith.constant 0 : i32
    return %c0_i32, %c0_i32_0 : i32, i32
  }
  func.func @transform_43(%arg0: i32) -> (i32, i32) {
    %c0_i32 = arith.constant 0 : i32
    %c0_i32_0 = arith.constant 0 : i32
    %c0_i32_1 = arith.constant 0 : i32
    return %c0_i32, %c0_i32_0 : i32, i32
  }
  func.func @transform_44(%arg0: i32) -> (i32, i32) {
    %c0_i32 = arith.constant 0 : i32
    %c0_i32_0 = arith.constant 0 : i32
    %c0_i32_1 = arith.constant 0 : i32
    return %c0_i32, %c0_i32_0 : i32, i32
  }
  func.func @transform_45(%arg0: i32) -> (i32, i32, i32) {
    %c0_i32 = arith.constant 0 : i32
    %c0_i32_0 = arith.constant 0 : i32
    %c0_i32_1 = arith.constant 0 : i32
    return %arg0, %c0_i32, %c0_i32_0 : i32, i32, i32
  }
}

</mosaic_0001>

<llo_original>
// kernel: unresolved_bert_forward.4
$region0: #{unresolved_bert_forward.4}
  #allocation0 [shape = 'u32[]', space=smem, size = 0x4, offset = 0x4, fixed_abs, tag = 'smem constant byte address 0x4 - core index']
  #allocation1 [shape = 'u32[144,128]{1,0:T(1,128)}', space=vmem, size = 0x12000, scoped, tag = 'internal scratch']
  %s0 = inlined_call_operand.vmem [shape: f32[16,64], index: 0, kind: input, shape index: {}]
  %s1 = inlined_call_operand.vmem [shape: bf16[64,32], index: 1, kind: input, shape index: {}]
  %s2 = inlined_call_operand.vmem [shape: f32[1,32], index: 2, kind: input, shape index: {}]
  %s3 = inlined_call_operand.vmem [shape: bf16[16,32], index: 3, kind: output, shape index: {}]
  %s4 = sld [smem:[#allocation0]]
  $region22: #{unresolved_bert_forward.4} parent=0
    _
  %s6 = ssub.s32 1, %s4
  %s7 = scalar_select 0, %s6, %s4
  // Predicated region
  $region2: #{unresolved_bert_forward.4} parent=0 // pred_check
    _
  $region3: #{unresolved_bert_forward.4} parent=0 // pred_check_branch
    %9 = sbr.rel (0) target = $region5
  $region4: #{unresolved_bert_forward.4} parent=0 // pred_region
    _
  $region5: #{unresolved_bert_forward.4} parent=0 // pred_fallthru
    _
  // Predicated region
  $region6: #{unresolved_bert_forward.4} parent=0 // pred_check
    _
  $region7: #{unresolved_bert_forward.4} parent=0 // pred_check_branch
    %11 = sbr.rel (0) target = $region9
  $region8: #{unresolved_bert_forward.4} parent=0 // pred_region
    _
  $region9: #{unresolved_bert_forward.4} parent=0 // pred_fallthru
    _
  // Predicated region
  $region10: #{unresolved_bert_forward.4} parent=0 // pred_check
    _
  $region11: #{unresolved_bert_forward.4} parent=0 // pred_check_branch
    %13 = sbr.rel (0) target = $region13
  $region12: #{unresolved_bert_forward.4} parent=0 // pred_region
    _
  $region13: #{unresolved_bert_forward.4} parent=0 // pred_fallthru
    _
  %v15 = vld [vmem:[%s0] sm:$0xff]
  %v16 = vld [vmem:[%s0 + $0x8] sm:$0xff]
  %v17 = vld [vmem:[%s1] sm:$0xf]
  %v18 = vld [vmem:[%s1 + $0x4] sm:$0xf]
  %v19 = vld [vmem:[%s1 + $0x8] sm:$0xf]
  %v20 = vld [vmem:[%s1 + $0xc] sm:$0xf]
  %v21 = vld [vmem:[%s1 + $0x10] sm:$0xf]
  %v22 = vld [vmem:[%s1 + $0x14] sm:$0xf]
  %v23 = vld [vmem:[%s1 + $0x18] sm:$0xf]
  %v24 = vld [vmem:[%s1 + $0x1c] sm:$0xf]
  %v25 = vld [vmem:[%s2] sm:$0x1]
  %v26 = vpack.c.bf16 %v16, %v15
  %v28 = vlaneseq
  %v29 = vshrl.u32 %v28, 7
  %v30 = vsub.s32 0, %v29
  %v31 = vrot.slane %v25, %v30
  %v41 = vunpack.c.l.b16 %v17
  %v42 = vunpack.c.l.b16 %v18
  %v43 = vunpack.c.l.b16 %v19
  %v44 = vunpack.c.l.b16 %v20
  %v45 = vunpack.c.l.b16 %v21
  %v46 = vunpack.c.l.b16 %v22
  %v47 = vunpack.c.l.b16 %v23
  %v48 = vunpack.c.l.b16 %v24
  %v49 = vpack.c.b16 %v42, %v41
  %v50 = vpack.c.b16 %v44, %v43
  %v51 = vpack.c.b16 %v46, %v45
  %v52 = vpack.c.b16 %v48, %v47
  %vm57 = vcmask 523264
  %v59 = vsel %vm57, %v26, 0
  %61 = vmatprep.subr.bf16.mxu0 0
  %62 = vmatpush1.bf16.msra.mxu0 0
  %63 = vmatprep.subr.bf16.mxu0 0
  %64 = vmatpush1.bf16.msra.mxu0 0
  %65 = vmatprep.subr.bf16.mxu0 0
  %66 = vmatpush1.bf16.msra.mxu0 0
  %67 = vmatprep.subr.bf16.mxu0 0
  %68 = vmatpush1.bf16.msra.mxu0 0
  %69 = vmatprep.subr.bf16.mxu0 0
  %70 = vmatpush1.bf16.msra.mxu0 %v52
  %71 = vmatprep.subr.bf16.mxu0 0
  %72 = vmatpush1.bf16.msra.mxu0 %v51
  %73 = vmatprep.subr.bf16.mxu0 0
  %74 = vmatpush1.bf16.msra.mxu0 %v50
  %75 = vmatprep.subr.bf16.mxu0 0
  %76 = vmatpush1.bf16.msra.mxu0 %v49
  %77 = vmatprep.subr.bf16.mxu0 0
  %78 = vmatpush2.bf16.msra.mxu0 0
  %79 = vmatprep.subr.bf16.mxu0 0
  %80 = vmatpush2.bf16.msra.mxu0 0
  %81 = vmatprep.subr.bf16.mxu0 0
  %82 = vmatpush2.bf16.msra.mxu0 0
  %83 = vmatprep.subr.bf16.mxu0 0
  %84 = vmatpush2.bf16.msra.mxu0 0
  %85 = vmatprep.subr.bf16.mxu0 0
  %86 = vmatpush2.bf16.msra.mxu0 0
  %87 = vmatprep.subr.bf16.mxu0 0
  %88 = vmatpush2.bf16.msra.mxu0 0
  %89 = vmatprep.subr.bf16.mxu0 0
  %90 = vmatpush2.bf16.msra.mxu0 0
  %91 = vmatprep.subr.bf16.mxu0 0
  %92 = vmatpush2.bf16.msra.mxu0 0
  %93 = vmatprep.mubr.bf16.mxu0 0
  %94 = vmatmul.mubr.bf16.gmra.mxu0 %v59
  %v95 = vpop.f32.mrf.mxu0
  %v96 = vadd.f32 %v31, %v95
  %v97 = vpop.f32.mrf.mxu0
  %v98 = vpop.f32.mrf.mxu0
  %v99 = vadd.f32 %v31, %v98
  %v100 = vpop.f32.mrf.mxu0
  %101 = vdwg.mxu0
  %v102 = vpack.c.bf16 %v99, %v96
  %v104 = vunpack.c.l.b16 %v102
  %v105 = vunpack.c.h.b16 %v102
  %v106 = vpack.c.b16 %v104, %v104
  %v107 = vpack.c.b16 %v105, %v105
  %vm110 = vcmask 257024
  %111 = vst.msk [vmem:[%s3] sm:$0xf] %vm110, %v106
  %112 = vst.msk [vmem:[%s3 + $0x4] sm:$0xf] %vm110, %v107
  // Predicated region
  $region14: #{unresolved_bert_forward.4} parent=0 // pred_check
    _
  $region15: #{unresolved_bert_forward.4} parent=0 // pred_check_branch
    %114 = sbr.rel (0) target = $region17
  $region16: #{unresolved_bert_forward.4} parent=0 // pred_region
    _
  $region17: #{unresolved_bert_forward.4} parent=0 // pred_fallthru
    _
  // Predicated region
  $region18: #{unresolved_bert_forward.4} parent=0 // pred_check
    _
  $region19: #{unresolved_bert_forward.4} parent=0 // pred_check_branch
    %116 = sbr.rel (0) target = $region21
  $region20: #{unresolved_bert_forward.4} parent=0 // pred_region
    _
  $region21: #{unresolved_bert_forward.4} parent=0 // pred_fallthru
    _

// kernel: unresolved_bert_forward.6
$region0: #{unresolved_bert_forward.6}
  #allocation0 [shape = 'u32[]', space=smem, size = 0x4, offset = 0x4, fixed_abs, tag = 'smem constant byte address 0x4 - core index']
  #allocation1 [shape = 'u32[144,128]{1,0:T(1,128)}', space=vmem, size = 0x12000, scoped, tag = 'internal scratch']
  #allocation2 [shape = 'f32[8,512]{1,0:T(8,128)}', space=vmem, size = 0x4000, scoped, tag = 'scratch operand']
  %s0 = inlined_call_operand.vmem [shape: bf16[2,8,32], index: 0, kind: input, shape index: {}]
  %s1 = inlined_call_operand.vmem [shape: bf16[32,1536], index: 1, kind: input, shape index: {}]
  %s2 = inlined_call_operand.vmem [shape: f32[1,1536], index: 2, kind: input, shape index: {}]
  %s3 = inlined_call_operand.vmem [shape: bf16[512,32], index: 3, kind: input, shape index: {}]
  %s4 = inlined_call_operand.vmem [shape: f32[1,32], index: 4, kind: input, shape index: {}]
  %s5 = inlined_call_operand.vmem [shape: f32[1,32], index: 5, kind: input, shape index: {}]
  %s6 = inlined_call_operand.vmem [shape: f32[1,32], index: 6, kind: input, shape index: {}]
  %s7 = inlined_call_operand.vmem [shape: bf16[32,128], index: 7, kind: input, shape index: {}]
  %s8 = inlined_call_operand.vmem [shape: f32[1,128], index: 8, kind: input, shape index: {}]
  %s9 = inlined_call_operand.vmem [shape: bf16[128,32], index: 9, kind: input, shape index: {}]
  %s10 = inlined_call_operand.vmem [shape: f32[1,32], index: 10, kind: input, shape index: {}]
  %s11 = inlined_call_operand.vmem [shape: f32[1,32], index: 11, kind: input, shape index: {}]
  %s12 = inlined_call_operand.vmem [shape: f32[1,32], index: 12, kind: input, shape index: {}]
  %s13 = inlined_call_operand.vmem [shape: f32[1,32], index: 13, kind: input, shape index: {}]
  %s14 = inlined_call_operand.vmem [shape: f32[1,32], index: 14, kind: input, shape index: {}]
  %s15 = inlined_call_operand.vmem [shape: bf16[2,8,32], index: 15, kind: output, shape index: {}]
  %s16 = sld [smem:[#allocation0]]
  $region93: #{unresolved_bert_forward.6} parent=0
    _
  %s18 = ssub.s32 1, %s16
  %s19 = scalar_select 0, %s18, %s16
  loop: start=0, step=1, limit=4
  $region2: #{unresolved_bert_forward.6} parent=0 // loop_pre_header
    _
  $region3: #{unresolved_bert_forward.6} parent=0 // loop_header
    %s21 = sphi 0, %s25
    %p22 = scmp.ge.s32.totalorder %s21, 4
    %s31 = sphi 0, %s33
    %s34 = sphi 0, %s31
    %s35 = sphi 0, %s34
    %s51 = sphi 0, %s35
    %s55 = sphi 0, %s55
    %s57 = sphi 0, %s55
    %s58 = sphi 0, %s57
    %s72 = sphi 0, %s58
    %s76 = sphi 0, %s76
    %s78 = sphi 0, %s76
    %s79 = sphi 0, %s78
    %s93 = sphi 0, %s79
    %s97 = sphi 0, %s97
    %s99 = sphi 0, %s97
    %s100 = sphi 0, %s99
    %s114 = sphi 0, %s100
    %s118 = sphi 0, %s118
    %s120 = sphi 0, %s118
    %s121 = sphi 0, %s120
    %s135 = sphi 0, %s121
    %s139 = sphi 0, %s139
    %s141 = sphi 0, %s139
    %s142 = sphi 0, %s141
    %s156 = sphi 0, %s142
    %s160 = sphi 0, %s160
    %s162 = sphi 0, %s160
    %s163 = sphi 0, %s162
    %s177 = sphi 0, %s163
    %s181 = sphi 0, %s181
    %s183 = sphi 0, %s181
    %s184 = sphi 0, %s183
    %s198 = sphi 0, %s184
    %s202 = sphi 0, %s202
    %s204 = sphi 0, %s202
    %s205 = sphi 0, %s204
    %s219 = sphi 0, %s205
    %s223 = sphi 0, %s223
    %s225 = sphi 0, %s223
    %s226 = sphi 0, %s225
    %s240 = sphi 0, %s226
    %s244 = sphi 0, %s244
    %s246 = sphi 0, %s244
    %s247 = sphi 0, %s246
    %s261 = sphi 0, %s247
    %s265 = sphi 0, %s265
    %s267 = sphi 0, %s265
    %s268 = sphi 0, %s267
    %s282 = sphi 0, %s268
    %s286 = sphi 0, %s286
    %s288 = sphi 0, %s286
    %s289 = sphi 0, %s288
    %s303 = sphi 0, %s289
    %s307 = sphi 0, %s307
    %s309 = sphi 0, %s307
    %s310 = sphi 0, %s309
    %s324 = sphi 0, %s310
    %s328 = sphi 0, %s328
    %s330 = sphi 0, %s328
    %s331 = sphi 0, %s330
    %s345 = sphi 0, %s331
    %s351 = sphi 0, %s353
    %s354 = sphi 0, %s351
    %s355 = sphi 0, %s354
    %s371 = sphi 0, %s355
  $region4: #{unresolved_bert_forward.6} parent=0 // loop_header_branch
    %24 = sbr.rel (%p22) target = $region8
  $region5: #{unresolved_bert_forward.6} parent=0 // loop_body
    %s26 = ssub.s32 %s21, 1
    %s27 = ssub.s32 %s21, 2
    %s28 = sadd.s32 %s21, 1
    %s29 = ssub.s32 %s21, %s28
    %p30 = scmp.eq.s32.totalorder %s29, 0
    %s32 = sadd.s32 %s31, 1
    %s33 = scalar_select %p30, %s31, %s32
    %p36 = pneg %p30
    %p37 = scmp.eq.s32.totalorder %s21, 1
    %p38 = por %p36, %p37
    %p39 = scmp.ne.s32.totalorder %s31, %s34
    %p40 = scmp.eq.s32.totalorder %s21, 0
    %p41 = por %p39, %p40
    %p42 = scmp.ne.s32.totalorder %s31, %s34
    %p43 = scmp.eq.s32.totalorder %s26, 1
    %p44 = por %p42, %p43
    %p45 = scmp.ne.s32.totalorder %s34, %s35
    %p46 = scmp.eq.s32.totalorder %s26, 0
    %p47 = por %p45, %p46
    %p48 = scmp.ne.s32.totalorder %s34, %s35
    %p49 = scmp.eq.s32.totalorder %s27, 1
    %p50 = por %p48, %p49
    %p52 = scmp.ne.s32.totalorder %s35, %s51
    %p53 = scmp.eq.s32.totalorder %s27, 0
    %p54 = por %p52, %p53
    %s56 = sadd.s32 %s55, 1
    %p59 = scmp.eq.s32.totalorder %s21, 1
    %p60 = scmp.ne.s32.totalorder %s55, %s57
    %p61 = scmp.eq.s32.totalorder %s21, 0
    %p62 = por %p60, %p61
    %p63 = scmp.ne.s32.totalorder %s55, %s57
    %p64 = scmp.eq.s32.totalorder %s26, 1
    %p65 = por %p63, %p64
    %p66 = scmp.ne.s32.totalorder %s57, %s58
    %p67 = scmp.eq.s32.totalorder %s26, 0
    %p68 = por %p66, %p67
    %p69 = scmp.ne.s32.totalorder %s57, %s58
    %p70 = scmp.eq.s32.totalorder %s27, 1
    %p71 = por %p69, %p70
    %p73 = scmp.ne.s32.totalorder %s58, %s72
    %p74 = scmp.eq.s32.totalorder %s27, 0
    %p75 = por %p73, %p74
    %s77 = sadd.s32 %s76, 1
    %p80 = scmp.eq.s32.totalorder %s21, 1
    %p81 = scmp.ne.s32.totalorder %s76, %s78
    %p82 = scmp.eq.s32.totalorder %s21, 0
    %p83 = por %p81, %p82
    %p84 = scmp.ne.s32.totalorder %s76, %s78
    %p85 = scmp.eq.s32.totalorder %s26, 1
    %p86 = por %p84, %p85
    %p87 = scmp.ne.s32.totalorder %s78, %s79
    %p88 = scmp.eq.s32.totalorder %s26, 0
    %p89 = por %p87, %p88
    %p90 = scmp.ne.s32.totalorder %s78, %s79
    %p91 = scmp.eq.s32.totalorder %s27, 1
    %p92 = por %p90, %p91
    %p94 = scmp.ne.s32.totalorder %s79, %s93
    %p95 = scmp.eq.s32.totalorder %s27, 0
    %p96 = por %p94, %p95
    %s98 = sadd.s32 %s97, 1
    %p101 = scmp.eq.s32.totalorder %s21, 1
    %p102 = scmp.ne.s32.totalorder %s97, %s99
    %p103 = scmp.eq.s32.totalorder %s21, 0
    %p104 = por %p102, %p103
    %p105 = scmp.ne.s32.totalorder %s97, %s99
    %p106 = scmp.eq.s32.totalorder %s26, 1
    %p107 = por %p105, %p106
    %p108 = scmp.ne.s32.totalorder %s99, %s100
    %p109 = scmp.eq.s32.totalorder %s26, 0
    %p110 = por %p108, %p109
    %p111 = scmp.ne.s32.totalorder %s99, %s100
    %p112 = scmp.eq.s32.totalorder %s27, 1
    %p113 = por %p111, %p112
    %p115 = scmp.ne.s32.totalorder %s100, %s114
    %p116 = scmp.eq.s32.totalorder %s27, 0
    %p117 = por %p115, %p116
    %s119 = sadd.s32 %s118, 1
    %p122 = scmp.eq.s32.totalorder %s21, 1
    %p123 = scmp.ne.s32.totalorder %s118, %s120
    %p124 = scmp.eq.s32.totalorder %s21, 0
    %p125 = por %p123, %p124
    %p126 = scmp.ne.s32.totalorder %s118, %s120
    %p127 = scmp.eq.s32.totalorder %s26, 1
    %p128 = por %p126, %p127
    %p129 = scmp.ne.s32.totalorder %s120, %s121
    %p130 = scmp.eq.s32.totalorder %s26, 0
    %p131 = por %p129, %p130
    %p132 = scmp.ne.s32.totalorder %s120, %s121
    %p133 = scmp.eq.s32.totalorder %s27, 1
    %p134 = por %p132, %p133
    %p136 = scmp.ne.s32.totalorder %s121, %s135
    %p137 = scmp.eq.s32.totalorder %s27, 0
    %p138 = por %p136, %p137
    %s140 = sadd.s32 %s139, 1
    %p143 = scmp.eq.s32.totalorder %s21, 1
    %p144 = scmp.ne.s32.totalorder %s139, %s141
    %p145 = scmp.eq.s32.totalorder %s21, 0
    %p146 = por %p144, %p145
    %p147 = scmp.ne.s32.totalorder %s139, %s141
    %p148 = scmp.eq.s32.totalorder %s26, 1
    %p149 = por %p147, %p148
    %p150 = scmp.ne.s32.totalorder %s141, %s142
    %p151 = scmp.eq.s32.totalorder %s26, 0
    %p152 = por %p150, %p151
    %p153 = scmp.ne.s32.totalorder %s141, %s142
    %p154 = scmp.eq.s32.totalorder %s27, 1
    %p155 = por %p153, %p154
    %p157 = scmp.ne.s32.totalorder %s142, %s156
    %p158 = scmp.eq.s32.totalorder %s27, 0
    %p159 = por %p157, %p158
    %s161 = sadd.s32 %s160, 1
    %p164 = scmp.eq.s32.totalorder %s21, 1
    %p165 = scmp.ne.s32.totalorder %s160, %s162
    %p166 = scmp.eq.s32.totalorder %s21, 0
    %p167 = por %p165, %p166
    %p168 = scmp.ne.s32.totalorder %s160, %s162
    %p169 = scmp.eq.s32.totalorder %s26, 1
    %p170 = por %p168, %p169
    %p171 = scmp.ne.s32.totalorder %s162, %s163
    %p172 = scmp.eq.s32.totalorder %s26, 0
    %p173 = por %p171, %p172
    %p174 = scmp.ne.s32.totalorder %s162, %s163
    %p175 = scmp.eq.s32.totalorder %s27, 1
    %p176 = por %p174, %p175
    %p178 = scmp.ne.s32.totalorder %s163, %s177
    %p179 = scmp.eq.s32.totalorder %s27, 0
    %p180 = por %p178, %p179
    %s182 = sadd.s32 %s181, 1
    %p185 = scmp.eq.s32.totalorder %s21, 1
    %p186 = scmp.ne.s32.totalorder %s181, %s183
    %p187 = scmp.eq.s32.totalorder %s21, 0
    %p188 = por %p186, %p187
    %p189 = scmp.ne.s32.totalorder %s181, %s183
    %p190 = scmp.eq.s32.totalorder %s26, 1
    %p191 = por %p189, %p190
    %p192 = scmp.ne.s32.totalorder %s183, %s184
    %p193 = scmp.eq.s32.totalorder %s26, 0
    %p194 = por %p192, %p193
    %p195 = scmp.ne.s32.totalorder %s183, %s184
    %p196 = scmp.eq.s32.totalorder %s27, 1
    %p197 = por %p195, %p196
    %p199 = scmp.ne.s32.totalorder %s184, %s198
    %p200 = scmp.eq.s32.totalorder %s27, 0
    %p201 = por %p199, %p200
    %s203 = sadd.s32 %s202, 1
    %p206 = scmp.eq.s32.totalorder %s21, 1
    %p207 = scmp.ne.s32.totalorder %s202, %s204
    %p208 = scmp.eq.s32.totalorder %s21, 0
    %p209 = por %p207, %p208
    %p210 = scmp.ne.s32.totalorder %s202, %s204
    %p211 = scmp.eq.s32.totalorder %s26, 1
    %p212 = por %p210, %p211
    %p213 = scmp.ne.s32.totalorder %s204, %s205
    %p214 = scmp.eq.s32.totalorder %s26, 0
    %p215 = por %p213, %p214
    %p216 = scmp.ne.s32.totalorder %s204, %s205
    %p217 = scmp.eq.s32.totalorder %s27, 1
    %p218 = por %p216, %p217
    %p220 = scmp.ne.s32.totalorder %s205, %s219
    %p221 = scmp.eq.s32.totalorder %s27, 0
    %p222 = por %p220, %p221
    %s224 = sadd.s32 %s223, 1
    %p227 = scmp.eq.s32.totalorder %s21, 1
    %p228 = scmp.ne.s32.totalorder %s223, %s225
    %p229 = scmp.eq.s32.totalorder %s21, 0
    %p230 = por %p228, %p229
    %p231 = scmp.ne.s32.totalorder %s223, %s225
    %p232 = scmp.eq.s32.totalorder %s26, 1
    %p233 = por %p231, %p232
    %p234 = scmp.ne.s32.totalorder %s225, %s226
    %p235 = scmp.eq.s32.totalorder %s26, 0
    %p236 = por %p234, %p235
    %p237 = scmp.ne.s32.totalorder %s225, %s226
    %p238 = scmp.eq.s32.totalorder %s27, 1
    %p239 = por %p237, %p238
    %p241 = scmp.ne.s32.totalorder %s226, %s240
    %p242 = scmp.eq.s32.totalorder %s27, 0
    %p243 = por %p241, %p242
    %s245 = sadd.s32 %s244, 1
    %p248 = scmp.eq.s32.totalorder %s21, 1
    %p249 = scmp.ne.s32.totalorder %s244, %s246
    %p250 = scmp.eq.s32.totalorder %s21, 0
    %p251 = por %p249, %p250
    %p252 = scmp.ne.s32.totalorder %s244, %s246
    %p253 = scmp.eq.s32.totalorder %s26, 1
    %p254 = por %p252, %p253
    %p255 = scmp.ne.s32.totalorder %s246, %s247
    %p256 = scmp.eq.s32.totalorder %s26, 0
    %p257 = por %p255, %p256
    %p258 = scmp.ne.s32.totalorder %s246, %s247
    %p259 = scmp.eq.s32.totalorder %s27, 1
    %p260 = por %p258, %p259
    %p262 = scmp.ne.s32.totalorder %s247, %s261
    %p263 = scmp.eq.s32.totalorder %s27, 0
    %p264 = por %p262, %p263
    %s266 = sadd.s32 %s265, 1
    %p269 = scmp.eq.s32.totalorder %s21, 1
    %p270 = scmp.ne.s32.totalorder %s265, %s267
    %p271 = scmp.eq.s32.totalorder %s21, 0
    %p272 = por %p270, %p271
    %p273 = scmp.ne.s32.totalorder %s265, %s267
    %p274 = scmp.eq.s32.totalorder %s26, 1
    %p275 = por %p273, %p274
    %p276 = scmp.ne.s32.totalorder %s267, %s268
    %p277 = scmp.eq.s32.totalorder %s26, 0
    %p278 = por %p276, %p277
    %p279 = scmp.ne.s32.totalorder %s267, %s268
    %p280 = scmp.eq.s32.totalorder %s27, 1
    %p281 = por %p279, %p280
    %p283 = scmp.ne.s32.totalorder %s268, %s282
    %p284 = scmp.eq.s32.totalorder %s27, 0
    %p285 = por %p283, %p284
    %s287 = sadd.s32 %s286, 1
    %p290 = scmp.eq.s32.totalorder %s21, 1
    %p291 = scmp.ne.s32.totalorder %s286, %s288
    %p292 = scmp.eq.s32.totalorder %s21, 0
    %p293 = por %p291, %p292
    %p294 = scmp.ne.s32.totalorder %s286, %s288
    %p295 = scmp.eq.s32.totalorder %s26, 1
    %p296 = por %p294, %p295
    %p297 = scmp.ne.s32.totalorder %s288, %s289
    %p298 = scmp.eq.s32.totalorder %s26, 0
    %p299 = por %p297, %p298
    %p300 = scmp.ne.s32.totalorder %s288, %s289
    %p301 = scmp.eq.s32.totalorder %s27, 1
    %p302 = por %p300, %p301
    %p304 = scmp.ne.s32.totalorder %s289, %s303
    %p305 = scmp.eq.s32.totalorder %s27, 0
    %p306 = por %p304, %p305
    %s308 = sadd.s32 %s307, 1
    %p311 = scmp.eq.s32.totalorder %s21, 1
    %p312 = scmp.ne.s32.totalorder %s307, %s309
    %p313 = scmp.eq.s32.totalorder %s21, 0
    %p314 = por %p312, %p313
    %p315 = scmp.ne.s32.totalorder %s307, %s309
    %p316 = scmp.eq.s32.totalorder %s26, 1
    %p317 = por %p315, %p316
    %p318 = scmp.ne.s32.totalorder %s309, %s310
    %p319 = scmp.eq.s32.totalorder %s26, 0
    %p320 = por %p318, %p319
    %p321 = scmp.ne.s32.totalorder %s309, %s310
    %p322 = scmp.eq.s32.totalorder %s27, 1
    %p323 = por %p321, %p322
    %p325 = scmp.ne.s32.totalorder %s310, %s324
    %p326 = scmp.eq.s32.totalorder %s27, 0
    %p327 = por %p325, %p326
    %s329 = sadd.s32 %s328, 1
    %p332 = scmp.eq.s32.totalorder %s21, 1
    %p333 = scmp.ne.s32.totalorder %s328, %s330
    %p334 = scmp.eq.s32.totalorder %s21, 0
    %p335 = por %p333, %p334
    %p336 = scmp.ne.s32.totalorder %s328, %s330
    %p337 = scmp.eq.s32.totalorder %s26, 1
    %p338 = por %p336, %p337
    %p339 = scmp.ne.s32.totalorder %s330, %s331
    %p340 = scmp.eq.s32.totalorder %s26, 0
    %p341 = por %p339, %p340
    %p342 = scmp.ne.s32.totalorder %s330, %s331
    %p343 = scmp.eq.s32.totalorder %s27, 1
    %p344 = por %p342, %p343
    %p346 = scmp.ne.s32.totalorder %s331, %s345
    %p347 = scmp.eq.s32.totalorder %s27, 0
    %p348 = por %p346, %p347
    %s349 = ssub.s32 %s21, %s28
    %p350 = scmp.eq.s32.totalorder %s349, 0
    %s352 = sadd.s32 %s351, 1
    %s353 = scalar_select %p350, %s351, %s352
    %p356 = pneg %p350
    %p357 = scmp.eq.s32.totalorder %s21, 1
    %p358 = por %p356, %p357
    %p359 = scmp.ne.s32.totalorder %s351, %s354
    %p360 = scmp.eq.s32.totalorder %s21, 0
    %p361 = por %p359, %p360
    %p362 = scmp.ne.s32.totalorder %s351, %s354
    %p363 = scmp.eq.s32.totalorder %s26, 1
    %p364 = por %p362, %p363
    %p365 = scmp.ne.s32.totalorder %s354, %s355
    %p366 = scmp.eq.s32.totalorder %s26, 0
    %p367 = por %p365, %p366
    %p368 = scmp.ne.s32.totalorder %s354, %s355
    %p369 = scmp.eq.s32.totalorder %s27, 1
    %p370 = por %p368, %p369
    %p372 = scmp.ne.s32.totalorder %s355, %s371
    %p373 = scmp.eq.s32.totalorder %s27, 0
    %p374 = por %p372, %p373
    %p375 = scmp.le.s32.totalorder 1, %s21
    %p376 = scmp.lt.s32.totalorder %s21, 3
    %p377 = pnand %p375, %p376
    %p378 = pneg %p377
    // Predicated region
    $region9: #{unresolved_bert_forward.6} parent=5 // pred_check
      _
    $region10: #{unresolved_bert_forward.6} parent=5 // pred_check_branch
      %380 = sbr.rel (%p377) target = $region12
    $region11: #{unresolved_bert_forward.6} parent=5 // pred_region
      %s381 = ssub.s32 %s21, 1
      // Predicated region
      $region13: #{unresolved_bert_forward.6} parent=11 // pred_check
        %p382 = pneg %p68
      $region14: #{unresolved_bert_forward.6} parent=11 // pred_check_branch
        %384 = sbr.rel (%p382) target = $region16
      $region15: #{unresolved_bert_forward.6} parent=11 // pred_region
        _
      $region16: #{unresolved_bert_forward.6} parent=11 // pred_fallthru
        _
      // Predicated region
      $region17: #{unresolved_bert_forward.6} parent=11 // pred_check
        %p385 = pneg %p89
      $region18: #{unresolved_bert_forward.6} parent=11 // pred_check_branch
        %387 = sbr.rel (%p385) target = $region20
      $region19: #{unresolved_bert_forward.6} parent=11 // pred_region
        _
      $region20: #{unresolved_bert_forward.6} parent=11 // pred_fallthru
        _
      // Predicated region
      $region21: #{unresolved_bert_forward.6} parent=11 // pred_check
        %p388 = pneg %p110
      $region22: #{unresolved_bert_forward.6} parent=11 // pred_check_branch
        %390 = sbr.rel (%p388) target = $region24
      $region23: #{unresolved_bert_forward.6} parent=11 // pred_region
        _
      $region24: #{unresolved_bert_forward.6} parent=11 // pred_fallthru
        _
      // Predicated region
      $region25: #{unresolved_bert_forward.6} parent=11 // pred_check
        %p391 = pneg %p131
      $region26: #{unresolved_bert_forward.6} parent=11 // pred_check_branch
        %393 = sbr.rel (%p391) target = $region28
      $region27: #{unresolved_bert_forward.6} parent=11 // pred_region
        _
      $region28: #{unresolved_bert_forward.6} parent=11 // pred_fallthru
        _
      // Predicated region
      $region29: #{unresolved_bert_forward.6} parent=11 // pred_check
        %p394 = pneg %p152
      $region30: #{unresolved_bert_forward.6} parent=11 // pred_check_branch
        %396 = sbr.rel (%p394) target = $region32
      $region31: #{unresolved_bert_forward.6} parent=11 // pred_region
        _
      $region32: #{unresolved_bert_forward.6} parent=11 // pred_fallthru
        _
      // Predicated region
      $region33: #{unresolved_bert_forward.6} parent=11 // pred_check
        %p397 = pneg %p173
      $region34: #{unresolved_bert_forward.6} parent=11 // pred_check_branch
        %399 = sbr.rel (%p397) target = $region36
      $region35: #{unresolved_bert_forward.6} parent=11 // pred_region
        _
      $region36: #{unresolved_bert_forward.6} parent=11 // pred_fallthru
        _
      // Predicated region
      $region37: #{unresolved_bert_forward.6} parent=11 // pred_check
        %p400 = pneg %p194
      $region38: #{unresolved_bert_forward.6} parent=11 // pred_check_branch
        %402 = sbr.rel (%p400) target = $region40
      $region39: #{unresolved_bert_forward.6} parent=11 // pred_region
        _
      $region40: #{unresolved_bert_forward.6} parent=11 // pred_fallthru
        _
      // Predicated region
      $region41: #{unresolved_bert_forward.6} parent=11 // pred_check
        %p403 = pneg %p215
      $region42: #{unresolved_bert_forward.6} parent=11 // pred_check_branch
        %405 = sbr.rel (%p403) target = $region44
      $region43: #{unresolved_bert_forward.6} parent=11 // pred_region
        _
      $region44: #{unresolved_bert_forward.6} parent=11 // pred_fallthru
        _
      // Predicated region
      $region45: #{unresolved_bert_forward.6} parent=11 // pred_check
        %p406 = pneg %p236
      $region46: #{unresolved_bert_forward.6} parent=11 // pred_check_branch
        %408 = sbr.rel (%p406) target = $region48
      $region47: #{unresolved_bert_forward.6} parent=11 // pred_region
        _
      $region48: #{unresolved_bert_forward.6} parent=11 // pred_fallthru
        _
      // Predicated region
      $region49: #{unresolved_bert_forward.6} parent=11 // pred_check
        %p409 = pneg %p257
      $region50: #{unresolved_bert_forward.6} parent=11 // pred_check_branch
        %411 = sbr.rel (%p409) target = $region52
      $region51: #{unresolved_bert_forward.6} parent=11 // pred_region
        _
      $region52: #{unresolved_bert_forward.6} parent=11 // pred_fallthru
        _
      // Predicated region
      $region53: #{unresolved_bert_forward.6} parent=11 // pred_check
        %p412 = pneg %p278
      $region54: #{unresolved_bert_forward.6} parent=11 // pred_check_branch
        %414 = sbr.rel (%p412) target = $region56
      $region55: #{unresolved_bert_forward.6} parent=11 // pred_region
        _
      $region56: #{unresolved_bert_forward.6} parent=11 // pred_fallthru
        _
      // Predicated region
      $region57: #{unresolved_bert_forward.6} parent=11 // pred_check
        %p415 = pneg %p299
      $region58: #{unresolved_bert_forward.6} parent=11 // pred_check_branch
        %417 = sbr.rel (%p415) target = $region60
      $region59: #{unresolved_bert_forward.6} parent=11 // pred_region
        _
      $region60: #{unresolved_bert_forward.6} parent=11 // pred_fallthru
        _
      // Predicated region
      $region61: #{unresolved_bert_forward.6} parent=11 // pred_check
        %p418 = pneg %p320
      $region62: #{unresolved_bert_forward.6} parent=11 // pred_check_branch
        %420 = sbr.rel (%p418) target = $region64
      $region63: #{unresolved_bert_forward.6} parent=11 // pred_region
        _
      $region64: #{unresolved_bert_forward.6} parent=11 // pred_fallthru
        _
      // Predicated region
      $region65: #{unresolved_bert_forward.6} parent=11 // pred_check
        %p421 = pneg %p341
      $region66: #{unresolved_bert_forward.6} parent=11 // pred_check_branch
        %423 = sbr.rel (%p421) target = $region68
      $region67: #{unresolved_bert_forward.6} parent=11 // pred_region
        _
      $region68: #{unresolved_bert_forward.6} parent=11 // pred_fallthru
        _
    $region12: #{unresolved_bert_forward.6} parent=5 // pred_fallthru
      _
    %p424 = scmp.lt.s32.totalorder %s21, 2
    // Predicated region
    $region69: #{unresolved_bert_forward.6} parent=5 // pred_check
      %p425 = pneg %p424
    $region70: #{unresolved_bert_forward.6} parent=5 // pred_check_branch
      %427 = sbr.rel (%p425) target = $region72
    $region71: #{unresolved_bert_forward.6} parent=5 // pred_region
      // Predicated region
      $region73: #{unresolved_bert_forward.6} parent=71 // pred_check
        %p428 = pneg %p41
      $region74: #{unresolved_bert_forward.6} parent=71 // pred_check_branch
        %430 = sbr.rel (%p428) target = $region76
      $region75: #{unresolved_bert_forward.6} parent=71 // pred_region
        %p431 = scmp.lt.s32.totalorder %s21, 1
        %s432 = scalar_select %p431, %s21, 1
        %s433 = smul.addr %s432, 4
        %s434 = scalar_lea.vmem %s0, %s433
      $region76: #{unresolved_bert_forward.6} parent=71 // pred_fallthru
        _
    $region72: #{unresolved_bert_forward.6} parent=5 // pred_fallthru
      _
    %p435 = scmp.le.s32.totalorder 1, %s21
    %p436 = scmp.lt.s32.totalorder %s21, 3
    %p437 = pnand %p435, %p436
    %p438 = pneg %p437
    // Predicated region
    $region77: #{unresolved_bert_forward.6} parent=5 // pred_check
      _
    $region78: #{unresolved_bert_forward.6} parent=5 // pred_check_branch
      %440 = sbr.rel (%p437) target = $region80
    $region79: #{unresolved_bert_forward.6} parent=5 // pred_region
      %s441 = ssub.s32 %s21, 1
      %p442 = scmp.lt.s32.totalorder %s26, 1
      %s443 = scalar_select %p442, %s26, 1
      %s444 = smul.addr %s443, 4
      %s445 = scalar_lea.vmem %s0, %s444
      %p446 = pneg %p47
      %p447 = pneg %p44
      %p448 = pneg %p68
      %p449 = pneg %p65
      %p450 = pneg %p89
      %p451 = pneg %p86
      %p452 = pneg %p110
      %p453 = pneg %p107
      %p454 = pneg %p131
      %p455 = pneg %p128
      %p456 = pneg %p152
      %p457 = pneg %p149
      %p458 = pneg %p173
      %p459 = pneg %p170
      %p460 = pneg %p194
      %p461 = pneg %p191
      %p462 = pneg %p215
      %p463 = pneg %p212
      %p464 = pneg %p236
      %p465 = pneg %p233
      %p466 = pneg %p257
      %p467 = pneg %p254
      %p468 = pneg %p278
      %p469 = pneg %p275
      %p470 = pneg %p299
      %p471 = pneg %p296
      %p472 = pneg %p320
      %p473 = pneg %p317
      %p474 = pneg %p341
      %p475 = pneg %p338
      %p476 = pneg %p367
      %p477 = pneg %p364
      %p478 = scmp.lt.s32.totalorder %s26, 1
      %s479 = scalar_select %p478, %s26, 1
      %s480 = smul.addr %s479, 4
      %s481 = scalar_lea.vmem %s15, %s480
      %p482 = scmp.lt.s32.totalorder %s26, 1
      %s483 = scalar_select %p482, %s26, 1
      %s484 = smul.addr %s483, 4
      %s485 = scalar_lea.vmem %s0, %s484
      %p486 = scmp.lt.s32.totalorder %s26, 1
      %s487 = scalar_select %p486, %s26, 1
      %s488 = smul.addr %s487, 4
      %s489 = scalar_lea.vmem %s15, %s488
      %v491 = vld [vmem:[%s485] sm:$0xf]
      %v492 = vunpack.c.l.bf16 %v491
      %v493 = vld [vmem:[%s1] sm:$0xff]
      %v494 = vld [vmem:[%s1 + $0x8] sm:$0xff]
      %v495 = vld [vmem:[%s1 + $0x10] sm:$0xff]
      %v496 = vld [vmem:[%s1 + $0x18] sm:$0xff]
      %v497 = vld [vmem:[%s1 + $0x20] sm:$0xff]
      %v498 = vld [vmem:[%s1 + $0x28] sm:$0xff]
      %v499 = vld [vmem:[%s1 + $0x30] sm:$0xff]
      %v500 = vld [vmem:[%s1 + $0x38] sm:$0xff]
      %v501 = vld [vmem:[%s1 + $0x40] sm:$0xff]
      %v502 = vld [vmem:[%s1 + $0x48] sm:$0xff]
      %v503 = vld [vmem:[%s1 + $0x50] sm:$0xff]
      %v504 = vld [vmem:[%s1 + $0x58] sm:$0xff]
      %v505 = vld [vmem:[%s1 + $0x60] sm:$0xff]
      %v506 = vld [vmem:[%s1 + $0x68] sm:$0xff]
      %v507 = vld [vmem:[%s1 + $0x70] sm:$0xff]
      %v508 = vld [vmem:[%s1 + $0x78] sm:$0xff]
      %v509 = vld [vmem:[%s1 + $0x80] sm:$0xff]
      %v510 = vld [vmem:[%s1 + $0x88] sm:$0xff]
      %v511 = vld [vmem:[%s1 + $0x90] sm:$0xff]
      %v512 = vld [vmem:[%s1 + $0x98] sm:$0xff]
      %v513 = vld [vmem:[%s1 + $0xa0] sm:$0xff]
      %v514 = vld [vmem:[%s1 + $0xa8] sm:$0xff]
      %v515 = vld [vmem:[%s1 + $0xb0] sm:$0xff]
      %v516 = vld [vmem:[%s1 + $0xb8] sm:$0xff]
      %v517 = vld [vmem:[%s2] sm:$0xff]
      %v518 = vld [vmem:[%s2 + $0x8] sm:$0xf]
      %v521 = vlaneseq
      %v522 = vshrl.u32 %v521, 7
      %v523 = vsub.s32 0, %v522
      %v524 = vrot.slane %v517, %v523
      %v525 = vlaneseq
      %v526 = vshrl.u32 %v525, 7
      %v527 = vsub.s32 1, %v526
      %v528 = vrot.slane %v517, %v527
      %v529 = vlaneseq
      %v530 = vshrl.u32 %v529, 7
      %v531 = vsub.s32 2, %v530
      %v532 = vrot.slane %v517, %v531
      %v533 = vlaneseq
      %v534 = vshrl.u32 %v533, 7
      %v535 = vsub.s32 3, %v534
      %v536 = vrot.slane %v517, %v535
      %v537 = vlaneseq
      %v538 = vshrl.u32 %v537, 7
      %v539 = vsub.s32 4, %v538
      %v540 = vrot.slane %v517, %v539
      %v541 = vlaneseq
      %v542 = vshrl.u32 %v541, 7
      %v543 = vsub.s32 5, %v542
      %v544 = vrot.slane %v517, %v543
      %v545 = vlaneseq
      %v546 = vshrl.u32 %v545, 7
      %v547 = vsub.s32 6, %v546
      %v548 = vrot.slane %v517, %v547
      %v549 = vlaneseq
      %v550 = vshrl.u32 %v549, 7
      %v551 = vsub.s32 7, %v550
      %v552 = vrot.slane %v517, %v551
      %v553 = vlaneseq
      %v554 = vshrl.u32 %v553, 7
      %v555 = vsub.s32 0, %v554
      %v556 = vrot.slane %v518, %v555
      %v557 = vlaneseq
      %v558 = vshrl.u32 %v557, 7
      %v559 = vsub.s32 1, %v558
      %v560 = vrot.slane %v518, %v559
      %v561 = vlaneseq
      %v562 = vshrl.u32 %v561, 7
      %v563 = vsub.s32 2, %v562
      %v564 = vrot.slane %v518, %v563
      %v565 = vlaneseq
      %v566 = vshrl.u32 %v565, 7
      %v567 = vsub.s32 3, %v566
      %v568 = vrot.slane %v518, %v567
      %v605 = vunpack.c.l.b16 %v493
      %v606 = vunpack.c.h.b16 %v493
      %v607 = vunpack.c.l.b16 %v494
      %v608 = vunpack.c.h.b16 %v494
      %v609 = vunpack.c.l.b16 %v495
      %v610 = vunpack.c.h.b16 %v495
      %v611 = vunpack.c.l.b16 %v496
      %v612 = vunpack.c.h.b16 %v496
      %v613 = vunpack.c.l.b16 %v497
      %v614 = vunpack.c.h.b16 %v497
      %v615 = vunpack.c.l.b16 %v498
      %v616 = vunpack.c.h.b16 %v498
      %v617 = vunpack.c.l.b16 %v499
      %v618 = vunpack.c.h.b16 %v499
      %v619 = vunpack.c.l.b16 %v500
      %v620 = vunpack.c.h.b16 %v500
      %v621 = vunpack.c.l.b16 %v501
      %v622 = vunpack.c.h.b16 %v501
      %v623 = vunpack.c.l.b16 %v502
      %v624 = vunpack.c.h.b16 %v502
      %v625 = vunpack.c.l.b16 %v503
      %v626 = vunpack.c.h.b16 %v503
      %v627 = vunpack.c.l.b16 %v504
      %v628 = vunpack.c.h.b16 %v504
      %v629 = vunpack.c.l.b16 %v505
      %v630 = vunpack.c.h.b16 %v505
      %v631 = vunpack.c.l.b16 %v506
      %v632 = vunpack.c.h.b16 %v506
      %v633 = vunpack.c.l.b16 %v507
      %v634 = vunpack.c.h.b16 %v507
      %v635 = vunpack.c.l.b16 %v508
      %v636 = vunpack.c.h.b16 %v508
      %v637 = vunpack.c.l.b16 %v509
      %v638 = vunpack.c.h.b16 %v509
      %v639 = vunpack.c.l.b16 %v510
      %v640 = vunpack.c.h.b16 %v510
      %v641 = vunpack.c.l.b16 %v511
      %v642 = vunpack.c.h.b16 %v511
      %v643 = vunpack.c.l.b16 %v512
      %v644 = vunpack.c.h.b16 %v512
      %v645 = vunpack.c.l.b16 %v513
      %v646 = vunpack.c.h.b16 %v513
      %v647 = vunpack.c.l.b16 %v514
      %v648 = vunpack.c.h.b16 %v514
      %v649 = vunpack.c.l.b16 %v515
      %v650 = vunpack.c.h.b16 %v515
      %v651 = vunpack.c.l.b16 %v516
      %v652 = vunpack.c.h.b16 %v516
      %v653 = vpack.c.b16 %v617, %v605
      %v654 = vpack.c.b16 %v618, %v606
      %v655 = vpack.c.b16 %v619, %v607
      %v656 = vpack.c.b16 %v620, %v608
      %v657 = vpack.c.b16 %v621, %v609
      %v658 = vpack.c.b16 %v622, %v610
      %v659 = vpack.c.b16 %v623, %v611
      %v660 = vpack.c.b16 %v624, %v612
      %v661 = vpack.c.b16 %v625, %v613
      %v662 = vpack.c.b16 %v626, %v614
      %v663 = vpack.c.b16 %v627, %v615
      %v664 = vpack.c.b16 %v628, %v616
      %v665 = vpack.c.b16 %v641, %v629
      %v666 = vpack.c.b16 %v642, %v630
      %v667 = vpack.c.b16 %v643, %v631
      %v668 = vpack.c.b16 %v644, %v632
      %v669 = vpack.c.b16 %v645, %v633
      %v670 = vpack.c.b16 %v646, %v634
      %v671 = vpack.c.b16 %v647, %v635
      %v672 = vpack.c.b16 %v648, %v636
      %v673 = vpack.c.b16 %v649, %v637
      %v674 = vpack.c.b16 %v650, %v638
      %v675 = vpack.c.b16 %v651, %v639
      %v676 = vpack.c.b16 %v652, %v640
      %vm701 = vcmask 261120
      %v703 = vsel %vm701, %v491, 0
      %705 = vmatprep.subr.bf16.mxu0 0
      %706 = vmatpush1.bf16.msra.mxu0 0
      %707 = vmatprep.subr.bf16.mxu0 0
      %708 = vmatpush1.bf16.msra.mxu0 0
      %709 = vmatprep.subr.bf16.mxu0 0
      %710 = vmatpush1.bf16.msra.mxu0 0
      %711 = vmatprep.subr.bf16.mxu0 0
      %712 = vmatpush1.bf16.msra.mxu0 0
      %713 = vmatprep.subr.bf16.mxu0 0
      %714 = vmatpush1.bf16.msra.mxu0 0
      %715 = vmatprep.subr.bf16.mxu0 0
      %716 = vmatpush1.bf16.msra.mxu0 0
      %717 = vmatprep.subr.bf16.mxu0 %v666
      %718 = vmatpush1.bf16.msra.mxu0 %v665
      %719 = vmatprep.subr.bf16.mxu0 %v654
      %720 = vmatpush1.bf16.msra.mxu0 %v653
      %721 = vmatprep.subr.bf16.mxu0 0
      %722 = vmatpush2.bf16.msra.mxu0 0
      %723 = vmatprep.subr.bf16.mxu0 0
      %724 = vmatpush2.bf16.msra.mxu0 0
      %725 = vmatprep.subr.bf16.mxu0 0
      %726 = vmatpush2.bf16.msra.mxu0 0
      %727 = vmatprep.subr.bf16.mxu0 0
      %728 = vmatpush2.bf16.msra.mxu0 0
      %729 = vmatprep.subr.bf16.mxu0 0
      %730 = vmatpush2.bf16.msra.mxu0 0
      %731 = vmatprep.subr.bf16.mxu0 0
      %732 = vmatpush2.bf16.msra.mxu0 0
      %733 = vmatprep.subr.bf16.mxu0 0
      %734 = vmatpush2.bf16.msra.mxu0 0
      %735 = vmatprep.subr.bf16.mxu0 0
      %736 = vmatpush2.bf16.msra.mxu0 0
      %737 = vmatprep.mubr.bf16.mxu0 0
      %738 = vmatmul.mubr.bf16.gmra.mxu0 %v703
      %v739 = vpop.f32.mrf.mxu0
      %v740 = vadd.f32 %v524, %v739
      %v741 = vpop.f32.mrf.mxu0
      %v742 = vadd.f32 %v528, %v741
      %v743 = vpop.f32.mrf.mxu0
      %v744 = vpop.f32.mrf.mxu0
      %745 = vdwg.mxu0
      %746 = vmatprep.subr.bf16.mxu0 0
      %747 = vmatpush1.bf16.msra.mxu0 0
      %748 = vmatprep.subr.bf16.mxu0 0
      %749 = vmatpush1.bf16.msra.mxu0 0
      %750 = vmatprep.subr.bf16.mxu0 0
      %751 = vmatpush1.bf16.msra.mxu0 0
      %752 = vmatprep.subr.bf16.mxu0 0
      %753 = vmatpush1.bf16.msra.mxu0 0
      %754 = vmatprep.subr.bf16.mxu0 0
      %755 = vmatpush1.bf16.msra.mxu0 0
      %756 = vmatprep.subr.bf16.mxu0 0
      %757 = vmatpush1.bf16.msra.mxu0 0
      %758 = vmatprep.subr.bf16.mxu0 %v668
      %759 = vmatpush1.bf16.msra.mxu0 %v667
      %760 = vmatprep.subr.bf16.mxu0 %v656
      %761 = vmatpush1.bf16.msra.mxu0 %v655
      %762 = vmatprep.subr.bf16.mxu0 0
      %763 = vmatpush2.bf16.msra.mxu0 0
      %764 = vmatprep.subr.bf16.mxu0 0
      %765 = vmatpush2.bf16.msra.mxu0 0
      %766 = vmatprep.subr.bf16.mxu0 0
      %767 = vmatpush2.bf16.msra.mxu0 0
      %768 = vmatprep.subr.bf16.mxu0 0
      %769 = vmatpush2.bf16.msra.mxu0 0
      %770 = vmatprep.subr.bf16.mxu0 0
      %771 = vmatpush2.bf16.msra.mxu0 0
      %772 = vmatprep.subr.bf16.mxu0 0
      %773 = vmatpush2.bf16.msra.mxu0 0
      %774 = vmatprep.subr.bf16.mxu0 0
      %775 = vmatpush2.bf16.msra.mxu0 0
      %776 = vmatprep.subr.bf16.mxu0 0
      %777 = vmatpush2.bf16.msra.mxu0 0
      %778 = vmatprep.mubr.bf16.mxu0 0
      %779 = vmatmul.mubr.bf16.gmra.mxu0 %v703
      %v780 = vpop.f32.mrf.mxu0
      %v781 = vadd.f32 %v532, %v780
      %v782 = vpop.f32.mrf.mxu0
      %v783 = vadd.f32 %v536, %v782
      %v784 = vpop.f32.mrf.mxu0
      %v785 = vpop.f32.mrf.mxu0
      %786 = vdwg.mxu0
      %787 = vmatprep.subr.bf16.mxu0 0
      %788 = vmatpush1.bf16.msra.mxu0 0
      %789 = vmatprep.subr.bf16.mxu0 0
      %790 = vmatpush1.bf16.msra.mxu0 0
      %791 = vmatprep.subr.bf16.mxu0 0
      %792 = vmatpush1.bf16.msra.mxu0 0
      %793 = vmatprep.subr.bf16.mxu0 0
      %794 = vmatpush1.bf16.msra.mxu0 0
      %795 = vmatprep.subr.bf16.mxu0 0
      %796 = vmatpush1.bf16.msra.mxu0 0
      %797 = vmatprep.subr.bf16.mxu0 0
      %798 = vmatpush1.bf16.msra.mxu0 0
      %799 = vmatprep.subr.bf16.mxu0 %v670
      %800 = vmatpush1.bf16.msra.mxu0 %v669
      %801 = vmatprep.subr.bf16.mxu0 %v658
      %802 = vmatpush1.bf16.msra.mxu0 %v657
      %803 = vmatprep.subr.bf16.mxu0 0
      %804 = vmatpush2.bf16.msra.mxu0 0
      %805 = vmatprep.subr.bf16.mxu0 0
      %806 = vmatpush2.bf16.msra.mxu0 0
      %807 = vmatprep.subr.bf16.mxu0 0
      %808 = vmatpush2.bf16.msra.mxu0 0
      %809 = vmatprep.subr.bf16.mxu0 0
      %810 = vmatpush2.bf16.msra.mxu0 0
      %811 = vmatprep.subr.bf16.mxu0 0
      %812 = vmatpush2.bf16.msra.mxu0 0
      %813 = vmatprep.subr.bf16.mxu0 0
      %814 = vmatpush2.bf16.msra.mxu0 0
      %815 = vmatprep.subr.bf16.mxu0 0
      %816 = vmatpush2.bf16.msra.mxu0 0
      %817 = vmatprep.subr.bf16.mxu0 0
      %818 = vmatpush2.bf16.msra.mxu0 0
      %819 = vmatprep.mubr.bf16.mxu0 0
      %820 = vmatmul.mubr.bf16.gmra.mxu0 %v703
      %v821 = vpop.f32.mrf.mxu0
      %v822 = vadd.f32 %v540, %v821
      %v823 = vpop.f32.mrf.mxu0
      %v824 = vadd.f32 %v544, %v823
      %v825 = vpop.f32.mrf.mxu0
      %v826 = vpop.f32.mrf.mxu0
      %827 = vdwg.mxu0
      %828 = vmatprep.subr.bf16.mxu0 0
      %829 = vmatpush1.bf16.msra.mxu0 0
      %830 = vmatprep.subr.bf16.mxu0 0
      %831 = vmatpush1.bf16.msra.mxu0 0
      %832 = vmatprep.subr.bf16.mxu0 0
      %833 = vmatpush1.bf16.msra.mxu0 0
      %834 = vmatprep.subr.bf16.mxu0 0
      %835 = vmatpush1.bf16.msra.mxu0 0
      %836 = vmatprep.subr.bf16.mxu0 0
      %837 = vmatpush1.bf16.msra.mxu0 0
      %838 = vmatprep.subr.bf16.mxu0 0
      %839 = vmatpush1.bf16.msra.mxu0 0
      %840 = vmatprep.subr.bf16.mxu0 %v672
      %841 = vmatpush1.bf16.msra.mxu0 %v671
      %842 = vmatprep.subr.bf16.mxu0 %v660
      %843 = vmatpush1.bf16.msra.mxu0 %v659
      %844 = vmatprep.subr.bf16.mxu0 0
      %845 = vmatpush2.bf16.msra.mxu0 0
      %846 = vmatprep.subr.bf16.mxu0 0
      %847 = vmatpush2.bf16.msra.mxu0 0
      %848 = vmatprep.subr.bf16.mxu0 0
      %849 = vmatpush2.bf16.msra.mxu0 0
      %850 = vmatprep.subr.bf16.mxu0 0
      %851 = vmatpush2.bf16.msra.mxu0 0
      %852 = vmatprep.subr.bf16.mxu0 0
      %853 = vmatpush2.bf16.msra.mxu0 0
      %854 = vmatprep.subr.bf16.mxu0 0
      %855 = vmatpush2.bf16.msra.mxu0 0
      %856 = vmatprep.subr.bf16.mxu0 0
      %857 = vmatpush2.bf16.msra.mxu0 0
      %858 = vmatprep.subr.bf16.mxu0 0
      %859 = vmatpush2.bf16.msra.mxu0 0
      %860 = vmatprep.mubr.bf16.mxu0 0
      %861 = vmatmul.mubr.bf16.gmra.mxu0 %v703
      %v862 = vpop.f32.mrf.mxu0
      %v863 = vadd.f32 %v548, %v862
      %v864 = vpop.f32.mrf.mxu0
      %v865 = vadd.f32 %v552, %v864
      %v866 = vpop.f32.mrf.mxu0
      %v867 = vpop.f32.mrf.mxu0
      %868 = vdwg.mxu0
      %869 = vmatprep.subr.bf16.mxu0 0
      %870 = vmatpush1.bf16.msra.mxu0 0
      %871 = vmatprep.subr.bf16.mxu0 0
      %872 = vmatpush1.bf16.msra.mxu0 0
      %873 = vmatprep.subr.bf16.mxu0 0
      %874 = vmatpush1.bf16.msra.mxu0 0
      %875 = vmatprep.subr.bf16.mxu0 0
      %876 = vmatpush1.bf16.msra.mxu0 0
      %877 = vmatprep.subr.bf16.mxu0 0
      %878 = vmatpush1.bf16.msra.mxu0 0
      %879 = vmatprep.subr.bf16.mxu0 0
      %880 = vmatpush1.bf16.msra.mxu0 0
      %881 = vmatprep.subr.bf16.mxu0 %v674
      %882 = vmatpush1.bf16.msra.mxu0 %v673
      %883 = vmatprep.subr.bf16.mxu0 %v662
      %884 = vmatpush1.bf16.msra.mxu0 %v661
      %885 = vmatprep.subr.bf16.mxu0 0
      %886 = vmatpush2.bf16.msra.mxu0 0
      %887 = vmatprep.subr.bf16.mxu0 0
      %888 = vmatpush2.bf16.msra.mxu0 0
      %889 = vmatprep.subr.bf16.mxu0 0
      %890 = vmatpush2.bf16.msra.mxu0 0
      %891 = vmatprep.subr.bf16.mxu0 0
      %892 = vmatpush2.bf16.msra.mxu0 0
      %893 = vmatprep.subr.bf16.mxu0 0
      %894 = vmatpush2.bf16.msra.mxu0 0
      %895 = vmatprep.subr.bf16.mxu0 0
      %896 = vmatpush2.bf16.msra.mxu0 0
      %897 = vmatprep.subr.bf16.mxu0 0
      %898 = vmatpush2.bf16.msra.mxu0 0
      %899 = vmatprep.subr.bf16.mxu0 0
      %900 = vmatpush2.bf16.msra.mxu0 0
      %901 = vmatprep.mubr.bf16.mxu0 0
      %902 = vmatmul.mubr.bf16.gmra.mxu0 %v703
      %v903 = vpop.f32.mrf.mxu0
      %v904 = vadd.f32 %v556, %v903
      %v905 = vpop.f32.mrf.mxu0
      %v906 = vadd.f32 %v560, %v905
      %v907 = vpop.f32.mrf.mxu0
      %v908 = vpop.f32.mrf.mxu0
      %909 = vdwg.mxu0
      %910 = vmatprep.subr.bf16.mxu0 0
      %911 = vmatpush1.bf16.msra.mxu0 0
      %912 = vmatprep.subr.bf16.mxu0 0
      %913 = vmatpush1.bf16.msra.mxu0 0
      %914 = vmatprep.subr.bf16.mxu0 0
      %915 = vmatpush1.bf16.msra.mxu0 0
      %916 = vmatprep.subr.bf16.mxu0 0
      %917 = vmatpush1.bf16.msra.mxu0 0
      %918 = vmatprep.subr.bf16.mxu0 0
      %919 = vmatpush1.bf16.msra.mxu0 0
      %920 = vmatprep.subr.bf16.mxu0 0
      %921 = vmatpush1.bf16.msra.mxu0 0
      %922 = vmatprep.subr.bf16.mxu0 %v676
      %923 = vmatpush1.bf16.msra.mxu0 %v675
      %924 = vmatprep.subr.bf16.mxu0 %v664
      %925 = vmatpush1.bf16.msra.mxu0 %v663
      %926 = vmatprep.subr.bf16.mxu0 0
      %927 = vmatpush2.bf16.msra.mxu0 0
      %928 = vmatprep.subr.bf16.mxu0 0
      %929 = vmatpush2.bf16.msra.mxu0 0
      %930 = vmatprep.subr.bf16.mxu0 0
      %931 = vmatpush2.bf16.msra.mxu0 0
      %932 = vmatprep.subr.bf16.mxu0 0
      %933 = vmatpush2.bf16.msra.mxu0 0
      %934 = vmatprep.subr.bf16.mxu0 0
      %935 = vmatpush2.bf16.msra.mxu0 0
      %936 = vmatprep.subr.bf16.mxu0 0
      %937 = vmatpush2.bf16.msra.mxu0 0
      %938 = vmatprep.subr.bf16.mxu0 0
      %939 = vmatpush2.bf16.msra.mxu0 0
      %940 = vmatprep.subr.bf16.mxu0 0
      %941 = vmatpush2.bf16.msra.mxu0 0
      %942 = vmatprep.mubr.bf16.mxu0 0
      %943 = vmatmul.mubr.bf16.gmra.mxu0 %v703
      %v944 = vpop.f32.mrf.mxu0
      %v945 = vadd.f32 %v564, %v944
      %v946 = vpop.f32.mrf.mxu0
      %v947 = vadd.f32 %v568, %v946
      %v948 = vpop.f32.mrf.mxu0
      %v949 = vpop.f32.mrf.mxu0
      %950 = vdwg.mxu0
      %v951 = vpack.c.bf16 %v740, %v740
      %v952 = vpack.c.bf16 %v742, %v742
      %v953 = vpack.c.bf16 %v781, %v781
      %v954 = vpack.c.bf16 %v783, %v783
      %v955 = vpack.c.bf16 %v822, %v822
      %v956 = vpack.c.bf16 %v824, %v824
      %v957 = vpack.c.bf16 %v863, %v863
      %v958 = vpack.c.bf16 %v865, %v865
      %v959 = vpack.c.bf16 %v904, %v904
      %v960 = vpack.c.bf16 %v906, %v906
      %v961 = vpack.c.bf16 %v945, %v945
      %v962 = vpack.c.bf16 %v947, %v947
      %963 = vmatprep.subr.bf16.mxu0 0
      %964 = vmatpush1.bf16.xpose.msra.mxu0 0
      %965 = vmatprep.subr.bf16.mxu0 0
      %966 = vmatpush1.bf16.xpose.msra.mxu0 0
      %967 = vmatprep.subr.bf16.mxu0 0
      %968 = vmatpush1.bf16.xpose.msra.mxu0 0
      %969 = vmatprep.subr.bf16.mxu0 0
      %970 = vmatpush1.bf16.xpose.msra.mxu0 0
      %971 = vmatprep.subr.bf16.mxu0 0
      %972 = vmatpush1.bf16.xpose.msra.mxu0 0
      %973 = vmatprep.subr.bf16.mxu0 0
      %974 = vmatpush1.bf16.xpose.msra.mxu0 0
      %975 = vmatprep.subr.bf16.mxu0 0
      %976 = vmatpush1.bf16.xpose.msra.mxu0 0
      %977 = vmatprep.subr.bf16.mxu0 0
      %978 = vmatpush1.bf16.xpose.msra.mxu0 %v955
      %979 = vmatprep.subr.bf16.mxu0 0
      %980 = vmatpush2.bf16.xpose.msra.mxu0 0
      %981 = vmatprep.subr.bf16.mxu0 0
      %982 = vmatpush2.bf16.xpose.msra.mxu0 0
      %983 = vmatprep.subr.bf16.mxu0 0
      %984 = vmatpush2.bf16.xpose.msra.mxu0 0
      %985 = vmatprep.subr.bf16.mxu0 0
      %986 = vmatpush2.bf16.xpose.msra.mxu0 0
      %987 = vmatprep.subr.bf16.mxu0 0
      %988 = vmatpush2.bf16.xpose.msra.mxu0 0
      %989 = vmatprep.subr.bf16.mxu0 0
      %990 = vmatpush2.bf16.xpose.msra.mxu0 0
      %991 = vmatprep.subr.bf16.mxu0 0
      %992 = vmatpush2.bf16.xpose.msra.mxu0 0
      %993 = vmatprep.subr.bf16.mxu0 0
      %994 = vmatpush2.bf16.xpose.msra.mxu0 0
      %995 = vmatprep.mubr.bf16.mxu0 0
      %996 = vmatmul.mubr.bf16.gmra.mxu0 %v951
      %v997 = vpop.f32.mrf.mxu0
      %v998 = vadd.f32 0.0, %v997
      %v999 = vpop.f32.mrf.mxu0
      %v1000 = vpop.f32.mrf.mxu0
      %v1001 = vpop.f32.mrf.mxu0
      %1002 = vdwg.mxu0
      %vm1003 = vcmask 64512
      %v1004 = vsel %vm1003, %v998, -inf
      %1005 = vmax.xlane.f32.xlu0 %v1004
      %v1006 = vpop.xlane.xlu0 %1005
      %v1007 = vsub.f32 %v998, %v1006
      %v1008 = vmul.f32 %v1007, 1.442695
      %v1009 = vpow.pop %v1008
      %v1010 = vsel %vm1003, %v1009, 0.0
      %1011 = vadd.xlane.f32.xlu0 %v1010
      %v1012 = vpop.xlane.xlu0 %1011
      %v1013 = vrcp.pop %v1012
      %v1014 = vmul.f32 %v1009, %v1013
      %v1015 = vpack.c.bf16 %v1014, %v1014
      %v1017 = vsel %vm1003, %v1015, 0
      %vm1019 = vcmask 1043456
      %v1021 = vsel %vm1019, %v959, 0
      %1023 = vmatprep.subr.bf16.mxu0 0
      %1024 = vmatpush1.bf16.msra.mxu0 0
      %1025 = vmatprep.subr.bf16.mxu0 0
      %1026 = vmatpush1.bf16.msra.mxu0 0
      %1027 = vmatprep.subr.bf16.mxu0 0
      %1028 = vmatpush1.bf16.msra.mxu0 0
      %1029 = vmatprep.subr.bf16.mxu0 0
      %1030 = vmatpush1.bf16.msra.mxu0 0
      %1031 = vmatprep.subr.bf16.mxu0 0
      %1032 = vmatpush1.bf16.msra.mxu0 0
      %1033 = vmatprep.subr.bf16.mxu0 0
      %1034 = vmatpush1.bf16.msra.mxu0 0
      %1035 = vmatprep.subr.bf16.mxu0 0
      %1036 = vmatpush1.bf16.msra.mxu0 0
      %1037 = vmatprep.subr.bf16.mxu0 0
      %1038 = vmatpush1.bf16.msra.mxu0 %v1021
      %1039 = vmatprep.subr.bf16.mxu0 0
      %1040 = vmatpush2.bf16.msra.mxu0 0
      %1041 = vmatprep.subr.bf16.mxu0 0
      %1042 = vmatpush2.bf16.msra.mxu0 0
      %1043 = vmatprep.subr.bf16.mxu0 0
      %1044 = vmatpush2.bf16.msra.mxu0 0
      %1045 = vmatprep.subr.bf16.mxu0 0
      %1046 = vmatpush2.bf16.msra.mxu0 0
      %1047 = vmatprep.subr.bf16.mxu0 0
      %1048 = vmatpush2.bf16.msra.mxu0 0
      %1049 = vmatprep.subr.bf16.mxu0 0
      %1050 = vmatpush2.bf16.msra.mxu0 0
      %1051 = vmatprep.subr.bf16.mxu0 0
      %1052 = vmatpush2.bf16.msra.mxu0 0
      %1053 = vmatprep.subr.bf16.mxu0 0
      %1054 = vmatpush2.bf16.msra.mxu0 0
      %1055 = vmatprep.mubr.bf16.mxu0 0
      %1056 = vmatmul.mubr.bf16.gmra.mxu0 %v1017
      %v1057 = vpop.f32.mrf.mxu0
      %v1058 = vadd.f32 0.0, %v1057
      %v1059 = vpop.f32.mrf.mxu0
      %v1060 = vpop.f32.mrf.mxu0
      %v1061 = vpop.f32.mrf.mxu0
      %1062 = vdwg.mxu0
      %1063 = vst [vmem:[#allocation2] sm:$0xff] %v1058
      %1064 = vmatprep.subr.bf16.mxu0 0
      %1065 = vmatpush1.bf16.xpose.msra.mxu0 0
      %1066 = vmatprep.subr.bf16.mxu0 0
      %1067 = vmatpush1.bf16.xpose.msra.mxu0 0
      %1068 = vmatprep.subr.bf16.mxu0 0
      %1069 = vmatpush1.bf16.xpose.msra.mxu0 0
      %1070 = vmatprep.subr.bf16.mxu0 0
      %1071 = vmatpush1.bf16.xpose.msra.mxu0 0
      %1072 = vmatprep.subr.bf16.mxu0 0
      %1073 = vmatpush1.bf16.xpose.msra.mxu0 0
      %1074 = vmatprep.subr.bf16.mxu0 0
      %1075 = vmatpush1.bf16.xpose.msra.mxu0 0
      %1076 = vmatprep.subr.bf16.mxu0 0
      %1077 = vmatpush1.bf16.xpose.msra.mxu0 0
      %1078 = vmatprep.subr.bf16.mxu0 0
      %1079 = vmatpush1.bf16.xpose.msra.mxu0 %v956
      %1080 = vmatprep.subr.bf16.mxu0 0
      %1081 = vmatpush2.bf16.xpose.msra.mxu0 0
      %1082 = vmatprep.subr.bf16.mxu0 0
      %1083 = vmatpush2.bf16.xpose.msra.mxu0 0
      %1084 = vmatprep.subr.bf16.mxu0 0
      %1085 = vmatpush2.bf16.xpose.msra.mxu0 0
      %1086 = vmatprep.subr.bf16.mxu0 0
      %1087 = vmatpush2.bf16.xpose.msra.mxu0 0
      %1088 = vmatprep.subr.bf16.mxu0 0
      %1089 = vmatpush2.bf16.xpose.msra.mxu0 0
      %1090 = vmatprep.subr.bf16.mxu0 0
      %1091 = vmatpush2.bf16.xpose.msra.mxu0 0
      %1092 = vmatprep.subr.bf16.mxu0 0
      %1093 = vmatpush2.bf16.xpose.msra.mxu0 0
      %1094 = vmatprep.subr.bf16.mxu0 0
      %1095 = vmatpush2.bf16.xpose.msra.mxu0 0
      %1096 = vmatprep.mubr.bf16.mxu0 0
      %1097 = vmatmul.mubr.bf16.gmra.mxu0 %v952
      %v1098 = vpop.f32.mrf.mxu0
      %v1099 = vadd.f32 0.0, %v1098
      %v1100 = vpop.f32.mrf.mxu0
      %v1101 = vpop.f32.mrf.mxu0
      %v1102 = vpop.f32.mrf.mxu0
      %1103 = vdwg.mxu0
      %v1104 = vsel %vm1003, %v1099, -inf
      %1105 = vmax.xlane.f32.xlu0 %v1104
      %v1106 = vpop.xlane.xlu0 %1105
      %v1107 = vsub.f32 %v1099, %v1106
      %v1108 = vmul.f32 %v1107, 1.442695
      %v1109 = vpow.pop %v1108
      %v1110 = vsel %vm1003, %v1109, 0.0
      %1111 = vadd.xlane.f32.xlu0 %v1110
      %v1112 = vpop.xlane.xlu0 %1111
      %v1113 = vrcp.pop %v1112
      %v1114 = vmul.f32 %v1109, %v1113
      %v1115 = vpack.c.bf16 %v1114, %v1114
      %v1117 = vsel %vm1003, %v1115, 0
      %v1120 = vsel %vm1019, %v960, 0
      %1122 = vmatprep.subr.bf16.mxu0 0
      %1123 = vmatpush1.bf16.msra.mxu0 0
      %1124 = vmatprep.subr.bf16.mxu0 0
      %1125 = vmatpush1.bf16.msra.mxu0 0
      %1126 = vmatprep.subr.bf16.mxu0 0
      %1127 = vmatpush1.bf16.msra.mxu0 0
      %1128 = vmatprep.subr.bf16.mxu0 0
      %1129 = vmatpush1.bf16.msra.mxu0 0
      %1130 = vmatprep.subr.bf16.mxu0 0
      %1131 = vmatpush1.bf16.msra.mxu0 0
      %1132 = vmatprep.subr.bf16.mxu0 0
      %1133 = vmatpush1.bf16.msra.mxu0 0
      %1134 = vmatprep.subr.bf16.mxu0 0
      %1135 = vmatpush1.bf16.msra.mxu0 0
      %1136 = vmatprep.subr.bf16.mxu0 0
      %1137 = vmatpush1.bf16.msra.mxu0 %v1120
      %1138 = vmatprep.subr.bf16.mxu0 0
      %1139 = vmatpush2.bf16.msra.mxu0 0
      %1140 = vmatprep.subr.bf16.mxu0 0
      %1141 = vmatpush2.bf16.msra.mxu0 0
      %1142 = vmatprep.subr.bf16.mxu0 0
      %1143 = vmatpush2.bf16.msra.mxu0 0
      %1144 = vmatprep.subr.bf16.mxu0 0
      %1145 = vmatpush2.bf16.msra.mxu0 0
      %1146 = vmatprep.subr.bf16.mxu0 0
      %1147 = vmatpush2.bf16.msra.mxu0 0
      %1148 = vmatprep.subr.bf16.mxu0 0
      %1149 = vmatpush2.bf16.msra.mxu0 0
      %1150 = vmatprep.subr.bf16.mxu0 0
      %1151 = vmatpush2.bf16.msra.mxu0 0
      %1152 = vmatprep.subr.bf16.mxu0 0
      %1153 = vmatpush2.bf16.msra.mxu0 0
      %1154 = vmatprep.mubr.bf16.mxu0 0
      %1155 = vmatmul.mubr.bf16.gmra.mxu0 %v1117
      %v1156 = vpop.f32.mrf.mxu0
      %v1157 = vadd.f32 0.0, %v1156
      %v1158 = vpop.f32.mrf.mxu0
      %v1159 = vpop.f32.mrf.mxu0
      %v1160 = vpop.f32.mrf.mxu0
      %1161 = vdwg.mxu0
      %1162 = vst [vmem:[#allocation2 + $0x8] sm:$0xff] %v1157
      %1163 = vmatprep.subr.bf16.mxu0 0
      %1164 = vmatpush1.bf16.xpose.msra.mxu0 0
      %1165 = vmatprep.subr.bf16.mxu0 0
      %1166 = vmatpush1.bf16.xpose.msra.mxu0 0
      %1167 = vmatprep.subr.bf16.mxu0 0
      %1168 = vmatpush1.bf16.xpose.msra.mxu0 0
      %1169 = vmatprep.subr.bf16.mxu0 0
      %1170 = vmatpush1.bf16.xpose.msra.mxu0 0
      %1171 = vmatprep.subr.bf16.mxu0 0
      %1172 = vmatpush1.bf16.xpose.msra.mxu0 0
      %1173 = vmatprep.subr.bf16.mxu0 0
      %1174 = vmatpush1.bf16.xpose.msra.mxu0 0
      %1175 = vmatprep.subr.bf16.mxu0 0
      %1176 = vmatpush1.bf16.xpose.msra.mxu0 0
      %1177 = vmatprep.subr.bf16.mxu0 0
      %1178 = vmatpush1.bf16.xpose.msra.mxu0 %v957
      %1179 = vmatprep.subr.bf16.mxu0 0
      %1180 = vmatpush2.bf16.xpose.msra.mxu0 0
      %1181 = vmatprep.subr.bf16.mxu0 0
      %1182 = vmatpush2.bf16.xpose.msra.mxu0 0
      %1183 = vmatprep.subr.bf16.mxu0 0
      %1184 = vmatpush2.bf16.xpose.msra.mxu0 0
      %1185 = vmatprep.subr.bf16.mxu0 0
      %1186 = vmatpush2.bf16.xpose.msra.mxu0 0
      %1187 = vmatprep.subr.bf16.mxu0 0
      %1188 = vmatpush2.bf16.xpose.msra.mxu0 0
      %1189 = vmatprep.subr.bf16.mxu0 0
      %1190 = vmatpush2.bf16.xpose.msra.mxu0 0
      %1191 = vmatprep.subr.bf16.mxu0 0
      %1192 = vmatpush2.bf16.xpose.msra.mxu0 0
      %1193 = vmatprep.subr.bf16.mxu0 0
      %1194 = vmatpush2.bf16.xpose.msra.mxu0 0
      %1195 = vmatprep.mubr.bf16.mxu0 0
      %1196 = vmatmul.mubr.bf16.gmra.mxu0 %v953
      %v1197 = vpop.f32.mrf.mxu0
      %v1198 = vadd.f32 0.0, %v1197
      %v1199 = vpop.f32.mrf.mxu0
      %v1200 = vpop.f32.mrf.mxu0
      %v1201 = vpop.f32.mrf.mxu0
      %1202 = vdwg.mxu0
      %v1203 = vsel %vm1003, %v1198, -inf
      %1204 = vmax.xlane.f32.xlu0 %v1203
      %v1205 = vpop.xlane.xlu0 %1204
      %v1206 = vsub.f32 %v1198, %v1205
      %v1207 = vmul.f32 %v1206, 1.442695
      %v1208 = vpow.pop %v1207
      %v1209 = vsel %vm1003, %v1208, 0.0
      %1210 = vadd.xlane.f32.xlu0 %v1209
      %v1211 = vpop.xlane.xlu0 %1210
      %v1212 = vrcp.pop %v1211
      %v1213 = vmul.f32 %v1208, %v1212
      %v1214 = vpack.c.bf16 %v1213, %v1213
      %v1216 = vsel %vm1003, %v1214, 0
      %v1219 = vsel %vm1019, %v961, 0
      %1221 = vmatprep.subr.bf16.mxu0 0
      %1222 = vmatpush1.bf16.msra.mxu0 0
      %1223 = vmatprep.subr.bf16.mxu0 0
      %1224 = vmatpush1.bf16.msra.mxu0 0
      %1225 = vmatprep.subr.bf16.mxu0 0
      %1226 = vmatpush1.bf16.msra.mxu0 0
      %1227 = vmatprep.subr.bf16.mxu0 0
      %1228 = vmatpush1.bf16.msra.mxu0 0
      %1229 = vmatprep.subr.bf16.mxu0 0
      %1230 = vmatpush1.bf16.msra.mxu0 0
      %1231 = vmatprep.subr.bf16.mxu0 0
      %1232 = vmatpush1.bf16.msra.mxu0 0
      %1233 = vmatprep.subr.bf16.mxu0 0
      %1234 = vmatpush1.bf16.msra.mxu0 0
      %1235 = vmatprep.subr.bf16.mxu0 0
      %1236 = vmatpush1.bf16.msra.mxu0 %v1219
      %1237 = vmatprep.subr.bf16.mxu0 0
      %1238 = vmatpush2.bf16.msra.mxu0 0
      %1239 = vmatprep.subr.bf16.mxu0 0
      %1240 = vmatpush2.bf16.msra.mxu0 0
      %1241 = vmatprep.subr.bf16.mxu0 0
      %1242 = vmatpush2.bf16.msra.mxu0 0
      %1243 = vmatprep.subr.bf16.mxu0 0
      %1244 = vmatpush2.bf16.msra.mxu0 0
      %1245 = vmatprep.subr.bf16.mxu0 0
      %1246 = vmatpush2.bf16.msra.mxu0 0
      %1247 = vmatprep.subr.bf16.mxu0 0
      %1248 = vmatpush2.bf16.msra.mxu0 0
      %1249 = vmatprep.subr.bf16.mxu0 0
      %1250 = vmatpush2.bf16.msra.mxu0 0
      %1251 = vmatprep.subr.bf16.mxu0 0
      %1252 = vmatpush2.bf16.msra.mxu0 0
      %1253 = vmatprep.mubr.bf16.mxu0 0
      %1254 = vmatmul.mubr.bf16.gmra.mxu0 %v1216
      %v1255 = vpop.f32.mrf.mxu0
      %v1256 = vadd.f32 0.0, %v1255
      %v1257 = vpop.f32.mrf.mxu0
      %v1258 = vpop.f32.mrf.mxu0
      %v1259 = vpop.f32.mrf.mxu0
      %1260 = vdwg.mxu0
      %1261 = vst [vmem:[#allocation2 + $0x10] sm:$0xff] %v1256
      %1262 = vmatprep.subr.bf16.mxu0 0
      %1263 = vmatpush1.bf16.xpose.msra.mxu0 0
      %1264 = vmatprep.subr.bf16.mxu0 0
      %1265 = vmatpush1.bf16.xpose.msra.mxu0 0
      %1266 = vmatprep.subr.bf16.mxu0 0
      %1267 = vmatpush1.bf16.xpose.msra.mxu0 0
      %1268 = vmatprep.subr.bf16.mxu0 0
      %1269 = vmatpush1.bf16.xpose.msra.mxu0 0
      %1270 = vmatprep.subr.bf16.mxu0 0
      %1271 = vmatpush1.bf16.xpose.msra.mxu0 0
      %1272 = vmatprep.subr.bf16.mxu0 0
      %1273 = vmatpush1.bf16.xpose.msra.mxu0 0
      %1274 = vmatprep.subr.bf16.mxu0 0
      %1275 = vmatpush1.bf16.xpose.msra.mxu0 0
      %1276 = vmatprep.subr.bf16.mxu0 0
      %1277 = vmatpush1.bf16.xpose.msra.mxu0 %v958
      %1278 = vmatprep.subr.bf16.mxu0 0
      %1279 = vmatpush2.bf16.xpose.msra.mxu0 0
      %1280 = vmatprep.subr.bf16.mxu0 0
      %1281 = vmatpush2.bf16.xpose.msra.mxu0 0
      %1282 = vmatprep.subr.bf16.mxu0 0
      %1283 = vmatpush2.bf16.xpose.msra.mxu0 0
      %1284 = vmatprep.subr.bf16.mxu0 0
      %1285 = vmatpush2.bf16.xpose.msra.mxu0 0
      %1286 = vmatprep.subr.bf16.mxu0 0
      %1287 = vmatpush2.bf16.xpose.msra.mxu0 0
      %1288 = vmatprep.subr.bf16.mxu0 0
      %1289 = vmatpush2.bf16.xpose.msra.mxu0 0
      %1290 = vmatprep.subr.bf16.mxu0 0
      %1291 = vmatpush2.bf16.xpose.msra.mxu0 0
      %1292 = vmatprep.subr.bf16.mxu0 0
      %1293 = vmatpush2.bf16.xpose.msra.mxu0 0
      %1294 = vmatprep.mubr.bf16.mxu0 0
      %1295 = vmatmul.mubr.bf16.gmra.mxu0 %v954
      %v1296 = vpop.f32.mrf.mxu0
      %v1297 = vadd.f32 0.0, %v1296
      %v1298 = vpop.f32.mrf.mxu0
      %v1299 = vpop.f32.mrf.mxu0
      %v1300 = vpop.f32.mrf.mxu0
      %1301 = vdwg.mxu0
      %v1302 = vsel %vm1003, %v1297, -inf
      %1303 = vmax.xlane.f32.xlu0 %v1302
      %v1304 = vpop.xlane.xlu0 %1303
      %v1305 = vsub.f32 %v1297, %v1304
      %v1306 = vmul.f32 %v1305, 1.442695
      %v1307 = vpow.pop %v1306
      %v1308 = vsel %vm1003, %v1307, 0.0
      %1309 = vadd.xlane.f32.xlu0 %v1308
      %v1310 = vpop.xlane.xlu0 %1309
      %v1311 = vrcp.pop %v1310
      %v1312 = vmul.f32 %v1307, %v1311
      %v1313 = vpack.c.bf16 %v1312, %v1312
      %v1315 = vsel %vm1003, %v1313, 0
      %v1318 = vsel %vm1019, %v962, 0
      %1320 = vmatprep.subr.bf16.mxu0 0
      %1321 = vmatpush1.bf16.msra.mxu0 0
      %1322 = vmatprep.subr.bf16.mxu0 0
      %1323 = vmatpush1.bf16.msra.mxu0 0
      %1324 = vmatprep.subr.bf16.mxu0 0
      %1325 = vmatpush1.bf16.msra.mxu0 0
      %1326 = vmatprep.subr.bf16.mxu0 0
      %1327 = vmatpush1.bf16.msra.mxu0 0
      %1328 = vmatprep.subr.bf16.mxu0 0
      %1329 = vmatpush1.bf16.msra.mxu0 0
      %1330 = vmatprep.subr.bf16.mxu0 0
      %1331 = vmatpush1.bf16.msra.mxu0 0
      %1332 = vmatprep.subr.bf16.mxu0 0
      %1333 = vmatpush1.bf16.msra.mxu0 0
      %1334 = vmatprep.subr.bf16.mxu0 0
      %1335 = vmatpush1.bf16.msra.mxu0 %v1318
      %1336 = vmatprep.subr.bf16.mxu0 0
      %1337 = vmatpush2.bf16.msra.mxu0 0
      %1338 = vmatprep.subr.bf16.mxu0 0
      %1339 = vmatpush2.bf16.msra.mxu0 0
      %1340 = vmatprep.subr.bf16.mxu0 0
      %1341 = vmatpush2.bf16.msra.mxu0 0
      %1342 = vmatprep.subr.bf16.mxu0 0
      %1343 = vmatpush2.bf16.msra.mxu0 0
      %1344 = vmatprep.subr.bf16.mxu0 0
      %1345 = vmatpush2.bf16.msra.mxu0 0
      %1346 = vmatprep.subr.bf16.mxu0 0
      %1347 = vmatpush2.bf16.msra.mxu0 0
      %1348 = vmatprep.subr.bf16.mxu0 0
      %1349 = vmatpush2.bf16.msra.mxu0 0
      %1350 = vmatprep.subr.bf16.mxu0 0
      %1351 = vmatpush2.bf16.msra.mxu0 0
      %1352 = vmatprep.mubr.bf16.mxu0 0
      %1353 = vmatmul.mubr.bf16.gmra.mxu0 %v1315
      %v1354 = vpop.f32.mrf.mxu0
      %v1355 = vadd.f32 0.0, %v1354
      %v1356 = vpop.f32.mrf.mxu0
      %v1357 = vpop.f32.mrf.mxu0
      %v1358 = vpop.f32.mrf.mxu0
      %1359 = vdwg.mxu0
      %1360 = vst [vmem:[#allocation2 + $0x18] sm:$0xff] %v1355
      %v1361 = vld [vmem:[#allocation2] sm:$0xff]
      %v1362 = vld [vmem:[#allocation2 + $0x8] sm:$0xff]
      %v1363 = vld [vmem:[#allocation2 + $0x10] sm:$0xff]
      %v1364 = vld [vmem:[#allocation2 + $0x18] sm:$0xff]
      %v1365 = vld [vmem:[%s3] sm:$0xf]
      %v1366 = vld [vmem:[%s3 + $0x4] sm:$0xf]
      %v1367 = vld [vmem:[%s3 + $0x8] sm:$0xf]
      %v1368 = vld [vmem:[%s3 + $0xc] sm:$0xf]
      %v1369 = vld [vmem:[%s3 + $0x10] sm:$0xf]
      %v1370 = vld [vmem:[%s3 + $0x14] sm:$0xf]
      %v1371 = vld [vmem:[%s3 + $0x18] sm:$0xf]
      %v1372 = vld [vmem:[%s3 + $0x1c] sm:$0xf]
      %v1373 = vld [vmem:[%s3 + $0x20] sm:$0xf]
      %v1374 = vld [vmem:[%s3 + $0x24] sm:$0xf]
      %v1375 = vld [vmem:[%s3 + $0x28] sm:$0xf]
      %v1376 = vld [vmem:[%s3 + $0x2c] sm:$0xf]
      %v1377 = vld [vmem:[%s3 + $0x30] sm:$0xf]
      %v1378 = vld [vmem:[%s3 + $0x34] sm:$0xf]
      %v1379 = vld [vmem:[%s3 + $0x38] sm:$0xf]
      %v1380 = vld [vmem:[%s3 + $0x3c] sm:$0xf]
      %v1381 = vld [vmem:[%s3 + $0x40] sm:$0xf]
      %v1382 = vld [vmem:[%s3 + $0x44] sm:$0xf]
      %v1383 = vld [vmem:[%s3 + $0x48] sm:$0xf]
      %v1384 = vld [vmem:[%s3 + $0x4c] sm:$0xf]
      %v1385 = vld [vmem:[%s3 + $0x50] sm:$0xf]
      %v1386 = vld [vmem:[%s3 + $0x54] sm:$0xf]
      %v1387 = vld [vmem:[%s3 + $0x58] sm:$0xf]
      %v1388 = vld [vmem:[%s3 + $0x5c] sm:$0xf]
      %v1389 = vld [vmem:[%s3 + $0x60] sm:$0xf]
      %v1390 = vld [vmem:[%s3 + $0x64] sm:$0xf]
      %v1391 = vld [vmem:[%s3 + $0x68] sm:$0xf]
      %v1392 = vld [vmem:[%s3 + $0x6c] sm:$0xf]
      %v1393 = vld [vmem:[%s3 + $0x70] sm:$0xf]
      %v1394 = vld [vmem:[%s3 + $0x74] sm:$0xf]
      %v1395 = vld [vmem:[%s3 + $0x78] sm:$0xf]
      %v1396 = vld [vmem:[%s3 + $0x7c] sm:$0xf]
      %v1397 = vld [vmem:[%s3 + $0x80] sm:$0xf]
      %v1398 = vld [vmem:[%s3 + $0x84] sm:$0xf]
      %v1399 = vld [vmem:[%s3 + $0x88] sm:$0xf]
      %v1400 = vld [vmem:[%s3 + $0x8c] sm:$0xf]
      %v1401 = vld [vmem:[%s3 + $0x90] sm:$0xf]
      %v1402 = vld [vmem:[%s3 + $0x94] sm:$0xf]
      %v1403 = vld [vmem:[%s3 + $0x98] sm:$0xf]
      %v1404 = vld [vmem:[%s3 + $0x9c] sm:$0xf]
      %v1405 = vld [vmem:[%s3 + $0xa0] sm:$0xf]
      %v1406 = vld [vmem:[%s3 + $0xa4] sm:$0xf]
      %v1407 = vld [vmem:[%s3 + $0xa8] sm:$0xf]
      %v1408 = vld [vmem:[%s3 + $0xac] sm:$0xf]
      %v1409 = vld [vmem:[%s3 + $0xb0] sm:$0xf]
      %v1410 = vld [vmem:[%s3 + $0xb4] sm:$0xf]
      %v1411 = vld [vmem:[%s3 + $0xb8] sm:$0xf]
      %v1412 = vld [vmem:[%s3 + $0xbc] sm:$0xf]
      %v1413 = vld [vmem:[%s3 + $0xc0] sm:$0xf]
      %v1414 = vld [vmem:[%s3 + $0xc4] sm:$0xf]
      %v1415 = vld [vmem:[%s3 + $0xc8] sm:$0xf]
      %v1416 = vld [vmem:[%s3 + $0xcc] sm:$0xf]
      %v1417 = vld [vmem:[%s3 + $0xd0] sm:$0xf]
      %v1418 = vld [vmem:[%s3 + $0xd4] sm:$0xf]
      %v1419 = vld [vmem:[%s3 + $0xd8] sm:$0xf]
      %v1420 = vld [vmem:[%s3 + $0xdc] sm:$0xf]
      %v1421 = vld [vmem:[%s3 + $0xe0] sm:$0xf]
      %v1422 = vld [vmem:[%s3 + $0xe4] sm:$0xf]
      %v1423 = vld [vmem:[%s3 + $0xe8] sm:$0xf]
      %v1424 = vld [vmem:[%s3 + $0xec] sm:$0xf]
      %v1425 = vld [vmem:[%s3 + $0xf0] sm:$0xf]
      %v1426 = vld [vmem:[%s3 + $0xf4] sm:$0xf]
      %v1427 = vld [vmem:[%s3 + $0xf8] sm:$0xf]
      %v1428 = vld [vmem:[%s3 + $0xfc] sm:$0xf]
      %v1429 = vld [vmem:[%s4] sm:$0x1]
      %v1430 = vpack.c.bf16 %v1361, %v1361
      %v1431 = vpack.c.bf16 %v1362, %v1362
      %v1432 = vpack.c.bf16 %v1363, %v1363
      %v1433 = vpack.c.bf16 %v1364, %v1364
      %v1435 = vlaneseq
      %v1436 = vshrl.u32 %v1435, 7
      %v1437 = vsub.s32 0, %v1436
      %v1438 = vrot.slane %v1429, %v1437
      %v1504 = vunpack.c.l.b16 %v1365
      %v1505 = vunpack.c.l.b16 %v1366
      %v1506 = vunpack.c.l.b16 %v1367
      %v1507 = vunpack.c.l.b16 %v1368
      %v1508 = vunpack.c.l.b16 %v1369
      %v1509 = vunpack.c.l.b16 %v1370
      %v1510 = vunpack.c.l.b16 %v1371
      %v1511 = vunpack.c.l.b16 %v1372
      %v1512 = vunpack.c.l.b16 %v1373
      %v1513 = vunpack.c.l.b16 %v1374
      %v1514 = vunpack.c.l.b16 %v1375
      %v1515 = vunpack.c.l.b16 %v1376
      %v1516 = vunpack.c.l.b16 %v1377
      %v1517 = vunpack.c.l.b16 %v1378
      %v1518 = vunpack.c.l.b16 %v1379
      %v1519 = vunpack.c.l.b16 %v1380
      %v1520 = vunpack.c.l.b16 %v1381
      %v1521 = vunpack.c.l.b16 %v1382
      %v1522 = vunpack.c.l.b16 %v1383
      %v1523 = vunpack.c.l.b16 %v1384
      %v1524 = vunpack.c.l.b16 %v1385
      %v1525 = vunpack.c.l.b16 %v1386
      %v1526 = vunpack.c.l.b16 %v1387
      %v1527 = vunpack.c.l.b16 %v1388
      %v1528 = vunpack.c.l.b16 %v1389
      %v1529 = vunpack.c.l.b16 %v1390
      %v1530 = vunpack.c.l.b16 %v1391
      %v1531 = vunpack.c.l.b16 %v1392
      %v1532 = vunpack.c.l.b16 %v1393
      %v1533 = vunpack.c.l.b16 %v1394
      %v1534 = vunpack.c.l.b16 %v1395
      %v1535 = vunpack.c.l.b16 %v1396
      %v1536 = vunpack.c.l.b16 %v1397
      %v1537 = vunpack.c.l.b16 %v1398
      %v1538 = vunpack.c.l.b16 %v1399
      %v1539 = vunpack.c.l.b16 %v1400
      %v1540 = vunpack.c.l.b16 %v1401
      %v1541 = vunpack.c.l.b16 %v1402
      %v1542 = vunpack.c.l.b16 %v1403
      %v1543 = vunpack.c.l.b16 %v1404
      %v1544 = vunpack.c.l.b16 %v1405
      %v1545 = vunpack.c.l.b16 %v1406
      %v1546 = vunpack.c.l.b16 %v1407
      %v1547 = vunpack.c.l.b16 %v1408
      %v1548 = vunpack.c.l.b16 %v1409
      %v1549 = vunpack.c.l.b16 %v1410
      %v1550 = vunpack.c.l.b16 %v1411
      %v1551 = vunpack.c.l.b16 %v1412
      %v1552 = vunpack.c.l.b16 %v1413
      %v1553 = vunpack.c.l.b16 %v1414
      %v1554 = vunpack.c.l.b16 %v1415
      %v1555 = vunpack.c.l.b16 %v1416
      %v1556 = vunpack.c.l.b16 %v1417
      %v1557 = vunpack.c.l.b16 %v1418
      %v1558 = vunpack.c.l.b16 %v1419
      %v1559 = vunpack.c.l.b16 %v1420
      %v1560 = vunpack.c.l.b16 %v1421
      %v1561 = vunpack.c.l.b16 %v1422
      %v1562 = vunpack.c.l.b16 %v1423
      %v1563 = vunpack.c.l.b16 %v1424
      %v1564 = vunpack.c.l.b16 %v1425
      %v1565 = vunpack.c.l.b16 %v1426
      %v1566 = vunpack.c.l.b16 %v1427
      %v1567 = vunpack.c.l.b16 %v1428
      %v1568 = vpack.c.b16 %v1505, %v1504
      %v1569 = vpack.c.b16 %v1507, %v1506
      %v1570 = vpack.c.b16 %v1509, %v1508
      %v1571 = vpack.c.b16 %v1511, %v1510
      %v1572 = vpack.c.b16 %v1513, %v1512
      %v1573 = vpack.c.b16 %v1515, %v1514
      %v1574 = vpack.c.b16 %v1517, %v1516
      %v1575 = vpack.c.b16 %v1519, %v1518
      %v1576 = vpack.c.b16 %v1521, %v1520
      %v1577 = vpack.c.b16 %v1523, %v1522
      %v1578 = vpack.c.b16 %v1525, %v1524
      %v1579 = vpack.c.b16 %v1527, %v1526
      %v1580 = vpack.c.b16 %v1529, %v1528
      %v1581 = vpack.c.b16 %v1531, %v1530
      %v1582 = vpack.c.b16 %v1533, %v1532
      %v1583 = vpack.c.b16 %v1535, %v1534
      %v1584 = vpack.c.b16 %v1537, %v1536
      %v1585 = vpack.c.b16 %v1539, %v1538
      %v1586 = vpack.c.b16 %v1541, %v1540
      %v1587 = vpack.c.b16 %v1543, %v1542
      %v1588 = vpack.c.b16 %v1545, %v1544
      %v1589 = vpack.c.b16 %v1547, %v1546
      %v1590 = vpack.c.b16 %v1549, %v1548
      %v1591 = vpack.c.b16 %v1551, %v1550
      %v1592 = vpack.c.b16 %v1553, %v1552
      %v1593 = vpack.c.b16 %v1555, %v1554
      %v1594 = vpack.c.b16 %v1557, %v1556
      %v1595 = vpack.c.b16 %v1559, %v1558
      %v1596 = vpack.c.b16 %v1561, %v1560
      %v1597 = vpack.c.b16 %v1563, %v1562
      %v1598 = vpack.c.b16 %v1565, %v1564
      %v1599 = vpack.c.b16 %v1567, %v1566
      %1632 = vmatprep.subr.bf16.mxu0 0
      %1633 = vmatpush1.bf16.msra.mxu0 %v1575
      %1634 = vmatprep.subr.bf16.mxu0 0
      %1635 = vmatpush1.bf16.msra.mxu0 %v1574
      %1636 = vmatprep.subr.bf16.mxu0 0
      %1637 = vmatpush1.bf16.msra.mxu0 %v1573
      %1638 = vmatprep.subr.bf16.mxu0 0
      %1639 = vmatpush1.bf16.msra.mxu0 %v1572
      %1640 = vmatprep.subr.bf16.mxu0 0
      %1641 = vmatpush1.bf16.msra.mxu0 %v1571
      %1642 = vmatprep.subr.bf16.mxu0 0
      %1643 = vmatpush1.bf16.msra.mxu0 %v1570
      %1644 = vmatprep.subr.bf16.mxu0 0
      %1645 = vmatpush1.bf16.msra.mxu0 %v1569
      %1646 = vmatprep.subr.bf16.mxu0 0
      %1647 = vmatpush1.bf16.msra.mxu0 %v1568
      %1648 = vmatprep.subr.bf16.mxu0 0
      %1649 = vmatpush2.bf16.msra.mxu0 %v1583
      %1650 = vmatprep.subr.bf16.mxu0 0
      %1651 = vmatpush2.bf16.msra.mxu0 %v1582
      %1652 = vmatprep.subr.bf16.mxu0 0
      %1653 = vmatpush2.bf16.msra.mxu0 %v1581
      %1654 = vmatprep.subr.bf16.mxu0 0
      %1655 = vmatpush2.bf16.msra.mxu0 %v1580
      %1656 = vmatprep.subr.bf16.mxu0 0
      %1657 = vmatpush2.bf16.msra.mxu0 %v1579
      %1658 = vmatprep.subr.bf16.mxu0 0
      %1659 = vmatpush2.bf16.msra.mxu0 %v1578
      %1660 = vmatprep.subr.bf16.mxu0 0
      %1661 = vmatpush2.bf16.msra.mxu0 %v1577
      %1662 = vmatprep.subr.bf16.mxu0 0
      %1663 = vmatpush2.bf16.msra.mxu0 %v1576
      %1664 = vmatprep.mubr.bf16.mxu0 %v1431
      %1665 = vmatmul.mubr.bf16.gmra.mxu0 %v1430
      %v1666 = vpop.f32.mrf.mxu0
      %v1667 = vadd.f32 %v1438, %v1666
      %v1668 = vpop.f32.mrf.mxu0
      %v1669 = vpop.f32.mrf.mxu0
      %v1670 = vpop.f32.mrf.mxu0
      %1671 = vdwg.mxu0
      %1672 = vmatprep.subr.bf16.mxu0 0
      %1673 = vmatpush1.bf16.msra.mxu0 %v1591
      %1674 = vmatprep.subr.bf16.mxu0 0
      %1675 = vmatpush1.bf16.msra.mxu0 %v1590
      %1676 = vmatprep.subr.bf16.mxu0 0
      %1677 = vmatpush1.bf16.msra.mxu0 %v1589
      %1678 = vmatprep.subr.bf16.mxu0 0
      %1679 = vmatpush1.bf16.msra.mxu0 %v1588
      %1680 = vmatprep.subr.bf16.mxu0 0
      %1681 = vmatpush1.bf16.msra.mxu0 %v1587
      %1682 = vmatprep.subr.bf16.mxu0 0
      %1683 = vmatpush1.bf16.msra.mxu0 %v1586
      %1684 = vmatprep.subr.bf16.mxu0 0
      %1685 = vmatpush1.bf16.msra.mxu0 %v1585
      %1686 = vmatprep.subr.bf16.mxu0 0
      %1687 = vmatpush1.bf16.msra.mxu0 %v1584
      %1688 = vmatprep.subr.bf16.mxu0 0
      %1689 = vmatpush2.bf16.msra.mxu0 %v1599
      %1690 = vmatprep.subr.bf16.mxu0 0
      %1691 = vmatpush2.bf16.msra.mxu0 %v1598
      %1692 = vmatprep.subr.bf16.mxu0 0
      %1693 = vmatpush2.bf16.msra.mxu0 %v1597
      %1694 = vmatprep.subr.bf16.mxu0 0
      %1695 = vmatpush2.bf16.msra.mxu0 %v1596
      %1696 = vmatprep.subr.bf16.mxu0 0
      %1697 = vmatpush2.bf16.msra.mxu0 %v1595
      %1698 = vmatprep.subr.bf16.mxu0 0
      %1699 = vmatpush2.bf16.msra.mxu0 %v1594
      %1700 = vmatprep.subr.bf16.mxu0 0
      %1701 = vmatpush2.bf16.msra.mxu0 %v1593
      %1702 = vmatprep.subr.bf16.mxu0 0
      %1703 = vmatpush2.bf16.msra.mxu0 %v1592
      %1704 = vmatprep.mubr.bf16.mxu0 %v1433
      %1705 = vmatmul.mubr.bf16.gmra.mxu0 %v1432
      %v1706 = vpop.f32.mrf.mxu0
      %v1707 = vadd.f32 %v1667, %v1706
      %v1708 = vpop.f32.mrf.mxu0
      %v1709 = vpop.f32.mrf.mxu0
      %v1710 = vpop.f32.mrf.mxu0
      %1711 = vdwg.mxu0
      %v1712 = vadd.f32 %v492, %v1707
      %v1713 = vld [vmem:[%s5] sm:$0x1]
      %v1714 = vld [vmem:[%s6] sm:$0x1]
      %v1715 = vsel %vm701, %v1712, 0.0
      %1716 = vadd.xlane.f32.xlu0 %v1715
      %v1717 = vpop.xlane.xlu0 %1716
      %v1718 = vrcp.pop 32.0
      %v1719 = vmul.f32 %v1717, %v1718
      %v1720 = vsub.f32 %v1712, %v1719
      %v1721 = vmul.f32 %v1720, %v1720
      %v1722 = vsel %vm701, %v1721, 0.0
      %1723 = vadd.xlane.f32.xlu0 %v1722
      %v1724 = vpop.xlane.xlu0 %1723
      %v1725 = vmul.f32 %v1724, %v1718
      %v1726 = vadd.f32 %v1725, 1e-05
      %v1727 = vrsqrt.pop %v1726
      %v1728 = vmul.f32 %v1720, %v1727
      %v1730 = vlaneseq
      %v1731 = vshrl.u32 %v1730, 7
      %v1732 = vsub.s32 0, %v1731
      %v1733 = vrot.slane %v1713, %v1732
      %v1735 = vmul.f32 %v1728, %v1733
      %v1737 = vlaneseq
      %v1738 = vshrl.u32 %v1737, 7
      %v1739 = vsub.s32 0, %v1738
      %v1740 = vrot.slane %v1714, %v1739
      %v1742 = vadd.f32 %v1735, %v1740
      %v1743 = vld [vmem:[%s7] sm:$0xf]
      %v1744 = vld [vmem:[%s7 + $0x4] sm:$0xf]
      %v1745 = vld [vmem:[%s7 + $0x8] sm:$0xf]
      %v1746 = vld [vmem:[%s7 + $0xc] sm:$0xf]
      %v1747 = vld [vmem:[%s8] sm:$0x1]
      %v1748 = vpack.c.bf16 %v1742, %v1742
      %v1750 = vlaneseq
      %v1751 = vshrl.u32 %v1750, 7
      %v1752 = vsub.s32 0, %v1751
      %v1753 = vrot.slane %v1747, %v1752
      %v1759 = vunpack.c.l.b16 %v1743
      %v1760 = vunpack.c.l.b16 %v1744
      %v1761 = vunpack.c.l.b16 %v1745
      %v1762 = vunpack.c.l.b16 %v1746
      %v1763 = vpack.c.b16 %v1760, %v1759
      %v1764 = vpack.c.b16 %v1762, %v1761
      %v1768 = vsel %vm701, %v1748, 0
      %1770 = vmatprep.subr.bf16.mxu0 0
      %1771 = vmatpush1.bf16.msra.mxu0 0
      %1772 = vmatprep.subr.bf16.mxu0 0
      %1773 = vmatpush1.bf16.msra.mxu0 0
      %1774 = vmatprep.subr.bf16.mxu0 0
      %1775 = vmatpush1.bf16.msra.mxu0 0
      %1776 = vmatprep.subr.bf16.mxu0 0
      %1777 = vmatpush1.bf16.msra.mxu0 0
      %1778 = vmatprep.subr.bf16.mxu0 0
      %1779 = vmatpush1.bf16.msra.mxu0 0
      %1780 = vmatprep.subr.bf16.mxu0 0
      %1781 = vmatpush1.bf16.msra.mxu0 0
      %1782 = vmatprep.subr.bf16.mxu0 0
      %1783 = vmatpush1.bf16.msra.mxu0 %v1764
      %1784 = vmatprep.subr.bf16.mxu0 0
      %1785 = vmatpush1.bf16.msra.mxu0 %v1763
      %1786 = vmatprep.subr.bf16.mxu0 0
      %1787 = vmatpush2.bf16.msra.mxu0 0
      %1788 = vmatprep.subr.bf16.mxu0 0
      %1789 = vmatpush2.bf16.msra.mxu0 0
      %1790 = vmatprep.subr.bf16.mxu0 0
      %1791 = vmatpush2.bf16.msra.mxu0 0
      %1792 = vmatprep.subr.bf16.mxu0 0
      %1793 = vmatpush2.bf16.msra.mxu0 0
      %1794 = vmatprep.subr.bf16.mxu0 0
      %1795 = vmatpush2.bf16.msra.mxu0 0
      %1796 = vmatprep.subr.bf16.mxu0 0
      %1797 = vmatpush2.bf16.msra.mxu0 0
      %1798 = vmatprep.subr.bf16.mxu0 0
      %1799 = vmatpush2.bf16.msra.mxu0 0
      %1800 = vmatprep.subr.bf16.mxu0 0
      %1801 = vmatpush2.bf16.msra.mxu0 0
      %1802 = vmatprep.mubr.bf16.mxu0 0
      %1803 = vmatmul.mubr.bf16.gmra.mxu0 %v1768
      %v1804 = vpop.f32.mrf.mxu0
      %v1805 = vadd.f32 %v1753, %v1804
      %v1806 = vpop.f32.mrf.mxu0
      %v1807 = vpop.f32.mrf.mxu0
      %v1808 = vpop.f32.mrf.mxu0
      %1809 = vdwg.mxu0
      %v1810 = vmax.f32 %v1805, 0.0
      %v1811 = vld [vmem:[%s9] sm:$0xf]
      %v1812 = vld [vmem:[%s9 + $0x4] sm:$0xf]
      %v1813 = vld [vmem:[%s9 + $0x8] sm:$0xf]
      %v1814 = vld [vmem:[%s9 + $0xc] sm:$0xf]
      %v1815 = vld [vmem:[%s9 + $0x10] sm:$0xf]
      %v1816 = vld [vmem:[%s9 + $0x14] sm:$0xf]
      %v1817 = vld [vmem:[%s9 + $0x18] sm:$0xf]
      %v1818 = vld [vmem:[%s9 + $0x1c] sm:$0xf]
      %v1819 = vld [vmem:[%s9 + $0x20] sm:$0xf]
      %v1820 = vld [vmem:[%s9 + $0x24] sm:$0xf]
      %v1821 = vld [vmem:[%s9 + $0x28] sm:$0xf]
      %v1822 = vld [vmem:[%s9 + $0x2c] sm:$0xf]
      %v1823 = vld [vmem:[%s9 + $0x30] sm:$0xf]
      %v1824 = vld [vmem:[%s9 + $0x34] sm:$0xf]
      %v1825 = vld [vmem:[%s9 + $0x38] sm:$0xf]
      %v1826 = vld [vmem:[%s9 + $0x3c] sm:$0xf]
      %v1827 = vld [vmem:[%s10] sm:$0x1]
      %v1828 = vpack.c.bf16 %v1810, %v1810
      %v1830 = vlaneseq
      %v1831 = vshrl.u32 %v1830, 7
      %v1832 = vsub.s32 0, %v1831
      %v1833 = vrot.slane %v1827, %v1832
      %v1851 = vunpack.c.l.b16 %v1811
      %v1852 = vunpack.c.l.b16 %v1812
      %v1853 = vunpack.c.l.b16 %v1813
      %v1854 = vunpack.c.l.b16 %v1814
      %v1855 = vunpack.c.l.b16 %v1815
      %v1856 = vunpack.c.l.b16 %v1816
      %v1857 = vunpack.c.l.b16 %v1817
      %v1858 = vunpack.c.l.b16 %v1818
      %v1859 = vunpack.c.l.b16 %v1819
      %v1860 = vunpack.c.l.b16 %v1820
      %v1861 = vunpack.c.l.b16 %v1821
      %v1862 = vunpack.c.l.b16 %v1822
      %v1863 = vunpack.c.l.b16 %v1823
      %v1864 = vunpack.c.l.b16 %v1824
      %v1865 = vunpack.c.l.b16 %v1825
      %v1866 = vunpack.c.l.b16 %v1826
      %v1867 = vpack.c.b16 %v1852, %v1851
      %v1868 = vpack.c.b16 %v1854, %v1853
      %v1869 = vpack.c.b16 %v1856, %v1855
      %v1870 = vpack.c.b16 %v1858, %v1857
      %v1871 = vpack.c.b16 %v1860, %v1859
      %v1872 = vpack.c.b16 %v1862, %v1861
      %v1873 = vpack.c.b16 %v1864, %v1863
      %v1874 = vpack.c.b16 %v1866, %v1865
      %1883 = vmatprep.subr.bf16.mxu0 0
      %1884 = vmatpush1.bf16.msra.mxu0 %v1874
      %1885 = vmatprep.subr.bf16.mxu0 0
      %1886 = vmatpush1.bf16.msra.mxu0 %v1873
      %1887 = vmatprep.subr.bf16.mxu0 0
      %1888 = vmatpush1.bf16.msra.mxu0 %v1872
      %1889 = vmatprep.subr.bf16.mxu0 0
      %1890 = vmatpush1.bf16.msra.mxu0 %v1871
      %1891 = vmatprep.subr.bf16.mxu0 0
      %1892 = vmatpush1.bf16.msra.mxu0 %v1870
      %1893 = vmatprep.subr.bf16.mxu0 0
      %1894 = vmatpush1.bf16.msra.mxu0 %v1869
      %1895 = vmatprep.subr.bf16.mxu0 0
      %1896 = vmatpush1.bf16.msra.mxu0 %v1868
      %1897 = vmatprep.subr.bf16.mxu0 0
      %1898 = vmatpush1.bf16.msra.mxu0 %v1867
      %1899 = vmatprep.subr.bf16.mxu0 0
      %1900 = vmatpush2.bf16.msra.mxu0 0
      %1901 = vmatprep.subr.bf16.mxu0 0
      %1902 = vmatpush2.bf16.msra.mxu0 0
      %1903 = vmatprep.subr.bf16.mxu0 0
      %1904 = vmatpush2.bf16.msra.mxu0 0
      %1905 = vmatprep.subr.bf16.mxu0 0
      %1906 = vmatpush2.bf16.msra.mxu0 0
      %1907 = vmatprep.subr.bf16.mxu0 0
      %1908 = vmatpush2.bf16.msra.mxu0 0
      %1909 = vmatprep.subr.bf16.mxu0 0
      %1910 = vmatpush2.bf16.msra.mxu0 0
      %1911 = vmatprep.subr.bf16.mxu0 0
      %1912 = vmatpush2.bf16.msra.mxu0 0
      %1913 = vmatprep.subr.bf16.mxu0 0
      %1914 = vmatpush2.bf16.msra.mxu0 0
      %1915 = vmatprep.mubr.bf16.mxu0 0
      %1916 = vmatmul.mubr.bf16.gmra.mxu0 %v1828
      %v1917 = vpop.f32.mrf.mxu0
      %v1918 = vadd.f32 %v1833, %v1917
      %v1919 = vpop.f32.mrf.mxu0
      %v1920 = vpop.f32.mrf.mxu0
      %v1921 = vpop.f32.mrf.mxu0
      %1922 = vdwg.mxu0
      %v1923 = vadd.f32 %v1742, %v1918
      %v1924 = vld [vmem:[%s11] sm:$0x1]
      %v1925 = vld [vmem:[%s12] sm:$0x1]
      %v1926 = vsel %vm701, %v1923, 0.0
      %1927 = vadd.xlane.f32.xlu0 %v1926
      %v1928 = vpop.xlane.xlu0 %1927
      %v1929 = vmul.f32 %v1928, %v1718
      %v1930 = vsub.f32 %v1923, %v1929
      %v1931 = vmul.f32 %v1930, %v1930
      %v1932 = vsel %vm701, %v1931, 0.0
      %1933 = vadd.xlane.f32.xlu0 %v1932
      %v1934 = vpop.xlane.xlu0 %1933
      %v1935 = vmul.f32 %v1934, %v1718
      %v1936 = vadd.f32 %v1935, 1e-05
      %v1937 = vrsqrt.pop %v1936
      %v1938 = vmul.f32 %v1930, %v1937
      %v1940 = vlaneseq
      %v1941 = vshrl.u32 %v1940, 7
      %v1942 = vsub.s32 0, %v1941
      %v1943 = vrot.slane %v1924, %v1942
      %v1945 = vmul.f32 %v1938, %v1943
      %v1947 = vlaneseq
      %v1948 = vshrl.u32 %v1947, 7
      %v1949 = vsub.s32 0, %v1948
      %v1950 = vrot.slane %v1925, %v1949
      %v1952 = vadd.f32 %v1945, %v1950
      %v1953 = vld [vmem:[%s13] sm:$0x1]
      %v1954 = vld [vmem:[%s14] sm:$0x1]
      %v1955 = vsel %vm701, %v1952, 0.0
      %1956 = vadd.xlane.f32.xlu0 %v1955
      %v1957 = vpop.xlane.xlu0 %1956
      %v1958 = vmul.f32 %v1957, %v1718
      %v1959 = vsub.f32 %v1952, %v1958
      %v1960 = vmul.f32 %v1959, %v1959
      %v1961 = vsel %vm701, %v1960, 0.0
      %1962 = vadd.xlane.f32.xlu0 %v1961
      %v1963 = vpop.xlane.xlu0 %1962
      %v1964 = vmul.f32 %v1963, %v1718
      %v1965 = vadd.f32 %v1964, 1e-05
      %v1966 = vrsqrt.pop %v1965
      %v1967 = vmul.f32 %v1959, %v1966
      %v1969 = vlaneseq
      %v1970 = vshrl.u32 %v1969, 7
      %v1971 = vsub.s32 0, %v1970
      %v1972 = vrot.slane %v1953, %v1971
      %v1974 = vmul.f32 %v1967, %v1972
      %v1976 = vlaneseq
      %v1977 = vshrl.u32 %v1976, 7
      %v1978 = vsub.s32 0, %v1977
      %v1979 = vrot.slane %v1954, %v1978
      %v1981 = vadd.f32 %v1974, %v1979
      %v1982 = vpack.c.bf16 %v1981, %v1981
      %vm1983 = vcmask 257024
      %1984 = vst.msk [vmem:[%s489] sm:$0xf] %vm1983, %v1982
      %p1985 = scmp.lt.s32.totalorder %s26, 1
      %s1986 = scalar_select %p1985, %s26, 1
      %s1987 = smul.addr %s1986, 4
      %s1988 = scalar_lea.vmem %s15, %s1987
      // Predicated region
      $region81: #{unresolved_bert_forward.6} parent=79 // pred_check
        %p1989 = pneg %p364
      $region82: #{unresolved_bert_forward.6} parent=79 // pred_check_branch
        %1991 = sbr.rel (%p1989) target = $region84
      $region83: #{unresolved_bert_forward.6} parent=79 // pred_region
        _
      $region84: #{unresolved_bert_forward.6} parent=79 // pred_fallthru
        _
    $region80: #{unresolved_bert_forward.6} parent=5 // pred_fallthru
      _
    %p1992 = scmp.le.s32.totalorder 2, %s21
    // Predicated region
    $region85: #{unresolved_bert_forward.6} parent=5 // pred_check
      %p1993 = pneg %p1992
    $region86: #{unresolved_bert_forward.6} parent=5 // pred_check_branch
      %1995 = sbr.rel (%p1993) target = $region88
    $region87: #{unresolved_bert_forward.6} parent=5 // pred_region
      %s1996 = ssub.s32 %s21, 2
      // Predicated region
      $region89: #{unresolved_bert_forward.6} parent=87 // pred_check
        %p1997 = pneg %p370
      $region90: #{unresolved_bert_forward.6} parent=87 // pred_check_branch
        %1999 = sbr.rel (%p1997) target = $region92
      $region91: #{unresolved_bert_forward.6} parent=87 // pred_region
        %p2000 = scmp.lt.s32.totalorder %s27, 1
        %s2001 = scalar_select %p2000, %s27, 1
        %s2002 = smul.addr %s2001, 4
        %s2003 = scalar_lea.vmem %s15, %s2002
      $region92: #{unresolved_bert_forward.6} parent=87 // pred_fallthru
        _
    $region88: #{unresolved_bert_forward.6} parent=5 // pred_fallthru
      _
  $region6: #{unresolved_bert_forward.6} parent=0 // loop_footer
    %s25 = sadd.s32 1, %s21
  $region7: #{unresolved_bert_forward.6} parent=0 // loop_footer_branch
    %20 = sbr.rel target = $region3
  $region8: #{unresolved_bert_forward.6} parent=0 // loop_exit
    _

// kernel: unresolved_bert_forward.5
$region0: #{unresolved_bert_forward.5}
  #allocation0 [shape = 'u32[]', space=smem, size = 0x4, offset = 0x4, fixed_abs, tag = 'smem constant byte address 0x4 - core index']
  #allocation1 [shape = 'u32[144,128]{1,0:T(1,128)}', space=vmem, size = 0x12000, scoped, tag = 'internal scratch']
  #allocation2 [shape = 'f32[8,512]{1,0:T(8,128)}', space=vmem, size = 0x4000, scoped, tag = 'scratch operand']
  %s0 = inlined_call_operand.vmem [shape: bf16[2,8,32], index: 0, kind: input, shape index: {}]
  %s1 = inlined_call_operand.vmem [shape: bf16[32,1536], index: 1, kind: input, shape index: {}]
  %s2 = inlined_call_operand.vmem [shape: f32[1,1536], index: 2, kind: input, shape index: {}]
  %s3 = inlined_call_operand.vmem [shape: bf16[512,32], index: 3, kind: input, shape index: {}]
  %s4 = inlined_call_operand.vmem [shape: f32[1,32], index: 4, kind: input, shape index: {}]
  %s5 = inlined_call_operand.vmem [shape: f32[1,32], index: 5, kind: input, shape index: {}]
  %s6 = inlined_call_operand.vmem [shape: f32[1,32], index: 6, kind: input, shape index: {}]
  %s7 = inlined_call_operand.vmem [shape: bf16[32,128], index: 7, kind: input, shape index: {}]
  %s8 = inlined_call_operand.vmem [shape: f32[1,128], index: 8, kind: input, shape index: {}]
  %s9 = inlined_call_operand.vmem [shape: bf16[128,32], index: 9, kind: input, shape index: {}]
  %s10 = inlined_call_operand.vmem [shape: f32[1,32], index: 10, kind: input, shape index: {}]
  %s11 = inlined_call_operand.vmem [shape: f32[1,32], index: 11, kind: input, shape index: {}]
  %s12 = inlined_call_operand.vmem [shape: f32[1,32], index: 12, kind: input, shape index: {}]
  %s13 = inlined_call_operand.vmem [shape: bf16[2,8,32], index: 13, kind: output, shape index: {}]
  %s14 = sld [smem:[#allocation0]]
  $region85: #{unresolved_bert_forward.5} parent=0
    _
  %s16 = ssub.s32 1, %s14
  %s17 = scalar_select 0, %s16, %s14
  loop: start=0, step=1, limit=4
  $region2: #{unresolved_bert_forward.5} parent=0 // loop_pre_header
    _
  $region3: #{unresolved_bert_forward.5} parent=0 // loop_header
    %s19 = sphi 0, %s23
    %p20 = scmp.ge.s32.totalorder %s19, 4
    %s29 = sphi 0, %s31
    %s32 = sphi 0, %s29
    %s33 = sphi 0, %s32
    %s49 = sphi 0, %s33
    %s53 = sphi 0, %s53
    %s55 = sphi 0, %s53
    %s56 = sphi 0, %s55
    %s70 = sphi 0, %s56
    %s74 = sphi 0, %s74
    %s76 = sphi 0, %s74
    %s77 = sphi 0, %s76
    %s91 = sphi 0, %s77
    %s95 = sphi 0, %s95
    %s97 = sphi 0, %s95
    %s98 = sphi 0, %s97
    %s112 = sphi 0, %s98
    %s116 = sphi 0, %s116
    %s118 = sphi 0, %s116
    %s119 = sphi 0, %s118
    %s133 = sphi 0, %s119
    %s137 = sphi 0, %s137
    %s139 = sphi 0, %s137
    %s140 = sphi 0, %s139
    %s154 = sphi 0, %s140
    %s158 = sphi 0, %s158
    %s160 = sphi 0, %s158
    %s161 = sphi 0, %s160
    %s175 = sphi 0, %s161
    %s179 = sphi 0, %s179
    %s181 = sphi 0, %s179
    %s182 = sphi 0, %s181
    %s196 = sphi 0, %s182
    %s200 = sphi 0, %s200
    %s202 = sphi 0, %s200
    %s203 = sphi 0, %s202
    %s217 = sphi 0, %s203
    %s221 = sphi 0, %s221
    %s223 = sphi 0, %s221
    %s224 = sphi 0, %s223
    %s238 = sphi 0, %s224
    %s242 = sphi 0, %s242
    %s244 = sphi 0, %s242
    %s245 = sphi 0, %s244
    %s259 = sphi 0, %s245
    %s263 = sphi 0, %s263
    %s265 = sphi 0, %s263
    %s266 = sphi 0, %s265
    %s280 = sphi 0, %s266
    %s284 = sphi 0, %s284
    %s286 = sphi 0, %s284
    %s287 = sphi 0, %s286
    %s301 = sphi 0, %s287
    %s307 = sphi 0, %s309
    %s310 = sphi 0, %s307
    %s311 = sphi 0, %s310
    %s327 = sphi 0, %s311
  $region4: #{unresolved_bert_forward.5} parent=0 // loop_header_branch
    %22 = sbr.rel (%p20) target = $region8
  $region5: #{unresolved_bert_forward.5} parent=0 // loop_body
    %s24 = ssub.s32 %s19, 1
    %s25 = ssub.s32 %s19, 2
    %s26 = sadd.s32 %s19, 1
    %s27 = ssub.s32 %s19, %s26
    %p28 = scmp.eq.s32.totalorder %s27, 0
    %s30 = sadd.s32 %s29, 1
    %s31 = scalar_select %p28, %s29, %s30
    %p34 = pneg %p28
    %p35 = scmp.eq.s32.totalorder %s19, 1
    %p36 = por %p34, %p35
    %p37 = scmp.ne.s32.totalorder %s29, %s32
    %p38 = scmp.eq.s32.totalorder %s19, 0
    %p39 = por %p37, %p38
    %p40 = scmp.ne.s32.totalorder %s29, %s32
    %p41 = scmp.eq.s32.totalorder %s24, 1
    %p42 = por %p40, %p41
    %p43 = scmp.ne.s32.totalorder %s32, %s33
    %p44 = scmp.eq.s32.totalorder %s24, 0
    %p45 = por %p43, %p44
    %p46 = scmp.ne.s32.totalorder %s32, %s33
    %p47 = scmp.eq.s32.totalorder %s25, 1
    %p48 = por %p46, %p47
    %p50 = scmp.ne.s32.totalorder %s33, %s49
    %p51 = scmp.eq.s32.totalorder %s25, 0
    %p52 = por %p50, %p51
    %s54 = sadd.s32 %s53, 1
    %p57 = scmp.eq.s32.totalorder %s19, 1
    %p58 = scmp.ne.s32.totalorder %s53, %s55
    %p59 = scmp.eq.s32.totalorder %s19, 0
    %p60 = por %p58, %p59
    %p61 = scmp.ne.s32.totalorder %s53, %s55
    %p62 = scmp.eq.s32.totalorder %s24, 1
    %p63 = por %p61, %p62
    %p64 = scmp.ne.s32.totalorder %s55, %s56
    %p65 = scmp.eq.s32.totalorder %s24, 0
    %p66 = por %p64, %p65
    %p67 = scmp.ne.s32.totalorder %s55, %s56
    %p68 = scmp.eq.s32.totalorder %s25, 1
    %p69 = por %p67, %p68
    %p71 = scmp.ne.s32.totalorder %s56, %s70
    %p72 = scmp.eq.s32.totalorder %s25, 0
    %p73 = por %p71, %p72
    %s75 = sadd.s32 %s74, 1
    %p78 = scmp.eq.s32.totalorder %s19, 1
    %p79 = scmp.ne.s32.totalorder %s74, %s76
    %p80 = scmp.eq.s32.totalorder %s19, 0
    %p81 = por %p79, %p80
    %p82 = scmp.ne.s32.totalorder %s74, %s76
    %p83 = scmp.eq.s32.totalorder %s24, 1
    %p84 = por %p82, %p83
    %p85 = scmp.ne.s32.totalorder %s76, %s77
    %p86 = scmp.eq.s32.totalorder %s24, 0
    %p87 = por %p85, %p86
    %p88 = scmp.ne.s32.totalorder %s76, %s77
    %p89 = scmp.eq.s32.totalorder %s25, 1
    %p90 = por %p88, %p89
    %p92 = scmp.ne.s32.totalorder %s77, %s91
    %p93 = scmp.eq.s32.totalorder %s25, 0
    %p94 = por %p92, %p93
    %s96 = sadd.s32 %s95, 1
    %p99 = scmp.eq.s32.totalorder %s19, 1
    %p100 = scmp.ne.s32.totalorder %s95, %s97
    %p101 = scmp.eq.s32.totalorder %s19, 0
    %p102 = por %p100, %p101
    %p103 = scmp.ne.s32.totalorder %s95, %s97
    %p104 = scmp.eq.s32.totalorder %s24, 1
    %p105 = por %p103, %p104
    %p106 = scmp.ne.s32.totalorder %s97, %s98
    %p107 = scmp.eq.s32.totalorder %s24, 0
    %p108 = por %p106, %p107
    %p109 = scmp.ne.s32.totalorder %s97, %s98
    %p110 = scmp.eq.s32.totalorder %s25, 1
    %p111 = por %p109, %p110
    %p113 = scmp.ne.s32.totalorder %s98, %s112
    %p114 = scmp.eq.s32.totalorder %s25, 0
    %p115 = por %p113, %p114
    %s117 = sadd.s32 %s116, 1
    %p120 = scmp.eq.s32.totalorder %s19, 1
    %p121 = scmp.ne.s32.totalorder %s116, %s118
    %p122 = scmp.eq.s32.totalorder %s19, 0
    %p123 = por %p121, %p122
    %p124 = scmp.ne.s32.totalorder %s116, %s118
    %p125 = scmp.eq.s32.totalorder %s24, 1
    %p126 = por %p124, %p125
    %p127 = scmp.ne.s32.totalorder %s118, %s119
    %p128 = scmp.eq.s32.totalorder %s24, 0
    %p129 = por %p127, %p128
    %p130 = scmp.ne.s32.totalorder %s118, %s119
    %p131 = scmp.eq.s32.totalorder %s25, 1
    %p132 = por %p130, %p131
    %p134 = scmp.ne.s32.totalorder %s119, %s133
    %p135 = scmp.eq.s32.totalorder %s25, 0
    %p136 = por %p134, %p135
    %s138 = sadd.s32 %s137, 1
    %p141 = scmp.eq.s32.totalorder %s19, 1
    %p142 = scmp.ne.s32.totalorder %s137, %s139
    %p143 = scmp.eq.s32.totalorder %s19, 0
    %p144 = por %p142, %p143
    %p145 = scmp.ne.s32.totalorder %s137, %s139
    %p146 = scmp.eq.s32.totalorder %s24, 1
    %p147 = por %p145, %p146
    %p148 = scmp.ne.s32.totalorder %s139, %s140
    %p149 = scmp.eq.s32.totalorder %s24, 0
    %p150 = por %p148, %p149
    %p151 = scmp.ne.s32.totalorder %s139, %s140
    %p152 = scmp.eq.s32.totalorder %s25, 1
    %p153 = por %p151, %p152
    %p155 = scmp.ne.s32.totalorder %s140, %s154
    %p156 = scmp.eq.s32.totalorder %s25, 0
    %p157 = por %p155, %p156
    %s159 = sadd.s32 %s158, 1
    %p162 = scmp.eq.s32.totalorder %s19, 1
    %p163 = scmp.ne.s32.totalorder %s158, %s160
    %p164 = scmp.eq.s32.totalorder %s19, 0
    %p165 = por %p163, %p164
    %p166 = scmp.ne.s32.totalorder %s158, %s160
    %p167 = scmp.eq.s32.totalorder %s24, 1
    %p168 = por %p166, %p167
    %p169 = scmp.ne.s32.totalorder %s160, %s161
    %p170 = scmp.eq.s32.totalorder %s24, 0
    %p171 = por %p169, %p170
    %p172 = scmp.ne.s32.totalorder %s160, %s161
    %p173 = scmp.eq.s32.totalorder %s25, 1
    %p174 = por %p172, %p173
    %p176 = scmp.ne.s32.totalorder %s161, %s175
    %p177 = scmp.eq.s32.totalorder %s25, 0
    %p178 = por %p176, %p177
    %s180 = sadd.s32 %s179, 1
    %p183 = scmp.eq.s32.totalorder %s19, 1
    %p184 = scmp.ne.s32.totalorder %s179, %s181
    %p185 = scmp.eq.s32.totalorder %s19, 0
    %p186 = por %p184, %p185
    %p187 = scmp.ne.s32.totalorder %s179, %s181
    %p188 = scmp.eq.s32.totalorder %s24, 1
    %p189 = por %p187, %p188
    %p190 = scmp.ne.s32.totalorder %s181, %s182
    %p191 = scmp.eq.s32.totalorder %s24, 0
    %p192 = por %p190, %p191
    %p193 = scmp.ne.s32.totalorder %s181, %s182
    %p194 = scmp.eq.s32.totalorder %s25, 1
    %p195 = por %p193, %p194
    %p197 = scmp.ne.s32.totalorder %s182, %s196
    %p198 = scmp.eq.s32.totalorder %s25, 0
    %p199 = por %p197, %p198
    %s201 = sadd.s32 %s200, 1
    %p204 = scmp.eq.s32.totalorder %s19, 1
    %p205 = scmp.ne.s32.totalorder %s200, %s202
    %p206 = scmp.eq.s32.totalorder %s19, 0
    %p207 = por %p205, %p206
    %p208 = scmp.ne.s32.totalorder %s200, %s202
    %p209 = scmp.eq.s32.totalorder %s24, 1
    %p210 = por %p208, %p209
    %p211 = scmp.ne.s32.totalorder %s202, %s203
    %p212 = scmp.eq.s32.totalorder %s24, 0
    %p213 = por %p211, %p212
    %p214 = scmp.ne.s32.totalorder %s202, %s203
    %p215 = scmp.eq.s32.totalorder %s25, 1
    %p216 = por %p214, %p215
    %p218 = scmp.ne.s32.totalorder %s203, %s217
    %p219 = scmp.eq.s32.totalorder %s25, 0
    %p220 = por %p218, %p219
    %s222 = sadd.s32 %s221, 1
    %p225 = scmp.eq.s32.totalorder %s19, 1
    %p226 = scmp.ne.s32.totalorder %s221, %s223
    %p227 = scmp.eq.s32.totalorder %s19, 0
    %p228 = por %p226, %p227
    %p229 = scmp.ne.s32.totalorder %s221, %s223
    %p230 = scmp.eq.s32.totalorder %s24, 1
    %p231 = por %p229, %p230
    %p232 = scmp.ne.s32.totalorder %s223, %s224
    %p233 = scmp.eq.s32.totalorder %s24, 0
    %p234 = por %p232, %p233
    %p235 = scmp.ne.s32.totalorder %s223, %s224
    %p236 = scmp.eq.s32.totalorder %s25, 1
    %p237 = por %p235, %p236
    %p239 = scmp.ne.s32.totalorder %s224, %s238
    %p240 = scmp.eq.s32.totalorder %s25, 0
    %p241 = por %p239, %p240
    %s243 = sadd.s32 %s242, 1
    %p246 = scmp.eq.s32.totalorder %s19, 1
    %p247 = scmp.ne.s32.totalorder %s242, %s244
    %p248 = scmp.eq.s32.totalorder %s19, 0
    %p249 = por %p247, %p248
    %p250 = scmp.ne.s32.totalorder %s242, %s244
    %p251 = scmp.eq.s32.totalorder %s24, 1
    %p252 = por %p250, %p251
    %p253 = scmp.ne.s32.totalorder %s244, %s245
    %p254 = scmp.eq.s32.totalorder %s24, 0
    %p255 = por %p253, %p254
    %p256 = scmp.ne.s32.totalorder %s244, %s245
    %p257 = scmp.eq.s32.totalorder %s25, 1
    %p258 = por %p256, %p257
    %p260 = scmp.ne.s32.totalorder %s245, %s259
    %p261 = scmp.eq.s32.totalorder %s25, 0
    %p262 = por %p260, %p261
    %s264 = sadd.s32 %s263, 1
    %p267 = scmp.eq.s32.totalorder %s19, 1
    %p268 = scmp.ne.s32.totalorder %s263, %s265
    %p269 = scmp.eq.s32.totalorder %s19, 0
    %p270 = por %p268, %p269
    %p271 = scmp.ne.s32.totalorder %s263, %s265
    %p272 = scmp.eq.s32.totalorder %s24, 1
    %p273 = por %p271, %p272
    %p274 = scmp.ne.s32.totalorder %s265, %s266
    %p275 = scmp.eq.s32.totalorder %s24, 0
    %p276 = por %p274, %p275
    %p277 = scmp.ne.s32.totalorder %s265, %s266
    %p278 = scmp.eq.s32.totalorder %s25, 1
    %p279 = por %p277, %p278
    %p281 = scmp.ne.s32.totalorder %s266, %s280
    %p282 = scmp.eq.s32.totalorder %s25, 0
    %p283 = por %p281, %p282
    %s285 = sadd.s32 %s284, 1
    %p288 = scmp.eq.s32.totalorder %s19, 1
    %p289 = scmp.ne.s32.totalorder %s284, %s286
    %p290 = scmp.eq.s32.totalorder %s19, 0
    %p291 = por %p289, %p290
    %p292 = scmp.ne.s32.totalorder %s284, %s286
    %p293 = scmp.eq.s32.totalorder %s24, 1
    %p294 = por %p292, %p293
    %p295 = scmp.ne.s32.totalorder %s286, %s287
    %p296 = scmp.eq.s32.totalorder %s24, 0
    %p297 = por %p295, %p296
    %p298 = scmp.ne.s32.totalorder %s286, %s287
    %p299 = scmp.eq.s32.totalorder %s25, 1
    %p300 = por %p298, %p299
    %p302 = scmp.ne.s32.totalorder %s287, %s301
    %p303 = scmp.eq.s32.totalorder %s25, 0
    %p304 = por %p302, %p303
    %s305 = ssub.s32 %s19, %s26
    %p306 = scmp.eq.s32.totalorder %s305, 0
    %s308 = sadd.s32 %s307, 1
    %s309 = scalar_select %p306, %s307, %s308
    %p312 = pneg %p306
    %p313 = scmp.eq.s32.totalorder %s19, 1
    %p314 = por %p312, %p313
    %p315 = scmp.ne.s32.totalorder %s307, %s310
    %p316 = scmp.eq.s32.totalorder %s19, 0
    %p317 = por %p315, %p316
    %p318 = scmp.ne.s32.totalorder %s307, %s310
    %p319 = scmp.eq.s32.totalorder %s24, 1
    %p320 = por %p318, %p319
    %p321 = scmp.ne.s32.totalorder %s310, %s311
    %p322 = scmp.eq.s32.totalorder %s24, 0
    %p323 = por %p321, %p322
    %p324 = scmp.ne.s32.totalorder %s310, %s311
    %p325 = scmp.eq.s32.totalorder %s25, 1
    %p326 = por %p324, %p325
    %p328 = scmp.ne.s32.totalorder %s311, %s327
    %p329 = scmp.eq.s32.totalorder %s25, 0
    %p330 = por %p328, %p329
    %p331 = scmp.le.s32.totalorder 1, %s19
    %p332 = scmp.lt.s32.totalorder %s19, 3
    %p333 = pnand %p331, %p332
    %p334 = pneg %p333
    // Predicated region
    $region9: #{unresolved_bert_forward.5} parent=5 // pred_check
      _
    $region10: #{unresolved_bert_forward.5} parent=5 // pred_check_branch
      %336 = sbr.rel (%p333) target = $region12
    $region11: #{unresolved_bert_forward.5} parent=5 // pred_region
      %s337 = ssub.s32 %s19, 1
      // Predicated region
      $region13: #{unresolved_bert_forward.5} parent=11 // pred_check
        %p338 = pneg %p66
      $region14: #{unresolved_bert_forward.5} parent=11 // pred_check_branch
        %340 = sbr.rel (%p338) target = $region16
      $region15: #{unresolved_bert_forward.5} parent=11 // pred_region
        _
      $region16: #{unresolved_bert_forward.5} parent=11 // pred_fallthru
        _
      // Predicated region
      $region17: #{unresolved_bert_forward.5} parent=11 // pred_check
        %p341 = pneg %p87
      $region18: #{unresolved_bert_forward.5} parent=11 // pred_check_branch
        %343 = sbr.rel (%p341) target = $region20
      $region19: #{unresolved_bert_forward.5} parent=11 // pred_region
        _
      $region20: #{unresolved_bert_forward.5} parent=11 // pred_fallthru
        _
      // Predicated region
      $region21: #{unresolved_bert_forward.5} parent=11 // pred_check
        %p344 = pneg %p108
      $region22: #{unresolved_bert_forward.5} parent=11 // pred_check_branch
        %346 = sbr.rel (%p344) target = $region24
      $region23: #{unresolved_bert_forward.5} parent=11 // pred_region
        _
      $region24: #{unresolved_bert_forward.5} parent=11 // pred_fallthru
        _
      // Predicated region
      $region25: #{unresolved_bert_forward.5} parent=11 // pred_check
        %p347 = pneg %p129
      $region26: #{unresolved_bert_forward.5} parent=11 // pred_check_branch
        %349 = sbr.rel (%p347) target = $region28
      $region27: #{unresolved_bert_forward.5} parent=11 // pred_region
        _
      $region28: #{unresolved_bert_forward.5} parent=11 // pred_fallthru
        _
      // Predicated region
      $region29: #{unresolved_bert_forward.5} parent=11 // pred_check
        %p350 = pneg %p150
      $region30: #{unresolved_bert_forward.5} parent=11 // pred_check_branch
        %352 = sbr.rel (%p350) target = $region32
      $region31: #{unresolved_bert_forward.5} parent=11 // pred_region
        _
      $region32: #{unresolved_bert_forward.5} parent=11 // pred_fallthru
        _
      // Predicated region
      $region33: #{unresolved_bert_forward.5} parent=11 // pred_check
        %p353 = pneg %p171
      $region34: #{unresolved_bert_forward.5} parent=11 // pred_check_branch
        %355 = sbr.rel (%p353) target = $region36
      $region35: #{unresolved_bert_forward.5} parent=11 // pred_region
        _
      $region36: #{unresolved_bert_forward.5} parent=11 // pred_fallthru
        _
      // Predicated region
      $region37: #{unresolved_bert_forward.5} parent=11 // pred_check
        %p356 = pneg %p192
      $region38: #{unresolved_bert_forward.5} parent=11 // pred_check_branch
        %358 = sbr.rel (%p356) target = $region40
      $region39: #{unresolved_bert_forward.5} parent=11 // pred_region
        _
      $region40: #{unresolved_bert_forward.5} parent=11 // pred_fallthru
        _
      // Predicated region
      $region41: #{unresolved_bert_forward.5} parent=11 // pred_check
        %p359 = pneg %p213
      $region42: #{unresolved_bert_forward.5} parent=11 // pred_check_branch
        %361 = sbr.rel (%p359) target = $region44
      $region43: #{unresolved_bert_forward.5} parent=11 // pred_region
        _
      $region44: #{unresolved_bert_forward.5} parent=11 // pred_fallthru
        _
      // Predicated region
      $region45: #{unresolved_bert_forward.5} parent=11 // pred_check
        %p362 = pneg %p234
      $region46: #{unresolved_bert_forward.5} parent=11 // pred_check_branch
        %364 = sbr.rel (%p362) target = $region48
      $region47: #{unresolved_bert_forward.5} parent=11 // pred_region
        _
      $region48: #{unresolved_bert_forward.5} parent=11 // pred_fallthru
        _
      // Predicated region
      $region49: #{unresolved_bert_forward.5} parent=11 // pred_check
        %p365 = pneg %p255
      $region50: #{unresolved_bert_forward.5} parent=11 // pred_check_branch
        %367 = sbr.rel (%p365) target = $region52
      $region51: #{unresolved_bert_forward.5} parent=11 // pred_region
        _
      $region52: #{unresolved_bert_forward.5} parent=11 // pred_fallthru
        _
      // Predicated region
      $region53: #{unresolved_bert_forward.5} parent=11 // pred_check
        %p368 = pneg %p276
      $region54: #{unresolved_bert_forward.5} parent=11 // pred_check_branch
        %370 = sbr.rel (%p368) target = $region56
      $region55: #{unresolved_bert_forward.5} parent=11 // pred_region
        _
      $region56: #{unresolved_bert_forward.5} parent=11 // pred_fallthru
        _
      // Predicated region
      $region57: #{unresolved_bert_forward.5} parent=11 // pred_check
        %p371 = pneg %p297
      $region58: #{unresolved_bert_forward.5} parent=11 // pred_check_branch
        %373 = sbr.rel (%p371) target = $region60
      $region59: #{unresolved_bert_forward.5} parent=11 // pred_region
        _
      $region60: #{unresolved_bert_forward.5} parent=11 // pred_fallthru
        _
    $region12: #{unresolved_bert_forward.5} parent=5 // pred_fallthru
      _
    %p374 = scmp.lt.s32.totalorder %s19, 2
    // Predicated region
    $region61: #{unresolved_bert_forward.5} parent=5 // pred_check
      %p375 = pneg %p374
    $region62: #{unresolved_bert_forward.5} parent=5 // pred_check_branch
      %377 = sbr.rel (%p375) target = $region64
    $region63: #{unresolved_bert_forward.5} parent=5 // pred_region
      // Predicated region
      $region65: #{unresolved_bert_forward.5} parent=63 // pred_check
        %p378 = pneg %p39
      $region66: #{unresolved_bert_forward.5} parent=63 // pred_check_branch
        %380 = sbr.rel (%p378) target = $region68
      $region67: #{unresolved_bert_forward.5} parent=63 // pred_region
        %p381 = scmp.lt.s32.totalorder %s19, 1
        %s382 = scalar_select %p381, %s19, 1
        %s383 = smul.addr %s382, 4
        %s384 = scalar_lea.vmem %s0, %s383
      $region68: #{unresolved_bert_forward.5} parent=63 // pred_fallthru
        _
    $region64: #{unresolved_bert_forward.5} parent=5 // pred_fallthru
      _
    %p385 = scmp.le.s32.totalorder 1, %s19
    %p386 = scmp.lt.s32.totalorder %s19, 3
    %p387 = pnand %p385, %p386
    %p388 = pneg %p387
    // Predicated region
    $region69: #{unresolved_bert_forward.5} parent=5 // pred_check
      _
    $region70: #{unresolved_bert_forward.5} parent=5 // pred_check_branch
      %390 = sbr.rel (%p387) target = $region72
    $region71: #{unresolved_bert_forward.5} parent=5 // pred_region
      %s391 = ssub.s32 %s19, 1
      %p392 = scmp.lt.s32.totalorder %s24, 1
      %s393 = scalar_select %p392, %s24, 1
      %s394 = smul.addr %s393, 4
      %s395 = scalar_lea.vmem %s0, %s394
      %p396 = pneg %p45
      %p397 = pneg %p42
      %p398 = pneg %p66
      %p399 = pneg %p63
      %p400 = pneg %p87
      %p401 = pneg %p84
      %p402 = pneg %p108
      %p403 = pneg %p105
      %p404 = pneg %p129
      %p405 = pneg %p126
      %p406 = pneg %p150
      %p407 = pneg %p147
      %p408 = pneg %p171
      %p409 = pneg %p168
      %p410 = pneg %p192
      %p411 = pneg %p189
      %p412 = pneg %p213
      %p413 = pneg %p210
      %p414 = pneg %p234
      %p415 = pneg %p231
      %p416 = pneg %p255
      %p417 = pneg %p252
      %p418 = pneg %p276
      %p419 = pneg %p273
      %p420 = pneg %p297
      %p421 = pneg %p294
      %p422 = pneg %p323
      %p423 = pneg %p320
      %p424 = scmp.lt.s32.totalorder %s24, 1
      %s425 = scalar_select %p424, %s24, 1
      %s426 = smul.addr %s425, 4
      %s427 = scalar_lea.vmem %s13, %s426
      %p428 = scmp.lt.s32.totalorder %s24, 1
      %s429 = scalar_select %p428, %s24, 1
      %s430 = smul.addr %s429, 4
      %s431 = scalar_lea.vmem %s0, %s430
      %p432 = scmp.lt.s32.totalorder %s24, 1
      %s433 = scalar_select %p432, %s24, 1
      %s434 = smul.addr %s433, 4
      %s435 = scalar_lea.vmem %s13, %s434
      %v437 = vld [vmem:[%s431] sm:$0xf]
      %v438 = vunpack.c.l.bf16 %v437
      %v439 = vld [vmem:[%s1] sm:$0xff]
      %v440 = vld [vmem:[%s1 + $0x8] sm:$0xff]
      %v441 = vld [vmem:[%s1 + $0x10] sm:$0xff]
      %v442 = vld [vmem:[%s1 + $0x18] sm:$0xff]
      %v443 = vld [vmem:[%s1 + $0x20] sm:$0xff]
      %v444 = vld [vmem:[%s1 + $0x28] sm:$0xff]
      %v445 = vld [vmem:[%s1 + $0x30] sm:$0xff]
      %v446 = vld [vmem:[%s1 + $0x38] sm:$0xff]
      %v447 = vld [vmem:[%s1 + $0x40] sm:$0xff]
      %v448 = vld [vmem:[%s1 + $0x48] sm:$0xff]
      %v449 = vld [vmem:[%s1 + $0x50] sm:$0xff]
      %v450 = vld [vmem:[%s1 + $0x58] sm:$0xff]
      %v451 = vld [vmem:[%s1 + $0x60] sm:$0xff]
      %v452 = vld [vmem:[%s1 + $0x68] sm:$0xff]
      %v453 = vld [vmem:[%s1 + $0x70] sm:$0xff]
      %v454 = vld [vmem:[%s1 + $0x78] sm:$0xff]
      %v455 = vld [vmem:[%s1 + $0x80] sm:$0xff]
      %v456 = vld [vmem:[%s1 + $0x88] sm:$0xff]
      %v457 = vld [vmem:[%s1 + $0x90] sm:$0xff]
      %v458 = vld [vmem:[%s1 + $0x98] sm:$0xff]
      %v459 = vld [vmem:[%s1 + $0xa0] sm:$0xff]
      %v460 = vld [vmem:[%s1 + $0xa8] sm:$0xff]
      %v461 = vld [vmem:[%s1 + $0xb0] sm:$0xff]
      %v462 = vld [vmem:[%s1 + $0xb8] sm:$0xff]
      %v463 = vld [vmem:[%s2] sm:$0xff]
      %v464 = vld [vmem:[%s2 + $0x8] sm:$0xf]
      %v467 = vlaneseq
      %v468 = vshrl.u32 %v467, 7
      %v469 = vsub.s32 0, %v468
      %v470 = vrot.slane %v463, %v469
      %v471 = vlaneseq
      %v472 = vshrl.u32 %v471, 7
      %v473 = vsub.s32 1, %v472
      %v474 = vrot.slane %v463, %v473
      %v475 = vlaneseq
      %v476 = vshrl.u32 %v475, 7
      %v477 = vsub.s32 2, %v476
      %v478 = vrot.slane %v463, %v477
      %v479 = vlaneseq
      %v480 = vshrl.u32 %v479, 7
      %v481 = vsub.s32 3, %v480
      %v482 = vrot.slane %v463, %v481
      %v483 = vlaneseq
      %v484 = vshrl.u32 %v483, 7
      %v485 = vsub.s32 4, %v484
      %v486 = vrot.slane %v463, %v485
      %v487 = vlaneseq
      %v488 = vshrl.u32 %v487, 7
      %v489 = vsub.s32 5, %v488
      %v490 = vrot.slane %v463, %v489
      %v491 = vlaneseq
      %v492 = vshrl.u32 %v491, 7
      %v493 = vsub.s32 6, %v492
      %v494 = vrot.slane %v463, %v493
      %v495 = vlaneseq
      %v496 = vshrl.u32 %v495, 7
      %v497 = vsub.s32 7, %v496
      %v498 = vrot.slane %v463, %v497
      %v499 = vlaneseq
      %v500 = vshrl.u32 %v499, 7
      %v501 = vsub.s32 0, %v500
      %v502 = vrot.slane %v464, %v501
      %v503 = vlaneseq
      %v504 = vshrl.u32 %v503, 7
      %v505 = vsub.s32 1, %v504
      %v506 = vrot.slane %v464, %v505
      %v507 = vlaneseq
      %v508 = vshrl.u32 %v507, 7
      %v509 = vsub.s32 2, %v508
      %v510 = vrot.slane %v464, %v509
      %v511 = vlaneseq
      %v512 = vshrl.u32 %v511, 7
      %v513 = vsub.s32 3, %v512
      %v514 = vrot.slane %v464, %v513
      %v551 = vunpack.c.l.b16 %v439
      %v552 = vunpack.c.h.b16 %v439
      %v553 = vunpack.c.l.b16 %v440
      %v554 = vunpack.c.h.b16 %v440
      %v555 = vunpack.c.l.b16 %v441
      %v556 = vunpack.c.h.b16 %v441
      %v557 = vunpack.c.l.b16 %v442
      %v558 = vunpack.c.h.b16 %v442
      %v559 = vunpack.c.l.b16 %v443
      %v560 = vunpack.c.h.b16 %v443
      %v561 = vunpack.c.l.b16 %v444
      %v562 = vunpack.c.h.b16 %v444
      %v563 = vunpack.c.l.b16 %v445
      %v564 = vunpack.c.h.b16 %v445
      %v565 = vunpack.c.l.b16 %v446
      %v566 = vunpack.c.h.b16 %v446
      %v567 = vunpack.c.l.b16 %v447
      %v568 = vunpack.c.h.b16 %v447
      %v569 = vunpack.c.l.b16 %v448
      %v570 = vunpack.c.h.b16 %v448
      %v571 = vunpack.c.l.b16 %v449
      %v572 = vunpack.c.h.b16 %v449
      %v573 = vunpack.c.l.b16 %v450
      %v574 = vunpack.c.h.b16 %v450
      %v575 = vunpack.c.l.b16 %v451
      %v576 = vunpack.c.h.b16 %v451
      %v577 = vunpack.c.l.b16 %v452
      %v578 = vunpack.c.h.b16 %v452
      %v579 = vunpack.c.l.b16 %v453
      %v580 = vunpack.c.h.b16 %v453
      %v581 = vunpack.c.l.b16 %v454
      %v582 = vunpack.c.h.b16 %v454
      %v583 = vunpack.c.l.b16 %v455
      %v584 = vunpack.c.h.b16 %v455
      %v585 = vunpack.c.l.b16 %v456
      %v586 = vunpack.c.h.b16 %v456
      %v587 = vunpack.c.l.b16 %v457
      %v588 = vunpack.c.h.b16 %v457
      %v589 = vunpack.c.l.b16 %v458
      %v590 = vunpack.c.h.b16 %v458
      %v591 = vunpack.c.l.b16 %v459
      %v592 = vunpack.c.h.b16 %v459
      %v593 = vunpack.c.l.b16 %v460
      %v594 = vunpack.c.h.b16 %v460
      %v595 = vunpack.c.l.b16 %v461
      %v596 = vunpack.c.h.b16 %v461
      %v597 = vunpack.c.l.b16 %v462
      %v598 = vunpack.c.h.b16 %v462
      %v599 = vpack.c.b16 %v563, %v551
      %v600 = vpack.c.b16 %v564, %v552
      %v601 = vpack.c.b16 %v565, %v553
      %v602 = vpack.c.b16 %v566, %v554
      %v603 = vpack.c.b16 %v567, %v555
      %v604 = vpack.c.b16 %v568, %v556
      %v605 = vpack.c.b16 %v569, %v557
      %v606 = vpack.c.b16 %v570, %v558
      %v607 = vpack.c.b16 %v571, %v559
      %v608 = vpack.c.b16 %v572, %v560
      %v609 = vpack.c.b16 %v573, %v561
      %v610 = vpack.c.b16 %v574, %v562
      %v611 = vpack.c.b16 %v587, %v575
      %v612 = vpack.c.b16 %v588, %v576
      %v613 = vpack.c.b16 %v589, %v577
      %v614 = vpack.c.b16 %v590, %v578
      %v615 = vpack.c.b16 %v591, %v579
      %v616 = vpack.c.b16 %v592, %v580
      %v617 = vpack.c.b16 %v593, %v581
      %v618 = vpack.c.b16 %v594, %v582
      %v619 = vpack.c.b16 %v595, %v583
      %v620 = vpack.c.b16 %v596, %v584
      %v621 = vpack.c.b16 %v597, %v585
      %v622 = vpack.c.b16 %v598, %v586
      %vm647 = vcmask 261120
      %v649 = vsel %vm647, %v437, 0
      %651 = vmatprep.subr.bf16.mxu0 0
      %652 = vmatpush1.bf16.msra.mxu0 0
      %653 = vmatprep.subr.bf16.mxu0 0
      %654 = vmatpush1.bf16.msra.mxu0 0
      %655 = vmatprep.subr.bf16.mxu0 0
      %656 = vmatpush1.bf16.msra.mxu0 0
      %657 = vmatprep.subr.bf16.mxu0 0
      %658 = vmatpush1.bf16.msra.mxu0 0
      %659 = vmatprep.subr.bf16.mxu0 0
      %660 = vmatpush1.bf16.msra.mxu0 0
      %661 = vmatprep.subr.bf16.mxu0 0
      %662 = vmatpush1.bf16.msra.mxu0 0
      %663 = vmatprep.subr.bf16.mxu0 %v612
      %664 = vmatpush1.bf16.msra.mxu0 %v611
      %665 = vmatprep.subr.bf16.mxu0 %v600
      %666 = vmatpush1.bf16.msra.mxu0 %v599
      %667 = vmatprep.subr.bf16.mxu0 0
      %668 = vmatpush2.bf16.msra.mxu0 0
      %669 = vmatprep.subr.bf16.mxu0 0
      %670 = vmatpush2.bf16.msra.mxu0 0
      %671 = vmatprep.subr.bf16.mxu0 0
      %672 = vmatpush2.bf16.msra.mxu0 0
      %673 = vmatprep.subr.bf16.mxu0 0
      %674 = vmatpush2.bf16.msra.mxu0 0
      %675 = vmatprep.subr.bf16.mxu0 0
      %676 = vmatpush2.bf16.msra.mxu0 0
      %677 = vmatprep.subr.bf16.mxu0 0
      %678 = vmatpush2.bf16.msra.mxu0 0
      %679 = vmatprep.subr.bf16.mxu0 0
      %680 = vmatpush2.bf16.msra.mxu0 0
      %681 = vmatprep.subr.bf16.mxu0 0
      %682 = vmatpush2.bf16.msra.mxu0 0
      %683 = vmatprep.mubr.bf16.mxu0 0
      %684 = vmatmul.mubr.bf16.gmra.mxu0 %v649
      %v685 = vpop.f32.mrf.mxu0
      %v686 = vadd.f32 %v470, %v685
      %v687 = vpop.f32.mrf.mxu0
      %v688 = vadd.f32 %v474, %v687
      %v689 = vpop.f32.mrf.mxu0
      %v690 = vpop.f32.mrf.mxu0
      %691 = vdwg.mxu0
      %692 = vmatprep.subr.bf16.mxu0 0
      %693 = vmatpush1.bf16.msra.mxu0 0
      %694 = vmatprep.subr.bf16.mxu0 0
      %695 = vmatpush1.bf16.msra.mxu0 0
      %696 = vmatprep.subr.bf16.mxu0 0
      %697 = vmatpush1.bf16.msra.mxu0 0
      %698 = vmatprep.subr.bf16.mxu0 0
      %699 = vmatpush1.bf16.msra.mxu0 0
      %700 = vmatprep.subr.bf16.mxu0 0
      %701 = vmatpush1.bf16.msra.mxu0 0
      %702 = vmatprep.subr.bf16.mxu0 0
      %703 = vmatpush1.bf16.msra.mxu0 0
      %704 = vmatprep.subr.bf16.mxu0 %v614
      %705 = vmatpush1.bf16.msra.mxu0 %v613
      %706 = vmatprep.subr.bf16.mxu0 %v602
      %707 = vmatpush1.bf16.msra.mxu0 %v601
      %708 = vmatprep.subr.bf16.mxu0 0
      %709 = vmatpush2.bf16.msra.mxu0 0
      %710 = vmatprep.subr.bf16.mxu0 0
      %711 = vmatpush2.bf16.msra.mxu0 0
      %712 = vmatprep.subr.bf16.mxu0 0
      %713 = vmatpush2.bf16.msra.mxu0 0
      %714 = vmatprep.subr.bf16.mxu0 0
      %715 = vmatpush2.bf16.msra.mxu0 0
      %716 = vmatprep.subr.bf16.mxu0 0
      %717 = vmatpush2.bf16.msra.mxu0 0
      %718 = vmatprep.subr.bf16.mxu0 0
      %719 = vmatpush2.bf16.msra.mxu0 0
      %720 = vmatprep.subr.bf16.mxu0 0
      %721 = vmatpush2.bf16.msra.mxu0 0
      %722 = vmatprep.subr.bf16.mxu0 0
      %723 = vmatpush2.bf16.msra.mxu0 0
      %724 = vmatprep.mubr.bf16.mxu0 0
      %725 = vmatmul.mubr.bf16.gmra.mxu0 %v649
      %v726 = vpop.f32.mrf.mxu0
      %v727 = vadd.f32 %v478, %v726
      %v728 = vpop.f32.mrf.mxu0
      %v729 = vadd.f32 %v482, %v728
      %v730 = vpop.f32.mrf.mxu0
      %v731 = vpop.f32.mrf.mxu0
      %732 = vdwg.mxu0
      %733 = vmatprep.subr.bf16.mxu0 0
      %734 = vmatpush1.bf16.msra.mxu0 0
      %735 = vmatprep.subr.bf16.mxu0 0
      %736 = vmatpush1.bf16.msra.mxu0 0
      %737 = vmatprep.subr.bf16.mxu0 0
      %738 = vmatpush1.bf16.msra.mxu0 0
      %739 = vmatprep.subr.bf16.mxu0 0
      %740 = vmatpush1.bf16.msra.mxu0 0
      %741 = vmatprep.subr.bf16.mxu0 0
      %742 = vmatpush1.bf16.msra.mxu0 0
      %743 = vmatprep.subr.bf16.mxu0 0
      %744 = vmatpush1.bf16.msra.mxu0 0
      %745 = vmatprep.subr.bf16.mxu0 %v616
      %746 = vmatpush1.bf16.msra.mxu0 %v615
      %747 = vmatprep.subr.bf16.mxu0 %v604
      %748 = vmatpush1.bf16.msra.mxu0 %v603
      %749 = vmatprep.subr.bf16.mxu0 0
      %750 = vmatpush2.bf16.msra.mxu0 0
      %751 = vmatprep.subr.bf16.mxu0 0
      %752 = vmatpush2.bf16.msra.mxu0 0
      %753 = vmatprep.subr.bf16.mxu0 0
      %754 = vmatpush2.bf16.msra.mxu0 0
      %755 = vmatprep.subr.bf16.mxu0 0
      %756 = vmatpush2.bf16.msra.mxu0 0
      %757 = vmatprep.subr.bf16.mxu0 0
      %758 = vmatpush2.bf16.msra.mxu0 0
      %759 = vmatprep.subr.bf16.mxu0 0
      %760 = vmatpush2.bf16.msra.mxu0 0
      %761 = vmatprep.subr.bf16.mxu0 0
      %762 = vmatpush2.bf16.msra.mxu0 0
      %763 = vmatprep.subr.bf16.mxu0 0
      %764 = vmatpush2.bf16.msra.mxu0 0
      %765 = vmatprep.mubr.bf16.mxu0 0
      %766 = vmatmul.mubr.bf16.gmra.mxu0 %v649
      %v767 = vpop.f32.mrf.mxu0
      %v768 = vadd.f32 %v486, %v767
      %v769 = vpop.f32.mrf.mxu0
      %v770 = vadd.f32 %v490, %v769
      %v771 = vpop.f32.mrf.mxu0
      %v772 = vpop.f32.mrf.mxu0
      %773 = vdwg.mxu0
      %774 = vmatprep.subr.bf16.mxu0 0
      %775 = vmatpush1.bf16.msra.mxu0 0
      %776 = vmatprep.subr.bf16.mxu0 0
      %777 = vmatpush1.bf16.msra.mxu0 0
      %778 = vmatprep.subr.bf16.mxu0 0
      %779 = vmatpush1.bf16.msra.mxu0 0
      %780 = vmatprep.subr.bf16.mxu0 0
      %781 = vmatpush1.bf16.msra.mxu0 0
      %782 = vmatprep.subr.bf16.mxu0 0
      %783 = vmatpush1.bf16.msra.mxu0 0
      %784 = vmatprep.subr.bf16.mxu0 0
      %785 = vmatpush1.bf16.msra.mxu0 0
      %786 = vmatprep.subr.bf16.mxu0 %v618
      %787 = vmatpush1.bf16.msra.mxu0 %v617
      %788 = vmatprep.subr.bf16.mxu0 %v606
      %789 = vmatpush1.bf16.msra.mxu0 %v605
      %790 = vmatprep.subr.bf16.mxu0 0
      %791 = vmatpush2.bf16.msra.mxu0 0
      %792 = vmatprep.subr.bf16.mxu0 0
      %793 = vmatpush2.bf16.msra.mxu0 0
      %794 = vmatprep.subr.bf16.mxu0 0
      %795 = vmatpush2.bf16.msra.mxu0 0
      %796 = vmatprep.subr.bf16.mxu0 0
      %797 = vmatpush2.bf16.msra.mxu0 0
      %798 = vmatprep.subr.bf16.mxu0 0
      %799 = vmatpush2.bf16.msra.mxu0 0
      %800 = vmatprep.subr.bf16.mxu0 0
      %801 = vmatpush2.bf16.msra.mxu0 0
      %802 = vmatprep.subr.bf16.mxu0 0
      %803 = vmatpush2.bf16.msra.mxu0 0
      %804 = vmatprep.subr.bf16.mxu0 0
      %805 = vmatpush2.bf16.msra.mxu0 0
      %806 = vmatprep.mubr.bf16.mxu0 0
      %807 = vmatmul.mubr.bf16.gmra.mxu0 %v649
      %v808 = vpop.f32.mrf.mxu0
      %v809 = vadd.f32 %v494, %v808
      %v810 = vpop.f32.mrf.mxu0
      %v811 = vadd.f32 %v498, %v810
      %v812 = vpop.f32.mrf.mxu0
      %v813 = vpop.f32.mrf.mxu0
      %814 = vdwg.mxu0
      %815 = vmatprep.subr.bf16.mxu0 0
      %816 = vmatpush1.bf16.msra.mxu0 0
      %817 = vmatprep.subr.bf16.mxu0 0
      %818 = vmatpush1.bf16.msra.mxu0 0
      %819 = vmatprep.subr.bf16.mxu0 0
      %820 = vmatpush1.bf16.msra.mxu0 0
      %821 = vmatprep.subr.bf16.mxu0 0
      %822 = vmatpush1.bf16.msra.mxu0 0
      %823 = vmatprep.subr.bf16.mxu0 0
      %824 = vmatpush1.bf16.msra.mxu0 0
      %825 = vmatprep.subr.bf16.mxu0 0
      %826 = vmatpush1.bf16.msra.mxu0 0
      %827 = vmatprep.subr.bf16.mxu0 %v620
      %828 = vmatpush1.bf16.msra.mxu0 %v619
      %829 = vmatprep.subr.bf16.mxu0 %v608
      %830 = vmatpush1.bf16.msra.mxu0 %v607
      %831 = vmatprep.subr.bf16.mxu0 0
      %832 = vmatpush2.bf16.msra.mxu0 0
      %833 = vmatprep.subr.bf16.mxu0 0
      %834 = vmatpush2.bf16.msra.mxu0 0
      %835 = vmatprep.subr.bf16.mxu0 0
      %836 = vmatpush2.bf16.msra.mxu0 0
      %837 = vmatprep.subr.bf16.mxu0 0
      %838 = vmatpush2.bf16.msra.mxu0 0
      %839 = vmatprep.subr.bf16.mxu0 0
      %840 = vmatpush2.bf16.msra.mxu0 0
      %841 = vmatprep.subr.bf16.mxu0 0
      %842 = vmatpush2.bf16.msra.mxu0 0
      %843 = vmatprep.subr.bf16.mxu0 0
      %844 = vmatpush2.bf16.msra.mxu0 0
      %845 = vmatprep.subr.bf16.mxu0 0
      %846 = vmatpush2.bf16.msra.mxu0 0
      %847 = vmatprep.mubr.bf16.mxu0 0
      %848 = vmatmul.mubr.bf16.gmra.mxu0 %v649
      %v849 = vpop.f32.mrf.mxu0
      %v850 = vadd.f32 %v502, %v849
      %v851 = vpop.f32.mrf.mxu0
      %v852 = vadd.f32 %v506, %v851
      %v853 = vpop.f32.mrf.mxu0
      %v854 = vpop.f32.mrf.mxu0
      %855 = vdwg.mxu0
      %856 = vmatprep.subr.bf16.mxu0 0
      %857 = vmatpush1.bf16.msra.mxu0 0
      %858 = vmatprep.subr.bf16.mxu0 0
      %859 = vmatpush1.bf16.msra.mxu0 0
      %860 = vmatprep.subr.bf16.mxu0 0
      %861 = vmatpush1.bf16.msra.mxu0 0
      %862 = vmatprep.subr.bf16.mxu0 0
      %863 = vmatpush1.bf16.msra.mxu0 0
      %864 = vmatprep.subr.bf16.mxu0 0
      %865 = vmatpush1.bf16.msra.mxu0 0
      %866 = vmatprep.subr.bf16.mxu0 0
      %867 = vmatpush1.bf16.msra.mxu0 0
      %868 = vmatprep.subr.bf16.mxu0 %v622
      %869 = vmatpush1.bf16.msra.mxu0 %v621
      %870 = vmatprep.subr.bf16.mxu0 %v610
      %871 = vmatpush1.bf16.msra.mxu0 %v609
      %872 = vmatprep.subr.bf16.mxu0 0
      %873 = vmatpush2.bf16.msra.mxu0 0
      %874 = vmatprep.subr.bf16.mxu0 0
      %875 = vmatpush2.bf16.msra.mxu0 0
      %876 = vmatprep.subr.bf16.mxu0 0
      %877 = vmatpush2.bf16.msra.mxu0 0
      %878 = vmatprep.subr.bf16.mxu0 0
      %879 = vmatpush2.bf16.msra.mxu0 0
      %880 = vmatprep.subr.bf16.mxu0 0
      %881 = vmatpush2.bf16.msra.mxu0 0
      %882 = vmatprep.subr.bf16.mxu0 0
      %883 = vmatpush2.bf16.msra.mxu0 0
      %884 = vmatprep.subr.bf16.mxu0 0
      %885 = vmatpush2.bf16.msra.mxu0 0
      %886 = vmatprep.subr.bf16.mxu0 0
      %887 = vmatpush2.bf16.msra.mxu0 0
      %888 = vmatprep.mubr.bf16.mxu0 0
      %889 = vmatmul.mubr.bf16.gmra.mxu0 %v649
      %v890 = vpop.f32.mrf.mxu0
      %v891 = vadd.f32 %v510, %v890
      %v892 = vpop.f32.mrf.mxu0
      %v893 = vadd.f32 %v514, %v892
      %v894 = vpop.f32.mrf.mxu0
      %v895 = vpop.f32.mrf.mxu0
      %896 = vdwg.mxu0
      %v897 = vpack.c.bf16 %v686, %v686
      %v898 = vpack.c.bf16 %v688, %v688
      %v899 = vpack.c.bf16 %v727, %v727
      %v900 = vpack.c.bf16 %v729, %v729
      %v901 = vpack.c.bf16 %v768, %v768
      %v902 = vpack.c.bf16 %v770, %v770
      %v903 = vpack.c.bf16 %v809, %v809
      %v904 = vpack.c.bf16 %v811, %v811
      %v905 = vpack.c.bf16 %v850, %v850
      %v906 = vpack.c.bf16 %v852, %v852
      %v907 = vpack.c.bf16 %v891, %v891
      %v908 = vpack.c.bf16 %v893, %v893
      %909 = vmatprep.subr.bf16.mxu0 0
      %910 = vmatpush1.bf16.xpose.msra.mxu0 0
      %911 = vmatprep.subr.bf16.mxu0 0
      %912 = vmatpush1.bf16.xpose.msra.mxu0 0
      %913 = vmatprep.subr.bf16.mxu0 0
      %914 = vmatpush1.bf16.xpose.msra.mxu0 0
      %915 = vmatprep.subr.bf16.mxu0 0
      %916 = vmatpush1.bf16.xpose.msra.mxu0 0
      %917 = vmatprep.subr.bf16.mxu0 0
      %918 = vmatpush1.bf16.xpose.msra.mxu0 0
      %919 = vmatprep.subr.bf16.mxu0 0
      %920 = vmatpush1.bf16.xpose.msra.mxu0 0
      %921 = vmatprep.subr.bf16.mxu0 0
      %922 = vmatpush1.bf16.xpose.msra.mxu0 0
      %923 = vmatprep.subr.bf16.mxu0 0
      %924 = vmatpush1.bf16.xpose.msra.mxu0 %v901
      %925 = vmatprep.subr.bf16.mxu0 0
      %926 = vmatpush2.bf16.xpose.msra.mxu0 0
      %927 = vmatprep.subr.bf16.mxu0 0
      %928 = vmatpush2.bf16.xpose.msra.mxu0 0
      %929 = vmatprep.subr.bf16.mxu0 0
      %930 = vmatpush2.bf16.xpose.msra.mxu0 0
      %931 = vmatprep.subr.bf16.mxu0 0
      %932 = vmatpush2.bf16.xpose.msra.mxu0 0
      %933 = vmatprep.subr.bf16.mxu0 0
      %934 = vmatpush2.bf16.xpose.msra.mxu0 0
      %935 = vmatprep.subr.bf16.mxu0 0
      %936 = vmatpush2.bf16.xpose.msra.mxu0 0
      %937 = vmatprep.subr.bf16.mxu0 0
      %938 = vmatpush2.bf16.xpose.msra.mxu0 0
      %939 = vmatprep.subr.bf16.mxu0 0
      %940 = vmatpush2.bf16.xpose.msra.mxu0 0
      %941 = vmatprep.mubr.bf16.mxu0 0
      %942 = vmatmul.mubr.bf16.gmra.mxu0 %v897
      %v943 = vpop.f32.mrf.mxu0
      %v944 = vadd.f32 0.0, %v943
      %v945 = vpop.f32.mrf.mxu0
      %v946 = vpop.f32.mrf.mxu0
      %v947 = vpop.f32.mrf.mxu0
      %948 = vdwg.mxu0
      %vm949 = vcmask 64512
      %v950 = vsel %vm949, %v944, -inf
      %951 = vmax.xlane.f32.xlu0 %v950
      %v952 = vpop.xlane.xlu0 %951
      %v953 = vsub.f32 %v944, %v952
      %v954 = vmul.f32 %v953, 1.442695
      %v955 = vpow.pop %v954
      %v956 = vsel %vm949, %v955, 0.0
      %957 = vadd.xlane.f32.xlu0 %v956
      %v958 = vpop.xlane.xlu0 %957
      %v959 = vrcp.pop %v958
      %v960 = vmul.f32 %v955, %v959
      %v961 = vpack.c.bf16 %v960, %v960
      %v963 = vsel %vm949, %v961, 0
      %vm965 = vcmask 1043456
      %v967 = vsel %vm965, %v905, 0
      %969 = vmatprep.subr.bf16.mxu0 0
      %970 = vmatpush1.bf16.msra.mxu0 0
      %971 = vmatprep.subr.bf16.mxu0 0
      %972 = vmatpush1.bf16.msra.mxu0 0
      %973 = vmatprep.subr.bf16.mxu0 0
      %974 = vmatpush1.bf16.msra.mxu0 0
      %975 = vmatprep.subr.bf16.mxu0 0
      %976 = vmatpush1.bf16.msra.mxu0 0
      %977 = vmatprep.subr.bf16.mxu0 0
      %978 = vmatpush1.bf16.msra.mxu0 0
      %979 = vmatprep.subr.bf16.mxu0 0
      %980 = vmatpush1.bf16.msra.mxu0 0
      %981 = vmatprep.subr.bf16.mxu0 0
      %982 = vmatpush1.bf16.msra.mxu0 0
      %983 = vmatprep.subr.bf16.mxu0 0
      %984 = vmatpush1.bf16.msra.mxu0 %v967
      %985 = vmatprep.subr.bf16.mxu0 0
      %986 = vmatpush2.bf16.msra.mxu0 0
      %987 = vmatprep.subr.bf16.mxu0 0
      %988 = vmatpush2.bf16.msra.mxu0 0
      %989 = vmatprep.subr.bf16.mxu0 0
      %990 = vmatpush2.bf16.msra.mxu0 0
      %991 = vmatprep.subr.bf16.mxu0 0
      %992 = vmatpush2.bf16.msra.mxu0 0
      %993 = vmatprep.subr.bf16.mxu0 0
      %994 = vmatpush2.bf16.msra.mxu0 0
      %995 = vmatprep.subr.bf16.mxu0 0
      %996 = vmatpush2.bf16.msra.mxu0 0
      %997 = vmatprep.subr.bf16.mxu0 0
      %998 = vmatpush2.bf16.msra.mxu0 0
      %999 = vmatprep.subr.bf16.mxu0 0
      %1000 = vmatpush2.bf16.msra.mxu0 0
      %1001 = vmatprep.mubr.bf16.mxu0 0
      %1002 = vmatmul.mubr.bf16.gmra.mxu0 %v963
      %v1003 = vpop.f32.mrf.mxu0
      %v1004 = vadd.f32 0.0, %v1003
      %v1005 = vpop.f32.mrf.mxu0
      %v1006 = vpop.f32.mrf.mxu0
      %v1007 = vpop.f32.mrf.mxu0
      %1008 = vdwg.mxu0
      %1009 = vst [vmem:[#allocation2] sm:$0xff] %v1004
      %1010 = vmatprep.subr.bf16.mxu0 0
      %1011 = vmatpush1.bf16.xpose.msra.mxu0 0
      %1012 = vmatprep.subr.bf16.mxu0 0
      %1013 = vmatpush1.bf16.xpose.msra.mxu0 0
      %1014 = vmatprep.subr.bf16.mxu0 0
      %1015 = vmatpush1.bf16.xpose.msra.mxu0 0
      %1016 = vmatprep.subr.bf16.mxu0 0
      %1017 = vmatpush1.bf16.xpose.msra.mxu0 0
      %1018 = vmatprep.subr.bf16.mxu0 0
      %1019 = vmatpush1.bf16.xpose.msra.mxu0 0
      %1020 = vmatprep.subr.bf16.mxu0 0
      %1021 = vmatpush1.bf16.xpose.msra.mxu0 0
      %1022 = vmatprep.subr.bf16.mxu0 0
      %1023 = vmatpush1.bf16.xpose.msra.mxu0 0
      %1024 = vmatprep.subr.bf16.mxu0 0
      %1025 = vmatpush1.bf16.xpose.msra.mxu0 %v902
      %1026 = vmatprep.subr.bf16.mxu0 0
      %1027 = vmatpush2.bf16.xpose.msra.mxu0 0
      %1028 = vmatprep.subr.bf16.mxu0 0
      %1029 = vmatpush2.bf16.xpose.msra.mxu0 0
      %1030 = vmatprep.subr.bf16.mxu0 0
      %1031 = vmatpush2.bf16.xpose.msra.mxu0 0
      %1032 = vmatprep.subr.bf16.mxu0 0
      %1033 = vmatpush2.bf16.xpose.msra.mxu0 0
      %1034 = vmatprep.subr.bf16.mxu0 0
      %1035 = vmatpush2.bf16.xpose.msra.mxu0 0
      %1036 = vmatprep.subr.bf16.mxu0 0
      %1037 = vmatpush2.bf16.xpose.msra.mxu0 0
      %1038 = vmatprep.subr.bf16.mxu0 0
      %1039 = vmatpush2.bf16.xpose.msra.mxu0 0
      %1040 = vmatprep.subr.bf16.mxu0 0
      %1041 = vmatpush2.bf16.xpose.msra.mxu0 0
      %1042 = vmatprep.mubr.bf16.mxu0 0
      %1043 = vmatmul.mubr.bf16.gmra.mxu0 %v898
      %v1044 = vpop.f32.mrf.mxu0
      %v1045 = vadd.f32 0.0, %v1044
      %v1046 = vpop.f32.mrf.mxu0
      %v1047 = vpop.f32.mrf.mxu0
      %v1048 = vpop.f32.mrf.mxu0
      %1049 = vdwg.mxu0
      %v1050 = vsel %vm949, %v1045, -inf
      %1051 = vmax.xlane.f32.xlu0 %v1050
      %v1052 = vpop.xlane.xlu0 %1051
      %v1053 = vsub.f32 %v1045, %v1052
      %v1054 = vmul.f32 %v1053, 1.442695
      %v1055 = vpow.pop %v1054
      %v1056 = vsel %vm949, %v1055, 0.0
      %1057 = vadd.xlane.f32.xlu0 %v1056
      %v1058 = vpop.xlane.xlu0 %1057
      %v1059 = vrcp.pop %v1058
      %v1060 = vmul.f32 %v1055, %v1059
      %v1061 = vpack.c.bf16 %v1060, %v1060
      %v1063 = vsel %vm949, %v1061, 0
      %v1066 = vsel %vm965, %v906, 0
      %1068 = vmatprep.subr.bf16.mxu0 0
      %1069 = vmatpush1.bf16.msra.mxu0 0
      %1070 = vmatprep.subr.bf16.mxu0 0
      %1071 = vmatpush1.bf16.msra.mxu0 0
      %1072 = vmatprep.subr.bf16.mxu0 0
      %1073 = vmatpush1.bf16.msra.mxu0 0
      %1074 = vmatprep.subr.bf16.mxu0 0
      %1075 = vmatpush1.bf16.msra.mxu0 0
      %1076 = vmatprep.subr.bf16.mxu0 0
      %1077 = vmatpush1.bf16.msra.mxu0 0
      %1078 = vmatprep.subr.bf16.mxu0 0
      %1079 = vmatpush1.bf16.msra.mxu0 0
      %1080 = vmatprep.subr.bf16.mxu0 0
      %1081 = vmatpush1.bf16.msra.mxu0 0
      %1082 = vmatprep.subr.bf16.mxu0 0
      %1083 = vmatpush1.bf16.msra.mxu0 %v1066
      %1084 = vmatprep.subr.bf16.mxu0 0
      %1085 = vmatpush2.bf16.msra.mxu0 0
      %1086 = vmatprep.subr.bf16.mxu0 0
      %1087 = vmatpush2.bf16.msra.mxu0 0
      %1088 = vmatprep.subr.bf16.mxu0 0
      %1089 = vmatpush2.bf16.msra.mxu0 0
      %1090 = vmatprep.subr.bf16.mxu0 0
      %1091 = vmatpush2.bf16.msra.mxu0 0
      %1092 = vmatprep.subr.bf16.mxu0 0
      %1093 = vmatpush2.bf16.msra.mxu0 0
      %1094 = vmatprep.subr.bf16.mxu0 0
      %1095 = vmatpush2.bf16.msra.mxu0 0
      %1096 = vmatprep.subr.bf16.mxu0 0
      %1097 = vmatpush2.bf16.msra.mxu0 0
      %1098 = vmatprep.subr.bf16.mxu0 0
      %1099 = vmatpush2.bf16.msra.mxu0 0
      %1100 = vmatprep.mubr.bf16.mxu0 0
      %1101 = vmatmul.mubr.bf16.gmra.mxu0 %v1063
      %v1102 = vpop.f32.mrf.mxu0
      %v1103 = vadd.f32 0.0, %v1102
      %v1104 = vpop.f32.mrf.mxu0
      %v1105 = vpop.f32.mrf.mxu0
      %v1106 = vpop.f32.mrf.mxu0
      %1107 = vdwg.mxu0
      %1108 = vst [vmem:[#allocation2 + $0x8] sm:$0xff] %v1103
      %1109 = vmatprep.subr.bf16.mxu0 0
      %1110 = vmatpush1.bf16.xpose.msra.mxu0 0
      %1111 = vmatprep.subr.bf16.mxu0 0
      %1112 = vmatpush1.bf16.xpose.msra.mxu0 0
      %1113 = vmatprep.subr.bf16.mxu0 0
      %1114 = vmatpush1.bf16.xpose.msra.mxu0 0
      %1115 = vmatprep.subr.bf16.mxu0 0
      %1116 = vmatpush1.bf16.xpose.msra.mxu0 0
      %1117 = vmatprep.subr.bf16.mxu0 0
      %1118 = vmatpush1.bf16.xpose.msra.mxu0 0
      %1119 = vmatprep.subr.bf16.mxu0 0
      %1120 = vmatpush1.bf16.xpose.msra.mxu0 0
      %1121 = vmatprep.subr.bf16.mxu0 0
      %1122 = vmatpush1.bf16.xpose.msra.mxu0 0
      %1123 = vmatprep.subr.bf16.mxu0 0
      %1124 = vmatpush1.bf16.xpose.msra.mxu0 %v903
      %1125 = vmatprep.subr.bf16.mxu0 0
      %1126 = vmatpush2.bf16.xpose.msra.mxu0 0
      %1127 = vmatprep.subr.bf16.mxu0 0
      %1128 = vmatpush2.bf16.xpose.msra.mxu0 0
      %1129 = vmatprep.subr.bf16.mxu0 0
      %1130 = vmatpush2.bf16.xpose.msra.mxu0 0
      %1131 = vmatprep.subr.bf16.mxu0 0
      %1132 = vmatpush2.bf16.xpose.msra.mxu0 0
      %1133 = vmatprep.subr.bf16.mxu0 0
      %1134 = vmatpush2.bf16.xpose.msra.mxu0 0
      %1135 = vmatprep.subr.bf16.mxu0 0
      %1136 = vmatpush2.bf16.xpose.msra.mxu0 0
      %1137 = vmatprep.subr.bf16.mxu0 0
      %1138 = vmatpush2.bf16.xpose.msra.mxu0 0
      %1139 = vmatprep.subr.bf16.mxu0 0
      %1140 = vmatpush2.bf16.xpose.msra.mxu0 0
      %1141 = vmatprep.mubr.bf16.mxu0 0
      %1142 = vmatmul.mubr.bf16.gmra.mxu0 %v899
      %v1143 = vpop.f32.mrf.mxu0
      %v1144 = vadd.f32 0.0, %v1143
      %v1145 = vpop.f32.mrf.mxu0
      %v1146 = vpop.f32.mrf.mxu0
      %v1147 = vpop.f32.mrf.mxu0
      %1148 = vdwg.mxu0
      %v1149 = vsel %vm949, %v1144, -inf
      %1150 = vmax.xlane.f32.xlu0 %v1149
      %v1151 = vpop.xlane.xlu0 %1150
      %v1152 = vsub.f32 %v1144, %v1151
      %v1153 = vmul.f32 %v1152, 1.442695
      %v1154 = vpow.pop %v1153
      %v1155 = vsel %vm949, %v1154, 0.0
      %1156 = vadd.xlane.f32.xlu0 %v1155
      %v1157 = vpop.xlane.xlu0 %1156
      %v1158 = vrcp.pop %v1157
      %v1159 = vmul.f32 %v1154, %v1158
      %v1160 = vpack.c.bf16 %v1159, %v1159
      %v1162 = vsel %vm949, %v1160, 0
      %v1165 = vsel %vm965, %v907, 0
      %1167 = vmatprep.subr.bf16.mxu0 0
      %1168 = vmatpush1.bf16.msra.mxu0 0
      %1169 = vmatprep.subr.bf16.mxu0 0
      %1170 = vmatpush1.bf16.msra.mxu0 0
      %1171 = vmatprep.subr.bf16.mxu0 0
      %1172 = vmatpush1.bf16.msra.mxu0 0
      %1173 = vmatprep.subr.bf16.mxu0 0
      %1174 = vmatpush1.bf16.msra.mxu0 0
      %1175 = vmatprep.subr.bf16.mxu0 0
      %1176 = vmatpush1.bf16.msra.mxu0 0
      %1177 = vmatprep.subr.bf16.mxu0 0
      %1178 = vmatpush1.bf16.msra.mxu0 0
      %1179 = vmatprep.subr.bf16.mxu0 0
      %1180 = vmatpush1.bf16.msra.mxu0 0
      %1181 = vmatprep.subr.bf16.mxu0 0
      %1182 = vmatpush1.bf16.msra.mxu0 %v1165
      %1183 = vmatprep.subr.bf16.mxu0 0
      %1184 = vmatpush2.bf16.msra.mxu0 0
      %1185 = vmatprep.subr.bf16.mxu0 0
      %1186 = vmatpush2.bf16.msra.mxu0 0
      %1187 = vmatprep.subr.bf16.mxu0 0
      %1188 = vmatpush2.bf16.msra.mxu0 0
      %1189 = vmatprep.subr.bf16.mxu0 0
      %1190 = vmatpush2.bf16.msra.mxu0 0
      %1191 = vmatprep.subr.bf16.mxu0 0
      %1192 = vmatpush2.bf16.msra.mxu0 0
      %1193 = vmatprep.subr.bf16.mxu0 0
      %1194 = vmatpush2.bf16.msra.mxu0 0
      %1195 = vmatprep.subr.bf16.mxu0 0
      %1196 = vmatpush2.bf16.msra.mxu0 0
      %1197 = vmatprep.subr.bf16.mxu0 0
      %1198 = vmatpush2.bf16.msra.mxu0 0
      %1199 = vmatprep.mubr.bf16.mxu0 0
      %1200 = vmatmul.mubr.bf16.gmra.mxu0 %v1162
      %v1201 = vpop.f32.mrf.mxu0
      %v1202 = vadd.f32 0.0, %v1201
      %v1203 = vpop.f32.mrf.mxu0
      %v1204 = vpop.f32.mrf.mxu0
      %v1205 = vpop.f32.mrf.mxu0
      %1206 = vdwg.mxu0
      %1207 = vst [vmem:[#allocation2 + $0x10] sm:$0xff] %v1202
      %1208 = vmatprep.subr.bf16.mxu0 0
      %1209 = vmatpush1.bf16.xpose.msra.mxu0 0
      %1210 = vmatprep.subr.bf16.mxu0 0
      %1211 = vmatpush1.bf16.xpose.msra.mxu0 0
      %1212 = vmatprep.subr.bf16.mxu0 0
      %1213 = vmatpush1.bf16.xpose.msra.mxu0 0
      %1214 = vmatprep.subr.bf16.mxu0 0
      %1215 = vmatpush1.bf16.xpose.msra.mxu0 0
      %1216 = vmatprep.subr.bf16.mxu0 0
      %1217 = vmatpush1.bf16.xpose.msra.mxu0 0
      %1218 = vmatprep.subr.bf16.mxu0 0
      %1219 = vmatpush1.bf16.xpose.msra.mxu0 0
      %1220 = vmatprep.subr.bf16.mxu0 0
      %1221 = vmatpush1.bf16.xpose.msra.mxu0 0
      %1222 = vmatprep.subr.bf16.mxu0 0
      %1223 = vmatpush1.bf16.xpose.msra.mxu0 %v904
      %1224 = vmatprep.subr.bf16.mxu0 0
      %1225 = vmatpush2.bf16.xpose.msra.mxu0 0
      %1226 = vmatprep.subr.bf16.mxu0 0
      %1227 = vmatpush2.bf16.xpose.msra.mxu0 0
      %1228 = vmatprep.subr.bf16.mxu0 0
      %1229 = vmatpush2.bf16.xpose.msra.mxu0 0
      %1230 = vmatprep.subr.bf16.mxu0 0
      %1231 = vmatpush2.bf16.xpose.msra.mxu0 0
      %1232 = vmatprep.subr.bf16.mxu0 0
      %1233 = vmatpush2.bf16.xpose.msra.mxu0 0
      %1234 = vmatprep.subr.bf16.mxu0 0
      %1235 = vmatpush2.bf16.xpose.msra.mxu0 0
      %1236 = vmatprep.subr.bf16.mxu0 0
      %1237 = vmatpush2.bf16.xpose.msra.mxu0 0
      %1238 = vmatprep.subr.bf16.mxu0 0
      %1239 = vmatpush2.bf16.xpose.msra.mxu0 0
      %1240 = vmatprep.mubr.bf16.mxu0 0
      %1241 = vmatmul.mubr.bf16.gmra.mxu0 %v900
      %v1242 = vpop.f32.mrf.mxu0
      %v1243 = vadd.f32 0.0, %v1242
      %v1244 = vpop.f32.mrf.mxu0
      %v1245 = vpop.f32.mrf.mxu0
      %v1246 = vpop.f32.mrf.mxu0
      %1247 = vdwg.mxu0
      %v1248 = vsel %vm949, %v1243, -inf
      %1249 = vmax.xlane.f32.xlu0 %v1248
      %v1250 = vpop.xlane.xlu0 %1249
      %v1251 = vsub.f32 %v1243, %v1250
      %v1252 = vmul.f32 %v1251, 1.442695
      %v1253 = vpow.pop %v1252
      %v1254 = vsel %vm949, %v1253, 0.0
      %1255 = vadd.xlane.f32.xlu0 %v1254
      %v1256 = vpop.xlane.xlu0 %1255
      %v1257 = vrcp.pop %v1256
      %v1258 = vmul.f32 %v1253, %v1257
      %v1259 = vpack.c.bf16 %v1258, %v1258
      %v1261 = vsel %vm949, %v1259, 0
      %v1264 = vsel %vm965, %v908, 0
      %1266 = vmatprep.subr.bf16.mxu0 0
      %1267 = vmatpush1.bf16.msra.mxu0 0
      %1268 = vmatprep.subr.bf16.mxu0 0
      %1269 = vmatpush1.bf16.msra.mxu0 0
      %1270 = vmatprep.subr.bf16.mxu0 0
      %1271 = vmatpush1.bf16.msra.mxu0 0
      %1272 = vmatprep.subr.bf16.mxu0 0
      %1273 = vmatpush1.bf16.msra.mxu0 0
      %1274 = vmatprep.subr.bf16.mxu0 0
      %1275 = vmatpush1.bf16.msra.mxu0 0
      %1276 = vmatprep.subr.bf16.mxu0 0
      %1277 = vmatpush1.bf16.msra.mxu0 0
      %1278 = vmatprep.subr.bf16.mxu0 0
      %1279 = vmatpush1.bf16.msra.mxu0 0
      %1280 = vmatprep.subr.bf16.mxu0 0
      %1281 = vmatpush1.bf16.msra.mxu0 %v1264
      %1282 = vmatprep.subr.bf16.mxu0 0
      %1283 = vmatpush2.bf16.msra.mxu0 0
      %1284 = vmatprep.subr.bf16.mxu0 0
      %1285 = vmatpush2.bf16.msra.mxu0 0
      %1286 = vmatprep.subr.bf16.mxu0 0
      %1287 = vmatpush2.bf16.msra.mxu0 0
      %1288 = vmatprep.subr.bf16.mxu0 0
      %1289 = vmatpush2.bf16.msra.mxu0 0
      %1290 = vmatprep.subr.bf16.mxu0 0
      %1291 = vmatpush2.bf16.msra.mxu0 0
      %1292 = vmatprep.subr.bf16.mxu0 0
      %1293 = vmatpush2.bf16.msra.mxu0 0
      %1294 = vmatprep.subr.bf16.mxu0 0
      %1295 = vmatpush2.bf16.msra.mxu0 0
      %1296 = vmatprep.subr.bf16.mxu0 0
      %1297 = vmatpush2.bf16.msra.mxu0 0
      %1298 = vmatprep.mubr.bf16.mxu0 0
      %1299 = vmatmul.mubr.bf16.gmra.mxu0 %v1261
      %v1300 = vpop.f32.mrf.mxu0
      %v1301 = vadd.f32 0.0, %v1300
      %v1302 = vpop.f32.mrf.mxu0
      %v1303 = vpop.f32.mrf.mxu0
      %v1304 = vpop.f32.mrf.mxu0
      %1305 = vdwg.mxu0
      %1306 = vst [vmem:[#allocation2 + $0x18] sm:$0xff] %v1301
      %v1307 = vld [vmem:[#allocation2] sm:$0xff]
      %v1308 = vld [vmem:[#allocation2 + $0x8] sm:$0xff]
      %v1309 = vld [vmem:[#allocation2 + $0x10] sm:$0xff]
      %v1310 = vld [vmem:[#allocation2 + $0x18] sm:$0xff]
      %v1311 = vld [vmem:[%s3] sm:$0xf]
      %v1312 = vld [vmem:[%s3 + $0x4] sm:$0xf]
      %v1313 = vld [vmem:[%s3 + $0x8] sm:$0xf]
      %v1314 = vld [vmem:[%s3 + $0xc] sm:$0xf]
      %v1315 = vld [vmem:[%s3 + $0x10] sm:$0xf]
      %v1316 = vld [vmem:[%s3 + $0x14] sm:$0xf]
      %v1317 = vld [vmem:[%s3 + $0x18] sm:$0xf]
      %v1318 = vld [vmem:[%s3 + $0x1c] sm:$0xf]
      %v1319 = vld [vmem:[%s3 + $0x20] sm:$0xf]
      %v1320 = vld [vmem:[%s3 + $0x24] sm:$0xf]
      %v1321 = vld [vmem:[%s3 + $0x28] sm:$0xf]
      %v1322 = vld [vmem:[%s3 + $0x2c] sm:$0xf]
      %v1323 = vld [vmem:[%s3 + $0x30] sm:$0xf]
      %v1324 = vld [vmem:[%s3 + $0x34] sm:$0xf]
      %v1325 = vld [vmem:[%s3 + $0x38] sm:$0xf]
      %v1326 = vld [vmem:[%s3 + $0x3c] sm:$0xf]
      %v1327 = vld [vmem:[%s3 + $0x40] sm:$0xf]
      %v1328 = vld [vmem:[%s3 + $0x44] sm:$0xf]
      %v1329 = vld [vmem:[%s3 + $0x48] sm:$0xf]
      %v1330 = vld [vmem:[%s3 + $0x4c] sm:$0xf]
      %v1331 = vld [vmem:[%s3 + $0x50] sm:$0xf]
      %v1332 = vld [vmem:[%s3 + $0x54] sm:$0xf]
      %v1333 = vld [vmem:[%s3 + $0x58] sm:$0xf]
      %v1334 = vld [vmem:[%s3 + $0x5c] sm:$0xf]
      %v1335 = vld [vmem:[%s3 + $0x60] sm:$0xf]
      %v1336 = vld [vmem:[%s3 + $0x64] sm:$0xf]
      %v1337 = vld [vmem:[%s3 + $0x68] sm:$0xf]
      %v1338 = vld [vmem:[%s3 + $0x6c] sm:$0xf]
      %v1339 = vld [vmem:[%s3 + $0x70] sm:$0xf]
      %v1340 = vld [vmem:[%s3 + $0x74] sm:$0xf]
      %v1341 = vld [vmem:[%s3 + $0x78] sm:$0xf]
      %v1342 = vld [vmem:[%s3 + $0x7c] sm:$0xf]
      %v1343 = vld [vmem:[%s3 + $0x80] sm:$0xf]
      %v1344 = vld [vmem:[%s3 + $0x84] sm:$0xf]
      %v1345 = vld [vmem:[%s3 + $0x88] sm:$0xf]
      %v1346 = vld [vmem:[%s3 + $0x8c] sm:$0xf]
      %v1347 = vld [vmem:[%s3 + $0x90] sm:$0xf]
      %v1348 = vld [vmem:[%s3 + $0x94] sm:$0xf]
      %v1349 = vld [vmem:[%s3 + $0x98] sm:$0xf]
      %v1350 = vld [vmem:[%s3 + $0x9c] sm:$0xf]
      %v1351 = vld [vmem:[%s3 + $0xa0] sm:$0xf]
      %v1352 = vld [vmem:[%s3 + $0xa4] sm:$0xf]
      %v1353 = vld [vmem:[%s3 + $0xa8] sm:$0xf]
      %v1354 = vld [vmem:[%s3 + $0xac] sm:$0xf]
      %v1355 = vld [vmem:[%s3 + $0xb0] sm:$0xf]
      %v1356 = vld [vmem:[%s3 + $0xb4] sm:$0xf]
      %v1357 = vld [vmem:[%s3 + $0xb8] sm:$0xf]
      %v1358 = vld [vmem:[%s3 + $0xbc] sm:$0xf]
      %v1359 = vld [vmem:[%s3 + $0xc0] sm:$0xf]
      %v1360 = vld [vmem:[%s3 + $0xc4] sm:$0xf]
      %v1361 = vld [vmem:[%s3 + $0xc8] sm:$0xf]
      %v1362 = vld [vmem:[%s3 + $0xcc] sm:$0xf]
      %v1363 = vld [vmem:[%s3 + $0xd0] sm:$0xf]
      %v1364 = vld [vmem:[%s3 + $0xd4] sm:$0xf]
      %v1365 = vld [vmem:[%s3 + $0xd8] sm:$0xf]
      %v1366 = vld [vmem:[%s3 + $0xdc] sm:$0xf]
      %v1367 = vld [vmem:[%s3 + $0xe0] sm:$0xf]
      %v1368 = vld [vmem:[%s3 + $0xe4] sm:$0xf]
      %v1369 = vld [vmem:[%s3 + $0xe8] sm:$0xf]
      %v1370 = vld [vmem:[%s3 + $0xec] sm:$0xf]
      %v1371 = vld [vmem:[%s3 + $0xf0] sm:$0xf]
      %v1372 = vld [vmem:[%s3 + $0xf4] sm:$0xf]
      %v1373 = vld [vmem:[%s3 + $0xf8] sm:$0xf]
      %v1374 = vld [vmem:[%s3 + $0xfc] sm:$0xf]
      %v1375 = vld [vmem:[%s4] sm:$0x1]
      %v1376 = vpack.c.bf16 %v1307, %v1307
      %v1377 = vpack.c.bf16 %v1308, %v1308
      %v1378 = vpack.c.bf16 %v1309, %v1309
      %v1379 = vpack.c.bf16 %v1310, %v1310
      %v1381 = vlaneseq
      %v1382 = vshrl.u32 %v1381, 7
      %v1383 = vsub.s32 0, %v1382
      %v1384 = vrot.slane %v1375, %v1383
      %v1450 = vunpack.c.l.b16 %v1311
      %v1451 = vunpack.c.l.b16 %v1312
      %v1452 = vunpack.c.l.b16 %v1313
      %v1453 = vunpack.c.l.b16 %v1314
      %v1454 = vunpack.c.l.b16 %v1315
      %v1455 = vunpack.c.l.b16 %v1316
      %v1456 = vunpack.c.l.b16 %v1317
      %v1457 = vunpack.c.l.b16 %v1318
      %v1458 = vunpack.c.l.b16 %v1319
      %v1459 = vunpack.c.l.b16 %v1320
      %v1460 = vunpack.c.l.b16 %v1321
      %v1461 = vunpack.c.l.b16 %v1322
      %v1462 = vunpack.c.l.b16 %v1323
      %v1463 = vunpack.c.l.b16 %v1324
      %v1464 = vunpack.c.l.b16 %v1325
      %v1465 = vunpack.c.l.b16 %v1326
      %v1466 = vunpack.c.l.b16 %v1327
      %v1467 = vunpack.c.l.b16 %v1328
      %v1468 = vunpack.c.l.b16 %v1329
      %v1469 = vunpack.c.l.b16 %v1330
      %v1470 = vunpack.c.l.b16 %v1331
      %v1471 = vunpack.c.l.b16 %v1332
      %v1472 = vunpack.c.l.b16 %v1333
      %v1473 = vunpack.c.l.b16 %v1334
      %v1474 = vunpack.c.l.b16 %v1335
      %v1475 = vunpack.c.l.b16 %v1336
      %v1476 = vunpack.c.l.b16 %v1337
      %v1477 = vunpack.c.l.b16 %v1338
      %v1478 = vunpack.c.l.b16 %v1339
      %v1479 = vunpack.c.l.b16 %v1340
      %v1480 = vunpack.c.l.b16 %v1341
      %v1481 = vunpack.c.l.b16 %v1342
      %v1482 = vunpack.c.l.b16 %v1343
      %v1483 = vunpack.c.l.b16 %v1344
      %v1484 = vunpack.c.l.b16 %v1345
      %v1485 = vunpack.c.l.b16 %v1346
      %v1486 = vunpack.c.l.b16 %v1347
      %v1487 = vunpack.c.l.b16 %v1348
      %v1488 = vunpack.c.l.b16 %v1349
      %v1489 = vunpack.c.l.b16 %v1350
      %v1490 = vunpack.c.l.b16 %v1351
      %v1491 = vunpack.c.l.b16 %v1352
      %v1492 = vunpack.c.l.b16 %v1353
      %v1493 = vunpack.c.l.b16 %v1354
      %v1494 = vunpack.c.l.b16 %v1355
      %v1495 = vunpack.c.l.b16 %v1356
      %v1496 = vunpack.c.l.b16 %v1357
      %v1497 = vunpack.c.l.b16 %v1358
      %v1498 = vunpack.c.l.b16 %v1359
      %v1499 = vunpack.c.l.b16 %v1360
      %v1500 = vunpack.c.l.b16 %v1361
      %v1501 = vunpack.c.l.b16 %v1362
      %v1502 = vunpack.c.l.b16 %v1363
      %v1503 = vunpack.c.l.b16 %v1364
      %v1504 = vunpack.c.l.b16 %v1365
      %v1505 = vunpack.c.l.b16 %v1366
      %v1506 = vunpack.c.l.b16 %v1367
      %v1507 = vunpack.c.l.b16 %v1368
      %v1508 = vunpack.c.l.b16 %v1369
      %v1509 = vunpack.c.l.b16 %v1370
      %v1510 = vunpack.c.l.b16 %v1371
      %v1511 = vunpack.c.l.b16 %v1372
      %v1512 = vunpack.c.l.b16 %v1373
      %v1513 = vunpack.c.l.b16 %v1374
      %v1514 = vpack.c.b16 %v1451, %v1450
      %v1515 = vpack.c.b16 %v1453, %v1452
      %v1516 = vpack.c.b16 %v1455, %v1454
      %v1517 = vpack.c.b16 %v1457, %v1456
      %v1518 = vpack.c.b16 %v1459, %v1458
      %v1519 = vpack.c.b16 %v1461, %v1460
      %v1520 = vpack.c.b16 %v1463, %v1462
      %v1521 = vpack.c.b16 %v1465, %v1464
      %v1522 = vpack.c.b16 %v1467, %v1466
      %v1523 = vpack.c.b16 %v1469, %v1468
      %v1524 = vpack.c.b16 %v1471, %v1470
      %v1525 = vpack.c.b16 %v1473, %v1472
      %v1526 = vpack.c.b16 %v1475, %v1474
      %v1527 = vpack.c.b16 %v1477, %v1476
      %v1528 = vpack.c.b16 %v1479, %v1478
      %v1529 = vpack.c.b16 %v1481, %v1480
      %v1530 = vpack.c.b16 %v1483, %v1482
      %v1531 = vpack.c.b16 %v1485, %v1484
      %v1532 = vpack.c.b16 %v1487, %v1486
      %v1533 = vpack.c.b16 %v1489, %v1488
      %v1534 = vpack.c.b16 %v1491, %v1490
      %v1535 = vpack.c.b16 %v1493, %v1492
      %v1536 = vpack.c.b16 %v1495, %v1494
      %v1537 = vpack.c.b16 %v1497, %v1496
      %v1538 = vpack.c.b16 %v1499, %v1498
      %v1539 = vpack.c.b16 %v1501, %v1500
      %v1540 = vpack.c.b16 %v1503, %v1502
      %v1541 = vpack.c.b16 %v1505, %v1504
      %v1542 = vpack.c.b16 %v1507, %v1506
      %v1543 = vpack.c.b16 %v1509, %v1508
      %v1544 = vpack.c.b16 %v1511, %v1510
      %v1545 = vpack.c.b16 %v1513, %v1512
      %1578 = vmatprep.subr.bf16.mxu0 0
      %1579 = vmatpush1.bf16.msra.mxu0 %v1521
      %1580 = vmatprep.subr.bf16.mxu0 0
      %1581 = vmatpush1.bf16.msra.mxu0 %v1520
      %1582 = vmatprep.subr.bf16.mxu0 0
      %1583 = vmatpush1.bf16.msra.mxu0 %v1519
      %1584 = vmatprep.subr.bf16.mxu0 0
      %1585 = vmatpush1.bf16.msra.mxu0 %v1518
      %1586 = vmatprep.subr.bf16.mxu0 0
      %1587 = vmatpush1.bf16.msra.mxu0 %v1517
      %1588 = vmatprep.subr.bf16.mxu0 0
      %1589 = vmatpush1.bf16.msra.mxu0 %v1516
      %1590 = vmatprep.subr.bf16.mxu0 0
      %1591 = vmatpush1.bf16.msra.mxu0 %v1515
      %1592 = vmatprep.subr.bf16.mxu0 0
      %1593 = vmatpush1.bf16.msra.mxu0 %v1514
      %1594 = vmatprep.subr.bf16.mxu0 0
      %1595 = vmatpush2.bf16.msra.mxu0 %v1529
      %1596 = vmatprep.subr.bf16.mxu0 0
      %1597 = vmatpush2.bf16.msra.mxu0 %v1528
      %1598 = vmatprep.subr.bf16.mxu0 0
      %1599 = vmatpush2.bf16.msra.mxu0 %v1527
      %1600 = vmatprep.subr.bf16.mxu0 0
      %1601 = vmatpush2.bf16.msra.mxu0 %v1526
      %1602 = vmatprep.subr.bf16.mxu0 0
      %1603 = vmatpush2.bf16.msra.mxu0 %v1525
      %1604 = vmatprep.subr.bf16.mxu0 0
      %1605 = vmatpush2.bf16.msra.mxu0 %v1524
      %1606 = vmatprep.subr.bf16.mxu0 0
      %1607 = vmatpush2.bf16.msra.mxu0 %v1523
      %1608 = vmatprep.subr.bf16.mxu0 0
      %1609 = vmatpush2.bf16.msra.mxu0 %v1522
      %1610 = vmatprep.mubr.bf16.mxu0 %v1377
      %1611 = vmatmul.mubr.bf16.gmra.mxu0 %v1376
      %v1612 = vpop.f32.mrf.mxu0
      %v1613 = vadd.f32 %v1384, %v1612
      %v1614 = vpop.f32.mrf.mxu0
      %v1615 = vpop.f32.mrf.mxu0
      %v1616 = vpop.f32.mrf.mxu0
      %1617 = vdwg.mxu0
      %1618 = vmatprep.subr.bf16.mxu0 0
      %1619 = vmatpush1.bf16.msra.mxu0 %v1537
      %1620 = vmatprep.subr.bf16.mxu0 0
      %1621 = vmatpush1.bf16.msra.mxu0 %v1536
      %1622 = vmatprep.subr.bf16.mxu0 0
      %1623 = vmatpush1.bf16.msra.mxu0 %v1535
      %1624 = vmatprep.subr.bf16.mxu0 0
      %1625 = vmatpush1.bf16.msra.mxu0 %v1534
      %1626 = vmatprep.subr.bf16.mxu0 0
      %1627 = vmatpush1.bf16.msra.mxu0 %v1533
      %1628 = vmatprep.subr.bf16.mxu0 0
      %1629 = vmatpush1.bf16.msra.mxu0 %v1532
      %1630 = vmatprep.subr.bf16.mxu0 0
      %1631 = vmatpush1.bf16.msra.mxu0 %v1531
      %1632 = vmatprep.subr.bf16.mxu0 0
      %1633 = vmatpush1.bf16.msra.mxu0 %v1530
      %1634 = vmatprep.subr.bf16.mxu0 0
      %1635 = vmatpush2.bf16.msra.mxu0 %v1545
      %1636 = vmatprep.subr.bf16.mxu0 0
      %1637 = vmatpush2.bf16.msra.mxu0 %v1544
      %1638 = vmatprep.subr.bf16.mxu0 0
      %1639 = vmatpush2.bf16.msra.mxu0 %v1543
      %1640 = vmatprep.subr.bf16.mxu0 0
      %1641 = vmatpush2.bf16.msra.mxu0 %v1542
      %1642 = vmatprep.subr.bf16.mxu0 0
      %1643 = vmatpush2.bf16.msra.mxu0 %v1541
      %1644 = vmatprep.subr.bf16.mxu0 0
      %1645 = vmatpush2.bf16.msra.mxu0 %v1540
      %1646 = vmatprep.subr.bf16.mxu0 0
      %1647 = vmatpush2.bf16.msra.mxu0 %v1539
      %1648 = vmatprep.subr.bf16.mxu0 0
      %1649 = vmatpush2.bf16.msra.mxu0 %v1538
      %1650 = vmatprep.mubr.bf16.mxu0 %v1379
      %1651 = vmatmul.mubr.bf16.gmra.mxu0 %v1378
      %v1652 = vpop.f32.mrf.mxu0
      %v1653 = vadd.f32 %v1613, %v1652
      %v1654 = vpop.f32.mrf.mxu0
      %v1655 = vpop.f32.mrf.mxu0
      %v1656 = vpop.f32.mrf.mxu0
      %1657 = vdwg.mxu0
      %v1658 = vadd.f32 %v438, %v1653
      %v1659 = vld [vmem:[%s5] sm:$0x1]
      %v1660 = vld [vmem:[%s6] sm:$0x1]
      %v1661 = vsel %vm647, %v1658, 0.0
      %1662 = vadd.xlane.f32.xlu0 %v1661
      %v1663 = vpop.xlane.xlu0 %1662
      %v1664 = vrcp.pop 32.0
      %v1665 = vmul.f32 %v1663, %v1664
      %v1666 = vsub.f32 %v1658, %v1665
      %v1667 = vmul.f32 %v1666, %v1666
      %v1668 = vsel %vm647, %v1667, 0.0
      %1669 = vadd.xlane.f32.xlu0 %v1668
      %v1670 = vpop.xlane.xlu0 %1669
      %v1671 = vmul.f32 %v1670, %v1664
      %v1672 = vadd.f32 %v1671, 1e-05
      %v1673 = vrsqrt.pop %v1672
      %v1674 = vmul.f32 %v1666, %v1673
      %v1676 = vlaneseq
      %v1677 = vshrl.u32 %v1676, 7
      %v1678 = vsub.s32 0, %v1677
      %v1679 = vrot.slane %v1659, %v1678
      %v1681 = vmul.f32 %v1674, %v1679
      %v1683 = vlaneseq
      %v1684 = vshrl.u32 %v1683, 7
      %v1685 = vsub.s32 0, %v1684
      %v1686 = vrot.slane %v1660, %v1685
      %v1688 = vadd.f32 %v1681, %v1686
      %v1689 = vld [vmem:[%s7] sm:$0xf]
      %v1690 = vld [vmem:[%s7 + $0x4] sm:$0xf]
      %v1691 = vld [vmem:[%s7 + $0x8] sm:$0xf]
      %v1692 = vld [vmem:[%s7 + $0xc] sm:$0xf]
      %v1693 = vld [vmem:[%s8] sm:$0x1]
      %v1694 = vpack.c.bf16 %v1688, %v1688
      %v1696 = vlaneseq
      %v1697 = vshrl.u32 %v1696, 7
      %v1698 = vsub.s32 0, %v1697
      %v1699 = vrot.slane %v1693, %v1698
      %v1705 = vunpack.c.l.b16 %v1689
      %v1706 = vunpack.c.l.b16 %v1690
      %v1707 = vunpack.c.l.b16 %v1691
      %v1708 = vunpack.c.l.b16 %v1692
      %v1709 = vpack.c.b16 %v1706, %v1705
      %v1710 = vpack.c.b16 %v1708, %v1707
      %v1714 = vsel %vm647, %v1694, 0
      %1716 = vmatprep.subr.bf16.mxu0 0
      %1717 = vmatpush1.bf16.msra.mxu0 0
      %1718 = vmatprep.subr.bf16.mxu0 0
      %1719 = vmatpush1.bf16.msra.mxu0 0
      %1720 = vmatprep.subr.bf16.mxu0 0
      %1721 = vmatpush1.bf16.msra.mxu0 0
      %1722 = vmatprep.subr.bf16.mxu0 0
      %1723 = vmatpush1.bf16.msra.mxu0 0
      %1724 = vmatprep.subr.bf16.mxu0 0
      %1725 = vmatpush1.bf16.msra.mxu0 0
      %1726 = vmatprep.subr.bf16.mxu0 0
      %1727 = vmatpush1.bf16.msra.mxu0 0
      %1728 = vmatprep.subr.bf16.mxu0 0
      %1729 = vmatpush1.bf16.msra.mxu0 %v1710
      %1730 = vmatprep.subr.bf16.mxu0 0
      %1731 = vmatpush1.bf16.msra.mxu0 %v1709
      %1732 = vmatprep.subr.bf16.mxu0 0
      %1733 = vmatpush2.bf16.msra.mxu0 0
      %1734 = vmatprep.subr.bf16.mxu0 0
      %1735 = vmatpush2.bf16.msra.mxu0 0
      %1736 = vmatprep.subr.bf16.mxu0 0
      %1737 = vmatpush2.bf16.msra.mxu0 0
      %1738 = vmatprep.subr.bf16.mxu0 0
      %1739 = vmatpush2.bf16.msra.mxu0 0
      %1740 = vmatprep.subr.bf16.mxu0 0
      %1741 = vmatpush2.bf16.msra.mxu0 0
      %1742 = vmatprep.subr.bf16.mxu0 0
      %1743 = vmatpush2.bf16.msra.mxu0 0
      %1744 = vmatprep.subr.bf16.mxu0 0
      %1745 = vmatpush2.bf16.msra.mxu0 0
      %1746 = vmatprep.subr.bf16.mxu0 0
      %1747 = vmatpush2.bf16.msra.mxu0 0
      %1748 = vmatprep.mubr.bf16.mxu0 0
      %1749 = vmatmul.mubr.bf16.gmra.mxu0 %v1714
      %v1750 = vpop.f32.mrf.mxu0
      %v1751 = vadd.f32 %v1699, %v1750
      %v1752 = vpop.f32.mrf.mxu0
      %v1753 = vpop.f32.mrf.mxu0
      %v1754 = vpop.f32.mrf.mxu0
      %1755 = vdwg.mxu0
      %v1756 = vmax.f32 %v1751, 0.0
      %v1757 = vld [vmem:[%s9] sm:$0xf]
      %v1758 = vld [vmem:[%s9 + $0x4] sm:$0xf]
      %v1759 = vld [vmem:[%s9 + $0x8] sm:$0xf]
      %v1760 = vld [vmem:[%s9 + $0xc] sm:$0xf]
      %v1761 = vld [vmem:[%s9 + $0x10] sm:$0xf]
      %v1762 = vld [vmem:[%s9 + $0x14] sm:$0xf]
      %v1763 = vld [vmem:[%s9 + $0x18] sm:$0xf]
      %v1764 = vld [vmem:[%s9 + $0x1c] sm:$0xf]
      %v1765 = vld [vmem:[%s9 + $0x20] sm:$0xf]
      %v1766 = vld [vmem:[%s9 + $0x24] sm:$0xf]
      %v1767 = vld [vmem:[%s9 + $0x28] sm:$0xf]
      %v1768 = vld [vmem:[%s9 + $0x2c] sm:$0xf]
      %v1769 = vld [vmem:[%s9 + $0x30] sm:$0xf]
      %v1770 = vld [vmem:[%s9 + $0x34] sm:$0xf]
      %v1771 = vld [vmem:[%s9 + $0x38] sm:$0xf]
      %v1772 = vld [vmem:[%s9 + $0x3c] sm:$0xf]
      %v1773 = vld [vmem:[%s10] sm:$0x1]
      %v1774 = vpack.c.bf16 %v1756, %v1756
      %v1776 = vlaneseq
      %v1777 = vshrl.u32 %v1776, 7
      %v1778 = vsub.s32 0, %v1777
      %v1779 = vrot.slane %v1773, %v1778
      %v1797 = vunpack.c.l.b16 %v1757
      %v1798 = vunpack.c.l.b16 %v1758
      %v1799 = vunpack.c.l.b16 %v1759
      %v1800 = vunpack.c.l.b16 %v1760
      %v1801 = vunpack.c.l.b16 %v1761
      %v1802 = vunpack.c.l.b16 %v1762
      %v1803 = vunpack.c.l.b16 %v1763
      %v1804 = vunpack.c.l.b16 %v1764
      %v1805 = vunpack.c.l.b16 %v1765
      %v1806 = vunpack.c.l.b16 %v1766
      %v1807 = vunpack.c.l.b16 %v1767
      %v1808 = vunpack.c.l.b16 %v1768
      %v1809 = vunpack.c.l.b16 %v1769
      %v1810 = vunpack.c.l.b16 %v1770
      %v1811 = vunpack.c.l.b16 %v1771
      %v1812 = vunpack.c.l.b16 %v1772
      %v1813 = vpack.c.b16 %v1798, %v1797
      %v1814 = vpack.c.b16 %v1800, %v1799
      %v1815 = vpack.c.b16 %v1802, %v1801
      %v1816 = vpack.c.b16 %v1804, %v1803
      %v1817 = vpack.c.b16 %v1806, %v1805
      %v1818 = vpack.c.b16 %v1808, %v1807
      %v1819 = vpack.c.b16 %v1810, %v1809
      %v1820 = vpack.c.b16 %v1812, %v1811
      %1829 = vmatprep.subr.bf16.mxu0 0
      %1830 = vmatpush1.bf16.msra.mxu0 %v1820
      %1831 = vmatprep.subr.bf16.mxu0 0
      %1832 = vmatpush1.bf16.msra.mxu0 %v1819
      %1833 = vmatprep.subr.bf16.mxu0 0
      %1834 = vmatpush1.bf16.msra.mxu0 %v1818
      %1835 = vmatprep.subr.bf16.mxu0 0
      %1836 = vmatpush1.bf16.msra.mxu0 %v1817
      %1837 = vmatprep.subr.bf16.mxu0 0
      %1838 = vmatpush1.bf16.msra.mxu0 %v1816
      %1839 = vmatprep.subr.bf16.mxu0 0
      %1840 = vmatpush1.bf16.msra.mxu0 %v1815
      %1841 = vmatprep.subr.bf16.mxu0 0
      %1842 = vmatpush1.bf16.msra.mxu0 %v1814
      %1843 = vmatprep.subr.bf16.mxu0 0
      %1844 = vmatpush1.bf16.msra.mxu0 %v1813
      %1845 = vmatprep.subr.bf16.mxu0 0
      %1846 = vmatpush2.bf16.msra.mxu0 0
      %1847 = vmatprep.subr.bf16.mxu0 0
      %1848 = vmatpush2.bf16.msra.mxu0 0
      %1849 = vmatprep.subr.bf16.mxu0 0
      %1850 = vmatpush2.bf16.msra.mxu0 0
      %1851 = vmatprep.subr.bf16.mxu0 0
      %1852 = vmatpush2.bf16.msra.mxu0 0
      %1853 = vmatprep.subr.bf16.mxu0 0
      %1854 = vmatpush2.bf16.msra.mxu0 0
      %1855 = vmatprep.subr.bf16.mxu0 0
      %1856 = vmatpush2.bf16.msra.mxu0 0
      %1857 = vmatprep.subr.bf16.mxu0 0
      %1858 = vmatpush2.bf16.msra.mxu0 0
      %1859 = vmatprep.subr.bf16.mxu0 0
      %1860 = vmatpush2.bf16.msra.mxu0 0
      %1861 = vmatprep.mubr.bf16.mxu0 0
      %1862 = vmatmul.mubr.bf16.gmra.mxu0 %v1774
      %v1863 = vpop.f32.mrf.mxu0
      %v1864 = vadd.f32 %v1779, %v1863
      %v1865 = vpop.f32.mrf.mxu0
      %v1866 = vpop.f32.mrf.mxu0
      %v1867 = vpop.f32.mrf.mxu0
      %1868 = vdwg.mxu0
      %v1869 = vadd.f32 %v1688, %v1864
      %v1870 = vld [vmem:[%s11] sm:$0x1]
      %v1871 = vld [vmem:[%s12] sm:$0x1]
      %v1872 = vsel %vm647, %v1869, 0.0
      %1873 = vadd.xlane.f32.xlu0 %v1872
      %v1874 = vpop.xlane.xlu0 %1873
      %v1875 = vmul.f32 %v1874, %v1664
      %v1876 = vsub.f32 %v1869, %v1875
      %v1877 = vmul.f32 %v1876, %v1876
      %v1878 = vsel %vm647, %v1877, 0.0
      %1879 = vadd.xlane.f32.xlu0 %v1878
      %v1880 = vpop.xlane.xlu0 %1879
      %v1881 = vmul.f32 %v1880, %v1664
      %v1882 = vadd.f32 %v1881, 1e-05
      %v1883 = vrsqrt.pop %v1882
      %v1884 = vmul.f32 %v1876, %v1883
      %v1886 = vlaneseq
      %v1887 = vshrl.u32 %v1886, 7
      %v1888 = vsub.s32 0, %v1887
      %v1889 = vrot.slane %v1870, %v1888
      %v1891 = vmul.f32 %v1884, %v1889
      %v1893 = vlaneseq
      %v1894 = vshrl.u32 %v1893, 7
      %v1895 = vsub.s32 0, %v1894
      %v1896 = vrot.slane %v1871, %v1895
      %v1898 = vadd.f32 %v1891, %v1896
      %v1899 = vpack.c.bf16 %v1898, %v1898
      %vm1900 = vcmask 257024
      %1901 = vst.msk [vmem:[%s435] sm:$0xf] %vm1900, %v1899
      %p1902 = scmp.lt.s32.totalorder %s24, 1
      %s1903 = scalar_select %p1902, %s24, 1
      %s1904 = smul.addr %s1903, 4
      %s1905 = scalar_lea.vmem %s13, %s1904
      // Predicated region
      $region73: #{unresolved_bert_forward.5} parent=71 // pred_check
        %p1906 = pneg %p320
      $region74: #{unresolved_bert_forward.5} parent=71 // pred_check_branch
        %1908 = sbr.rel (%p1906) target = $region76
      $region75: #{unresolved_bert_forward.5} parent=71 // pred_region
        _
      $region76: #{unresolved_bert_forward.5} parent=71 // pred_fallthru
        _
    $region72: #{unresolved_bert_forward.5} parent=5 // pred_fallthru
      _
    %p1909 = scmp.le.s32.totalorder 2, %s19
    // Predicated region
    $region77: #{unresolved_bert_forward.5} parent=5 // pred_check
      %p1910 = pneg %p1909
    $region78: #{unresolved_bert_forward.5} parent=5 // pred_check_branch
      %1912 = sbr.rel (%p1910) target = $region80
    $region79: #{unresolved_bert_forward.5} parent=5 // pred_region
      %s1913 = ssub.s32 %s19, 2
      // Predicated region
      $region81: #{unresolved_bert_forward.5} parent=79 // pred_check
        %p1914 = pneg %p326
      $region82: #{unresolved_bert_forward.5} parent=79 // pred_check_branch
        %1916 = sbr.rel (%p1914) target = $region84
      $region83: #{unresolved_bert_forward.5} parent=79 // pred_region
        %p1917 = scmp.lt.s32.totalorder %s25, 1
        %s1918 = scalar_select %p1917, %s25, 1
        %s1919 = smul.addr %s1918, 4
        %s1920 = scalar_lea.vmem %s13, %s1919
      $region84: #{unresolved_bert_forward.5} parent=79 // pred_fallthru
        _
    $region80: #{unresolved_bert_forward.5} parent=5 // pred_fallthru
      _
  $region6: #{unresolved_bert_forward.5} parent=0 // loop_footer
    %s23 = sadd.s32 1, %s19
  $region7: #{unresolved_bert_forward.5} parent=0 // loop_footer_branch
    %18 = sbr.rel target = $region3
  $region8: #{unresolved_bert_forward.5} parent=0 // loop_exit
    _

// kernel: unresolved_bert_forward.7
$region0: #{unresolved_bert_forward.7}
  #allocation0 [shape = 'u32[]', space=smem, size = 0x4, offset = 0x4, fixed_abs, tag = 'smem constant byte address 0x4 - core index']
  #allocation1 [shape = 'u32[144,128]{1,0:T(1,128)}', space=vmem, size = 0x12000, scoped, tag = 'internal scratch']
  #allocation2 [shape = 'f32[1,512]{1,0:T(1,128)}', space=vmem, size = 0x800, scoped, tag = 'scratch operand']
  #allocation3 [shape = 'f32[1,1]{1,0:T(1,128)S(1)}', space=vmem, size = 0x200, scoped, tag = 'scoped memory for unresolved_bert_forward.7']
  %s0 = inlined_call_operand.smem [shape: u32[46], index: -1, kind: input, shape index: {}]
  %s1 = sld [smem:[%s0]]
  %s2 = scalar_lea.smem %s0, 1
  %s3 = sld [smem:[%s2]]
  %s4 = scalar_lea.smem %s0, 2
  %s5 = sld [smem:[%s4]]
  %s6 = scalar_lea.smem %s0, 3
  %s7 = sld [smem:[%s6]]
  %s8 = scalar_lea.smem %s0, 4
  %s9 = sld [smem:[%s8]]
  %s10 = scalar_lea.smem %s0, 5
  %s11 = sld [smem:[%s10]]
  %s12 = scalar_lea.smem %s0, 6
  %s13 = sld [smem:[%s12]]
  %s14 = scalar_lea.smem %s0, 7
  %s15 = sld [smem:[%s14]]
  %s16 = scalar_lea.smem %s0, 8
  %s17 = sld [smem:[%s16]]
  %s18 = scalar_lea.smem %s0, 9
  %s19 = sld [smem:[%s18]]
  %s20 = scalar_lea.smem %s0, 10
  %s21 = sld [smem:[%s20]]
  %s22 = scalar_lea.smem %s0, 11
  %s23 = sld [smem:[%s22]]
  %s24 = scalar_lea.smem %s0, 12
  %s25 = sld [smem:[%s24]]
  %s26 = scalar_lea.smem %s0, 13
  %s27 = sld [smem:[%s26]]
  %s28 = scalar_lea.smem %s0, 14
  %s29 = sld [smem:[%s28]]
  %s30 = scalar_lea.smem %s0, 15
  %s31 = sld [smem:[%s30]]
  %s32 = scalar_lea.smem %s0, 16
  %s33 = sld [smem:[%s32]]
  %s34 = scalar_lea.smem %s0, 17
  %s35 = sld [smem:[%s34]]
  %s36 = scalar_lea.smem %s0, 18
  %s37 = sld [smem:[%s36]]
  %s38 = scalar_lea.smem %s0, 19
  %s39 = sld [smem:[%s38]]
  %s40 = scalar_lea.smem %s0, 20
  %s41 = sld [smem:[%s40]]
  %s42 = scalar_lea.smem %s0, 21
  %s43 = sld [smem:[%s42]]
  %s44 = scalar_lea.smem %s0, 22
  %s45 = sld [smem:[%s44]]
  %s46 = scalar_lea.smem %s0, 23
  %s47 = sld [smem:[%s46]]
  %s48 = scalar_lea.smem %s0, 24
  %s49 = sld [smem:[%s48]]
  %s50 = scalar_lea.smem %s0, 25
  %s51 = sld [smem:[%s50]]
  %s52 = scalar_lea.smem %s0, 26
  %s53 = sld [smem:[%s52]]
  %s54 = scalar_lea.smem %s0, 27
  %s55 = sld [smem:[%s54]]
  %s56 = scalar_lea.smem %s0, 28
  %s57 = sld [smem:[%s56]]
  %s58 = scalar_lea.smem %s0, 29
  %s59 = sld [smem:[%s58]]
  %s60 = scalar_lea.smem %s0, 30
  %s61 = sld [smem:[%s60]]
  %s62 = scalar_lea.smem %s0, 31
  %s63 = sld [smem:[%s62]]
  %s64 = scalar_lea.smem %s0, 32
  %s65 = sld [smem:[%s64]]
  %s66 = scalar_lea.smem %s0, 33
  %s67 = sld [smem:[%s66]]
  %s68 = scalar_lea.smem %s0, 34
  %s69 = sld [smem:[%s68]]
  %s70 = scalar_lea.smem %s0, 35
  %s71 = sld [smem:[%s70]]
  %s72 = scalar_lea.smem %s0, 36
  %s73 = sld [smem:[%s72]]
  %s74 = scalar_lea.smem %s0, 37
  %s75 = sld [smem:[%s74]]
  %s76 = scalar_lea.smem %s0, 38
  %s77 = sld [smem:[%s76]]
  %s78 = scalar_lea.smem %s0, 39
  %s79 = sld [smem:[%s78]]
  %s80 = scalar_lea.smem %s0, 40
  %s81 = sld [smem:[%s80]]
  %s82 = scalar_lea.smem %s0, 41
  %s83 = sld [smem:[%s82]]
  %s84 = scalar_lea.smem %s0, 42
  %s85 = sld [smem:[%s84]]
  %s86 = scalar_lea.smem %s0, 43
  %s87 = sld [smem:[%s86]]
  %s88 = scalar_lea.smem %s0, 44
  %s89 = sld [smem:[%s88]]
  %s90 = scalar_lea.smem %s0, 45
  %s91 = sld [smem:[%s90]]
  %s92 = sld [smem:[#allocation0]]
  $region233: #{unresolved_bert_forward.7} parent=0
    _
  %s94 = ssub.s32 1, %s92
  %s95 = scalar_select 0, %s94, %s92
  %v96 = vstv %s89
  %97 = vst [vmem:[#allocation3] sm:$0x1] %v96
  $region1: #{unresolved_bert_forward.7} parent=0
    #allocation4 [shape = 'u8[512]{0}', space=vmem, size = 0x400, scoped, tag = 'input window, operand 38, single buffered']
    #allocation5 [shape = 's32[2]{0}', space=sflag, size = 0x8, scoped, tag = 'scoped memory for unresolved_bert_forward.7']
    #allocation6 [shape = 'u8[512]{0}', space=vmem, size = 0x400, scoped, tag = 'input window, operand 39, single buffered']
    #allocation7 [shape = 's32[1]{0}', space=sflag, size = 0x4, scoped, tag = 'scoped memory for unresolved_bert_forward.7']
    #allocation8 [shape = 'u8[512]{0}', space=vmem, size = 0x400, scoped, tag = 'input window, operand 40, single buffered']
    #allocation9 [shape = 'u8[512]{0}', space=vmem, size = 0x400, scoped, tag = 'input window, operand 41, single buffered']
    #allocation10 [shape = 's32[1]{0}', space=sflag, size = 0x4, scoped, tag = 'scoped memory for unresolved_bert_forward.7']
    #allocation11 [shape = 'u8[512]{0}', space=vmem, size = 0x400, scoped, tag = 'input window, operand 42, single buffered']
    %98 = vsyncpa [#allocation5], 0
    %99 = vsyncpa [#allocation7], 0
    %100 = vsyncpa [#allocation10], 0
    loop: start=0, step=1, limit=4
    $region2: #{unresolved_bert_forward.7} parent=1 // loop_pre_header
      _
    $region3: #{unresolved_bert_forward.7} parent=1 // loop_header
      %s102 = sphi 0, %s106
      %p103 = scmp.ge.s32.totalorder %s102, 4
      %s112 = sphi 0, %s114
      %s115 = sphi 0, %s112
      %s116 = sphi 0, %s115
      %s132 = sphi 0, %s116
      %s136 = sphi 0, %s136
      %s138 = sphi 0, %s136
      %s139 = sphi 0, %s138
      %s153 = sphi 0, %s139
      %s157 = sphi 0, %s157
      %s159 = sphi 0, %s157
      %s160 = sphi 0, %s159
      %s174 = sphi 0, %s160
      %s178 = sphi 0, %s178
      %s180 = sphi 0, %s178
      %s181 = sphi 0, %s180
      %s195 = sphi 0, %s181
      %s199 = sphi 0, %s199
      %s201 = sphi 0, %s199
      %s202 = sphi 0, %s201
      %s216 = sphi 0, %s202
      %s220 = sphi 0, %s220
      %s222 = sphi 0, %s220
      %s223 = sphi 0, %s222
      %s237 = sphi 0, %s223
      %s241 = sphi 0, %s241
      %s243 = sphi 0, %s241
      %s244 = sphi 0, %s243
      %s258 = sphi 0, %s244
      %s262 = sphi 0, %s262
      %s264 = sphi 0, %s262
      %s265 = sphi 0, %s264
      %s279 = sphi 0, %s265
      %s283 = sphi 0, %s283
      %s285 = sphi 0, %s283
      %s286 = sphi 0, %s285
      %s300 = sphi 0, %s286
      %s304 = sphi 0, %s304
      %s306 = sphi 0, %s304
      %s307 = sphi 0, %s306
      %s321 = sphi 0, %s307
      %s325 = sphi 0, %s325
      %s327 = sphi 0, %s325
      %s328 = sphi 0, %s327
      %s342 = sphi 0, %s328
      %s346 = sphi 0, %s346
      %s348 = sphi 0, %s346
      %s349 = sphi 0, %s348
      %s363 = sphi 0, %s349
      %s367 = sphi 0, %s367
      %s369 = sphi 0, %s367
      %s370 = sphi 0, %s369
      %s384 = sphi 0, %s370
      %s388 = sphi 0, %s388
      %s390 = sphi 0, %s388
      %s391 = sphi 0, %s390
      %s405 = sphi 0, %s391
      %s409 = sphi 0, %s409
      %s411 = sphi 0, %s409
      %s412 = sphi 0, %s411
      %s426 = sphi 0, %s412
      %s430 = sphi 0, %s430
      %s432 = sphi 0, %s430
      %s433 = sphi 0, %s432
      %s447 = sphi 0, %s433
      %s451 = sphi 0, %s451
      %s453 = sphi 0, %s451
      %s454 = sphi 0, %s453
      %s468 = sphi 0, %s454
      %s472 = sphi 0, %s472
      %s474 = sphi 0, %s472
      %s475 = sphi 0, %s474
      %s489 = sphi 0, %s475
      %s493 = sphi 0, %s493
      %s495 = sphi 0, %s493
      %s496 = sphi 0, %s495
      %s510 = sphi 0, %s496
      %s514 = sphi 0, %s514
      %s516 = sphi 0, %s514
      %s517 = sphi 0, %s516
      %s531 = sphi 0, %s517
      %s535 = sphi 0, %s535
      %s537 = sphi 0, %s535
      %s538 = sphi 0, %s537
      %s552 = sphi 0, %s538
      %s556 = sphi 0, %s556
      %s558 = sphi 0, %s556
      %s559 = sphi 0, %s558
      %s573 = sphi 0, %s559
      %s577 = sphi 0, %s577
      %s579 = sphi 0, %s577
      %s580 = sphi 0, %s579
      %s594 = sphi 0, %s580
      %s598 = sphi 0, %s598
      %s600 = sphi 0, %s598
      %s601 = sphi 0, %s600
      %s615 = sphi 0, %s601
      %s619 = sphi 0, %s619
      %s621 = sphi 0, %s619
      %s622 = sphi 0, %s621
      %s636 = sphi 0, %s622
      %s640 = sphi 0, %s640
      %s642 = sphi 0, %s640
      %s643 = sphi 0, %s642
      %s657 = sphi 0, %s643
      %s661 = sphi 0, %s661
      %s663 = sphi 0, %s661
      %s664 = sphi 0, %s663
      %s678 = sphi 0, %s664
      %s682 = sphi 0, %s682
      %s684 = sphi 0, %s682
      %s685 = sphi 0, %s684
      %s699 = sphi 0, %s685
      %s703 = sphi 0, %s703
      %s705 = sphi 0, %s703
      %s706 = sphi 0, %s705
      %s720 = sphi 0, %s706
      %s724 = sphi 0, %s724
      %s726 = sphi 0, %s724
      %s727 = sphi 0, %s726
      %s741 = sphi 0, %s727
      %s745 = sphi 0, %s745
      %s747 = sphi 0, %s745
      %s748 = sphi 0, %s747
      %s762 = sphi 0, %s748
      %s766 = sphi 0, %s766
      %s768 = sphi 0, %s766
      %s769 = sphi 0, %s768
      %s783 = sphi 0, %s769
      %s787 = sphi 0, %s787
      %s789 = sphi 0, %s787
      %s790 = sphi 0, %s789
      %s804 = sphi 0, %s790
      %s808 = sphi 0, %s808
      %s810 = sphi 0, %s808
      %s811 = sphi 0, %s810
      %s825 = sphi 0, %s811
      %s829 = sphi 0, %s829
      %s831 = sphi 0, %s829
      %s832 = sphi 0, %s831
      %s846 = sphi 0, %s832
      %s850 = sphi 0, %s850
      %s852 = sphi 0, %s850
      %s853 = sphi 0, %s852
      %s867 = sphi 0, %s853
      %s871 = sphi 0, %s871
      %s873 = sphi 0, %s871
      %s874 = sphi 0, %s873
      %s888 = sphi 0, %s874
      %s892 = sphi 0, %s892
      %s894 = sphi 0, %s892
      %s895 = sphi 0, %s894
      %s909 = sphi 0, %s895
      %s913 = sphi 0, %s913
      %s915 = sphi 0, %s913
      %s916 = sphi 0, %s915
      %s930 = sphi 0, %s916
      %s934 = sphi 0, %s934
      %s936 = sphi 0, %s934
      %s937 = sphi 0, %s936
      %s951 = sphi 0, %s937
      %s955 = sphi 0, %s955
      %s957 = sphi 0, %s955
      %s958 = sphi 0, %s957
      %s972 = sphi 0, %s958
      %s976 = sphi 0, %s976
      %s978 = sphi 0, %s976
      %s979 = sphi 0, %s978
      %s993 = sphi 0, %s979
      %s997 = sphi 0, %s997
      %s999 = sphi 0, %s997
      %s1000 = sphi 0, %s999
      %s1014 = sphi 0, %s1000
      %s1018 = sphi 0, %s1018
      %s1020 = sphi 0, %s1018
      %s1021 = sphi 0, %s1020
      %s1035 = sphi 0, %s1021
      %s1039 = sphi 0, %s1039
      %s1041 = sphi 0, %s1039
      %s1042 = sphi 0, %s1041
      %s1056 = sphi 0, %s1042
      %s1062 = sphi 0, %s1064
      %s1065 = sphi 0, %s1062
      %s1066 = sphi 0, %s1065
      %s1082 = sphi 0, %s1066
    $region4: #{unresolved_bert_forward.7} parent=1 // loop_header_branch
      %105 = sbr.rel (%p103) target = $region8
    $region5: #{unresolved_bert_forward.7} parent=1 // loop_body
      %s107 = ssub.s32 %s102, 1
      %s108 = ssub.s32 %s102, 2
      %s109 = sadd.s32 %s102, 1
      %s110 = ssub.s32 %s102, %s109
      %p111 = scmp.eq.s32.totalorder %s110, 0
      %s113 = sadd.s32 %s112, 1
      %s114 = scalar_select %p111, %s112, %s113
      %p117 = pneg %p111
      %p118 = scmp.eq.s32.totalorder %s102, 1
      %p119 = por %p117, %p118
      %p120 = scmp.ne.s32.totalorder %s112, %s115
      %p121 = scmp.eq.s32.totalorder %s102, 0
      %p122 = por %p120, %p121
      %p123 = scmp.ne.s32.totalorder %s112, %s115
      %p124 = scmp.eq.s32.totalorder %s107, 1
      %p125 = por %p123, %p124
      %p126 = scmp.ne.s32.totalorder %s115, %s116
      %p127 = scmp.eq.s32.totalorder %s107, 0
      %p128 = por %p126, %p127
      %p129 = scmp.ne.s32.totalorder %s115, %s116
      %p130 = scmp.eq.s32.totalorder %s108, 1
      %p131 = por %p129, %p130
      %p133 = scmp.ne.s32.totalorder %s116, %s132
      %p134 = scmp.eq.s32.totalorder %s108, 0
      %p135 = por %p133, %p134
      %s137 = sadd.s32 %s136, 1
      %p140 = scmp.eq.s32.totalorder %s102, 1
      %p141 = scmp.ne.s32.totalorder %s136, %s138
      %p142 = scmp.eq.s32.totalorder %s102, 0
      %p143 = por %p141, %p142
      %p144 = scmp.ne.s32.totalorder %s136, %s138
      %p145 = scmp.eq.s32.totalorder %s107, 1
      %p146 = por %p144, %p145
      %p147 = scmp.ne.s32.totalorder %s138, %s139
      %p148 = scmp.eq.s32.totalorder %s107, 0
      %p149 = por %p147, %p148
      %p150 = scmp.ne.s32.totalorder %s138, %s139
      %p151 = scmp.eq.s32.totalorder %s108, 1
      %p152 = por %p150, %p151
      %p154 = scmp.ne.s32.totalorder %s139, %s153
      %p155 = scmp.eq.s32.totalorder %s108, 0
      %p156 = por %p154, %p155
      %s158 = sadd.s32 %s157, 1
      %p161 = scmp.eq.s32.totalorder %s102, 1
      %p162 = scmp.ne.s32.totalorder %s157, %s159
      %p163 = scmp.eq.s32.totalorder %s102, 0
      %p164 = por %p162, %p163
      %p165 = scmp.ne.s32.totalorder %s157, %s159
      %p166 = scmp.eq.s32.totalorder %s107, 1
      %p167 = por %p165, %p166
      %p168 = scmp.ne.s32.totalorder %s159, %s160
      %p169 = scmp.eq.s32.totalorder %s107, 0
      %p170 = por %p168, %p169
      %p171 = scmp.ne.s32.totalorder %s159, %s160
      %p172 = scmp.eq.s32.totalorder %s108, 1
      %p173 = por %p171, %p172
      %p175 = scmp.ne.s32.totalorder %s160, %s174
      %p176 = scmp.eq.s32.totalorder %s108, 0
      %p177 = por %p175, %p176
      %s179 = sadd.s32 %s178, 1
      %p182 = scmp.eq.s32.totalorder %s102, 1
      %p183 = scmp.ne.s32.totalorder %s178, %s180
      %p184 = scmp.eq.s32.totalorder %s102, 0
      %p185 = por %p183, %p184
      %p186 = scmp.ne.s32.totalorder %s178, %s180
      %p187 = scmp.eq.s32.totalorder %s107, 1
      %p188 = por %p186, %p187
      %p189 = scmp.ne.s32.totalorder %s180, %s181
      %p190 = scmp.eq.s32.totalorder %s107, 0
      %p191 = por %p189, %p190
      %p192 = scmp.ne.s32.totalorder %s180, %s181
      %p193 = scmp.eq.s32.totalorder %s108, 1
      %p194 = por %p192, %p193
      %p196 = scmp.ne.s32.totalorder %s181, %s195
      %p197 = scmp.eq.s32.totalorder %s108, 0
      %p198 = por %p196, %p197
      %s200 = sadd.s32 %s199, 1
      %p203 = scmp.eq.s32.totalorder %s102, 1
      %p204 = scmp.ne.s32.totalorder %s199, %s201
      %p205 = scmp.eq.s32.totalorder %s102, 0
      %p206 = por %p204, %p205
      %p207 = scmp.ne.s32.totalorder %s199, %s201
      %p208 = scmp.eq.s32.totalorder %s107, 1
      %p209 = por %p207, %p208
      %p210 = scmp.ne.s32.totalorder %s201, %s202
      %p211 = scmp.eq.s32.totalorder %s107, 0
      %p212 = por %p210, %p211
      %p213 = scmp.ne.s32.totalorder %s201, %s202
      %p214 = scmp.eq.s32.totalorder %s108, 1
      %p215 = por %p213, %p214
      %p217 = scmp.ne.s32.totalorder %s202, %s216
      %p218 = scmp.eq.s32.totalorder %s108, 0
      %p219 = por %p217, %p218
      %s221 = sadd.s32 %s220, 1
      %p224 = scmp.eq.s32.totalorder %s102, 1
      %p225 = scmp.ne.s32.totalorder %s220, %s222
      %p226 = scmp.eq.s32.totalorder %s102, 0
      %p227 = por %p225, %p226
      %p228 = scmp.ne.s32.totalorder %s220, %s222
      %p229 = scmp.eq.s32.totalorder %s107, 1
      %p230 = por %p228, %p229
      %p231 = scmp.ne.s32.totalorder %s222, %s223
      %p232 = scmp.eq.s32.totalorder %s107, 0
      %p233 = por %p231, %p232
      %p234 = scmp.ne.s32.totalorder %s222, %s223
      %p235 = scmp.eq.s32.totalorder %s108, 1
      %p236 = por %p234, %p235
      %p238 = scmp.ne.s32.totalorder %s223, %s237
      %p239 = scmp.eq.s32.totalorder %s108, 0
      %p240 = por %p238, %p239
      %s242 = sadd.s32 %s241, 1
      %p245 = scmp.eq.s32.totalorder %s102, 1
      %p246 = scmp.ne.s32.totalorder %s241, %s243
      %p247 = scmp.eq.s32.totalorder %s102, 0
      %p248 = por %p246, %p247
      %p249 = scmp.ne.s32.totalorder %s241, %s243
      %p250 = scmp.eq.s32.totalorder %s107, 1
      %p251 = por %p249, %p250
      %p252 = scmp.ne.s32.totalorder %s243, %s244
      %p253 = scmp.eq.s32.totalorder %s107, 0
      %p254 = por %p252, %p253
      %p255 = scmp.ne.s32.totalorder %s243, %s244
      %p256 = scmp.eq.s32.totalorder %s108, 1
      %p257 = por %p255, %p256
      %p259 = scmp.ne.s32.totalorder %s244, %s258
      %p260 = scmp.eq.s32.totalorder %s108, 0
      %p261 = por %p259, %p260
      %s263 = sadd.s32 %s262, 1
      %p266 = scmp.eq.s32.totalorder %s102, 1
      %p267 = scmp.ne.s32.totalorder %s262, %s264
      %p268 = scmp.eq.s32.totalorder %s102, 0
      %p269 = por %p267, %p268
      %p270 = scmp.ne.s32.totalorder %s262, %s264
      %p271 = scmp.eq.s32.totalorder %s107, 1
      %p272 = por %p270, %p271
      %p273 = scmp.ne.s32.totalorder %s264, %s265
      %p274 = scmp.eq.s32.totalorder %s107, 0
      %p275 = por %p273, %p274
      %p276 = scmp.ne.s32.totalorder %s264, %s265
      %p277 = scmp.eq.s32.totalorder %s108, 1
      %p278 = por %p276, %p277
      %p280 = scmp.ne.s32.totalorder %s265, %s279
      %p281 = scmp.eq.s32.totalorder %s108, 0
      %p282 = por %p280, %p281
      %s284 = sadd.s32 %s283, 1
      %p287 = scmp.eq.s32.totalorder %s102, 1
      %p288 = scmp.ne.s32.totalorder %s283, %s285
      %p289 = scmp.eq.s32.totalorder %s102, 0
      %p290 = por %p288, %p289
      %p291 = scmp.ne.s32.totalorder %s283, %s285
      %p292 = scmp.eq.s32.totalorder %s107, 1
      %p293 = por %p291, %p292
      %p294 = scmp.ne.s32.totalorder %s285, %s286
      %p295 = scmp.eq.s32.totalorder %s107, 0
      %p296 = por %p294, %p295
      %p297 = scmp.ne.s32.totalorder %s285, %s286
      %p298 = scmp.eq.s32.totalorder %s108, 1
      %p299 = por %p297, %p298
      %p301 = scmp.ne.s32.totalorder %s286, %s300
      %p302 = scmp.eq.s32.totalorder %s108, 0
      %p303 = por %p301, %p302
      %s305 = sadd.s32 %s304, 1
      %p308 = scmp.eq.s32.totalorder %s102, 1
      %p309 = scmp.ne.s32.totalorder %s304, %s306
      %p310 = scmp.eq.s32.totalorder %s102, 0
      %p311 = por %p309, %p310
      %p312 = scmp.ne.s32.totalorder %s304, %s306
      %p313 = scmp.eq.s32.totalorder %s107, 1
      %p314 = por %p312, %p313
      %p315 = scmp.ne.s32.totalorder %s306, %s307
      %p316 = scmp.eq.s32.totalorder %s107, 0
      %p317 = por %p315, %p316
      %p318 = scmp.ne.s32.totalorder %s306, %s307
      %p319 = scmp.eq.s32.totalorder %s108, 1
      %p320 = por %p318, %p319
      %p322 = scmp.ne.s32.totalorder %s307, %s321
      %p323 = scmp.eq.s32.totalorder %s108, 0
      %p324 = por %p322, %p323
      %s326 = sadd.s32 %s325, 1
      %p329 = scmp.eq.s32.totalorder %s102, 1
      %p330 = scmp.ne.s32.totalorder %s325, %s327
      %p331 = scmp.eq.s32.totalorder %s102, 0
      %p332 = por %p330, %p331
      %p333 = scmp.ne.s32.totalorder %s325, %s327
      %p334 = scmp.eq.s32.totalorder %s107, 1
      %p335 = por %p333, %p334
      %p336 = scmp.ne.s32.totalorder %s327, %s328
      %p337 = scmp.eq.s32.totalorder %s107, 0
      %p338 = por %p336, %p337
      %p339 = scmp.ne.s32.totalorder %s327, %s328
      %p340 = scmp.eq.s32.totalorder %s108, 1
      %p341 = por %p339, %p340
      %p343 = scmp.ne.s32.totalorder %s328, %s342
      %p344 = scmp.eq.s32.totalorder %s108, 0
      %p345 = por %p343, %p344
      %s347 = sadd.s32 %s346, 1
      %p350 = scmp.eq.s32.totalorder %s102, 1
      %p351 = scmp.ne.s32.totalorder %s346, %s348
      %p352 = scmp.eq.s32.totalorder %s102, 0
      %p353 = por %p351, %p352
      %p354 = scmp.ne.s32.totalorder %s346, %s348
      %p355 = scmp.eq.s32.totalorder %s107, 1
      %p356 = por %p354, %p355
      %p357 = scmp.ne.s32.totalorder %s348, %s349
      %p358 = scmp.eq.s32.totalorder %s107, 0
      %p359 = por %p357, %p358
      %p360 = scmp.ne.s32.totalorder %s348, %s349
      %p361 = scmp.eq.s32.totalorder %s108, 1
      %p362 = por %p360, %p361
      %p364 = scmp.ne.s32.totalorder %s349, %s363
      %p365 = scmp.eq.s32.totalorder %s108, 0
      %p366 = por %p364, %p365
      %s368 = sadd.s32 %s367, 1
      %p371 = scmp.eq.s32.totalorder %s102, 1
      %p372 = scmp.ne.s32.totalorder %s367, %s369
      %p373 = scmp.eq.s32.totalorder %s102, 0
      %p374 = por %p372, %p373
      %p375 = scmp.ne.s32.totalorder %s367, %s369
      %p376 = scmp.eq.s32.totalorder %s107, 1
      %p377 = por %p375, %p376
      %p378 = scmp.ne.s32.totalorder %s369, %s370
      %p379 = scmp.eq.s32.totalorder %s107, 0
      %p380 = por %p378, %p379
      %p381 = scmp.ne.s32.totalorder %s369, %s370
      %p382 = scmp.eq.s32.totalorder %s108, 1
      %p383 = por %p381, %p382
      %p385 = scmp.ne.s32.totalorder %s370, %s384
      %p386 = scmp.eq.s32.totalorder %s108, 0
      %p387 = por %p385, %p386
      %s389 = sadd.s32 %s388, 1
      %p392 = scmp.eq.s32.totalorder %s102, 1
      %p393 = scmp.ne.s32.totalorder %s388, %s390
      %p394 = scmp.eq.s32.totalorder %s102, 0
      %p395 = por %p393, %p394
      %p396 = scmp.ne.s32.totalorder %s388, %s390
      %p397 = scmp.eq.s32.totalorder %s107, 1
      %p398 = por %p396, %p397
      %p399 = scmp.ne.s32.totalorder %s390, %s391
      %p400 = scmp.eq.s32.totalorder %s107, 0
      %p401 = por %p399, %p400
      %p402 = scmp.ne.s32.totalorder %s390, %s391
      %p403 = scmp.eq.s32.totalorder %s108, 1
      %p404 = por %p402, %p403
      %p406 = scmp.ne.s32.totalorder %s391, %s405
      %p407 = scmp.eq.s32.totalorder %s108, 0
      %p408 = por %p406, %p407
      %s410 = sadd.s32 %s409, 1
      %p413 = scmp.eq.s32.totalorder %s102, 1
      %p414 = scmp.ne.s32.totalorder %s409, %s411
      %p415 = scmp.eq.s32.totalorder %s102, 0
      %p416 = por %p414, %p415
      %p417 = scmp.ne.s32.totalorder %s409, %s411
      %p418 = scmp.eq.s32.totalorder %s107, 1
      %p419 = por %p417, %p418
      %p420 = scmp.ne.s32.totalorder %s411, %s412
      %p421 = scmp.eq.s32.totalorder %s107, 0
      %p422 = por %p420, %p421
      %p423 = scmp.ne.s32.totalorder %s411, %s412
      %p424 = scmp.eq.s32.totalorder %s108, 1
      %p425 = por %p423, %p424
      %p427 = scmp.ne.s32.totalorder %s412, %s426
      %p428 = scmp.eq.s32.totalorder %s108, 0
      %p429 = por %p427, %p428
      %s431 = sadd.s32 %s430, 1
      %p434 = scmp.eq.s32.totalorder %s102, 1
      %p435 = scmp.ne.s32.totalorder %s430, %s432
      %p436 = scmp.eq.s32.totalorder %s102, 0
      %p437 = por %p435, %p436
      %p438 = scmp.ne.s32.totalorder %s430, %s432
      %p439 = scmp.eq.s32.totalorder %s107, 1
      %p440 = por %p438, %p439
      %p441 = scmp.ne.s32.totalorder %s432, %s433
      %p442 = scmp.eq.s32.totalorder %s107, 0
      %p443 = por %p441, %p442
      %p444 = scmp.ne.s32.totalorder %s432, %s433
      %p445 = scmp.eq.s32.totalorder %s108, 1
      %p446 = por %p444, %p445
      %p448 = scmp.ne.s32.totalorder %s433, %s447
      %p449 = scmp.eq.s32.totalorder %s108, 0
      %p450 = por %p448, %p449
      %s452 = sadd.s32 %s451, 1
      %p455 = scmp.eq.s32.totalorder %s102, 1
      %p456 = scmp.ne.s32.totalorder %s451, %s453
      %p457 = scmp.eq.s32.totalorder %s102, 0
      %p458 = por %p456, %p457
      %p459 = scmp.ne.s32.totalorder %s451, %s453
      %p460 = scmp.eq.s32.totalorder %s107, 1
      %p461 = por %p459, %p460
      %p462 = scmp.ne.s32.totalorder %s453, %s454
      %p463 = scmp.eq.s32.totalorder %s107, 0
      %p464 = por %p462, %p463
      %p465 = scmp.ne.s32.totalorder %s453, %s454
      %p466 = scmp.eq.s32.totalorder %s108, 1
      %p467 = por %p465, %p466
      %p469 = scmp.ne.s32.totalorder %s454, %s468
      %p470 = scmp.eq.s32.totalorder %s108, 0
      %p471 = por %p469, %p470
      %s473 = sadd.s32 %s472, 1
      %p476 = scmp.eq.s32.totalorder %s102, 1
      %p477 = scmp.ne.s32.totalorder %s472, %s474
      %p478 = scmp.eq.s32.totalorder %s102, 0
      %p479 = por %p477, %p478
      %p480 = scmp.ne.s32.totalorder %s472, %s474
      %p481 = scmp.eq.s32.totalorder %s107, 1
      %p482 = por %p480, %p481
      %p483 = scmp.ne.s32.totalorder %s474, %s475
      %p484 = scmp.eq.s32.totalorder %s107, 0
      %p485 = por %p483, %p484
      %p486 = scmp.ne.s32.totalorder %s474, %s475
      %p487 = scmp.eq.s32.totalorder %s108, 1
      %p488 = por %p486, %p487
      %p490 = scmp.ne.s32.totalorder %s475, %s489
      %p491 = scmp.eq.s32.totalorder %s108, 0
      %p492 = por %p490, %p491
      %s494 = sadd.s32 %s493, 1
      %p497 = scmp.eq.s32.totalorder %s102, 1
      %p498 = scmp.ne.s32.totalorder %s493, %s495
      %p499 = scmp.eq.s32.totalorder %s102, 0
      %p500 = por %p498, %p499
      %p501 = scmp.ne.s32.totalorder %s493, %s495
      %p502 = scmp.eq.s32.totalorder %s107, 1
      %p503 = por %p501, %p502
      %p504 = scmp.ne.s32.totalorder %s495, %s496
      %p505 = scmp.eq.s32.totalorder %s107, 0
      %p506 = por %p504, %p505
      %p507 = scmp.ne.s32.totalorder %s495, %s496
      %p508 = scmp.eq.s32.totalorder %s108, 1
      %p509 = por %p507, %p508
      %p511 = scmp.ne.s32.totalorder %s496, %s510
      %p512 = scmp.eq.s32.totalorder %s108, 0
      %p513 = por %p511, %p512
      %s515 = sadd.s32 %s514, 1
      %p518 = scmp.eq.s32.totalorder %s102, 1
      %p519 = scmp.ne.s32.totalorder %s514, %s516
      %p520 = scmp.eq.s32.totalorder %s102, 0
      %p521 = por %p519, %p520
      %p522 = scmp.ne.s32.totalorder %s514, %s516
      %p523 = scmp.eq.s32.totalorder %s107, 1
      %p524 = por %p522, %p523
      %p525 = scmp.ne.s32.totalorder %s516, %s517
      %p526 = scmp.eq.s32.totalorder %s107, 0
      %p527 = por %p525, %p526
      %p528 = scmp.ne.s32.totalorder %s516, %s517
      %p529 = scmp.eq.s32.totalorder %s108, 1
      %p530 = por %p528, %p529
      %p532 = scmp.ne.s32.totalorder %s517, %s531
      %p533 = scmp.eq.s32.totalorder %s108, 0
      %p534 = por %p532, %p533
      %s536 = sadd.s32 %s535, 1
      %p539 = scmp.eq.s32.totalorder %s102, 1
      %p540 = scmp.ne.s32.totalorder %s535, %s537
      %p541 = scmp.eq.s32.totalorder %s102, 0
      %p542 = por %p540, %p541
      %p543 = scmp.ne.s32.totalorder %s535, %s537
      %p544 = scmp.eq.s32.totalorder %s107, 1
      %p545 = por %p543, %p544
      %p546 = scmp.ne.s32.totalorder %s537, %s538
      %p547 = scmp.eq.s32.totalorder %s107, 0
      %p548 = por %p546, %p547
      %p549 = scmp.ne.s32.totalorder %s537, %s538
      %p550 = scmp.eq.s32.totalorder %s108, 1
      %p551 = por %p549, %p550
      %p553 = scmp.ne.s32.totalorder %s538, %s552
      %p554 = scmp.eq.s32.totalorder %s108, 0
      %p555 = por %p553, %p554
      %s557 = sadd.s32 %s556, 1
      %p560 = scmp.eq.s32.totalorder %s102, 1
      %p561 = scmp.ne.s32.totalorder %s556, %s558
      %p562 = scmp.eq.s32.totalorder %s102, 0
      %p563 = por %p561, %p562
      %p564 = scmp.ne.s32.totalorder %s556, %s558
      %p565 = scmp.eq.s32.totalorder %s107, 1
      %p566 = por %p564, %p565
      %p567 = scmp.ne.s32.totalorder %s558, %s559
      %p568 = scmp.eq.s32.totalorder %s107, 0
      %p569 = por %p567, %p568
      %p570 = scmp.ne.s32.totalorder %s558, %s559
      %p571 = scmp.eq.s32.totalorder %s108, 1
      %p572 = por %p570, %p571
      %p574 = scmp.ne.s32.totalorder %s559, %s573
      %p575 = scmp.eq.s32.totalorder %s108, 0
      %p576 = por %p574, %p575
      %s578 = sadd.s32 %s577, 1
      %p581 = scmp.eq.s32.totalorder %s102, 1
      %p582 = scmp.ne.s32.totalorder %s577, %s579
      %p583 = scmp.eq.s32.totalorder %s102, 0
      %p584 = por %p582, %p583
      %p585 = scmp.ne.s32.totalorder %s577, %s579
      %p586 = scmp.eq.s32.totalorder %s107, 1
      %p587 = por %p585, %p586
      %p588 = scmp.ne.s32.totalorder %s579, %s580
      %p589 = scmp.eq.s32.totalorder %s107, 0
      %p590 = por %p588, %p589
      %p591 = scmp.ne.s32.totalorder %s579, %s580
      %p592 = scmp.eq.s32.totalorder %s108, 1
      %p593 = por %p591, %p592
      %p595 = scmp.ne.s32.totalorder %s580, %s594
      %p596 = scmp.eq.s32.totalorder %s108, 0
      %p597 = por %p595, %p596
      %s599 = sadd.s32 %s598, 1
      %p602 = scmp.eq.s32.totalorder %s102, 1
      %p603 = scmp.ne.s32.totalorder %s598, %s600
      %p604 = scmp.eq.s32.totalorder %s102, 0
      %p605 = por %p603, %p604
      %p606 = scmp.ne.s32.totalorder %s598, %s600
      %p607 = scmp.eq.s32.totalorder %s107, 1
      %p608 = por %p606, %p607
      %p609 = scmp.ne.s32.totalorder %s600, %s601
      %p610 = scmp.eq.s32.totalorder %s107, 0
      %p611 = por %p609, %p610
      %p612 = scmp.ne.s32.totalorder %s600, %s601
      %p613 = scmp.eq.s32.totalorder %s108, 1
      %p614 = por %p612, %p613
      %p616 = scmp.ne.s32.totalorder %s601, %s615
      %p617 = scmp.eq.s32.totalorder %s108, 0
      %p618 = por %p616, %p617
      %s620 = sadd.s32 %s619, 1
      %p623 = scmp.eq.s32.totalorder %s102, 1
      %p624 = scmp.ne.s32.totalorder %s619, %s621
      %p625 = scmp.eq.s32.totalorder %s102, 0
      %p626 = por %p624, %p625
      %p627 = scmp.ne.s32.totalorder %s619, %s621
      %p628 = scmp.eq.s32.totalorder %s107, 1
      %p629 = por %p627, %p628
      %p630 = scmp.ne.s32.totalorder %s621, %s622
      %p631 = scmp.eq.s32.totalorder %s107, 0
      %p632 = por %p630, %p631
      %p633 = scmp.ne.s32.totalorder %s621, %s622
      %p634 = scmp.eq.s32.totalorder %s108, 1
      %p635 = por %p633, %p634
      %p637 = scmp.ne.s32.totalorder %s622, %s636
      %p638 = scmp.eq.s32.totalorder %s108, 0
      %p639 = por %p637, %p638
      %s641 = sadd.s32 %s640, 1
      %p644 = scmp.eq.s32.totalorder %s102, 1
      %p645 = scmp.ne.s32.totalorder %s640, %s642
      %p646 = scmp.eq.s32.totalorder %s102, 0
      %p647 = por %p645, %p646
      %p648 = scmp.ne.s32.totalorder %s640, %s642
      %p649 = scmp.eq.s32.totalorder %s107, 1
      %p650 = por %p648, %p649
      %p651 = scmp.ne.s32.totalorder %s642, %s643
      %p652 = scmp.eq.s32.totalorder %s107, 0
      %p653 = por %p651, %p652
      %p654 = scmp.ne.s32.totalorder %s642, %s643
      %p655 = scmp.eq.s32.totalorder %s108, 1
      %p656 = por %p654, %p655
      %p658 = scmp.ne.s32.totalorder %s643, %s657
      %p659 = scmp.eq.s32.totalorder %s108, 0
      %p660 = por %p658, %p659
      %s662 = sadd.s32 %s661, 1
      %p665 = scmp.eq.s32.totalorder %s102, 1
      %p666 = scmp.ne.s32.totalorder %s661, %s663
      %p667 = scmp.eq.s32.totalorder %s102, 0
      %p668 = por %p666, %p667
      %p669 = scmp.ne.s32.totalorder %s661, %s663
      %p670 = scmp.eq.s32.totalorder %s107, 1
      %p671 = por %p669, %p670
      %p672 = scmp.ne.s32.totalorder %s663, %s664
      %p673 = scmp.eq.s32.totalorder %s107, 0
      %p674 = por %p672, %p673
      %p675 = scmp.ne.s32.totalorder %s663, %s664
      %p676 = scmp.eq.s32.totalorder %s108, 1
      %p677 = por %p675, %p676
      %p679 = scmp.ne.s32.totalorder %s664, %s678
      %p680 = scmp.eq.s32.totalorder %s108, 0
      %p681 = por %p679, %p680
      %s683 = sadd.s32 %s682, 1
      %p686 = scmp.eq.s32.totalorder %s102, 1
      %p687 = scmp.ne.s32.totalorder %s682, %s684
      %p688 = scmp.eq.s32.totalorder %s102, 0
      %p689 = por %p687, %p688
      %p690 = scmp.ne.s32.totalorder %s682, %s684
      %p691 = scmp.eq.s32.totalorder %s107, 1
      %p692 = por %p690, %p691
      %p693 = scmp.ne.s32.totalorder %s684, %s685
      %p694 = scmp.eq.s32.totalorder %s107, 0
      %p695 = por %p693, %p694
      %p696 = scmp.ne.s32.totalorder %s684, %s685
      %p697 = scmp.eq.s32.totalorder %s108, 1
      %p698 = por %p696, %p697
      %p700 = scmp.ne.s32.totalorder %s685, %s699
      %p701 = scmp.eq.s32.totalorder %s108, 0
      %p702 = por %p700, %p701
      %s704 = sadd.s32 %s703, 1
      %p707 = scmp.eq.s32.totalorder %s102, 1
      %p708 = scmp.ne.s32.totalorder %s703, %s705
      %p709 = scmp.eq.s32.totalorder %s102, 0
      %p710 = por %p708, %p709
      %p711 = scmp.ne.s32.totalorder %s703, %s705
      %p712 = scmp.eq.s32.totalorder %s107, 1
      %p713 = por %p711, %p712
      %p714 = scmp.ne.s32.totalorder %s705, %s706
      %p715 = scmp.eq.s32.totalorder %s107, 0
      %p716 = por %p714, %p715
      %p717 = scmp.ne.s32.totalorder %s705, %s706
      %p718 = scmp.eq.s32.totalorder %s108, 1
      %p719 = por %p717, %p718
      %p721 = scmp.ne.s32.totalorder %s706, %s720
      %p722 = scmp.eq.s32.totalorder %s108, 0
      %p723 = por %p721, %p722
      %s725 = sadd.s32 %s724, 1
      %p728 = scmp.eq.s32.totalorder %s102, 1
      %p729 = scmp.ne.s32.totalorder %s724, %s726
      %p730 = scmp.eq.s32.totalorder %s102, 0
      %p731 = por %p729, %p730
      %p732 = scmp.ne.s32.totalorder %s724, %s726
      %p733 = scmp.eq.s32.totalorder %s107, 1
      %p734 = por %p732, %p733
      %p735 = scmp.ne.s32.totalorder %s726, %s727
      %p736 = scmp.eq.s32.totalorder %s107, 0
      %p737 = por %p735, %p736
      %p738 = scmp.ne.s32.totalorder %s726, %s727
      %p739 = scmp.eq.s32.totalorder %s108, 1
      %p740 = por %p738, %p739
      %p742 = scmp.ne.s32.totalorder %s727, %s741
      %p743 = scmp.eq.s32.totalorder %s108, 0
      %p744 = por %p742, %p743
      %s746 = sadd.s32 %s745, 1
      %p749 = scmp.eq.s32.totalorder %s102, 1
      %p750 = scmp.ne.s32.totalorder %s745, %s747
      %p751 = scmp.eq.s32.totalorder %s102, 0
      %p752 = por %p750, %p751
      %p753 = scmp.ne.s32.totalorder %s745, %s747
      %p754 = scmp.eq.s32.totalorder %s107, 1
      %p755 = por %p753, %p754
      %p756 = scmp.ne.s32.totalorder %s747, %s748
      %p757 = scmp.eq.s32.totalorder %s107, 0
      %p758 = por %p756, %p757
      %p759 = scmp.ne.s32.totalorder %s747, %s748
      %p760 = scmp.eq.s32.totalorder %s108, 1
      %p761 = por %p759, %p760
      %p763 = scmp.ne.s32.totalorder %s748, %s762
      %p764 = scmp.eq.s32.totalorder %s108, 0
      %p765 = por %p763, %p764
      %s767 = sadd.s32 %s766, 1
      %p770 = scmp.eq.s32.totalorder %s102, 1
      %p771 = scmp.ne.s32.totalorder %s766, %s768
      %p772 = scmp.eq.s32.totalorder %s102, 0
      %p773 = por %p771, %p772
      %p774 = scmp.ne.s32.totalorder %s766, %s768
      %p775 = scmp.eq.s32.totalorder %s107, 1
      %p776 = por %p774, %p775
      %p777 = scmp.ne.s32.totalorder %s768, %s769
      %p778 = scmp.eq.s32.totalorder %s107, 0
      %p779 = por %p777, %p778
      %p780 = scmp.ne.s32.totalorder %s768, %s769
      %p781 = scmp.eq.s32.totalorder %s108, 1
      %p782 = por %p780, %p781
      %p784 = scmp.ne.s32.totalorder %s769, %s783
      %p785 = scmp.eq.s32.totalorder %s108, 0
      %p786 = por %p784, %p785
      %s788 = sadd.s32 %s787, 1
      %p791 = scmp.eq.s32.totalorder %s102, 1
      %p792 = scmp.ne.s32.totalorder %s787, %s789
      %p793 = scmp.eq.s32.totalorder %s102, 0
      %p794 = por %p792, %p793
      %p795 = scmp.ne.s32.totalorder %s787, %s789
      %p796 = scmp.eq.s32.totalorder %s107, 1
      %p797 = por %p795, %p796
      %p798 = scmp.ne.s32.totalorder %s789, %s790
      %p799 = scmp.eq.s32.totalorder %s107, 0
      %p800 = por %p798, %p799
      %p801 = scmp.ne.s32.totalorder %s789, %s790
      %p802 = scmp.eq.s32.totalorder %s108, 1
      %p803 = por %p801, %p802
      %p805 = scmp.ne.s32.totalorder %s790, %s804
      %p806 = scmp.eq.s32.totalorder %s108, 0
      %p807 = por %p805, %p806
      %s809 = sadd.s32 %s808, 1
      %p812 = scmp.eq.s32.totalorder %s102, 1
      %p813 = scmp.ne.s32.totalorder %s808, %s810
      %p814 = scmp.eq.s32.totalorder %s102, 0
      %p815 = por %p813, %p814
      %p816 = scmp.ne.s32.totalorder %s808, %s810
      %p817 = scmp.eq.s32.totalorder %s107, 1
      %p818 = por %p816, %p817
      %p819 = scmp.ne.s32.totalorder %s810, %s811
      %p820 = scmp.eq.s32.totalorder %s107, 0
      %p821 = por %p819, %p820
      %p822 = scmp.ne.s32.totalorder %s810, %s811
      %p823 = scmp.eq.s32.totalorder %s108, 1
      %p824 = por %p822, %p823
      %p826 = scmp.ne.s32.totalorder %s811, %s825
      %p827 = scmp.eq.s32.totalorder %s108, 0
      %p828 = por %p826, %p827
      %s830 = sadd.s32 %s829, 1
      %p833 = scmp.eq.s32.totalorder %s102, 1
      %p834 = scmp.ne.s32.totalorder %s829, %s831
      %p835 = scmp.eq.s32.totalorder %s102, 0
      %p836 = por %p834, %p835
      %p837 = scmp.ne.s32.totalorder %s829, %s831
      %p838 = scmp.eq.s32.totalorder %s107, 1
      %p839 = por %p837, %p838
      %p840 = scmp.ne.s32.totalorder %s831, %s832
      %p841 = scmp.eq.s32.totalorder %s107, 0
      %p842 = por %p840, %p841
      %p843 = scmp.ne.s32.totalorder %s831, %s832
      %p844 = scmp.eq.s32.totalorder %s108, 1
      %p845 = por %p843, %p844
      %p847 = scmp.ne.s32.totalorder %s832, %s846
      %p848 = scmp.eq.s32.totalorder %s108, 0
      %p849 = por %p847, %p848
      %s851 = sadd.s32 %s850, 1
      %p854 = scmp.eq.s32.totalorder %s102, 1
      %p855 = scmp.ne.s32.totalorder %s850, %s852
      %p856 = scmp.eq.s32.totalorder %s102, 0
      %p857 = por %p855, %p856
      %p858 = scmp.ne.s32.totalorder %s850, %s852
      %p859 = scmp.eq.s32.totalorder %s107, 1
      %p860 = por %p858, %p859
      %p861 = scmp.ne.s32.totalorder %s852, %s853
      %p862 = scmp.eq.s32.totalorder %s107, 0
      %p863 = por %p861, %p862
      %p864 = scmp.ne.s32.totalorder %s852, %s853
      %p865 = scmp.eq.s32.totalorder %s108, 1
      %p866 = por %p864, %p865
      %p868 = scmp.ne.s32.totalorder %s853, %s867
      %p869 = scmp.eq.s32.totalorder %s108, 0
      %p870 = por %p868, %p869
      %s872 = sadd.s32 %s871, 1
      %p875 = scmp.eq.s32.totalorder %s102, 1
      %p876 = scmp.ne.s32.totalorder %s871, %s873
      %p877 = scmp.eq.s32.totalorder %s102, 0
      %p878 = por %p876, %p877
      %p879 = scmp.ne.s32.totalorder %s871, %s873
      %p880 = scmp.eq.s32.totalorder %s107, 1
      %p881 = por %p879, %p880
      %p882 = scmp.ne.s32.totalorder %s873, %s874
      %p883 = scmp.eq.s32.totalorder %s107, 0
      %p884 = por %p882, %p883
      %p885 = scmp.ne.s32.totalorder %s873, %s874
      %p886 = scmp.eq.s32.totalorder %s108, 1
      %p887 = por %p885, %p886
      %p889 = scmp.ne.s32.totalorder %s874, %s888
      %p890 = scmp.eq.s32.totalorder %s108, 0
      %p891 = por %p889, %p890
      %s893 = sadd.s32 %s892, 1
      %p896 = scmp.eq.s32.totalorder %s102, 1
      %p897 = scmp.ne.s32.totalorder %s892, %s894
      %p898 = scmp.eq.s32.totalorder %s102, 0
      %p899 = por %p897, %p898
      %p900 = scmp.ne.s32.totalorder %s892, %s894
      %p901 = scmp.eq.s32.totalorder %s107, 1
      %p902 = por %p900, %p901
      %p903 = scmp.ne.s32.totalorder %s894, %s895
      %p904 = scmp.eq.s32.totalorder %s107, 0
      %p905 = por %p903, %p904
      %p906 = scmp.ne.s32.totalorder %s894, %s895
      %p907 = scmp.eq.s32.totalorder %s108, 1
      %p908 = por %p906, %p907
      %p910 = scmp.ne.s32.totalorder %s895, %s909
      %p911 = scmp.eq.s32.totalorder %s108, 0
      %p912 = por %p910, %p911
      %s914 = sadd.s32 %s913, 1
      %p917 = scmp.eq.s32.totalorder %s102, 1
      %p918 = scmp.ne.s32.totalorder %s913, %s915
      %p919 = scmp.eq.s32.totalorder %s102, 0
      %p920 = por %p918, %p919
      %p921 = scmp.ne.s32.totalorder %s913, %s915
      %p922 = scmp.eq.s32.totalorder %s107, 1
      %p923 = por %p921, %p922
      %p924 = scmp.ne.s32.totalorder %s915, %s916
      %p925 = scmp.eq.s32.totalorder %s107, 0
      %p926 = por %p924, %p925
      %p927 = scmp.ne.s32.totalorder %s915, %s916
      %p928 = scmp.eq.s32.totalorder %s108, 1
      %p929 = por %p927, %p928
      %p931 = scmp.ne.s32.totalorder %s916, %s930
      %p932 = scmp.eq.s32.totalorder %s108, 0
      %p933 = por %p931, %p932
      %s935 = sadd.s32 %s934, 1
      %p938 = scmp.eq.s32.totalorder %s102, 1
      %p939 = scmp.ne.s32.totalorder %s934, %s936
      %p940 = scmp.eq.s32.totalorder %s102, 0
      %p941 = por %p939, %p940
      %p942 = scmp.ne.s32.totalorder %s934, %s936
      %p943 = scmp.eq.s32.totalorder %s107, 1
      %p944 = por %p942, %p943
      %p945 = scmp.ne.s32.totalorder %s936, %s937
      %p946 = scmp.eq.s32.totalorder %s107, 0
      %p947 = por %p945, %p946
      %p948 = scmp.ne.s32.totalorder %s936, %s937
      %p949 = scmp.eq.s32.totalorder %s108, 1
      %p950 = por %p948, %p949
      %p952 = scmp.ne.s32.totalorder %s937, %s951
      %p953 = scmp.eq.s32.totalorder %s108, 0
      %p954 = por %p952, %p953
      %s956 = sadd.s32 %s955, 1
      %p959 = scmp.eq.s32.totalorder %s102, 1
      %p960 = scmp.ne.s32.totalorder %s955, %s957
      %p961 = scmp.eq.s32.totalorder %s102, 0
      %p962 = por %p960, %p961
      %p963 = scmp.ne.s32.totalorder %s955, %s957
      %p964 = scmp.eq.s32.totalorder %s107, 1
      %p965 = por %p963, %p964
      %p966 = scmp.ne.s32.totalorder %s957, %s958
      %p967 = scmp.eq.s32.totalorder %s107, 0
      %p968 = por %p966, %p967
      %p969 = scmp.ne.s32.totalorder %s957, %s958
      %p970 = scmp.eq.s32.totalorder %s108, 1
      %p971 = por %p969, %p970
      %p973 = scmp.ne.s32.totalorder %s958, %s972
      %p974 = scmp.eq.s32.totalorder %s108, 0
      %p975 = por %p973, %p974
      %s977 = sadd.s32 %s976, 1
      %p980 = scmp.eq.s32.totalorder %s102, 1
      %p981 = scmp.ne.s32.totalorder %s976, %s978
      %p982 = scmp.eq.s32.totalorder %s102, 0
      %p983 = por %p981, %p982
      %p984 = scmp.ne.s32.totalorder %s976, %s978
      %p985 = scmp.eq.s32.totalorder %s107, 1
      %p986 = por %p984, %p985
      %p987 = scmp.ne.s32.totalorder %s978, %s979
      %p988 = scmp.eq.s32.totalorder %s107, 0
      %p989 = por %p987, %p988
      %p990 = scmp.ne.s32.totalorder %s978, %s979
      %p991 = scmp.eq.s32.totalorder %s108, 1
      %p992 = por %p990, %p991
      %p994 = scmp.ne.s32.totalorder %s979, %s993
      %p995 = scmp.eq.s32.totalorder %s108, 0
      %p996 = por %p994, %p995
      %s998 = sadd.s32 %s997, 1
      %p1001 = scmp.eq.s32.totalorder %s102, 1
      %p1002 = scmp.ne.s32.totalorder %s997, %s999
      %p1003 = scmp.eq.s32.totalorder %s102, 0
      %p1004 = por %p1002, %p1003
      %p1005 = scmp.ne.s32.totalorder %s997, %s999
      %p1006 = scmp.eq.s32.totalorder %s107, 1
      %p1007 = por %p1005, %p1006
      %p1008 = scmp.ne.s32.totalorder %s999, %s1000
      %p1009 = scmp.eq.s32.totalorder %s107, 0
      %p1010 = por %p1008, %p1009
      %p1011 = scmp.ne.s32.totalorder %s999, %s1000
      %p1012 = scmp.eq.s32.totalorder %s108, 1
      %p1013 = por %p1011, %p1012
      %p1015 = scmp.ne.s32.totalorder %s1000, %s1014
      %p1016 = scmp.eq.s32.totalorder %s108, 0
      %p1017 = por %p1015, %p1016
      %s1019 = sadd.s32 %s1018, 1
      %p1022 = scmp.eq.s32.totalorder %s102, 1
      %p1023 = scmp.ne.s32.totalorder %s1018, %s1020
      %p1024 = scmp.eq.s32.totalorder %s102, 0
      %p1025 = por %p1023, %p1024
      %p1026 = scmp.ne.s32.totalorder %s1018, %s1020
      %p1027 = scmp.eq.s32.totalorder %s107, 1
      %p1028 = por %p1026, %p1027
      %p1029 = scmp.ne.s32.totalorder %s1020, %s1021
      %p1030 = scmp.eq.s32.totalorder %s107, 0
      %p1031 = por %p1029, %p1030
      %p1032 = scmp.ne.s32.totalorder %s1020, %s1021
      %p1033 = scmp.eq.s32.totalorder %s108, 1
      %p1034 = por %p1032, %p1033
      %p1036 = scmp.ne.s32.totalorder %s1021, %s1035
      %p1037 = scmp.eq.s32.totalorder %s108, 0
      %p1038 = por %p1036, %p1037
      %s1040 = sadd.s32 %s1039, 1
      %p1043 = scmp.eq.s32.totalorder %s102, 1
      %p1044 = scmp.ne.s32.totalorder %s1039, %s1041
      %p1045 = scmp.eq.s32.totalorder %s102, 0
      %p1046 = por %p1044, %p1045
      %p1047 = scmp.ne.s32.totalorder %s1039, %s1041
      %p1048 = scmp.eq.s32.totalorder %s107, 1
      %p1049 = por %p1047, %p1048
      %p1050 = scmp.ne.s32.totalorder %s1041, %s1042
      %p1051 = scmp.eq.s32.totalorder %s107, 0
      %p1052 = por %p1050, %p1051
      %p1053 = scmp.ne.s32.totalorder %s1041, %s1042
      %p1054 = scmp.eq.s32.totalorder %s108, 1
      %p1055 = por %p1053, %p1054
      %p1057 = scmp.ne.s32.totalorder %s1042, %s1056
      %p1058 = scmp.eq.s32.totalorder %s108, 0
      %p1059 = por %p1057, %p1058
      %s1060 = ssub.s32 %s102, %s109
      %p1061 = scmp.eq.s32.totalorder %s1060, 0
      %s1063 = sadd.s32 %s1062, 1
      %s1064 = scalar_select %p1061, %s1062, %s1063
      %p1067 = pneg %p1061
      %p1068 = scmp.eq.s32.totalorder %s102, 1
      %p1069 = por %p1067, %p1068
      %p1070 = scmp.ne.s32.totalorder %s1062, %s1065
      %p1071 = scmp.eq.s32.totalorder %s102, 0
      %p1072 = por %p1070, %p1071
      %p1073 = scmp.ne.s32.totalorder %s1062, %s1065
      %p1074 = scmp.eq.s32.totalorder %s107, 1
      %p1075 = por %p1073, %p1074
      %p1076 = scmp.ne.s32.totalorder %s1065, %s1066
      %p1077 = scmp.eq.s32.totalorder %s107, 0
      %p1078 = por %p1076, %p1077
      %p1079 = scmp.ne.s32.totalorder %s1065, %s1066
      %p1080 = scmp.eq.s32.totalorder %s108, 1
      %p1081 = por %p1079, %p1080
      %p1083 = scmp.ne.s32.totalorder %s1066, %s1082
      %p1084 = scmp.eq.s32.totalorder %s108, 0
      %p1085 = por %p1083, %p1084
      %p1086 = scmp.le.s32.totalorder 1, %s102
      %p1087 = scmp.lt.s32.totalorder %s102, 3
      %p1088 = pnand %p1086, %p1087
      %p1089 = pneg %p1088
      // Predicated region
      $region9: #{unresolved_bert_forward.7} parent=5 // pred_check
        _
      $region10: #{unresolved_bert_forward.7} parent=5 // pred_check_branch
        %1091 = sbr.rel (%p1088) target = $region12
      $region11: #{unresolved_bert_forward.7} parent=5 // pred_region
        %s1092 = ssub.s32 %s102, 1
        // Predicated region
        $region13: #{unresolved_bert_forward.7} parent=11 // pred_check
          %p1093 = pneg %p149
        $region14: #{unresolved_bert_forward.7} parent=11 // pred_check_branch
          %1095 = sbr.rel (%p1093) target = $region16
        $region15: #{unresolved_bert_forward.7} parent=11 // pred_region
          _
        $region16: #{unresolved_bert_forward.7} parent=11 // pred_fallthru
          _
        // Predicated region
        $region17: #{unresolved_bert_forward.7} parent=11 // pred_check
          %p1096 = pneg %p170
        $region18: #{unresolved_bert_forward.7} parent=11 // pred_check_branch
          %1098 = sbr.rel (%p1096) target = $region20
        $region19: #{unresolved_bert_forward.7} parent=11 // pred_region
          _
        $region20: #{unresolved_bert_forward.7} parent=11 // pred_fallthru
          _
        // Predicated region
        $region21: #{unresolved_bert_forward.7} parent=11 // pred_check
          %p1099 = pneg %p191
        $region22: #{unresolved_bert_forward.7} parent=11 // pred_check_branch
          %1101 = sbr.rel (%p1099) target = $region24
        $region23: #{unresolved_bert_forward.7} parent=11 // pred_region
          _
        $region24: #{unresolved_bert_forward.7} parent=11 // pred_fallthru
          _
        // Predicated region
        $region25: #{unresolved_bert_forward.7} parent=11 // pred_check
          %p1102 = pneg %p212
        $region26: #{unresolved_bert_forward.7} parent=11 // pred_check_branch
          %1104 = sbr.rel (%p1102) target = $region28
        $region27: #{unresolved_bert_forward.7} parent=11 // pred_region
          _
        $region28: #{unresolved_bert_forward.7} parent=11 // pred_fallthru
          _
        // Predicated region
        $region29: #{unresolved_bert_forward.7} parent=11 // pred_check
          %p1105 = pneg %p233
        $region30: #{unresolved_bert_forward.7} parent=11 // pred_check_branch
          %1107 = sbr.rel (%p1105) target = $region32
        $region31: #{unresolved_bert_forward.7} parent=11 // pred_region
          _
        $region32: #{unresolved_bert_forward.7} parent=11 // pred_fallthru
          _
        // Predicated region
        $region33: #{unresolved_bert_forward.7} parent=11 // pred_check
          %p1108 = pneg %p254
        $region34: #{unresolved_bert_forward.7} parent=11 // pred_check_branch
          %1110 = sbr.rel (%p1108) target = $region36
        $region35: #{unresolved_bert_forward.7} parent=11 // pred_region
          _
        $region36: #{unresolved_bert_forward.7} parent=11 // pred_fallthru
          _
        // Predicated region
        $region37: #{unresolved_bert_forward.7} parent=11 // pred_check
          %p1111 = pneg %p275
        $region38: #{unresolved_bert_forward.7} parent=11 // pred_check_branch
          %1113 = sbr.rel (%p1111) target = $region40
        $region39: #{unresolved_bert_forward.7} parent=11 // pred_region
          _
        $region40: #{unresolved_bert_forward.7} parent=11 // pred_fallthru
          _
        // Predicated region
        $region41: #{unresolved_bert_forward.7} parent=11 // pred_check
          %p1114 = pneg %p296
        $region42: #{unresolved_bert_forward.7} parent=11 // pred_check_branch
          %1116 = sbr.rel (%p1114) target = $region44
        $region43: #{unresolved_bert_forward.7} parent=11 // pred_region
          _
        $region44: #{unresolved_bert_forward.7} parent=11 // pred_fallthru
          _
        // Predicated region
        $region45: #{unresolved_bert_forward.7} parent=11 // pred_check
          %p1117 = pneg %p317
        $region46: #{unresolved_bert_forward.7} parent=11 // pred_check_branch
          %1119 = sbr.rel (%p1117) target = $region48
        $region47: #{unresolved_bert_forward.7} parent=11 // pred_region
          _
        $region48: #{unresolved_bert_forward.7} parent=11 // pred_fallthru
          _
        // Predicated region
        $region49: #{unresolved_bert_forward.7} parent=11 // pred_check
          %p1120 = pneg %p338
        $region50: #{unresolved_bert_forward.7} parent=11 // pred_check_branch
          %1122 = sbr.rel (%p1120) target = $region52
        $region51: #{unresolved_bert_forward.7} parent=11 // pred_region
          _
        $region52: #{unresolved_bert_forward.7} parent=11 // pred_fallthru
          _
        // Predicated region
        $region53: #{unresolved_bert_forward.7} parent=11 // pred_check
          %p1123 = pneg %p359
        $region54: #{unresolved_bert_forward.7} parent=11 // pred_check_branch
          %1125 = sbr.rel (%p1123) target = $region56
        $region55: #{unresolved_bert_forward.7} parent=11 // pred_region
          _
        $region56: #{unresolved_bert_forward.7} parent=11 // pred_fallthru
          _
        // Predicated region
        $region57: #{unresolved_bert_forward.7} parent=11 // pred_check
          %p1126 = pneg %p380
        $region58: #{unresolved_bert_forward.7} parent=11 // pred_check_branch
          %1128 = sbr.rel (%p1126) target = $region60
        $region59: #{unresolved_bert_forward.7} parent=11 // pred_region
          _
        $region60: #{unresolved_bert_forward.7} parent=11 // pred_fallthru
          _
        // Predicated region
        $region61: #{unresolved_bert_forward.7} parent=11 // pred_check
          %p1129 = pneg %p401
        $region62: #{unresolved_bert_forward.7} parent=11 // pred_check_branch
          %1131 = sbr.rel (%p1129) target = $region64
        $region63: #{unresolved_bert_forward.7} parent=11 // pred_region
          _
        $region64: #{unresolved_bert_forward.7} parent=11 // pred_fallthru
          _
        // Predicated region
        $region65: #{unresolved_bert_forward.7} parent=11 // pred_check
          %p1132 = pneg %p422
        $region66: #{unresolved_bert_forward.7} parent=11 // pred_check_branch
          %1134 = sbr.rel (%p1132) target = $region68
        $region67: #{unresolved_bert_forward.7} parent=11 // pred_region
          _
        $region68: #{unresolved_bert_forward.7} parent=11 // pred_fallthru
          _
        // Predicated region
        $region69: #{unresolved_bert_forward.7} parent=11 // pred_check
          %p1135 = pneg %p443
        $region70: #{unresolved_bert_forward.7} parent=11 // pred_check_branch
          %1137 = sbr.rel (%p1135) target = $region72
        $region71: #{unresolved_bert_forward.7} parent=11 // pred_region
          _
        $region72: #{unresolved_bert_forward.7} parent=11 // pred_fallthru
          _
        // Predicated region
        $region73: #{unresolved_bert_forward.7} parent=11 // pred_check
          %p1138 = pneg %p464
        $region74: #{unresolved_bert_forward.7} parent=11 // pred_check_branch
          %1140 = sbr.rel (%p1138) target = $region76
        $region75: #{unresolved_bert_forward.7} parent=11 // pred_region
          _
        $region76: #{unresolved_bert_forward.7} parent=11 // pred_fallthru
          _
        // Predicated region
        $region77: #{unresolved_bert_forward.7} parent=11 // pred_check
          %p1141 = pneg %p485
        $region78: #{unresolved_bert_forward.7} parent=11 // pred_check_branch
          %1143 = sbr.rel (%p1141) target = $region80
        $region79: #{unresolved_bert_forward.7} parent=11 // pred_region
          _
        $region80: #{unresolved_bert_forward.7} parent=11 // pred_fallthru
          _
        // Predicated region
        $region81: #{unresolved_bert_forward.7} parent=11 // pred_check
          %p1144 = pneg %p506
        $region82: #{unresolved_bert_forward.7} parent=11 // pred_check_branch
          %1146 = sbr.rel (%p1144) target = $region84
        $region83: #{unresolved_bert_forward.7} parent=11 // pred_region
          _
        $region84: #{unresolved_bert_forward.7} parent=11 // pred_fallthru
          _
        // Predicated region
        $region85: #{unresolved_bert_forward.7} parent=11 // pred_check
          %p1147 = pneg %p527
        $region86: #{unresolved_bert_forward.7} parent=11 // pred_check_branch
          %1149 = sbr.rel (%p1147) target = $region88
        $region87: #{unresolved_bert_forward.7} parent=11 // pred_region
          _
        $region88: #{unresolved_bert_forward.7} parent=11 // pred_fallthru
          _
        // Predicated region
        $region89: #{unresolved_bert_forward.7} parent=11 // pred_check
          %p1150 = pneg %p548
        $region90: #{unresolved_bert_forward.7} parent=11 // pred_check_branch
          %1152 = sbr.rel (%p1150) target = $region92
        $region91: #{unresolved_bert_forward.7} parent=11 // pred_region
          _
        $region92: #{unresolved_bert_forward.7} parent=11 // pred_fallthru
          _
        // Predicated region
        $region93: #{unresolved_bert_forward.7} parent=11 // pred_check
          %p1153 = pneg %p569
        $region94: #{unresolved_bert_forward.7} parent=11 // pred_check_branch
          %1155 = sbr.rel (%p1153) target = $region96
        $region95: #{unresolved_bert_forward.7} parent=11 // pred_region
          _
        $region96: #{unresolved_bert_forward.7} parent=11 // pred_fallthru
          _
        // Predicated region
        $region97: #{unresolved_bert_forward.7} parent=11 // pred_check
          %p1156 = pneg %p590
        $region98: #{unresolved_bert_forward.7} parent=11 // pred_check_branch
          %1158 = sbr.rel (%p1156) target = $region100
        $region99: #{unresolved_bert_forward.7} parent=11 // pred_region
          _
        $region100: #{unresolved_bert_forward.7} parent=11 // pred_fallthru
          _
        // Predicated region
        $region101: #{unresolved_bert_forward.7} parent=11 // pred_check
          %p1159 = pneg %p611
        $region102: #{unresolved_bert_forward.7} parent=11 // pred_check_branch
          %1161 = sbr.rel (%p1159) target = $region104
        $region103: #{unresolved_bert_forward.7} parent=11 // pred_region
          _
        $region104: #{unresolved_bert_forward.7} parent=11 // pred_fallthru
          _
        // Predicated region
        $region105: #{unresolved_bert_forward.7} parent=11 // pred_check
          %p1162 = pneg %p632
        $region106: #{unresolved_bert_forward.7} parent=11 // pred_check_branch
          %1164 = sbr.rel (%p1162) target = $region108
        $region107: #{unresolved_bert_forward.7} parent=11 // pred_region
          _
        $region108: #{unresolved_bert_forward.7} parent=11 // pred_fallthru
          _
        // Predicated region
        $region109: #{unresolved_bert_forward.7} parent=11 // pred_check
          %p1165 = pneg %p653
        $region110: #{unresolved_bert_forward.7} parent=11 // pred_check_branch
          %1167 = sbr.rel (%p1165) target = $region112
        $region111: #{unresolved_bert_forward.7} parent=11 // pred_region
          _
        $region112: #{unresolved_bert_forward.7} parent=11 // pred_fallthru
          _
        // Predicated region
        $region113: #{unresolved_bert_forward.7} parent=11 // pred_check
          %p1168 = pneg %p674
        $region114: #{unresolved_bert_forward.7} parent=11 // pred_check_branch
          %1170 = sbr.rel (%p1168) target = $region116
        $region115: #{unresolved_bert_forward.7} parent=11 // pred_region
          _
        $region116: #{unresolved_bert_forward.7} parent=11 // pred_fallthru
          _
        // Predicated region
        $region117: #{unresolved_bert_forward.7} parent=11 // pred_check
          %p1171 = pneg %p695
        $region118: #{unresolved_bert_forward.7} parent=11 // pred_check_branch
          %1173 = sbr.rel (%p1171) target = $region120
        $region119: #{unresolved_bert_forward.7} parent=11 // pred_region
          _
        $region120: #{unresolved_bert_forward.7} parent=11 // pred_fallthru
          _
        // Predicated region
        $region121: #{unresolved_bert_forward.7} parent=11 // pred_check
          %p1174 = pneg %p716
        $region122: #{unresolved_bert_forward.7} parent=11 // pred_check_branch
          %1176 = sbr.rel (%p1174) target = $region124
        $region123: #{unresolved_bert_forward.7} parent=11 // pred_region
          _
        $region124: #{unresolved_bert_forward.7} parent=11 // pred_fallthru
          _
        // Predicated region
        $region125: #{unresolved_bert_forward.7} parent=11 // pred_check
          %p1177 = pneg %p737
        $region126: #{unresolved_bert_forward.7} parent=11 // pred_check_branch
          %1179 = sbr.rel (%p1177) target = $region128
        $region127: #{unresolved_bert_forward.7} parent=11 // pred_region
          _
        $region128: #{unresolved_bert_forward.7} parent=11 // pred_fallthru
          _
        // Predicated region
        $region129: #{unresolved_bert_forward.7} parent=11 // pred_check
          %p1180 = pneg %p758
        $region130: #{unresolved_bert_forward.7} parent=11 // pred_check_branch
          %1182 = sbr.rel (%p1180) target = $region132
        $region131: #{unresolved_bert_forward.7} parent=11 // pred_region
          _
        $region132: #{unresolved_bert_forward.7} parent=11 // pred_fallthru
          _
        // Predicated region
        $region133: #{unresolved_bert_forward.7} parent=11 // pred_check
          %p1183 = pneg %p779
        $region134: #{unresolved_bert_forward.7} parent=11 // pred_check_branch
          %1185 = sbr.rel (%p1183) target = $region136
        $region135: #{unresolved_bert_forward.7} parent=11 // pred_region
          _
        $region136: #{unresolved_bert_forward.7} parent=11 // pred_fallthru
          _
        // Predicated region
        $region137: #{unresolved_bert_forward.7} parent=11 // pred_check
          %p1186 = pneg %p800
        $region138: #{unresolved_bert_forward.7} parent=11 // pred_check_branch
          %1188 = sbr.rel (%p1186) target = $region140
        $region139: #{unresolved_bert_forward.7} parent=11 // pred_region
          _
        $region140: #{unresolved_bert_forward.7} parent=11 // pred_fallthru
          _
        // Predicated region
        $region141: #{unresolved_bert_forward.7} parent=11 // pred_check
          %p1189 = pneg %p821
        $region142: #{unresolved_bert_forward.7} parent=11 // pred_check_branch
          %1191 = sbr.rel (%p1189) target = $region144
        $region143: #{unresolved_bert_forward.7} parent=11 // pred_region
          _
        $region144: #{unresolved_bert_forward.7} parent=11 // pred_fallthru
          _
        // Predicated region
        $region145: #{unresolved_bert_forward.7} parent=11 // pred_check
          %p1192 = pneg %p842
        $region146: #{unresolved_bert_forward.7} parent=11 // pred_check_branch
          %1194 = sbr.rel (%p1192) target = $region148
        $region147: #{unresolved_bert_forward.7} parent=11 // pred_region
          _
        $region148: #{unresolved_bert_forward.7} parent=11 // pred_fallthru
          _
        // Predicated region
        $region149: #{unresolved_bert_forward.7} parent=11 // pred_check
          %p1195 = pneg %p863
        $region150: #{unresolved_bert_forward.7} parent=11 // pred_check_branch
          %1197 = sbr.rel (%p1195) target = $region152
        $region151: #{unresolved_bert_forward.7} parent=11 // pred_region
          _
        $region152: #{unresolved_bert_forward.7} parent=11 // pred_fallthru
          _
        // Predicated region
        $region153: #{unresolved_bert_forward.7} parent=11 // pred_check
          %p1198 = pneg %p884
        $region154: #{unresolved_bert_forward.7} parent=11 // pred_check_branch
          %1200 = sbr.rel (%p1198) target = $region156
        $region155: #{unresolved_bert_forward.7} parent=11 // pred_region
          _
        $region156: #{unresolved_bert_forward.7} parent=11 // pred_fallthru
          _
        // Predicated region
        $region157: #{unresolved_bert_forward.7} parent=11 // pred_check
          %p1201 = pneg %p905
        $region158: #{unresolved_bert_forward.7} parent=11 // pred_check_branch
          %1203 = sbr.rel (%p1201) target = $region160
        $region159: #{unresolved_bert_forward.7} parent=11 // pred_region
          _
        $region160: #{unresolved_bert_forward.7} parent=11 // pred_fallthru
          _
        // Predicated region
        $region161: #{unresolved_bert_forward.7} parent=11 // pred_check
          %p1204 = pneg %p926
        $region162: #{unresolved_bert_forward.7} parent=11 // pred_check_branch
          %1206 = sbr.rel (%p1204) target = $region164
        $region163: #{unresolved_bert_forward.7} parent=11 // pred_region
          %s1208 = ssub.s32 16, 16
          %1209 = vsyncadd [#allocation5], %s1208
          %s1211 = sshll.u32 [#allocation4], 4
          %s1212 = int_to_ptr.vmem [resolvable:$true] %s1211
          %1214 = dma.hbm_to_vmem [thread:$0]  %s77, 16, %s1212, [#allocation5]
        $region164: #{unresolved_bert_forward.7} parent=11 // pred_fallthru
          _
        // Predicated region
        $region165: #{unresolved_bert_forward.7} parent=11 // pred_check
          %p1215 = pneg %p947
        $region166: #{unresolved_bert_forward.7} parent=11 // pred_check_branch
          %1217 = sbr.rel (%p1215) target = $region168
        $region167: #{unresolved_bert_forward.7} parent=11 // pred_region
          %s1219 = ssub.s32 16, 16
          %1220 = vsyncadd [#allocation7], %s1219
          %s1222 = sshll.u32 [#allocation6], 4
          %s1223 = int_to_ptr.vmem [resolvable:$true] %s1222
          %1225 = dma.hbm_to_vmem [thread:$0]  %s79, 16, %s1223, [#allocation7]
        $region168: #{unresolved_bert_forward.7} parent=11 // pred_fallthru
          _
        // Predicated region
        $region169: #{unresolved_bert_forward.7} parent=11 // pred_check
          %p1226 = pneg %p968
        $region170: #{unresolved_bert_forward.7} parent=11 // pred_check_branch
          %1228 = sbr.rel (%p1226) target = $region172
        $region171: #{unresolved_bert_forward.7} parent=11 // pred_region
          %s1230 = ssub.s32 16, 16
          %1231 = vsyncadd [#allocation7], %s1230
          %s1233 = sshll.u32 [#allocation8], 4
          %s1234 = int_to_ptr.vmem [resolvable:$true] %s1233
          %1236 = dma.hbm_to_vmem [thread:$0]  %s81, 16, %s1234, [#allocation7]
        $region172: #{unresolved_bert_forward.7} parent=11 // pred_fallthru
          _
        // Predicated region
        $region173: #{unresolved_bert_forward.7} parent=11 // pred_check
          %p1237 = pneg %p989
        $region174: #{unresolved_bert_forward.7} parent=11 // pred_check_branch
          %1239 = sbr.rel (%p1237) target = $region176
        $region175: #{unresolved_bert_forward.7} parent=11 // pred_region
          %s1241 = ssub.s32 16, 16
          %1242 = vsyncadd [#allocation10], %s1241
          %s1244 = sshll.u32 [#allocation9], 4
          %s1245 = int_to_ptr.vmem [resolvable:$true] %s1244
          %1247 = dma.hbm_to_vmem [thread:$0]  %s83, 16, %s1245, [#allocation10]
        $region176: #{unresolved_bert_forward.7} parent=11 // pred_fallthru
          _
        // Predicated region
        $region177: #{unresolved_bert_forward.7} parent=11 // pred_check
          %p1248 = pneg %p1010
        $region178: #{unresolved_bert_forward.7} parent=11 // pred_check_branch
          %1250 = sbr.rel (%p1248) target = $region180
        $region179: #{unresolved_bert_forward.7} parent=11 // pred_region
          %s1252 = ssub.s32 16, 16
          %1253 = vsyncadd [#allocation10], %s1252
          %s1255 = sshll.u32 [#allocation11], 4
          %s1256 = int_to_ptr.vmem [resolvable:$true] %s1255
          %1258 = dma.hbm_to_vmem [thread:$0]  %s85, 16, %s1256, [#allocation10]
        $region180: #{unresolved_bert_forward.7} parent=11 // pred_fallthru
          _
        // Predicated region
        $region181: #{unresolved_bert_forward.7} parent=11 // pred_check
          %p1259 = pneg %p1031
        $region182: #{unresolved_bert_forward.7} parent=11 // pred_check_branch
          %1261 = sbr.rel (%p1259) target = $region184
        $region183: #{unresolved_bert_forward.7} parent=11 // pred_region
          _
        $region184: #{unresolved_bert_forward.7} parent=11 // pred_fallthru
          _
        // Predicated region
        $region185: #{unresolved_bert_forward.7} parent=11 // pred_check
          %p1262 = pneg %p1052
        $region186: #{unresolved_bert_forward.7} parent=11 // pred_check_branch
          %1264 = sbr.rel (%p1262) target = $region188
        $region187: #{unresolved_bert_forward.7} parent=11 // pred_region
          _
        $region188: #{unresolved_bert_forward.7} parent=11 // pred_fallthru
          _
      $region12: #{unresolved_bert_forward.7} parent=5 // pred_fallthru
        _
      %p1265 = scmp.lt.s32.totalorder %s102, 2
      // Predicated region
      $region189: #{unresolved_bert_forward.7} parent=5 // pred_check
        %p1266 = pneg %p1265
      $region190: #{unresolved_bert_forward.7} parent=5 // pred_check_branch
        %1268 = sbr.rel (%p1266) target = $region192
      $region191: #{unresolved_bert_forward.7} parent=5 // pred_region
        // Predicated region
        $region193: #{unresolved_bert_forward.7} parent=191 // pred_check
          %p1269 = pneg %p122
        $region194: #{unresolved_bert_forward.7} parent=191 // pred_check_branch
          %1271 = sbr.rel (%p1269) target = $region196
        $region195: #{unresolved_bert_forward.7} parent=191 // pred_region
          %p1272 = scmp.lt.s32.totalorder %s102, 1
          %s1273 = scalar_select %p1272, %s102, 1
          %s1274 = smul.addr %s1273, 4
          %s1275 = scalar_lea.vmem %s1, %s1274
        $region196: #{unresolved_bert_forward.7} parent=191 // pred_fallthru
          _
      $region192: #{unresolved_bert_forward.7} parent=5 // pred_fallthru
        _
      %p1276 = scmp.le.s32.totalorder 1, %s102
      %p1277 = scmp.lt.s32.totalorder %s102, 3
      %p1278 = pnand %p1276, %p1277
      %p1279 = pneg %p1278
      // Predicated region
      $region197: #{unresolved_bert_forward.7} parent=5 // pred_check
        _
      $region198: #{unresolved_bert_forward.7} parent=5 // pred_check_branch
        %1281 = sbr.rel (%p1278) target = $region200
      $region199: #{unresolved_bert_forward.7} parent=5 // pred_region
        %s1282 = ssub.s32 %s102, 1
        // Predicated region
        $region201: #{unresolved_bert_forward.7} parent=199 // pred_check
          %p1283 = pneg %p926
        $region202: #{unresolved_bert_forward.7} parent=199 // pred_check_branch
          %1285 = sbr.rel (%p1283) target = $region204
        $region203: #{unresolved_bert_forward.7} parent=199 // pred_region
          %1286 = dma.done [#allocation5], 16
        $region204: #{unresolved_bert_forward.7} parent=199 // pred_fallthru
          _
        // Predicated region
        $region205: #{unresolved_bert_forward.7} parent=199 // pred_check
          %p1287 = pneg %p947
        $region206: #{unresolved_bert_forward.7} parent=199 // pred_check_branch
          %1289 = sbr.rel (%p1287) target = $region208
        $region207: #{unresolved_bert_forward.7} parent=199 // pred_region
          %1290 = dma.done [#allocation7], 16
        $region208: #{unresolved_bert_forward.7} parent=199 // pred_fallthru
          _
        // Predicated region
        $region209: #{unresolved_bert_forward.7} parent=199 // pred_check
          %p1291 = pneg %p968
        $region210: #{unresolved_bert_forward.7} parent=199 // pred_check_branch
          %1293 = sbr.rel (%p1291) target = $region212
        $region211: #{unresolved_bert_forward.7} parent=199 // pred_region
          %1294 = dma.done [#allocation7], 16
        $region212: #{unresolved_bert_forward.7} parent=199 // pred_fallthru
          _
        // Predicated region
        $region213: #{unresolved_bert_forward.7} parent=199 // pred_check
          %p1295 = pneg %p989
        $region214: #{unresolved_bert_forward.7} parent=199 // pred_check_branch
          %1297 = sbr.rel (%p1295) target = $region216
        $region215: #{unresolved_bert_forward.7} parent=199 // pred_region
          %1298 = dma.done [#allocation10], 16
        $region216: #{unresolved_bert_forward.7} parent=199 // pred_fallthru
          _
        // Predicated region
        $region217: #{unresolved_bert_forward.7} parent=199 // pred_check
          %p1299 = pneg %p1010
        $region218: #{unresolved_bert_forward.7} parent=199 // pred_check_branch
          %1301 = sbr.rel (%p1299) target = $region220
        $region219: #{unresolved_bert_forward.7} parent=199 // pred_region
          %1302 = dma.done [#allocation10], 16
        $region220: #{unresolved_bert_forward.7} parent=199 // pred_fallthru
          _
        %p1303 = scmp.lt.s32.totalorder %s107, 1
        %s1304 = scalar_select %p1303, %s107, 1
        %s1305 = smul.addr %s1304, 4
        %s1306 = scalar_lea.vmem %s1, %s1305
        %p1307 = pneg %p128
        %p1308 = pneg %p125
        %p1309 = pneg %p149
        %p1310 = pneg %p146
        %p1311 = pneg %p170
        %p1312 = pneg %p167
        %p1313 = pneg %p191
        %p1314 = pneg %p188
        %p1315 = pneg %p212
        %p1316 = pneg %p209
        %p1317 = pneg %p233
        %p1318 = pneg %p230
        %p1319 = pneg %p254
        %p1320 = pneg %p251
        %p1321 = pneg %p275
        %p1322 = pneg %p272
        %p1323 = pneg %p296
        %p1324 = pneg %p293
        %p1325 = pneg %p317
        %p1326 = pneg %p314
        %p1327 = pneg %p338
        %p1328 = pneg %p335
        %p1329 = pneg %p359
        %p1330 = pneg %p356
        %p1331 = pneg %p380
        %p1332 = pneg %p377
        %p1333 = pneg %p401
        %p1334 = pneg %p398
        %p1335 = pneg %p422
        %p1336 = pneg %p419
        %p1337 = pneg %p443
        %p1338 = pneg %p440
        %p1339 = pneg %p464
        %p1340 = pneg %p461
        %p1341 = pneg %p485
        %p1342 = pneg %p482
        %p1343 = pneg %p506
        %p1344 = pneg %p503
        %p1345 = pneg %p527
        %p1346 = pneg %p524
        %p1347 = pneg %p548
        %p1348 = pneg %p545
        %p1349 = pneg %p569
        %p1350 = pneg %p566
        %p1351 = pneg %p590
        %p1352 = pneg %p587
        %p1353 = pneg %p611
        %p1354 = pneg %p608
        %p1355 = pneg %p632
        %p1356 = pneg %p629
        %p1357 = pneg %p653
        %p1358 = pneg %p650
        %p1359 = pneg %p674
        %p1360 = pneg %p671
        %p1361 = pneg %p695
        %p1362 = pneg %p692
        %p1363 = pneg %p716
        %p1364 = pneg %p713
        %p1365 = pneg %p737
        %p1366 = pneg %p734
        %p1367 = pneg %p758
        %p1368 = pneg %p755
        %p1369 = pneg %p779
        %p1370 = pneg %p776
        %p1371 = pneg %p800
        %p1372 = pneg %p797
        %p1373 = pneg %p821
        %p1374 = pneg %p818
        %p1375 = pneg %p842
        %p1376 = pneg %p839
        %p1377 = pneg %p863
        %p1378 = pneg %p860
        %p1379 = pneg %p884
        %p1380 = pneg %p881
        %p1381 = pneg %p905
        %p1382 = pneg %p902
        %p1383 = pneg %p926
        %p1384 = pneg %p923
        %p1385 = pneg %p947
        %p1386 = pneg %p944
        %p1387 = pneg %p968
        %p1388 = pneg %p965
        %p1389 = pneg %p989
        %p1390 = pneg %p986
        %p1391 = pneg %p1010
        %p1392 = pneg %p1007
        %p1393 = pneg %p1031
        %p1394 = pneg %p1028
        %p1395 = pneg %p1052
        %p1396 = pneg %p1049
        %p1397 = pneg %p1078
        %p1398 = pneg %p1075
        %p1399 = scmp.lt.s32.totalorder %s107, 1
        %s1400 = scalar_select %p1399, %s107, 1
        %s1401 = scalar_lea.vmem %s91, %s1400
        %p1402 = scmp.lt.s32.totalorder %s107, 1
        %s1403 = scalar_select %p1402, %s107, 1
        %s1404 = smul.addr %s1403, 4
        %s1405 = scalar_lea.vmem %s1, %s1404
        %p1406 = scmp.lt.s32.totalorder %s107, 1
        %s1407 = scalar_select %p1406, %s107, 1
        %s1408 = scalar_lea.vmem %s91, %s1407
        %v1410 = vld [vmem:[%s1405] sm:$0xf]
        %v1411 = vld [vmem:[%s3] sm:$0xf]
        %v1412 = vld [vmem:[%s3 + $0x4] sm:$0xf]
        %v1413 = vld [vmem:[%s3 + $0x8] sm:$0xf]
        %v1414 = vld [vmem:[%s3 + $0xc] sm:$0xf]
        %v1415 = vld [vmem:[%s5] sm:$0x1]
        %v1420 = vunpack.c.l.b16 %v1411
        %v1421 = vunpack.c.l.b16 %v1412
        %v1422 = vunpack.c.l.b16 %v1413
        %v1423 = vunpack.c.l.b16 %v1414
        %v1424 = vpack.c.b16 %v1421, %v1420
        %v1425 = vpack.c.b16 %v1423, %v1422
        %vm1428 = vcmask 261120
        %v1430 = vsel %vm1428, 0, 0
        %1432 = vmatprep.subr.bf16.mxu0 0
        %1433 = vmatpush1.bf16.msra.mxu0 0
        %1434 = vmatprep.subr.bf16.mxu0 0
        %1435 = vmatpush1.bf16.msra.mxu0 0
        %1436 = vmatprep.subr.bf16.mxu0 0
        %1437 = vmatpush1.bf16.msra.mxu0 0
        %1438 = vmatprep.subr.bf16.mxu0 0
        %1439 = vmatpush1.bf16.msra.mxu0 0
        %1440 = vmatprep.subr.bf16.mxu0 0
        %1441 = vmatpush1.bf16.msra.mxu0 0
        %1442 = vmatprep.subr.bf16.mxu0 0
        %1443 = vmatpush1.bf16.msra.mxu0 0
        %1444 = vmatprep.subr.bf16.mxu0 0
        %1445 = vmatpush1.bf16.msra.mxu0 %v1425
        %1446 = vmatprep.subr.bf16.mxu0 0
        %1447 = vmatpush1.bf16.msra.mxu0 %v1424
        %1448 = vmatprep.subr.bf16.mxu0 0
        %1449 = vmatpush2.bf16.msra.mxu0 0
        %1450 = vmatprep.subr.bf16.mxu0 0
        %1451 = vmatpush2.bf16.msra.mxu0 0
        %1452 = vmatprep.subr.bf16.mxu0 0
        %1453 = vmatpush2.bf16.msra.mxu0 0
        %1454 = vmatprep.subr.bf16.mxu0 0
        %1455 = vmatpush2.bf16.msra.mxu0 0
        %1456 = vmatprep.subr.bf16.mxu0 0
        %1457 = vmatpush2.bf16.msra.mxu0 0
        %1458 = vmatprep.subr.bf16.mxu0 0
        %1459 = vmatpush2.bf16.msra.mxu0 0
        %1460 = vmatprep.subr.bf16.mxu0 0
        %1461 = vmatpush2.bf16.msra.mxu0 0
        %1462 = vmatprep.subr.bf16.mxu0 0
        %1463 = vmatpush2.bf16.msra.mxu0 0
        %1464 = vmatprep.mubr.bf16.mxu0 0
        %1465 = vmatmul.mubr.bf16.gmra.mxu0 %v1430
        %v1466 = vpop.f32.mrf.mxu0
        %v1467 = vadd.f32 %v1415, %v1466
        %v1468 = vpop.f32.mrf.mxu0
        %v1469 = vpop.f32.mrf.mxu0
        %v1470 = vpop.f32.mrf.mxu0
        %1471 = vdwg.mxu0
        %v1472 = vld [vmem:[%s7] sm:$0xf]
        %v1473 = vld [vmem:[%s7 + $0x4] sm:$0xf]
        %v1474 = vld [vmem:[%s7 + $0x8] sm:$0xf]
        %v1475 = vld [vmem:[%s7 + $0xc] sm:$0xf]
        %v1476 = vld [vmem:[%s9] sm:$0x1]
        %v1477 = vpack.c.bf16 %v1467, %v1467
        %v1482 = vunpack.c.l.b16 %v1472
        %v1483 = vunpack.c.l.b16 %v1473
        %v1484 = vunpack.c.l.b16 %v1474
        %v1485 = vunpack.c.l.b16 %v1475
        %v1486 = vpack.c.b16 %v1483, %v1482
        %v1487 = vpack.c.b16 %v1485, %v1484
        %v1491 = vsel %vm1428, %v1477, 0
        %1493 = vmatprep.subr.bf16.mxu0 0
        %1494 = vmatpush1.bf16.msra.mxu0 0
        %1495 = vmatprep.subr.bf16.mxu0 0
        %1496 = vmatpush1.bf16.msra.mxu0 0
        %1497 = vmatprep.subr.bf16.mxu0 0
        %1498 = vmatpush1.bf16.msra.mxu0 0
        %1499 = vmatprep.subr.bf16.mxu0 0
        %1500 = vmatpush1.bf16.msra.mxu0 0
        %1501 = vmatprep.subr.bf16.mxu0 0
        %1502 = vmatpush1.bf16.msra.mxu0 0
        %1503 = vmatprep.subr.bf16.mxu0 0
        %1504 = vmatpush1.bf16.msra.mxu0 0
        %1505 = vmatprep.subr.bf16.mxu0 0
        %1506 = vmatpush1.bf16.msra.mxu0 %v1487
        %1507 = vmatprep.subr.bf16.mxu0 0
        %1508 = vmatpush1.bf16.msra.mxu0 %v1486
        %1509 = vmatprep.subr.bf16.mxu0 0
        %1510 = vmatpush2.bf16.msra.mxu0 0
        %1511 = vmatprep.subr.bf16.mxu0 0
        %1512 = vmatpush2.bf16.msra.mxu0 0
        %1513 = vmatprep.subr.bf16.mxu0 0
        %1514 = vmatpush2.bf16.msra.mxu0 0
        %1515 = vmatprep.subr.bf16.mxu0 0
        %1516 = vmatpush2.bf16.msra.mxu0 0
        %1517 = vmatprep.subr.bf16.mxu0 0
        %1518 = vmatpush2.bf16.msra.mxu0 0
        %1519 = vmatprep.subr.bf16.mxu0 0
        %1520 = vmatpush2.bf16.msra.mxu0 0
        %1521 = vmatprep.subr.bf16.mxu0 0
        %1522 = vmatpush2.bf16.msra.mxu0 0
        %1523 = vmatprep.subr.bf16.mxu0 0
        %1524 = vmatpush2.bf16.msra.mxu0 0
        %1525 = vmatprep.mubr.bf16.mxu0 0
        %1526 = vmatmul.mubr.bf16.gmra.mxu0 %v1491
        %v1527 = vpop.f32.mrf.mxu0
        %v1528 = vadd.f32 %v1476, %v1527
        %v1529 = vpop.f32.mrf.mxu0
        %v1530 = vpop.f32.mrf.mxu0
        %v1531 = vpop.f32.mrf.mxu0
        %1532 = vdwg.mxu0
        %v1533 = vadd.f32 %v1528, 0.0
        %v1534 = vld [vmem:[%s11] sm:$0x1]
        %v1535 = vld [vmem:[%s13] sm:$0x1]
        %vm1536 = vcmask 253952
        %v1537 = vsel %vm1536, %v1533, 0.0
        %1538 = vadd.xlane.f32.xlu0 %v1537
        %v1539 = vpop.xlane.xlu0 %1538
        %v1540 = vrcp.pop 32.0
        %v1541 = vmul.f32 %v1539, %v1540
        %v1542 = vsub.f32 %v1533, %v1541
        %v1543 = vmul.f32 %v1542, %v1542
        %v1544 = vsel %vm1536, %v1543, 0.0
        %1545 = vadd.xlane.f32.xlu0 %v1544
        %v1546 = vpop.xlane.xlu0 %1545
        %v1547 = vmul.f32 %v1546, %v1540
        %v1548 = vadd.f32 %v1547, 1e-05
        %v1549 = vrsqrt.pop %v1548
        %v1550 = vmul.f32 %v1542, %v1549
        %v1551 = vmul.f32 %v1550, %v1534
        %v1552 = vadd.f32 %v1551, %v1535
        %v1553 = vld [vmem:[%s15] sm:$0xff]
        %v1554 = vld [vmem:[%s15 + $0x8] sm:$0xff]
        %v1555 = vld [vmem:[%s15 + $0x10] sm:$0xff]
        %v1556 = vld [vmem:[%s15 + $0x18] sm:$0xff]
        %v1557 = vld [vmem:[%s15 + $0x20] sm:$0xff]
        %v1558 = vld [vmem:[%s15 + $0x28] sm:$0xff]
        %v1559 = vld [vmem:[%s15 + $0x30] sm:$0xff]
        %v1560 = vld [vmem:[%s15 + $0x38] sm:$0xff]
        %v1561 = vld [vmem:[%s17] sm:$0xf]
        %v1562 = vpack.c.bf16 %v1552, %v1552
        %v1571 = vunpack.c.l.b16 %v1553
        %v1572 = vunpack.c.h.b16 %v1553
        %v1573 = vunpack.c.l.b16 %v1554
        %v1574 = vunpack.c.h.b16 %v1554
        %v1575 = vunpack.c.l.b16 %v1555
        %v1576 = vunpack.c.h.b16 %v1555
        %v1577 = vunpack.c.l.b16 %v1556
        %v1578 = vunpack.c.h.b16 %v1556
        %v1579 = vunpack.c.l.b16 %v1557
        %v1580 = vunpack.c.h.b16 %v1557
        %v1581 = vunpack.c.l.b16 %v1558
        %v1582 = vunpack.c.h.b16 %v1558
        %v1583 = vunpack.c.l.b16 %v1559
        %v1584 = vunpack.c.h.b16 %v1559
        %v1585 = vunpack.c.l.b16 %v1560
        %v1586 = vunpack.c.h.b16 %v1560
        %v1587 = vpack.c.b16 %v1575, %v1571
        %v1588 = vpack.c.b16 %v1576, %v1572
        %v1589 = vpack.c.b16 %v1577, %v1573
        %v1590 = vpack.c.b16 %v1578, %v1574
        %v1591 = vpack.c.b16 %v1583, %v1579
        %v1592 = vpack.c.b16 %v1584, %v1580
        %v1593 = vpack.c.b16 %v1585, %v1581
        %v1594 = vpack.c.b16 %v1586, %v1582
        %v1604 = vlaneseq
        %v1605 = vshrl.u32 %v1604, 7
        %v1606 = vsub.s32 0, %v1605
        %v1607 = vrot.slane %v1561, %v1606
        %v1608 = vlaneseq
        %v1609 = vshrl.u32 %v1608, 7
        %v1610 = vsub.s32 1, %v1609
        %v1611 = vrot.slane %v1561, %v1610
        %v1612 = vlaneseq
        %v1613 = vshrl.u32 %v1612, 7
        %v1614 = vsub.s32 2, %v1613
        %v1615 = vrot.slane %v1561, %v1614
        %v1616 = vlaneseq
        %v1617 = vshrl.u32 %v1616, 7
        %v1618 = vsub.s32 3, %v1617
        %v1619 = vrot.slane %v1561, %v1618
        %v1625 = vsel %vm1428, %v1562, 0
        %1627 = vmatprep.subr.bf16.mxu0 0
        %1628 = vmatpush1.bf16.msra.mxu0 0
        %1629 = vmatprep.subr.bf16.mxu0 0
        %1630 = vmatpush1.bf16.msra.mxu0 0
        %1631 = vmatprep.subr.bf16.mxu0 0
        %1632 = vmatpush1.bf16.msra.mxu0 0
        %1633 = vmatprep.subr.bf16.mxu0 0
        %1634 = vmatpush1.bf16.msra.mxu0 0
        %1635 = vmatprep.subr.bf16.mxu0 0
        %1636 = vmatpush1.bf16.msra.mxu0 0
        %1637 = vmatprep.subr.bf16.mxu0 0
        %1638 = vmatpush1.bf16.msra.mxu0 0
        %1639 = vmatprep.subr.bf16.mxu0 %v1592
        %1640 = vmatpush1.bf16.msra.mxu0 %v1591
        %1641 = vmatprep.subr.bf16.mxu0 %v1588
        %1642 = vmatpush1.bf16.msra.mxu0 %v1587
        %1643 = vmatprep.subr.bf16.mxu0 0
        %1644 = vmatpush2.bf16.msra.mxu0 0
        %1645 = vmatprep.subr.bf16.mxu0 0
        %1646 = vmatpush2.bf16.msra.mxu0 0
        %1647 = vmatprep.subr.bf16.mxu0 0
        %1648 = vmatpush2.bf16.msra.mxu0 0
        %1649 = vmatprep.subr.bf16.mxu0 0
        %1650 = vmatpush2.bf16.msra.mxu0 0
        %1651 = vmatprep.subr.bf16.mxu0 0
        %1652 = vmatpush2.bf16.msra.mxu0 0
        %1653 = vmatprep.subr.bf16.mxu0 0
        %1654 = vmatpush2.bf16.msra.mxu0 0
        %1655 = vmatprep.subr.bf16.mxu0 0
        %1656 = vmatpush2.bf16.msra.mxu0 0
        %1657 = vmatprep.subr.bf16.mxu0 0
        %1658 = vmatpush2.bf16.msra.mxu0 0
        %1659 = vmatprep.mubr.bf16.mxu0 0
        %1660 = vmatmul.mubr.bf16.gmra.mxu0 %v1625
        %v1661 = vpop.f32.mrf.mxu0
        %v1662 = vadd.f32 %v1607, %v1661
        %v1663 = vpop.f32.mrf.mxu0
        %v1664 = vadd.f32 %v1611, %v1663
        %v1665 = vpop.f32.mrf.mxu0
        %v1666 = vpop.f32.mrf.mxu0
        %1667 = vdwg.mxu0
        %1668 = vmatprep.subr.bf16.mxu0 0
        %1669 = vmatpush1.bf16.msra.mxu0 0
        %1670 = vmatprep.subr.bf16.mxu0 0
        %1671 = vmatpush1.bf16.msra.mxu0 0
        %1672 = vmatprep.subr.bf16.mxu0 0
        %1673 = vmatpush1.bf16.msra.mxu0 0
        %1674 = vmatprep.subr.bf16.mxu0 0
        %1675 = vmatpush1.bf16.msra.mxu0 0
        %1676 = vmatprep.subr.bf16.mxu0 0
        %1677 = vmatpush1.bf16.msra.mxu0 0
        %1678 = vmatprep.subr.bf16.mxu0 0
        %1679 = vmatpush1.bf16.msra.mxu0 0
        %1680 = vmatprep.subr.bf16.mxu0 %v1594
        %1681 = vmatpush1.bf16.msra.mxu0 %v1593
        %1682 = vmatprep.subr.bf16.mxu0 %v1590
        %1683 = vmatpush1.bf16.msra.mxu0 %v1589
        %1684 = vmatprep.subr.bf16.mxu0 0
        %1685 = vmatpush2.bf16.msra.mxu0 0
        %1686 = vmatprep.subr.bf16.mxu0 0
        %1687 = vmatpush2.bf16.msra.mxu0 0
        %1688 = vmatprep.subr.bf16.mxu0 0
        %1689 = vmatpush2.bf16.msra.mxu0 0
        %1690 = vmatprep.subr.bf16.mxu0 0
        %1691 = vmatpush2.bf16.msra.mxu0 0
        %1692 = vmatprep.subr.bf16.mxu0 0
        %1693 = vmatpush2.bf16.msra.mxu0 0
        %1694 = vmatprep.subr.bf16.mxu0 0
        %1695 = vmatpush2.bf16.msra.mxu0 0
        %1696 = vmatprep.subr.bf16.mxu0 0
        %1697 = vmatpush2.bf16.msra.mxu0 0
        %1698 = vmatprep.subr.bf16.mxu0 0
        %1699 = vmatpush2.bf16.msra.mxu0 0
        %1700 = vmatprep.mubr.bf16.mxu0 0
        %1701 = vmatmul.mubr.bf16.gmra.mxu0 %v1625
        %v1702 = vpop.f32.mrf.mxu0
        %v1703 = vadd.f32 %v1615, %v1702
        %v1704 = vpop.f32.mrf.mxu0
        %v1705 = vadd.f32 %v1619, %v1704
        %v1706 = vpop.f32.mrf.mxu0
        %v1707 = vpop.f32.mrf.mxu0
        %1708 = vdwg.mxu0
        %v1709 = vpack.c.bf16 %v1662, %v1662
        %v1710 = vpack.c.bf16 %v1664, %v1664
        %v1711 = vpack.c.bf16 %v1703, %v1703
        %v1712 = vpack.c.bf16 %v1705, %v1705
        %v1713 = vld [vmem:[%s19] sm:$0xff]
        %v1714 = vld [vmem:[%s19 + $0x8] sm:$0xff]
        %v1715 = vld [vmem:[%s19 + $0x10] sm:$0xff]
        %v1716 = vld [vmem:[%s19 + $0x18] sm:$0xff]
        %v1717 = vld [vmem:[%s19 + $0x20] sm:$0xff]
        %v1718 = vld [vmem:[%s19 + $0x28] sm:$0xff]
        %v1719 = vld [vmem:[%s19 + $0x30] sm:$0xff]
        %v1720 = vld [vmem:[%s19 + $0x38] sm:$0xff]
        %v1721 = vld [vmem:[%s19 + $0x40] sm:$0xff]
        %v1722 = vld [vmem:[%s19 + $0x48] sm:$0xff]
        %v1723 = vld [vmem:[%s19 + $0x50] sm:$0xff]
        %v1724 = vld [vmem:[%s19 + $0x58] sm:$0xff]
        %v1725 = vld [vmem:[%s19 + $0x60] sm:$0xff]
        %v1726 = vld [vmem:[%s19 + $0x68] sm:$0xff]
        %v1727 = vld [vmem:[%s19 + $0x70] sm:$0xff]
        %v1728 = vld [vmem:[%s19 + $0x78] sm:$0xff]
        %v1729 = vld [vmem:[%s21] sm:$0xff]
        %v1731 = vlaneseq
        %v1732 = vshrl.u32 %v1731, 7
        %v1733 = vsub.s32 0, %v1732
        %v1734 = vrot.slane %v1729, %v1733
        %v1735 = vlaneseq
        %v1736 = vshrl.u32 %v1735, 7
        %v1737 = vsub.s32 1, %v1736
        %v1738 = vrot.slane %v1729, %v1737
        %v1739 = vlaneseq
        %v1740 = vshrl.u32 %v1739, 7
        %v1741 = vsub.s32 2, %v1740
        %v1742 = vrot.slane %v1729, %v1741
        %v1743 = vlaneseq
        %v1744 = vshrl.u32 %v1743, 7
        %v1745 = vsub.s32 3, %v1744
        %v1746 = vrot.slane %v1729, %v1745
        %v1747 = vlaneseq
        %v1748 = vshrl.u32 %v1747, 7
        %v1749 = vsub.s32 4, %v1748
        %v1750 = vrot.slane %v1729, %v1749
        %v1751 = vlaneseq
        %v1752 = vshrl.u32 %v1751, 7
        %v1753 = vsub.s32 5, %v1752
        %v1754 = vrot.slane %v1729, %v1753
        %v1755 = vlaneseq
        %v1756 = vshrl.u32 %v1755, 7
        %v1757 = vsub.s32 6, %v1756
        %v1758 = vrot.slane %v1729, %v1757
        %v1759 = vlaneseq
        %v1760 = vshrl.u32 %v1759, 7
        %v1761 = vsub.s32 7, %v1760
        %v1762 = vrot.slane %v1729, %v1761
        %v1787 = vunpack.c.l.b16 %v1713
        %v1788 = vunpack.c.h.b16 %v1713
        %v1789 = vunpack.c.l.b16 %v1714
        %v1790 = vunpack.c.h.b16 %v1714
        %v1791 = vunpack.c.l.b16 %v1715
        %v1792 = vunpack.c.h.b16 %v1715
        %v1793 = vunpack.c.l.b16 %v1716
        %v1794 = vunpack.c.h.b16 %v1716
        %v1795 = vunpack.c.l.b16 %v1717
        %v1796 = vunpack.c.h.b16 %v1717
        %v1797 = vunpack.c.l.b16 %v1718
        %v1798 = vunpack.c.h.b16 %v1718
        %v1799 = vunpack.c.l.b16 %v1719
        %v1800 = vunpack.c.h.b16 %v1719
        %v1801 = vunpack.c.l.b16 %v1720
        %v1802 = vunpack.c.h.b16 %v1720
        %v1803 = vunpack.c.l.b16 %v1721
        %v1804 = vunpack.c.h.b16 %v1721
        %v1805 = vunpack.c.l.b16 %v1722
        %v1806 = vunpack.c.h.b16 %v1722
        %v1807 = vunpack.c.l.b16 %v1723
        %v1808 = vunpack.c.h.b16 %v1723
        %v1809 = vunpack.c.l.b16 %v1724
        %v1810 = vunpack.c.h.b16 %v1724
        %v1811 = vunpack.c.l.b16 %v1725
        %v1812 = vunpack.c.h.b16 %v1725
        %v1813 = vunpack.c.l.b16 %v1726
        %v1814 = vunpack.c.h.b16 %v1726
        %v1815 = vunpack.c.l.b16 %v1727
        %v1816 = vunpack.c.h.b16 %v1727
        %v1817 = vunpack.c.l.b16 %v1728
        %v1818 = vunpack.c.h.b16 %v1728
        %v1819 = vpack.c.b16 %v1795, %v1787
        %v1820 = vpack.c.b16 %v1796, %v1788
        %v1821 = vpack.c.b16 %v1797, %v1789
        %v1822 = vpack.c.b16 %v1798, %v1790
        %v1823 = vpack.c.b16 %v1799, %v1791
        %v1824 = vpack.c.b16 %v1800, %v1792
        %v1825 = vpack.c.b16 %v1801, %v1793
        %v1826 = vpack.c.b16 %v1802, %v1794
        %v1827 = vpack.c.b16 %v1811, %v1803
        %v1828 = vpack.c.b16 %v1812, %v1804
        %v1829 = vpack.c.b16 %v1813, %v1805
        %v1830 = vpack.c.b16 %v1814, %v1806
        %v1831 = vpack.c.b16 %v1815, %v1807
        %v1832 = vpack.c.b16 %v1816, %v1808
        %v1833 = vpack.c.b16 %v1817, %v1809
        %v1834 = vpack.c.b16 %v1818, %v1810
        %v1852 = vsel %vm1428, %v1410, 0
        %1854 = vmatprep.subr.bf16.mxu0 0
        %1855 = vmatpush1.bf16.msra.mxu0 0
        %1856 = vmatprep.subr.bf16.mxu0 0
        %1857 = vmatpush1.bf16.msra.mxu0 0
        %1858 = vmatprep.subr.bf16.mxu0 0
        %1859 = vmatpush1.bf16.msra.mxu0 0
        %1860 = vmatprep.subr.bf16.mxu0 0
        %1861 = vmatpush1.bf16.msra.mxu0 0
        %1862 = vmatprep.subr.bf16.mxu0 0
        %1863 = vmatpush1.bf16.msra.mxu0 0
        %1864 = vmatprep.subr.bf16.mxu0 0
        %1865 = vmatpush1.bf16.msra.mxu0 0
        %1866 = vmatprep.subr.bf16.mxu0 %v1828
        %1867 = vmatpush1.bf16.msra.mxu0 %v1827
        %1868 = vmatprep.subr.bf16.mxu0 %v1820
        %1869 = vmatpush1.bf16.msra.mxu0 %v1819
        %1870 = vmatprep.subr.bf16.mxu0 0
        %1871 = vmatpush2.bf16.msra.mxu0 0
        %1872 = vmatprep.subr.bf16.mxu0 0
        %1873 = vmatpush2.bf16.msra.mxu0 0
        %1874 = vmatprep.subr.bf16.mxu0 0
        %1875 = vmatpush2.bf16.msra.mxu0 0
        %1876 = vmatprep.subr.bf16.mxu0 0
        %1877 = vmatpush2.bf16.msra.mxu0 0
        %1878 = vmatprep.subr.bf16.mxu0 0
        %1879 = vmatpush2.bf16.msra.mxu0 0
        %1880 = vmatprep.subr.bf16.mxu0 0
        %1881 = vmatpush2.bf16.msra.mxu0 0
        %1882 = vmatprep.subr.bf16.mxu0 0
        %1883 = vmatpush2.bf16.msra.mxu0 0
        %1884 = vmatprep.subr.bf16.mxu0 0
        %1885 = vmatpush2.bf16.msra.mxu0 0
        %1886 = vmatprep.mubr.bf16.mxu0 0
        %1887 = vmatmul.mubr.bf16.gmra.mxu0 %v1852
        %v1888 = vpop.f32.mrf.mxu0
        %v1889 = vadd.f32 %v1734, %v1888
        %v1890 = vpop.f32.mrf.mxu0
        %v1891 = vadd.f32 %v1738, %v1890
        %v1892 = vpop.f32.mrf.mxu0
        %v1893 = vpop.f32.mrf.mxu0
        %1894 = vdwg.mxu0
        %1895 = vmatprep.subr.bf16.mxu0 0
        %1896 = vmatpush1.bf16.msra.mxu0 0
        %1897 = vmatprep.subr.bf16.mxu0 0
        %1898 = vmatpush1.bf16.msra.mxu0 0
        %1899 = vmatprep.subr.bf16.mxu0 0
        %1900 = vmatpush1.bf16.msra.mxu0 0
        %1901 = vmatprep.subr.bf16.mxu0 0
        %1902 = vmatpush1.bf16.msra.mxu0 0
        %1903 = vmatprep.subr.bf16.mxu0 0
        %1904 = vmatpush1.bf16.msra.mxu0 0
        %1905 = vmatprep.subr.bf16.mxu0 0
        %1906 = vmatpush1.bf16.msra.mxu0 0
        %1907 = vmatprep.subr.bf16.mxu0 %v1830
        %1908 = vmatpush1.bf16.msra.mxu0 %v1829
        %1909 = vmatprep.subr.bf16.mxu0 %v1822
        %1910 = vmatpush1.bf16.msra.mxu0 %v1821
        %1911 = vmatprep.subr.bf16.mxu0 0
        %1912 = vmatpush2.bf16.msra.mxu0 0
        %1913 = vmatprep.subr.bf16.mxu0 0
        %1914 = vmatpush2.bf16.msra.mxu0 0
        %1915 = vmatprep.subr.bf16.mxu0 0
        %1916 = vmatpush2.bf16.msra.mxu0 0
        %1917 = vmatprep.subr.bf16.mxu0 0
        %1918 = vmatpush2.bf16.msra.mxu0 0
        %1919 = vmatprep.subr.bf16.mxu0 0
        %1920 = vmatpush2.bf16.msra.mxu0 0
        %1921 = vmatprep.subr.bf16.mxu0 0
        %1922 = vmatpush2.bf16.msra.mxu0 0
        %1923 = vmatprep.subr.bf16.mxu0 0
        %1924 = vmatpush2.bf16.msra.mxu0 0
        %1925 = vmatprep.subr.bf16.mxu0 0
        %1926 = vmatpush2.bf16.msra.mxu0 0
        %1927 = vmatprep.mubr.bf16.mxu0 0
        %1928 = vmatmul.mubr.bf16.gmra.mxu0 %v1852
        %v1929 = vpop.f32.mrf.mxu0
        %v1930 = vadd.f32 %v1742, %v1929
        %v1931 = vpop.f32.mrf.mxu0
        %v1932 = vadd.f32 %v1746, %v1931
        %v1933 = vpop.f32.mrf.mxu0
        %v1934 = vpop.f32.mrf.mxu0
        %1935 = vdwg.mxu0
        %1936 = vmatprep.subr.bf16.mxu0 0
        %1937 = vmatpush1.bf16.msra.mxu0 0
        %1938 = vmatprep.subr.bf16.mxu0 0
        %1939 = vmatpush1.bf16.msra.mxu0 0
        %1940 = vmatprep.subr.bf16.mxu0 0
        %1941 = vmatpush1.bf16.msra.mxu0 0
        %1942 = vmatprep.subr.bf16.mxu0 0
        %1943 = vmatpush1.bf16.msra.mxu0 0
        %1944 = vmatprep.subr.bf16.mxu0 0
        %1945 = vmatpush1.bf16.msra.mxu0 0
        %1946 = vmatprep.subr.bf16.mxu0 0
        %1947 = vmatpush1.bf16.msra.mxu0 0
        %1948 = vmatprep.subr.bf16.mxu0 %v1832
        %1949 = vmatpush1.bf16.msra.mxu0 %v1831
        %1950 = vmatprep.subr.bf16.mxu0 %v1824
        %1951 = vmatpush1.bf16.msra.mxu0 %v1823
        %1952 = vmatprep.subr.bf16.mxu0 0
        %1953 = vmatpush2.bf16.msra.mxu0 0
        %1954 = vmatprep.subr.bf16.mxu0 0
        %1955 = vmatpush2.bf16.msra.mxu0 0
        %1956 = vmatprep.subr.bf16.mxu0 0
        %1957 = vmatpush2.bf16.msra.mxu0 0
        %1958 = vmatprep.subr.bf16.mxu0 0
        %1959 = vmatpush2.bf16.msra.mxu0 0
        %1960 = vmatprep.subr.bf16.mxu0 0
        %1961 = vmatpush2.bf16.msra.mxu0 0
        %1962 = vmatprep.subr.bf16.mxu0 0
        %1963 = vmatpush2.bf16.msra.mxu0 0
        %1964 = vmatprep.subr.bf16.mxu0 0
        %1965 = vmatpush2.bf16.msra.mxu0 0
        %1966 = vmatprep.subr.bf16.mxu0 0
        %1967 = vmatpush2.bf16.msra.mxu0 0
        %1968 = vmatprep.mubr.bf16.mxu0 0
        %1969 = vmatmul.mubr.bf16.gmra.mxu0 %v1852
        %v1970 = vpop.f32.mrf.mxu0
        %v1971 = vadd.f32 %v1750, %v1970
        %v1972 = vpop.f32.mrf.mxu0
        %v1973 = vadd.f32 %v1754, %v1972
        %v1974 = vpop.f32.mrf.mxu0
        %v1975 = vpop.f32.mrf.mxu0
        %1976 = vdwg.mxu0
        %1977 = vmatprep.subr.bf16.mxu0 0
        %1978 = vmatpush1.bf16.msra.mxu0 0
        %1979 = vmatprep.subr.bf16.mxu0 0
        %1980 = vmatpush1.bf16.msra.mxu0 0
        %1981 = vmatprep.subr.bf16.mxu0 0
        %1982 = vmatpush1.bf16.msra.mxu0 0
        %1983 = vmatprep.subr.bf16.mxu0 0
        %1984 = vmatpush1.bf16.msra.mxu0 0
        %1985 = vmatprep.subr.bf16.mxu0 0
        %1986 = vmatpush1.bf16.msra.mxu0 0
        %1987 = vmatprep.subr.bf16.mxu0 0
        %1988 = vmatpush1.bf16.msra.mxu0 0
        %1989 = vmatprep.subr.bf16.mxu0 %v1834
        %1990 = vmatpush1.bf16.msra.mxu0 %v1833
        %1991 = vmatprep.subr.bf16.mxu0 %v1826
        %1992 = vmatpush1.bf16.msra.mxu0 %v1825
        %1993 = vmatprep.subr.bf16.mxu0 0
        %1994 = vmatpush2.bf16.msra.mxu0 0
        %1995 = vmatprep.subr.bf16.mxu0 0
        %1996 = vmatpush2.bf16.msra.mxu0 0
        %1997 = vmatprep.subr.bf16.mxu0 0
        %1998 = vmatpush2.bf16.msra.mxu0 0
        %1999 = vmatprep.subr.bf16.mxu0 0
        %2000 = vmatpush2.bf16.msra.mxu0 0
        %2001 = vmatprep.subr.bf16.mxu0 0
        %2002 = vmatpush2.bf16.msra.mxu0 0
        %2003 = vmatprep.subr.bf16.mxu0 0
        %2004 = vmatpush2.bf16.msra.mxu0 0
        %2005 = vmatprep.subr.bf16.mxu0 0
        %2006 = vmatpush2.bf16.msra.mxu0 0
        %2007 = vmatprep.subr.bf16.mxu0 0
        %2008 = vmatpush2.bf16.msra.mxu0 0
        %2009 = vmatprep.mubr.bf16.mxu0 0
        %2010 = vmatmul.mubr.bf16.gmra.mxu0 %v1852
        %v2011 = vpop.f32.mrf.mxu0
        %v2012 = vadd.f32 %v1758, %v2011
        %v2013 = vpop.f32.mrf.mxu0
        %v2014 = vadd.f32 %v1762, %v2013
        %v2015 = vpop.f32.mrf.mxu0
        %v2016 = vpop.f32.mrf.mxu0
        %2017 = vdwg.mxu0
        %v2018 = vpack.c.bf16 %v1889, %v1889
        %v2019 = vpack.c.bf16 %v1891, %v1891
        %v2020 = vpack.c.bf16 %v1930, %v1930
        %v2021 = vpack.c.bf16 %v1932, %v1932
        %v2022 = vpack.c.bf16 %v1971, %v1971
        %v2023 = vpack.c.bf16 %v1973, %v1973
        %v2024 = vpack.c.bf16 %v2012, %v2012
        %v2025 = vpack.c.bf16 %v2014, %v2014
        %2026 = vmatprep.subr.bf16.mxu0 0
        %2027 = vmatpush1.bf16.xpose.msra.mxu0 0
        %2028 = vmatprep.subr.bf16.mxu0 0
        %2029 = vmatpush1.bf16.xpose.msra.mxu0 0
        %2030 = vmatprep.subr.bf16.mxu0 0
        %2031 = vmatpush1.bf16.xpose.msra.mxu0 0
        %2032 = vmatprep.subr.bf16.mxu0 0
        %2033 = vmatpush1.bf16.xpose.msra.mxu0 0
        %2034 = vmatprep.subr.bf16.mxu0 0
        %2035 = vmatpush1.bf16.xpose.msra.mxu0 0
        %2036 = vmatprep.subr.bf16.mxu0 0
        %2037 = vmatpush1.bf16.xpose.msra.mxu0 0
        %2038 = vmatprep.subr.bf16.mxu0 0
        %2039 = vmatpush1.bf16.xpose.msra.mxu0 0
        %2040 = vmatprep.subr.bf16.mxu0 0
        %2041 = vmatpush1.bf16.xpose.msra.mxu0 %v2018
        %2042 = vmatprep.subr.bf16.mxu0 0
        %2043 = vmatpush2.bf16.xpose.msra.mxu0 0
        %2044 = vmatprep.subr.bf16.mxu0 0
        %2045 = vmatpush2.bf16.xpose.msra.mxu0 0
        %2046 = vmatprep.subr.bf16.mxu0 0
        %2047 = vmatpush2.bf16.xpose.msra.mxu0 0
        %2048 = vmatprep.subr.bf16.mxu0 0
        %2049 = vmatpush2.bf16.xpose.msra.mxu0 0
        %2050 = vmatprep.subr.bf16.mxu0 0
        %2051 = vmatpush2.bf16.xpose.msra.mxu0 0
        %2052 = vmatprep.subr.bf16.mxu0 0
        %2053 = vmatpush2.bf16.xpose.msra.mxu0 0
        %2054 = vmatprep.subr.bf16.mxu0 0
        %2055 = vmatpush2.bf16.xpose.msra.mxu0 0
        %2056 = vmatprep.subr.bf16.mxu0 0
        %2057 = vmatpush2.bf16.xpose.msra.mxu0 0
        %2058 = vmatprep.mubr.bf16.mxu0 0
        %2059 = vmatmul.mubr.bf16.gmra.mxu0 %v1709
        %v2060 = vpop.f32.mrf.mxu0
        %v2061 = vadd.f32 0.0, %v2060
        %v2062 = vpop.f32.mrf.mxu0
        %v2063 = vpop.f32.mrf.mxu0
        %v2064 = vpop.f32.mrf.mxu0
        %2065 = vdwg.mxu0
        %vm2066 = vcmask 57344
        %v2067 = vsel %vm2066, %v2061, -inf
        %2068 = vmax.xlane.f32.xlu0 %v2067
        %v2069 = vpop.xlane.xlu0 %2068
        %v2070 = vsub.f32 %v2061, %v2069
        %v2071 = vmul.f32 %v2070, 1.442695
        %v2072 = vpow.pop %v2071
        %v2073 = vsel %vm2066, %v2072, 0.0
        %2074 = vadd.xlane.f32.xlu0 %v2073
        %v2075 = vpop.xlane.xlu0 %2074
        %v2076 = vrcp.pop %v2075
        %v2077 = vmul.f32 %v2072, %v2076
        %v2078 = vpack.c.bf16 %v2077, %v2077
        %vm2079 = vcmask 64512
        %v2081 = vsel %vm2079, %v2078, 0
        %vm2083 = vcmask 1043456
        %v2085 = vsel %vm2083, %v2022, 0
        %2087 = vmatprep.subr.bf16.mxu0 0
        %2088 = vmatpush1.bf16.msra.mxu0 0
        %2089 = vmatprep.subr.bf16.mxu0 0
        %2090 = vmatpush1.bf16.msra.mxu0 0
        %2091 = vmatprep.subr.bf16.mxu0 0
        %2092 = vmatpush1.bf16.msra.mxu0 0
        %2093 = vmatprep.subr.bf16.mxu0 0
        %2094 = vmatpush1.bf16.msra.mxu0 0
        %2095 = vmatprep.subr.bf16.mxu0 0
        %2096 = vmatpush1.bf16.msra.mxu0 0
        %2097 = vmatprep.subr.bf16.mxu0 0
        %2098 = vmatpush1.bf16.msra.mxu0 0
        %2099 = vmatprep.subr.bf16.mxu0 0
        %2100 = vmatpush1.bf16.msra.mxu0 0
        %2101 = vmatprep.subr.bf16.mxu0 0
        %2102 = vmatpush1.bf16.msra.mxu0 %v2085
        %2103 = vmatprep.subr.bf16.mxu0 0
        %2104 = vmatpush2.bf16.msra.mxu0 0
        %2105 = vmatprep.subr.bf16.mxu0 0
        %2106 = vmatpush2.bf16.msra.mxu0 0
        %2107 = vmatprep.subr.bf16.mxu0 0
        %2108 = vmatpush2.bf16.msra.mxu0 0
        %2109 = vmatprep.subr.bf16.mxu0 0
        %2110 = vmatpush2.bf16.msra.mxu0 0
        %2111 = vmatprep.subr.bf16.mxu0 0
        %2112 = vmatpush2.bf16.msra.mxu0 0
        %2113 = vmatprep.subr.bf16.mxu0 0
        %2114 = vmatpush2.bf16.msra.mxu0 0
        %2115 = vmatprep.subr.bf16.mxu0 0
        %2116 = vmatpush2.bf16.msra.mxu0 0
        %2117 = vmatprep.subr.bf16.mxu0 0
        %2118 = vmatpush2.bf16.msra.mxu0 0
        %2119 = vmatprep.mubr.bf16.mxu0 0
        %2120 = vmatmul.mubr.bf16.gmra.mxu0 %v2081
        %v2121 = vpop.f32.mrf.mxu0
        %v2122 = vadd.f32 0.0, %v2121
        %v2123 = vpop.f32.mrf.mxu0
        %v2124 = vpop.f32.mrf.mxu0
        %v2125 = vpop.f32.mrf.mxu0
        %2126 = vdwg.mxu0
        %v2127 = vlaneseq
        %vm2128 = vcmp.ge.s32.totalorder %v2127, 0
        %vm2129 = vcmp.lt.s32.totalorder %v2127, 128
        %vm2130 = vmand %vm2128, %vm2129
        %2131 = vst.msk [vmem:[#allocation2] sm:$0x1] %vm2130, %v2122
        %2132 = vmatprep.subr.bf16.mxu0 0
        %2133 = vmatpush1.bf16.xpose.msra.mxu0 0
        %2134 = vmatprep.subr.bf16.mxu0 0
        %2135 = vmatpush1.bf16.xpose.msra.mxu0 0
        %2136 = vmatprep.subr.bf16.mxu0 0
        %2137 = vmatpush1.bf16.xpose.msra.mxu0 0
        %2138 = vmatprep.subr.bf16.mxu0 0
        %2139 = vmatpush1.bf16.xpose.msra.mxu0 0
        %2140 = vmatprep.subr.bf16.mxu0 0
        %2141 = vmatpush1.bf16.xpose.msra.mxu0 0
        %2142 = vmatprep.subr.bf16.mxu0 0
        %2143 = vmatpush1.bf16.xpose.msra.mxu0 0
        %2144 = vmatprep.subr.bf16.mxu0 0
        %2145 = vmatpush1.bf16.xpose.msra.mxu0 0
        %2146 = vmatprep.subr.bf16.mxu0 0
        %2147 = vmatpush1.bf16.xpose.msra.mxu0 %v2019
        %2148 = vmatprep.subr.bf16.mxu0 0
        %2149 = vmatpush2.bf16.xpose.msra.mxu0 0
        %2150 = vmatprep.subr.bf16.mxu0 0
        %2151 = vmatpush2.bf16.xpose.msra.mxu0 0
        %2152 = vmatprep.subr.bf16.mxu0 0
        %2153 = vmatpush2.bf16.xpose.msra.mxu0 0
        %2154 = vmatprep.subr.bf16.mxu0 0
        %2155 = vmatpush2.bf16.xpose.msra.mxu0 0
        %2156 = vmatprep.subr.bf16.mxu0 0
        %2157 = vmatpush2.bf16.xpose.msra.mxu0 0
        %2158 = vmatprep.subr.bf16.mxu0 0
        %2159 = vmatpush2.bf16.xpose.msra.mxu0 0
        %2160 = vmatprep.subr.bf16.mxu0 0
        %2161 = vmatpush2.bf16.xpose.msra.mxu0 0
        %2162 = vmatprep.subr.bf16.mxu0 0
        %2163 = vmatpush2.bf16.xpose.msra.mxu0 0
        %2164 = vmatprep.mubr.bf16.mxu0 0
        %2165 = vmatmul.mubr.bf16.gmra.mxu0 %v1710
        %v2166 = vpop.f32.mrf.mxu0
        %v2167 = vadd.f32 0.0, %v2166
        %v2168 = vpop.f32.mrf.mxu0
        %v2169 = vpop.f32.mrf.mxu0
        %v2170 = vpop.f32.mrf.mxu0
        %2171 = vdwg.mxu0
        %v2172 = vsel %vm2066, %v2167, -inf
        %2173 = vmax.xlane.f32.xlu0 %v2172
        %v2174 = vpop.xlane.xlu0 %2173
        %v2175 = vsub.f32 %v2167, %v2174
        %v2176 = vmul.f32 %v2175, 1.442695
        %v2177 = vpow.pop %v2176
        %v2178 = vsel %vm2066, %v2177, 0.0
        %2179 = vadd.xlane.f32.xlu0 %v2178
        %v2180 = vpop.xlane.xlu0 %2179
        %v2181 = vrcp.pop %v2180
        %v2182 = vmul.f32 %v2177, %v2181
        %v2183 = vpack.c.bf16 %v2182, %v2182
        %v2185 = vsel %vm2079, %v2183, 0
        %v2188 = vsel %vm2083, %v2023, 0
        %2190 = vmatprep.subr.bf16.mxu0 0
        %2191 = vmatpush1.bf16.msra.mxu0 0
        %2192 = vmatprep.subr.bf16.mxu0 0
        %2193 = vmatpush1.bf16.msra.mxu0 0
        %2194 = vmatprep.subr.bf16.mxu0 0
        %2195 = vmatpush1.bf16.msra.mxu0 0
        %2196 = vmatprep.subr.bf16.mxu0 0
        %2197 = vmatpush1.bf16.msra.mxu0 0
        %2198 = vmatprep.subr.bf16.mxu0 0
        %2199 = vmatpush1.bf16.msra.mxu0 0
        %2200 = vmatprep.subr.bf16.mxu0 0
        %2201 = vmatpush1.bf16.msra.mxu0 0
        %2202 = vmatprep.subr.bf16.mxu0 0
        %2203 = vmatpush1.bf16.msra.mxu0 0
        %2204 = vmatprep.subr.bf16.mxu0 0
        %2205 = vmatpush1.bf16.msra.mxu0 %v2188
        %2206 = vmatprep.subr.bf16.mxu0 0
        %2207 = vmatpush2.bf16.msra.mxu0 0
        %2208 = vmatprep.subr.bf16.mxu0 0
        %2209 = vmatpush2.bf16.msra.mxu0 0
        %2210 = vmatprep.subr.bf16.mxu0 0
        %2211 = vmatpush2.bf16.msra.mxu0 0
        %2212 = vmatprep.subr.bf16.mxu0 0
        %2213 = vmatpush2.bf16.msra.mxu0 0
        %2214 = vmatprep.subr.bf16.mxu0 0
        %2215 = vmatpush2.bf16.msra.mxu0 0
        %2216 = vmatprep.subr.bf16.mxu0 0
        %2217 = vmatpush2.bf16.msra.mxu0 0
        %2218 = vmatprep.subr.bf16.mxu0 0
        %2219 = vmatpush2.bf16.msra.mxu0 0
        %2220 = vmatprep.subr.bf16.mxu0 0
        %2221 = vmatpush2.bf16.msra.mxu0 0
        %2222 = vmatprep.mubr.bf16.mxu0 0
        %2223 = vmatmul.mubr.bf16.gmra.mxu0 %v2185
        %v2224 = vpop.f32.mrf.mxu0
        %v2225 = vadd.f32 0.0, %v2224
        %v2226 = vpop.f32.mrf.mxu0
        %v2227 = vpop.f32.mrf.mxu0
        %v2228 = vpop.f32.mrf.mxu0
        %2229 = vdwg.mxu0
        %2230 = vst.msk [vmem:[#allocation2 + $0x1] sm:$0x1] %vm2130, %v2225
        %2231 = vmatprep.subr.bf16.mxu0 0
        %2232 = vmatpush1.bf16.xpose.msra.mxu0 0
        %2233 = vmatprep.subr.bf16.mxu0 0
        %2234 = vmatpush1.bf16.xpose.msra.mxu0 0
        %2235 = vmatprep.subr.bf16.mxu0 0
        %2236 = vmatpush1.bf16.xpose.msra.mxu0 0
        %2237 = vmatprep.subr.bf16.mxu0 0
        %2238 = vmatpush1.bf16.xpose.msra.mxu0 0
        %2239 = vmatprep.subr.bf16.mxu0 0
        %2240 = vmatpush1.bf16.xpose.msra.mxu0 0
        %2241 = vmatprep.subr.bf16.mxu0 0
        %2242 = vmatpush1.bf16.xpose.msra.mxu0 0
        %2243 = vmatprep.subr.bf16.mxu0 0
        %2244 = vmatpush1.bf16.xpose.msra.mxu0 0
        %2245 = vmatprep.subr.bf16.mxu0 0
        %2246 = vmatpush1.bf16.xpose.msra.mxu0 %v2020
        %2247 = vmatprep.subr.bf16.mxu0 0
        %2248 = vmatpush2.bf16.xpose.msra.mxu0 0
        %2249 = vmatprep.subr.bf16.mxu0 0
        %2250 = vmatpush2.bf16.xpose.msra.mxu0 0
        %2251 = vmatprep.subr.bf16.mxu0 0
        %2252 = vmatpush2.bf16.xpose.msra.mxu0 0
        %2253 = vmatprep.subr.bf16.mxu0 0
        %2254 = vmatpush2.bf16.xpose.msra.mxu0 0
        %2255 = vmatprep.subr.bf16.mxu0 0
        %2256 = vmatpush2.bf16.xpose.msra.mxu0 0
        %2257 = vmatprep.subr.bf16.mxu0 0
        %2258 = vmatpush2.bf16.xpose.msra.mxu0 0
        %2259 = vmatprep.subr.bf16.mxu0 0
        %2260 = vmatpush2.bf16.xpose.msra.mxu0 0
        %2261 = vmatprep.subr.bf16.mxu0 0
        %2262 = vmatpush2.bf16.xpose.msra.mxu0 0
        %2263 = vmatprep.mubr.bf16.mxu0 0
        %2264 = vmatmul.mubr.bf16.gmra.mxu0 %v1711
        %v2265 = vpop.f32.mrf.mxu0
        %v2266 = vadd.f32 0.0, %v2265
        %v2267 = vpop.f32.mrf.mxu0
        %v2268 = vpop.f32.mrf.mxu0
        %v2269 = vpop.f32.mrf.mxu0
        %2270 = vdwg.mxu0
        %v2271 = vsel %vm2066, %v2266, -inf
        %2272 = vmax.xlane.f32.xlu0 %v2271
        %v2273 = vpop.xlane.xlu0 %2272
        %v2274 = vsub.f32 %v2266, %v2273
        %v2275 = vmul.f32 %v2274, 1.442695
        %v2276 = vpow.pop %v2275
        %v2277 = vsel %vm2066, %v2276, 0.0
        %2278 = vadd.xlane.f32.xlu0 %v2277
        %v2279 = vpop.xlane.xlu0 %2278
        %v2280 = vrcp.pop %v2279
        %v2281 = vmul.f32 %v2276, %v2280
        %v2282 = vpack.c.bf16 %v2281, %v2281
        %v2284 = vsel %vm2079, %v2282, 0
        %v2287 = vsel %vm2083, %v2024, 0
        %2289 = vmatprep.subr.bf16.mxu0 0
        %2290 = vmatpush1.bf16.msra.mxu0 0
        %2291 = vmatprep.subr.bf16.mxu0 0
        %2292 = vmatpush1.bf16.msra.mxu0 0
        %2293 = vmatprep.subr.bf16.mxu0 0
        %2294 = vmatpush1.bf16.msra.mxu0 0
        %2295 = vmatprep.subr.bf16.mxu0 0
        %2296 = vmatpush1.bf16.msra.mxu0 0
        %2297 = vmatprep.subr.bf16.mxu0 0
        %2298 = vmatpush1.bf16.msra.mxu0 0
        %2299 = vmatprep.subr.bf16.mxu0 0
        %2300 = vmatpush1.bf16.msra.mxu0 0
        %2301 = vmatprep.subr.bf16.mxu0 0
        %2302 = vmatpush1.bf16.msra.mxu0 0
        %2303 = vmatprep.subr.bf16.mxu0 0
        %2304 = vmatpush1.bf16.msra.mxu0 %v2287
        %2305 = vmatprep.subr.bf16.mxu0 0
        %2306 = vmatpush2.bf16.msra.mxu0 0
        %2307 = vmatprep.subr.bf16.mxu0 0
        %2308 = vmatpush2.bf16.msra.mxu0 0
        %2309 = vmatprep.subr.bf16.mxu0 0
        %2310 = vmatpush2.bf16.msra.mxu0 0
        %2311 = vmatprep.subr.bf16.mxu0 0
        %2312 = vmatpush2.bf16.msra.mxu0 0
        %2313 = vmatprep.subr.bf16.mxu0 0
        %2314 = vmatpush2.bf16.msra.mxu0 0
        %2315 = vmatprep.subr.bf16.mxu0 0
        %2316 = vmatpush2.bf16.msra.mxu0 0
        %2317 = vmatprep.subr.bf16.mxu0 0
        %2318 = vmatpush2.bf16.msra.mxu0 0
        %2319 = vmatprep.subr.bf16.mxu0 0
        %2320 = vmatpush2.bf16.msra.mxu0 0
        %2321 = vmatprep.mubr.bf16.mxu0 0
        %2322 = vmatmul.mubr.bf16.gmra.mxu0 %v2284
        %v2323 = vpop.f32.mrf.mxu0
        %v2324 = vadd.f32 0.0, %v2323
        %v2325 = vpop.f32.mrf.mxu0
        %v2326 = vpop.f32.mrf.mxu0
        %v2327 = vpop.f32.mrf.mxu0
        %2328 = vdwg.mxu0
        %2329 = vst.msk [vmem:[#allocation2 + $0x2] sm:$0x1] %vm2130, %v2324
        %2330 = vmatprep.subr.bf16.mxu0 0
        %2331 = vmatpush1.bf16.xpose.msra.mxu0 0
        %2332 = vmatprep.subr.bf16.mxu0 0
        %2333 = vmatpush1.bf16.xpose.msra.mxu0 0
        %2334 = vmatprep.subr.bf16.mxu0 0
        %2335 = vmatpush1.bf16.xpose.msra.mxu0 0
        %2336 = vmatprep.subr.bf16.mxu0 0
        %2337 = vmatpush1.bf16.xpose.msra.mxu0 0
        %2338 = vmatprep.subr.bf16.mxu0 0
        %2339 = vmatpush1.bf16.xpose.msra.mxu0 0
        %2340 = vmatprep.subr.bf16.mxu0 0
        %2341 = vmatpush1.bf16.xpose.msra.mxu0 0
        %2342 = vmatprep.subr.bf16.mxu0 0
        %2343 = vmatpush1.bf16.xpose.msra.mxu0 0
        %2344 = vmatprep.subr.bf16.mxu0 0
        %2345 = vmatpush1.bf16.xpose.msra.mxu0 %v2021
        %2346 = vmatprep.subr.bf16.mxu0 0
        %2347 = vmatpush2.bf16.xpose.msra.mxu0 0
        %2348 = vmatprep.subr.bf16.mxu0 0
        %2349 = vmatpush2.bf16.xpose.msra.mxu0 0
        %2350 = vmatprep.subr.bf16.mxu0 0
        %2351 = vmatpush2.bf16.xpose.msra.mxu0 0
        %2352 = vmatprep.subr.bf16.mxu0 0
        %2353 = vmatpush2.bf16.xpose.msra.mxu0 0
        %2354 = vmatprep.subr.bf16.mxu0 0
        %2355 = vmatpush2.bf16.xpose.msra.mxu0 0
        %2356 = vmatprep.subr.bf16.mxu0 0
        %2357 = vmatpush2.bf16.xpose.msra.mxu0 0
        %2358 = vmatprep.subr.bf16.mxu0 0
        %2359 = vmatpush2.bf16.xpose.msra.mxu0 0
        %2360 = vmatprep.subr.bf16.mxu0 0
        %2361 = vmatpush2.bf16.xpose.msra.mxu0 0
        %2362 = vmatprep.mubr.bf16.mxu0 0
        %2363 = vmatmul.mubr.bf16.gmra.mxu0 %v1712
        %v2364 = vpop.f32.mrf.mxu0
        %v2365 = vadd.f32 0.0, %v2364
        %v2366 = vpop.f32.mrf.mxu0
        %v2367 = vpop.f32.mrf.mxu0
        %v2368 = vpop.f32.mrf.mxu0
        %2369 = vdwg.mxu0
        %v2370 = vsel %vm2066, %v2365, -inf
        %2371 = vmax.xlane.f32.xlu0 %v2370
        %v2372 = vpop.xlane.xlu0 %2371
        %v2373 = vsub.f32 %v2365, %v2372
        %v2374 = vmul.f32 %v2373, 1.442695
        %v2375 = vpow.pop %v2374
        %v2376 = vsel %vm2066, %v2375, 0.0
        %2377 = vadd.xlane.f32.xlu0 %v2376
        %v2378 = vpop.xlane.xlu0 %2377
        %v2379 = vrcp.pop %v2378
        %v2380 = vmul.f32 %v2375, %v2379
        %v2381 = vpack.c.bf16 %v2380, %v2380
        %v2383 = vsel %vm2079, %v2381, 0
        %v2386 = vsel %vm2083, %v2025, 0
        %2388 = vmatprep.subr.bf16.mxu0 0
        %2389 = vmatpush1.bf16.msra.mxu0 0
        %2390 = vmatprep.subr.bf16.mxu0 0
        %2391 = vmatpush1.bf16.msra.mxu0 0
        %2392 = vmatprep.subr.bf16.mxu0 0
        %2393 = vmatpush1.bf16.msra.mxu0 0
        %2394 = vmatprep.subr.bf16.mxu0 0
        %2395 = vmatpush1.bf16.msra.mxu0 0
        %2396 = vmatprep.subr.bf16.mxu0 0
        %2397 = vmatpush1.bf16.msra.mxu0 0
        %2398 = vmatprep.subr.bf16.mxu0 0
        %2399 = vmatpush1.bf16.msra.mxu0 0
        %2400 = vmatprep.subr.bf16.mxu0 0
        %2401 = vmatpush1.bf16.msra.mxu0 0
        %2402 = vmatprep.subr.bf16.mxu0 0
        %2403 = vmatpush1.bf16.msra.mxu0 %v2386
        %2404 = vmatprep.subr.bf16.mxu0 0
        %2405 = vmatpush2.bf16.msra.mxu0 0
        %2406 = vmatprep.subr.bf16.mxu0 0
        %2407 = vmatpush2.bf16.msra.mxu0 0
        %2408 = vmatprep.subr.bf16.mxu0 0
        %2409 = vmatpush2.bf16.msra.mxu0 0
        %2410 = vmatprep.subr.bf16.mxu0 0
        %2411 = vmatpush2.bf16.msra.mxu0 0
        %2412 = vmatprep.subr.bf16.mxu0 0
        %2413 = vmatpush2.bf16.msra.mxu0 0
        %2414 = vmatprep.subr.bf16.mxu0 0
        %2415 = vmatpush2.bf16.msra.mxu0 0
        %2416 = vmatprep.subr.bf16.mxu0 0
        %2417 = vmatpush2.bf16.msra.mxu0 0
        %2418 = vmatprep.subr.bf16.mxu0 0
        %2419 = vmatpush2.bf16.msra.mxu0 0
        %2420 = vmatprep.mubr.bf16.mxu0 0
        %2421 = vmatmul.mubr.bf16.gmra.mxu0 %v2383
        %v2422 = vpop.f32.mrf.mxu0
        %v2423 = vadd.f32 0.0, %v2422
        %v2424 = vpop.f32.mrf.mxu0
        %v2425 = vpop.f32.mrf.mxu0
        %v2426 = vpop.f32.mrf.mxu0
        %2427 = vdwg.mxu0
        %2428 = vst.msk [vmem:[#allocation2 + $0x3] sm:$0x1] %vm2130, %v2423
        %v2429 = vld [vmem:[#allocation2] sm:$0xf]
        %v2430 = vld [vmem:[%s23] sm:$0xf]
        %v2431 = vld [vmem:[%s23 + $0x4] sm:$0xf]
        %v2432 = vld [vmem:[%s23 + $0x8] sm:$0xf]
        %v2433 = vld [vmem:[%s23 + $0xc] sm:$0xf]
        %v2434 = vld [vmem:[%s23 + $0x10] sm:$0xf]
        %v2435 = vld [vmem:[%s23 + $0x14] sm:$0xf]
        %v2436 = vld [vmem:[%s23 + $0x18] sm:$0xf]
        %v2437 = vld [vmem:[%s23 + $0x1c] sm:$0xf]
        %v2438 = vld [vmem:[%s23 + $0x20] sm:$0xf]
        %v2439 = vld [vmem:[%s23 + $0x24] sm:$0xf]
        %v2440 = vld [vmem:[%s23 + $0x28] sm:$0xf]
        %v2441 = vld [vmem:[%s23 + $0x2c] sm:$0xf]
        %v2442 = vld [vmem:[%s23 + $0x30] sm:$0xf]
        %v2443 = vld [vmem:[%s23 + $0x34] sm:$0xf]
        %v2444 = vld [vmem:[%s23 + $0x38] sm:$0xf]
        %v2445 = vld [vmem:[%s23 + $0x3c] sm:$0xf]
        %v2446 = vld [vmem:[%s23 + $0x40] sm:$0xf]
        %v2447 = vld [vmem:[%s23 + $0x44] sm:$0xf]
        %v2448 = vld [vmem:[%s23 + $0x48] sm:$0xf]
        %v2449 = vld [vmem:[%s23 + $0x4c] sm:$0xf]
        %v2450 = vld [vmem:[%s23 + $0x50] sm:$0xf]
        %v2451 = vld [vmem:[%s23 + $0x54] sm:$0xf]
        %v2452 = vld [vmem:[%s23 + $0x58] sm:$0xf]
        %v2453 = vld [vmem:[%s23 + $0x5c] sm:$0xf]
        %v2454 = vld [vmem:[%s23 + $0x60] sm:$0xf]
        %v2455 = vld [vmem:[%s23 + $0x64] sm:$0xf]
        %v2456 = vld [vmem:[%s23 + $0x68] sm:$0xf]
        %v2457 = vld [vmem:[%s23 + $0x6c] sm:$0xf]
        %v2458 = vld [vmem:[%s23 + $0x70] sm:$0xf]
        %v2459 = vld [vmem:[%s23 + $0x74] sm:$0xf]
        %v2460 = vld [vmem:[%s23 + $0x78] sm:$0xf]
        %v2461 = vld [vmem:[%s23 + $0x7c] sm:$0xf]
        %v2462 = vld [vmem:[%s23 + $0x80] sm:$0xf]
        %v2463 = vld [vmem:[%s23 + $0x84] sm:$0xf]
        %v2464 = vld [vmem:[%s23 + $0x88] sm:$0xf]
        %v2465 = vld [vmem:[%s23 + $0x8c] sm:$0xf]
        %v2466 = vld [vmem:[%s23 + $0x90] sm:$0xf]
        %v2467 = vld [vmem:[%s23 + $0x94] sm:$0xf]
        %v2468 = vld [vmem:[%s23 + $0x98] sm:$0xf]
        %v2469 = vld [vmem:[%s23 + $0x9c] sm:$0xf]
        %v2470 = vld [vmem:[%s23 + $0xa0] sm:$0xf]
        %v2471 = vld [vmem:[%s23 + $0xa4] sm:$0xf]
        %v2472 = vld [vmem:[%s23 + $0xa8] sm:$0xf]
        %v2473 = vld [vmem:[%s23 + $0xac] sm:$0xf]
        %v2474 = vld [vmem:[%s23 + $0xb0] sm:$0xf]
        %v2475 = vld [vmem:[%s23 + $0xb4] sm:$0xf]
        %v2476 = vld [vmem:[%s23 + $0xb8] sm:$0xf]
        %v2477 = vld [vmem:[%s23 + $0xbc] sm:$0xf]
        %v2478 = vld [vmem:[%s23 + $0xc0] sm:$0xf]
        %v2479 = vld [vmem:[%s23 + $0xc4] sm:$0xf]
        %v2480 = vld [vmem:[%s23 + $0xc8] sm:$0xf]
        %v2481 = vld [vmem:[%s23 + $0xcc] sm:$0xf]
        %v2482 = vld [vmem:[%s23 + $0xd0] sm:$0xf]
        %v2483 = vld [vmem:[%s23 + $0xd4] sm:$0xf]
        %v2484 = vld [vmem:[%s23 + $0xd8] sm:$0xf]
        %v2485 = vld [vmem:[%s23 + $0xdc] sm:$0xf]
        %v2486 = vld [vmem:[%s23 + $0xe0] sm:$0xf]
        %v2487 = vld [vmem:[%s23 + $0xe4] sm:$0xf]
        %v2488 = vld [vmem:[%s23 + $0xe8] sm:$0xf]
        %v2489 = vld [vmem:[%s23 + $0xec] sm:$0xf]
        %v2490 = vld [vmem:[%s23 + $0xf0] sm:$0xf]
        %v2491 = vld [vmem:[%s23 + $0xf4] sm:$0xf]
        %v2492 = vld [vmem:[%s23 + $0xf8] sm:$0xf]
        %v2493 = vld [vmem:[%s23 + $0xfc] sm:$0xf]
        %v2494 = vld [vmem:[%s25] sm:$0x1]
        %v2496 = vlaneseq
        %v2497 = vshrl.u32 %v2496, 7
        %v2498 = vsub.s32 0, %v2497
        %v2499 = vrot.slane %v2429, %v2498
        %v2500 = vlaneseq
        %v2501 = vshrl.u32 %v2500, 7
        %v2502 = vsub.s32 1, %v2501
        %v2503 = vrot.slane %v2429, %v2502
        %v2504 = vlaneseq
        %v2505 = vshrl.u32 %v2504, 7
        %v2506 = vsub.s32 2, %v2505
        %v2507 = vrot.slane %v2429, %v2506
        %v2508 = vlaneseq
        %v2509 = vshrl.u32 %v2508, 7
        %v2510 = vsub.s32 3, %v2509
        %v2511 = vrot.slane %v2429, %v2510
        %v2516 = vpack.c.bf16 %v2499, %v2499
        %v2517 = vpack.c.bf16 %v2503, %v2503
        %v2518 = vpack.c.bf16 %v2507, %v2507
        %v2519 = vpack.c.bf16 %v2511, %v2511
        %v2584 = vunpack.c.l.b16 %v2430
        %v2585 = vunpack.c.l.b16 %v2431
        %v2586 = vunpack.c.l.b16 %v2432
        %v2587 = vunpack.c.l.b16 %v2433
        %v2588 = vunpack.c.l.b16 %v2434
        %v2589 = vunpack.c.l.b16 %v2435
        %v2590 = vunpack.c.l.b16 %v2436
        %v2591 = vunpack.c.l.b16 %v2437
        %v2592 = vunpack.c.l.b16 %v2438
        %v2593 = vunpack.c.l.b16 %v2439
        %v2594 = vunpack.c.l.b16 %v2440
        %v2595 = vunpack.c.l.b16 %v2441
        %v2596 = vunpack.c.l.b16 %v2442
        %v2597 = vunpack.c.l.b16 %v2443
        %v2598 = vunpack.c.l.b16 %v2444
        %v2599 = vunpack.c.l.b16 %v2445
        %v2600 = vunpack.c.l.b16 %v2446
        %v2601 = vunpack.c.l.b16 %v2447
        %v2602 = vunpack.c.l.b16 %v2448
        %v2603 = vunpack.c.l.b16 %v2449
        %v2604 = vunpack.c.l.b16 %v2450
        %v2605 = vunpack.c.l.b16 %v2451
        %v2606 = vunpack.c.l.b16 %v2452
        %v2607 = vunpack.c.l.b16 %v2453
        %v2608 = vunpack.c.l.b16 %v2454
        %v2609 = vunpack.c.l.b16 %v2455
        %v2610 = vunpack.c.l.b16 %v2456
        %v2611 = vunpack.c.l.b16 %v2457
        %v2612 = vunpack.c.l.b16 %v2458
        %v2613 = vunpack.c.l.b16 %v2459
        %v2614 = vunpack.c.l.b16 %v2460
        %v2615 = vunpack.c.l.b16 %v2461
        %v2616 = vunpack.c.l.b16 %v2462
        %v2617 = vunpack.c.l.b16 %v2463
        %v2618 = vunpack.c.l.b16 %v2464
        %v2619 = vunpack.c.l.b16 %v2465
        %v2620 = vunpack.c.l.b16 %v2466
        %v2621 = vunpack.c.l.b16 %v2467
        %v2622 = vunpack.c.l.b16 %v2468
        %v2623 = vunpack.c.l.b16 %v2469
        %v2624 = vunpack.c.l.b16 %v2470
        %v2625 = vunpack.c.l.b16 %v2471
        %v2626 = vunpack.c.l.b16 %v2472
        %v2627 = vunpack.c.l.b16 %v2473
        %v2628 = vunpack.c.l.b16 %v2474
        %v2629 = vunpack.c.l.b16 %v2475
        %v2630 = vunpack.c.l.b16 %v2476
        %v2631 = vunpack.c.l.b16 %v2477
        %v2632 = vunpack.c.l.b16 %v2478
        %v2633 = vunpack.c.l.b16 %v2479
        %v2634 = vunpack.c.l.b16 %v2480
        %v2635 = vunpack.c.l.b16 %v2481
        %v2636 = vunpack.c.l.b16 %v2482
        %v2637 = vunpack.c.l.b16 %v2483
        %v2638 = vunpack.c.l.b16 %v2484
        %v2639 = vunpack.c.l.b16 %v2485
        %v2640 = vunpack.c.l.b16 %v2486
        %v2641 = vunpack.c.l.b16 %v2487
        %v2642 = vunpack.c.l.b16 %v2488
        %v2643 = vunpack.c.l.b16 %v2489
        %v2644 = vunpack.c.l.b16 %v2490
        %v2645 = vunpack.c.l.b16 %v2491
        %v2646 = vunpack.c.l.b16 %v2492
        %v2647 = vunpack.c.l.b16 %v2493
        %v2648 = vpack.c.b16 %v2585, %v2584
        %v2649 = vpack.c.b16 %v2587, %v2586
        %v2650 = vpack.c.b16 %v2589, %v2588
        %v2651 = vpack.c.b16 %v2591, %v2590
        %v2652 = vpack.c.b16 %v2593, %v2592
        %v2653 = vpack.c.b16 %v2595, %v2594
        %v2654 = vpack.c.b16 %v2597, %v2596
        %v2655 = vpack.c.b16 %v2599, %v2598
        %v2656 = vpack.c.b16 %v2601, %v2600
        %v2657 = vpack.c.b16 %v2603, %v2602
        %v2658 = vpack.c.b16 %v2605, %v2604
        %v2659 = vpack.c.b16 %v2607, %v2606
        %v2660 = vpack.c.b16 %v2609, %v2608
        %v2661 = vpack.c.b16 %v2611, %v2610
        %v2662 = vpack.c.b16 %v2613, %v2612
        %v2663 = vpack.c.b16 %v2615, %v2614
        %v2664 = vpack.c.b16 %v2617, %v2616
        %v2665 = vpack.c.b16 %v2619, %v2618
        %v2666 = vpack.c.b16 %v2621, %v2620
        %v2667 = vpack.c.b16 %v2623, %v2622
        %v2668 = vpack.c.b16 %v2625, %v2624
        %v2669 = vpack.c.b16 %v2627, %v2626
        %v2670 = vpack.c.b16 %v2629, %v2628
        %v2671 = vpack.c.b16 %v2631, %v2630
        %v2672 = vpack.c.b16 %v2633, %v2632
        %v2673 = vpack.c.b16 %v2635, %v2634
        %v2674 = vpack.c.b16 %v2637, %v2636
        %v2675 = vpack.c.b16 %v2639, %v2638
        %v2676 = vpack.c.b16 %v2641, %v2640
        %v2677 = vpack.c.b16 %v2643, %v2642
        %v2678 = vpack.c.b16 %v2645, %v2644
        %v2679 = vpack.c.b16 %v2647, %v2646
        %2712 = vmatprep.subr.bf16.mxu0 0
        %2713 = vmatpush1.bf16.msra.mxu0 %v2655
        %2714 = vmatprep.subr.bf16.mxu0 0
        %2715 = vmatpush1.bf16.msra.mxu0 %v2654
        %2716 = vmatprep.subr.bf16.mxu0 0
        %2717 = vmatpush1.bf16.msra.mxu0 %v2653
        %2718 = vmatprep.subr.bf16.mxu0 0
        %2719 = vmatpush1.bf16.msra.mxu0 %v2652
        %2720 = vmatprep.subr.bf16.mxu0 0
        %2721 = vmatpush1.bf16.msra.mxu0 %v2651
        %2722 = vmatprep.subr.bf16.mxu0 0
        %2723 = vmatpush1.bf16.msra.mxu0 %v2650
        %2724 = vmatprep.subr.bf16.mxu0 0
        %2725 = vmatpush1.bf16.msra.mxu0 %v2649
        %2726 = vmatprep.subr.bf16.mxu0 0
        %2727 = vmatpush1.bf16.msra.mxu0 %v2648
        %2728 = vmatprep.subr.bf16.mxu0 0
        %2729 = vmatpush2.bf16.msra.mxu0 %v2663
        %2730 = vmatprep.subr.bf16.mxu0 0
        %2731 = vmatpush2.bf16.msra.mxu0 %v2662
        %2732 = vmatprep.subr.bf16.mxu0 0
        %2733 = vmatpush2.bf16.msra.mxu0 %v2661
        %2734 = vmatprep.subr.bf16.mxu0 0
        %2735 = vmatpush2.bf16.msra.mxu0 %v2660
        %2736 = vmatprep.subr.bf16.mxu0 0
        %2737 = vmatpush2.bf16.msra.mxu0 %v2659
        %2738 = vmatprep.subr.bf16.mxu0 0
        %2739 = vmatpush2.bf16.msra.mxu0 %v2658
        %2740 = vmatprep.subr.bf16.mxu0 0
        %2741 = vmatpush2.bf16.msra.mxu0 %v2657
        %2742 = vmatprep.subr.bf16.mxu0 0
        %2743 = vmatpush2.bf16.msra.mxu0 %v2656
        %2744 = vmatprep.mubr.bf16.mxu0 %v2517
        %2745 = vmatmul.mubr.bf16.gmra.mxu0 %v2516
        %v2746 = vpop.f32.mrf.mxu0
        %v2747 = vadd.f32 %v2494, %v2746
        %v2748 = vpop.f32.mrf.mxu0
        %v2749 = vpop.f32.mrf.mxu0
        %v2750 = vpop.f32.mrf.mxu0
        %2751 = vdwg.mxu0
        %2752 = vmatprep.subr.bf16.mxu0 0
        %2753 = vmatpush1.bf16.msra.mxu0 %v2671
        %2754 = vmatprep.subr.bf16.mxu0 0
        %2755 = vmatpush1.bf16.msra.mxu0 %v2670
        %2756 = vmatprep.subr.bf16.mxu0 0
        %2757 = vmatpush1.bf16.msra.mxu0 %v2669
        %2758 = vmatprep.subr.bf16.mxu0 0
        %2759 = vmatpush1.bf16.msra.mxu0 %v2668
        %2760 = vmatprep.subr.bf16.mxu0 0
        %2761 = vmatpush1.bf16.msra.mxu0 %v2667
        %2762 = vmatprep.subr.bf16.mxu0 0
        %2763 = vmatpush1.bf16.msra.mxu0 %v2666
        %2764 = vmatprep.subr.bf16.mxu0 0
        %2765 = vmatpush1.bf16.msra.mxu0 %v2665
        %2766 = vmatprep.subr.bf16.mxu0 0
        %2767 = vmatpush1.bf16.msra.mxu0 %v2664
        %2768 = vmatprep.subr.bf16.mxu0 0
        %2769 = vmatpush2.bf16.msra.mxu0 %v2679
        %2770 = vmatprep.subr.bf16.mxu0 0
        %2771 = vmatpush2.bf16.msra.mxu0 %v2678
        %2772 = vmatprep.subr.bf16.mxu0 0
        %2773 = vmatpush2.bf16.msra.mxu0 %v2677
        %2774 = vmatprep.subr.bf16.mxu0 0
        %2775 = vmatpush2.bf16.msra.mxu0 %v2676
        %2776 = vmatprep.subr.bf16.mxu0 0
        %2777 = vmatpush2.bf16.msra.mxu0 %v2675
        %2778 = vmatprep.subr.bf16.mxu0 0
        %2779 = vmatpush2.bf16.msra.mxu0 %v2674
        %2780 = vmatprep.subr.bf16.mxu0 0
        %2781 = vmatpush2.bf16.msra.mxu0 %v2673
        %2782 = vmatprep.subr.bf16.mxu0 0
        %2783 = vmatpush2.bf16.msra.mxu0 %v2672
        %2784 = vmatprep.mubr.bf16.mxu0 %v2519
        %2785 = vmatmul.mubr.bf16.gmra.mxu0 %v2518
        %v2786 = vpop.f32.mrf.mxu0
        %v2787 = vadd.f32 %v2747, %v2786
        %v2788 = vpop.f32.mrf.mxu0
        %v2789 = vpop.f32.mrf.mxu0
        %v2790 = vpop.f32.mrf.mxu0
        %2791 = vdwg.mxu0
        %v2792 = vadd.f32 %v1552, %v2787
        %v2793 = vld [vmem:[%s27] sm:$0x1]
        %v2794 = vld [vmem:[%s29] sm:$0x1]
        %v2795 = vsel %vm1536, %v2792, 0.0
        %2796 = vadd.xlane.f32.xlu0 %v2795
        %v2797 = vpop.xlane.xlu0 %2796
        %v2798 = vmul.f32 %v2797, %v1540
        %v2799 = vsub.f32 %v2792, %v2798
        %v2800 = vmul.f32 %v2799, %v2799
        %v2801 = vsel %vm1536, %v2800, 0.0
        %2802 = vadd.xlane.f32.xlu0 %v2801
        %v2803 = vpop.xlane.xlu0 %2802
        %v2804 = vmul.f32 %v2803, %v1540
        %v2805 = vadd.f32 %v2804, 1e-05
        %v2806 = vrsqrt.pop %v2805
        %v2807 = vmul.f32 %v2799, %v2806
        %v2808 = vmul.f32 %v2807, %v2793
        %v2809 = vadd.f32 %v2808, %v2794
        %v2810 = vld [vmem:[%s31] sm:$0xf]
        %v2811 = vld [vmem:[%s31 + $0x4] sm:$0xf]
        %v2812 = vld [vmem:[%s31 + $0x8] sm:$0xf]
        %v2813 = vld [vmem:[%s31 + $0xc] sm:$0xf]
        %v2814 = vld [vmem:[%s33] sm:$0x1]
        %v2815 = vpack.c.bf16 %v2809, %v2809
        %v2820 = vunpack.c.l.b16 %v2810
        %v2821 = vunpack.c.l.b16 %v2811
        %v2822 = vunpack.c.l.b16 %v2812
        %v2823 = vunpack.c.l.b16 %v2813
        %v2824 = vpack.c.b16 %v2821, %v2820
        %v2825 = vpack.c.b16 %v2823, %v2822
        %v2829 = vsel %vm1428, %v2815, 0
        %2831 = vmatprep.subr.bf16.mxu0 0
        %2832 = vmatpush1.bf16.msra.mxu0 0
        %2833 = vmatprep.subr.bf16.mxu0 0
        %2834 = vmatpush1.bf16.msra.mxu0 0
        %2835 = vmatprep.subr.bf16.mxu0 0
        %2836 = vmatpush1.bf16.msra.mxu0 0
        %2837 = vmatprep.subr.bf16.mxu0 0
        %2838 = vmatpush1.bf16.msra.mxu0 0
        %2839 = vmatprep.subr.bf16.mxu0 0
        %2840 = vmatpush1.bf16.msra.mxu0 0
        %2841 = vmatprep.subr.bf16.mxu0 0
        %2842 = vmatpush1.bf16.msra.mxu0 0
        %2843 = vmatprep.subr.bf16.mxu0 0
        %2844 = vmatpush1.bf16.msra.mxu0 %v2825
        %2845 = vmatprep.subr.bf16.mxu0 0
        %2846 = vmatpush1.bf16.msra.mxu0 %v2824
        %2847 = vmatprep.subr.bf16.mxu0 0
        %2848 = vmatpush2.bf16.msra.mxu0 0
        %2849 = vmatprep.subr.bf16.mxu0 0
        %2850 = vmatpush2.bf16.msra.mxu0 0
        %2851 = vmatprep.subr.bf16.mxu0 0
        %2852 = vmatpush2.bf16.msra.mxu0 0
        %2853 = vmatprep.subr.bf16.mxu0 0
        %2854 = vmatpush2.bf16.msra.mxu0 0
        %2855 = vmatprep.subr.bf16.mxu0 0
        %2856 = vmatpush2.bf16.msra.mxu0 0
        %2857 = vmatprep.subr.bf16.mxu0 0
        %2858 = vmatpush2.bf16.msra.mxu0 0
        %2859 = vmatprep.subr.bf16.mxu0 0
        %2860 = vmatpush2.bf16.msra.mxu0 0
        %2861 = vmatprep.subr.bf16.mxu0 0
        %2862 = vmatpush2.bf16.msra.mxu0 0
        %2863 = vmatprep.mubr.bf16.mxu0 0
        %2864 = vmatmul.mubr.bf16.gmra.mxu0 %v2829
        %v2865 = vpop.f32.mrf.mxu0
        %v2866 = vadd.f32 %v2814, %v2865
        %v2867 = vpop.f32.mrf.mxu0
        %v2868 = vpop.f32.mrf.mxu0
        %v2869 = vpop.f32.mrf.mxu0
        %2870 = vdwg.mxu0
        %v2871 = vmax.f32 %v2866, 0.0
        %v2872 = vld [vmem:[%s35] sm:$0xf]
        %v2873 = vld [vmem:[%s35 + $0x4] sm:$0xf]
        %v2874 = vld [vmem:[%s35 + $0x8] sm:$0xf]
        %v2875 = vld [vmem:[%s35 + $0xc] sm:$0xf]
        %v2876 = vld [vmem:[%s35 + $0x10] sm:$0xf]
        %v2877 = vld [vmem:[%s35 + $0x14] sm:$0xf]
        %v2878 = vld [vmem:[%s35 + $0x18] sm:$0xf]
        %v2879 = vld [vmem:[%s35 + $0x1c] sm:$0xf]
        %v2880 = vld [vmem:[%s35 + $0x20] sm:$0xf]
        %v2881 = vld [vmem:[%s35 + $0x24] sm:$0xf]
        %v2882 = vld [vmem:[%s35 + $0x28] sm:$0xf]
        %v2883 = vld [vmem:[%s35 + $0x2c] sm:$0xf]
        %v2884 = vld [vmem:[%s35 + $0x30] sm:$0xf]
        %v2885 = vld [vmem:[%s35 + $0x34] sm:$0xf]
        %v2886 = vld [vmem:[%s35 + $0x38] sm:$0xf]
        %v2887 = vld [vmem:[%s35 + $0x3c] sm:$0xf]
        %v2888 = vld [vmem:[%s37] sm:$0x1]
        %v2889 = vpack.c.bf16 %v2871, %v2871
        %v2906 = vunpack.c.l.b16 %v2872
        %v2907 = vunpack.c.l.b16 %v2873
        %v2908 = vunpack.c.l.b16 %v2874
        %v2909 = vunpack.c.l.b16 %v2875
        %v2910 = vunpack.c.l.b16 %v2876
        %v2911 = vunpack.c.l.b16 %v2877
        %v2912 = vunpack.c.l.b16 %v2878
        %v2913 = vunpack.c.l.b16 %v2879
        %v2914 = vunpack.c.l.b16 %v2880
        %v2915 = vunpack.c.l.b16 %v2881
        %v2916 = vunpack.c.l.b16 %v2882
        %v2917 = vunpack.c.l.b16 %v2883
        %v2918 = vunpack.c.l.b16 %v2884
        %v2919 = vunpack.c.l.b16 %v2885
        %v2920 = vunpack.c.l.b16 %v2886
        %v2921 = vunpack.c.l.b16 %v2887
        %v2922 = vpack.c.b16 %v2907, %v2906
        %v2923 = vpack.c.b16 %v2909, %v2908
        %v2924 = vpack.c.b16 %v2911, %v2910
        %v2925 = vpack.c.b16 %v2913, %v2912
        %v2926 = vpack.c.b16 %v2915, %v2914
        %v2927 = vpack.c.b16 %v2917, %v2916
        %v2928 = vpack.c.b16 %v2919, %v2918
        %v2929 = vpack.c.b16 %v2921, %v2920
        %2938 = vmatprep.subr.bf16.mxu0 0
        %2939 = vmatpush1.bf16.msra.mxu0 %v2929
        %2940 = vmatprep.subr.bf16.mxu0 0
        %2941 = vmatpush1.bf16.msra.mxu0 %v2928
        %2942 = vmatprep.subr.bf16.mxu0 0
        %2943 = vmatpush1.bf16.msra.mxu0 %v2927
        %2944 = vmatprep.subr.bf16.mxu0 0
        %2945 = vmatpush1.bf16.msra.mxu0 %v2926
        %2946 = vmatprep.subr.bf16.mxu0 0
        %2947 = vmatpush1.bf16.msra.mxu0 %v2925
        %2948 = vmatprep.subr.bf16.mxu0 0
        %2949 = vmatpush1.bf16.msra.mxu0 %v2924
        %2950 = vmatprep.subr.bf16.mxu0 0
        %2951 = vmatpush1.bf16.msra.mxu0 %v2923
        %2952 = vmatprep.subr.bf16.mxu0 0
        %2953 = vmatpush1.bf16.msra.mxu0 %v2922
        %2954 = vmatprep.subr.bf16.mxu0 0
        %2955 = vmatpush2.bf16.msra.mxu0 0
        %2956 = vmatprep.subr.bf16.mxu0 0
        %2957 = vmatpush2.bf16.msra.mxu0 0
        %2958 = vmatprep.subr.bf16.mxu0 0
        %2959 = vmatpush2.bf16.msra.mxu0 0
        %2960 = vmatprep.subr.bf16.mxu0 0
        %2961 = vmatpush2.bf16.msra.mxu0 0
        %2962 = vmatprep.subr.bf16.mxu0 0
        %2963 = vmatpush2.bf16.msra.mxu0 0
        %2964 = vmatprep.subr.bf16.mxu0 0
        %2965 = vmatpush2.bf16.msra.mxu0 0
        %2966 = vmatprep.subr.bf16.mxu0 0
        %2967 = vmatpush2.bf16.msra.mxu0 0
        %2968 = vmatprep.subr.bf16.mxu0 0
        %2969 = vmatpush2.bf16.msra.mxu0 0
        %2970 = vmatprep.mubr.bf16.mxu0 0
        %2971 = vmatmul.mubr.bf16.gmra.mxu0 %v2889
        %v2972 = vpop.f32.mrf.mxu0
        %v2973 = vadd.f32 %v2888, %v2972
        %v2974 = vpop.f32.mrf.mxu0
        %v2975 = vpop.f32.mrf.mxu0
        %v2976 = vpop.f32.mrf.mxu0
        %2977 = vdwg.mxu0
        %v2978 = vadd.f32 %v2809, %v2973
        %v2979 = vld [vmem:[%s39] sm:$0x1]
        %v2980 = vld [vmem:[%s41] sm:$0x1]
        %v2981 = vsel %vm1536, %v2978, 0.0
        %2982 = vadd.xlane.f32.xlu0 %v2981
        %v2983 = vpop.xlane.xlu0 %2982
        %v2984 = vmul.f32 %v2983, %v1540
        %v2985 = vsub.f32 %v2978, %v2984
        %v2986 = vmul.f32 %v2985, %v2985
        %v2987 = vsel %vm1536, %v2986, 0.0
        %2988 = vadd.xlane.f32.xlu0 %v2987
        %v2989 = vpop.xlane.xlu0 %2988
        %v2990 = vmul.f32 %v2989, %v1540
        %v2991 = vadd.f32 %v2990, 1e-05
        %v2992 = vrsqrt.pop %v2991
        %v2993 = vmul.f32 %v2985, %v2992
        %v2994 = vmul.f32 %v2993, %v2979
        %v2995 = vadd.f32 %v2994, %v2980
        %v2996 = vld [vmem:[%s43] sm:$0xf]
        %v2997 = vld [vmem:[%s43 + $0x4] sm:$0xf]
        %v2998 = vld [vmem:[%s43 + $0x8] sm:$0xf]
        %v2999 = vld [vmem:[%s43 + $0xc] sm:$0xf]
        %v3000 = vld [vmem:[%s45] sm:$0x1]
        %v3001 = vpack.c.bf16 %v2995, %v2995
        %v3006 = vunpack.c.l.b16 %v2996
        %v3007 = vunpack.c.l.b16 %v2997
        %v3008 = vunpack.c.l.b16 %v2998
        %v3009 = vunpack.c.l.b16 %v2999
        %v3010 = vpack.c.b16 %v3007, %v3006
        %v3011 = vpack.c.b16 %v3009, %v3008
        %v3015 = vsel %vm1428, %v3001, 0
        %3017 = vmatprep.subr.bf16.mxu0 0
        %3018 = vmatpush1.bf16.msra.mxu0 0
        %3019 = vmatprep.subr.bf16.mxu0 0
        %3020 = vmatpush1.bf16.msra.mxu0 0
        %3021 = vmatprep.subr.bf16.mxu0 0
        %3022 = vmatpush1.bf16.msra.mxu0 0
        %3023 = vmatprep.subr.bf16.mxu0 0
        %3024 = vmatpush1.bf16.msra.mxu0 0
        %3025 = vmatprep.subr.bf16.mxu0 0
        %3026 = vmatpush1.bf16.msra.mxu0 0
        %3027 = vmatprep.subr.bf16.mxu0 0
        %3028 = vmatpush1.bf16.msra.mxu0 0
        %3029 = vmatprep.subr.bf16.mxu0 0
        %3030 = vmatpush1.bf16.msra.mxu0 %v3011
        %3031 = vmatprep.subr.bf16.mxu0 0
        %3032 = vmatpush1.bf16.msra.mxu0 %v3010
        %3033 = vmatprep.subr.bf16.mxu0 0
        %3034 = vmatpush2.bf16.msra.mxu0 0
        %3035 = vmatprep.subr.bf16.mxu0 0
        %3036 = vmatpush2.bf16.msra.mxu0 0
        %3037 = vmatprep.subr.bf16.mxu0 0
        %3038 = vmatpush2.bf16.msra.mxu0 0
        %3039 = vmatprep.subr.bf16.mxu0 0
        %3040 = vmatpush2.bf16.msra.mxu0 0
        %3041 = vmatprep.subr.bf16.mxu0 0
        %3042 = vmatpush2.bf16.msra.mxu0 0
        %3043 = vmatprep.subr.bf16.mxu0 0
        %3044 = vmatpush2.bf16.msra.mxu0 0
        %3045 = vmatprep.subr.bf16.mxu0 0
        %3046 = vmatpush2.bf16.msra.mxu0 0
        %3047 = vmatprep.subr.bf16.mxu0 0
        %3048 = vmatpush2.bf16.msra.mxu0 0
        %3049 = vmatprep.mubr.bf16.mxu0 0
        %3050 = vmatmul.mubr.bf16.gmra.mxu0 %v3015
        %v3051 = vpop.f32.mrf.mxu0
        %v3052 = vadd.f32 %v3000, %v3051
        %v3053 = vpop.f32.mrf.mxu0
        %v3054 = vpop.f32.mrf.mxu0
        %v3055 = vpop.f32.mrf.mxu0
        %3056 = vdwg.mxu0
        %v3057 = vld [vmem:[%s47] sm:$0xf]
        %v3058 = vld [vmem:[%s47 + $0x4] sm:$0xf]
        %v3059 = vld [vmem:[%s47 + $0x8] sm:$0xf]
        %v3060 = vld [vmem:[%s47 + $0xc] sm:$0xf]
        %v3061 = vld [vmem:[%s49] sm:$0x1]
        %v3062 = vpack.c.bf16 %v3052, %v3052
        %v3067 = vunpack.c.l.b16 %v3057
        %v3068 = vunpack.c.l.b16 %v3058
        %v3069 = vunpack.c.l.b16 %v3059
        %v3070 = vunpack.c.l.b16 %v3060
        %v3071 = vpack.c.b16 %v3068, %v3067
        %v3072 = vpack.c.b16 %v3070, %v3069
        %v3076 = vsel %vm1428, %v3062, 0
        %3078 = vmatprep.subr.bf16.mxu0 0
        %3079 = vmatpush1.bf16.msra.mxu0 0
        %3080 = vmatprep.subr.bf16.mxu0 0
        %3081 = vmatpush1.bf16.msra.mxu0 0
        %3082 = vmatprep.subr.bf16.mxu0 0
        %3083 = vmatpush1.bf16.msra.mxu0 0
        %3084 = vmatprep.subr.bf16.mxu0 0
        %3085 = vmatpush1.bf16.msra.mxu0 0
        %3086 = vmatprep.subr.bf16.mxu0 0
        %3087 = vmatpush1.bf16.msra.mxu0 0
        %3088 = vmatprep.subr.bf16.mxu0 0
        %3089 = vmatpush1.bf16.msra.mxu0 0
        %3090 = vmatprep.subr.bf16.mxu0 0
        %3091 = vmatpush1.bf16.msra.mxu0 %v3072
        %3092 = vmatprep.subr.bf16.mxu0 0
        %3093 = vmatpush1.bf16.msra.mxu0 %v3071
        %3094 = vmatprep.subr.bf16.mxu0 0
        %3095 = vmatpush2.bf16.msra.mxu0 0
        %3096 = vmatprep.subr.bf16.mxu0 0
        %3097 = vmatpush2.bf16.msra.mxu0 0
        %3098 = vmatprep.subr.bf16.mxu0 0
        %3099 = vmatpush2.bf16.msra.mxu0 0
        %3100 = vmatprep.subr.bf16.mxu0 0
        %3101 = vmatpush2.bf16.msra.mxu0 0
        %3102 = vmatprep.subr.bf16.mxu0 0
        %3103 = vmatpush2.bf16.msra.mxu0 0
        %3104 = vmatprep.subr.bf16.mxu0 0
        %3105 = vmatpush2.bf16.msra.mxu0 0
        %3106 = vmatprep.subr.bf16.mxu0 0
        %3107 = vmatpush2.bf16.msra.mxu0 0
        %3108 = vmatprep.subr.bf16.mxu0 0
        %3109 = vmatpush2.bf16.msra.mxu0 0
        %3110 = vmatprep.mubr.bf16.mxu0 0
        %3111 = vmatmul.mubr.bf16.gmra.mxu0 %v3076
        %v3112 = vpop.f32.mrf.mxu0
        %v3113 = vadd.f32 %v3061, %v3112
        %v3114 = vpop.f32.mrf.mxu0
        %v3115 = vpop.f32.mrf.mxu0
        %v3116 = vpop.f32.mrf.mxu0
        %3117 = vdwg.mxu0
        %v3118 = vadd.f32 %v2995, %v3113
        %v3119 = vld [vmem:[%s51] sm:$0x1]
        %v3120 = vld [vmem:[%s53] sm:$0x1]
        %v3121 = vsel %vm1536, %v3118, 0.0
        %3122 = vadd.xlane.f32.xlu0 %v3121
        %v3123 = vpop.xlane.xlu0 %3122
        %v3124 = vmul.f32 %v3123, %v1540
        %v3125 = vsub.f32 %v3118, %v3124
        %v3126 = vmul.f32 %v3125, %v3125
        %v3127 = vsel %vm1536, %v3126, 0.0
        %3128 = vadd.xlane.f32.xlu0 %v3127
        %v3129 = vpop.xlane.xlu0 %3128
        %v3130 = vmul.f32 %v3129, %v1540
        %v3131 = vadd.f32 %v3130, 1e-05
        %v3132 = vrsqrt.pop %v3131
        %v3133 = vmul.f32 %v3125, %v3132
        %v3134 = vmul.f32 %v3133, %v3119
        %v3135 = vadd.f32 %v3134, %v3120
        %v3136 = vld [vmem:[%s55] sm:$0xff]
        %v3137 = vld [vmem:[%s55 + $0x8] sm:$0xff]
        %v3138 = vld [vmem:[%s55 + $0x10] sm:$0xff]
        %v3139 = vld [vmem:[%s55 + $0x18] sm:$0xff]
        %v3140 = vld [vmem:[%s55 + $0x20] sm:$0xff]
        %v3141 = vld [vmem:[%s55 + $0x28] sm:$0xff]
        %v3142 = vld [vmem:[%s55 + $0x30] sm:$0xff]
        %v3143 = vld [vmem:[%s55 + $0x38] sm:$0xff]
        %v3144 = vld [vmem:[%s57] sm:$0xf]
        %v3145 = vpack.c.bf16 %v3135, %v3135
        %v3154 = vunpack.c.l.b16 %v3136
        %v3155 = vunpack.c.h.b16 %v3136
        %v3156 = vunpack.c.l.b16 %v3137
        %v3157 = vunpack.c.h.b16 %v3137
        %v3158 = vunpack.c.l.b16 %v3138
        %v3159 = vunpack.c.h.b16 %v3138
        %v3160 = vunpack.c.l.b16 %v3139
        %v3161 = vunpack.c.h.b16 %v3139
        %v3162 = vunpack.c.l.b16 %v3140
        %v3163 = vunpack.c.h.b16 %v3140
        %v3164 = vunpack.c.l.b16 %v3141
        %v3165 = vunpack.c.h.b16 %v3141
        %v3166 = vunpack.c.l.b16 %v3142
        %v3167 = vunpack.c.h.b16 %v3142
        %v3168 = vunpack.c.l.b16 %v3143
        %v3169 = vunpack.c.h.b16 %v3143
        %v3170 = vpack.c.b16 %v3158, %v3154
        %v3171 = vpack.c.b16 %v3159, %v3155
        %v3172 = vpack.c.b16 %v3160, %v3156
        %v3173 = vpack.c.b16 %v3161, %v3157
        %v3174 = vpack.c.b16 %v3166, %v3162
        %v3175 = vpack.c.b16 %v3167, %v3163
        %v3176 = vpack.c.b16 %v3168, %v3164
        %v3177 = vpack.c.b16 %v3169, %v3165
        %v3187 = vlaneseq
        %v3188 = vshrl.u32 %v3187, 7
        %v3189 = vsub.s32 0, %v3188
        %v3190 = vrot.slane %v3144, %v3189
        %v3191 = vlaneseq
        %v3192 = vshrl.u32 %v3191, 7
        %v3193 = vsub.s32 1, %v3192
        %v3194 = vrot.slane %v3144, %v3193
        %v3195 = vlaneseq
        %v3196 = vshrl.u32 %v3195, 7
        %v3197 = vsub.s32 2, %v3196
        %v3198 = vrot.slane %v3144, %v3197
        %v3199 = vlaneseq
        %v3200 = vshrl.u32 %v3199, 7
        %v3201 = vsub.s32 3, %v3200
        %v3202 = vrot.slane %v3144, %v3201
        %v3208 = vsel %vm1428, %v3145, 0
        %3210 = vmatprep.subr.bf16.mxu0 0
        %3211 = vmatpush1.bf16.msra.mxu0 0
        %3212 = vmatprep.subr.bf16.mxu0 0
        %3213 = vmatpush1.bf16.msra.mxu0 0
        %3214 = vmatprep.subr.bf16.mxu0 0
        %3215 = vmatpush1.bf16.msra.mxu0 0
        %3216 = vmatprep.subr.bf16.mxu0 0
        %3217 = vmatpush1.bf16.msra.mxu0 0
        %3218 = vmatprep.subr.bf16.mxu0 0
        %3219 = vmatpush1.bf16.msra.mxu0 0
        %3220 = vmatprep.subr.bf16.mxu0 0
        %3221 = vmatpush1.bf16.msra.mxu0 0
        %3222 = vmatprep.subr.bf16.mxu0 %v3175
        %3223 = vmatpush1.bf16.msra.mxu0 %v3174
        %3224 = vmatprep.subr.bf16.mxu0 %v3171
        %3225 = vmatpush1.bf16.msra.mxu0 %v3170
        %3226 = vmatprep.subr.bf16.mxu0 0
        %3227 = vmatpush2.bf16.msra.mxu0 0
        %3228 = vmatprep.subr.bf16.mxu0 0
        %3229 = vmatpush2.bf16.msra.mxu0 0
        %3230 = vmatprep.subr.bf16.mxu0 0
        %3231 = vmatpush2.bf16.msra.mxu0 0
        %3232 = vmatprep.subr.bf16.mxu0 0
        %3233 = vmatpush2.bf16.msra.mxu0 0
        %3234 = vmatprep.subr.bf16.mxu0 0
        %3235 = vmatpush2.bf16.msra.mxu0 0
        %3236 = vmatprep.subr.bf16.mxu0 0
        %3237 = vmatpush2.bf16.msra.mxu0 0
        %3238 = vmatprep.subr.bf16.mxu0 0
        %3239 = vmatpush2.bf16.msra.mxu0 0
        %3240 = vmatprep.subr.bf16.mxu0 0
        %3241 = vmatpush2.bf16.msra.mxu0 0
        %3242 = vmatprep.mubr.bf16.mxu0 0
        %3243 = vmatmul.mubr.bf16.gmra.mxu0 %v3208
        %v3244 = vpop.f32.mrf.mxu0
        %v3245 = vadd.f32 %v3190, %v3244
        %v3246 = vpop.f32.mrf.mxu0
        %v3247 = vadd.f32 %v3194, %v3246
        %v3248 = vpop.f32.mrf.mxu0
        %v3249 = vpop.f32.mrf.mxu0
        %3250 = vdwg.mxu0
        %3251 = vmatprep.subr.bf16.mxu0 0
        %3252 = vmatpush1.bf16.msra.mxu0 0
        %3253 = vmatprep.subr.bf16.mxu0 0
        %3254 = vmatpush1.bf16.msra.mxu0 0
        %3255 = vmatprep.subr.bf16.mxu0 0
        %3256 = vmatpush1.bf16.msra.mxu0 0
        %3257 = vmatprep.subr.bf16.mxu0 0
        %3258 = vmatpush1.bf16.msra.mxu0 0
        %3259 = vmatprep.subr.bf16.mxu0 0
        %3260 = vmatpush1.bf16.msra.mxu0 0
        %3261 = vmatprep.subr.bf16.mxu0 0
        %3262 = vmatpush1.bf16.msra.mxu0 0
        %3263 = vmatprep.subr.bf16.mxu0 %v3177
        %3264 = vmatpush1.bf16.msra.mxu0 %v3176
        %3265 = vmatprep.subr.bf16.mxu0 %v3173
        %3266 = vmatpush1.bf16.msra.mxu0 %v3172
        %3267 = vmatprep.subr.bf16.mxu0 0
        %3268 = vmatpush2.bf16.msra.mxu0 0
        %3269 = vmatprep.subr.bf16.mxu0 0
        %3270 = vmatpush2.bf16.msra.mxu0 0
        %3271 = vmatprep.subr.bf16.mxu0 0
        %3272 = vmatpush2.bf16.msra.mxu0 0
        %3273 = vmatprep.subr.bf16.mxu0 0
        %3274 = vmatpush2.bf16.msra.mxu0 0
        %3275 = vmatprep.subr.bf16.mxu0 0
        %3276 = vmatpush2.bf16.msra.mxu0 0
        %3277 = vmatprep.subr.bf16.mxu0 0
        %3278 = vmatpush2.bf16.msra.mxu0 0
        %3279 = vmatprep.subr.bf16.mxu0 0
        %3280 = vmatpush2.bf16.msra.mxu0 0
        %3281 = vmatprep.subr.bf16.mxu0 0
        %3282 = vmatpush2.bf16.msra.mxu0 0
        %3283 = vmatprep.mubr.bf16.mxu0 0
        %3284 = vmatmul.mubr.bf16.gmra.mxu0 %v3208
        %v3285 = vpop.f32.mrf.mxu0
        %v3286 = vadd.f32 %v3198, %v3285
        %v3287 = vpop.f32.mrf.mxu0
        %v3288 = vadd.f32 %v3202, %v3287
        %v3289 = vpop.f32.mrf.mxu0
        %v3290 = vpop.f32.mrf.mxu0
        %3291 = vdwg.mxu0
        %v3292 = vpack.c.bf16 %v3245, %v3245
        %v3293 = vpack.c.bf16 %v3247, %v3247
        %v3294 = vpack.c.bf16 %v3286, %v3286
        %v3295 = vpack.c.bf16 %v3288, %v3288
        %v3296 = vld [vmem:[%s59] sm:$0xff]
        %v3297 = vld [vmem:[%s59 + $0x8] sm:$0xff]
        %v3298 = vld [vmem:[%s59 + $0x10] sm:$0xff]
        %v3299 = vld [vmem:[%s59 + $0x18] sm:$0xff]
        %v3300 = vld [vmem:[%s59 + $0x20] sm:$0xff]
        %v3301 = vld [vmem:[%s59 + $0x28] sm:$0xff]
        %v3302 = vld [vmem:[%s59 + $0x30] sm:$0xff]
        %v3303 = vld [vmem:[%s59 + $0x38] sm:$0xff]
        %v3304 = vld [vmem:[%s59 + $0x40] sm:$0xff]
        %v3305 = vld [vmem:[%s59 + $0x48] sm:$0xff]
        %v3306 = vld [vmem:[%s59 + $0x50] sm:$0xff]
        %v3307 = vld [vmem:[%s59 + $0x58] sm:$0xff]
        %v3308 = vld [vmem:[%s59 + $0x60] sm:$0xff]
        %v3309 = vld [vmem:[%s59 + $0x68] sm:$0xff]
        %v3310 = vld [vmem:[%s59 + $0x70] sm:$0xff]
        %v3311 = vld [vmem:[%s59 + $0x78] sm:$0xff]
        %v3312 = vld [vmem:[%s61] sm:$0xff]
        %v3314 = vlaneseq
        %v3315 = vshrl.u32 %v3314, 7
        %v3316 = vsub.s32 0, %v3315
        %v3317 = vrot.slane %v3312, %v3316
        %v3318 = vlaneseq
        %v3319 = vshrl.u32 %v3318, 7
        %v3320 = vsub.s32 1, %v3319
        %v3321 = vrot.slane %v3312, %v3320
        %v3322 = vlaneseq
        %v3323 = vshrl.u32 %v3322, 7
        %v3324 = vsub.s32 2, %v3323
        %v3325 = vrot.slane %v3312, %v3324
        %v3326 = vlaneseq
        %v3327 = vshrl.u32 %v3326, 7
        %v3328 = vsub.s32 3, %v3327
        %v3329 = vrot.slane %v3312, %v3328
        %v3330 = vlaneseq
        %v3331 = vshrl.u32 %v3330, 7
        %v3332 = vsub.s32 4, %v3331
        %v3333 = vrot.slane %v3312, %v3332
        %v3334 = vlaneseq
        %v3335 = vshrl.u32 %v3334, 7
        %v3336 = vsub.s32 5, %v3335
        %v3337 = vrot.slane %v3312, %v3336
        %v3338 = vlaneseq
        %v3339 = vshrl.u32 %v3338, 7
        %v3340 = vsub.s32 6, %v3339
        %v3341 = vrot.slane %v3312, %v3340
        %v3342 = vlaneseq
        %v3343 = vshrl.u32 %v3342, 7
        %v3344 = vsub.s32 7, %v3343
        %v3345 = vrot.slane %v3312, %v3344
        %v3370 = vunpack.c.l.b16 %v3296
        %v3371 = vunpack.c.h.b16 %v3296
        %v3372 = vunpack.c.l.b16 %v3297
        %v3373 = vunpack.c.h.b16 %v3297
        %v3374 = vunpack.c.l.b16 %v3298
        %v3375 = vunpack.c.h.b16 %v3298
        %v3376 = vunpack.c.l.b16 %v3299
        %v3377 = vunpack.c.h.b16 %v3299
        %v3378 = vunpack.c.l.b16 %v3300
        %v3379 = vunpack.c.h.b16 %v3300
        %v3380 = vunpack.c.l.b16 %v3301
        %v3381 = vunpack.c.h.b16 %v3301
        %v3382 = vunpack.c.l.b16 %v3302
        %v3383 = vunpack.c.h.b16 %v3302
        %v3384 = vunpack.c.l.b16 %v3303
        %v3385 = vunpack.c.h.b16 %v3303
        %v3386 = vunpack.c.l.b16 %v3304
        %v3387 = vunpack.c.h.b16 %v3304
        %v3388 = vunpack.c.l.b16 %v3305
        %v3389 = vunpack.c.h.b16 %v3305
        %v3390 = vunpack.c.l.b16 %v3306
        %v3391 = vunpack.c.h.b16 %v3306
        %v3392 = vunpack.c.l.b16 %v3307
        %v3393 = vunpack.c.h.b16 %v3307
        %v3394 = vunpack.c.l.b16 %v3308
        %v3395 = vunpack.c.h.b16 %v3308
        %v3396 = vunpack.c.l.b16 %v3309
        %v3397 = vunpack.c.h.b16 %v3309
        %v3398 = vunpack.c.l.b16 %v3310
        %v3399 = vunpack.c.h.b16 %v3310
        %v3400 = vunpack.c.l.b16 %v3311
        %v3401 = vunpack.c.h.b16 %v3311
        %v3402 = vpack.c.b16 %v3378, %v3370
        %v3403 = vpack.c.b16 %v3379, %v3371
        %v3404 = vpack.c.b16 %v3380, %v3372
        %v3405 = vpack.c.b16 %v3381, %v3373
        %v3406 = vpack.c.b16 %v3382, %v3374
        %v3407 = vpack.c.b16 %v3383, %v3375
        %v3408 = vpack.c.b16 %v3384, %v3376
        %v3409 = vpack.c.b16 %v3385, %v3377
        %v3410 = vpack.c.b16 %v3394, %v3386
        %v3411 = vpack.c.b16 %v3395, %v3387
        %v3412 = vpack.c.b16 %v3396, %v3388
        %v3413 = vpack.c.b16 %v3397, %v3389
        %v3414 = vpack.c.b16 %v3398, %v3390
        %v3415 = vpack.c.b16 %v3399, %v3391
        %v3416 = vpack.c.b16 %v3400, %v3392
        %v3417 = vpack.c.b16 %v3401, %v3393
        %3434 = vmatprep.subr.bf16.mxu0 0
        %3435 = vmatpush1.bf16.msra.mxu0 0
        %3436 = vmatprep.subr.bf16.mxu0 0
        %3437 = vmatpush1.bf16.msra.mxu0 0
        %3438 = vmatprep.subr.bf16.mxu0 0
        %3439 = vmatpush1.bf16.msra.mxu0 0
        %3440 = vmatprep.subr.bf16.mxu0 0
        %3441 = vmatpush1.bf16.msra.mxu0 0
        %3442 = vmatprep.subr.bf16.mxu0 0
        %3443 = vmatpush1.bf16.msra.mxu0 0
        %3444 = vmatprep.subr.bf16.mxu0 0
        %3445 = vmatpush1.bf16.msra.mxu0 0
        %3446 = vmatprep.subr.bf16.mxu0 %v3411
        %3447 = vmatpush1.bf16.msra.mxu0 %v3410
        %3448 = vmatprep.subr.bf16.mxu0 %v3403
        %3449 = vmatpush1.bf16.msra.mxu0 %v3402
        %3450 = vmatprep.subr.bf16.mxu0 0
        %3451 = vmatpush2.bf16.msra.mxu0 0
        %3452 = vmatprep.subr.bf16.mxu0 0
        %3453 = vmatpush2.bf16.msra.mxu0 0
        %3454 = vmatprep.subr.bf16.mxu0 0
        %3455 = vmatpush2.bf16.msra.mxu0 0
        %3456 = vmatprep.subr.bf16.mxu0 0
        %3457 = vmatpush2.bf16.msra.mxu0 0
        %3458 = vmatprep.subr.bf16.mxu0 0
        %3459 = vmatpush2.bf16.msra.mxu0 0
        %3460 = vmatprep.subr.bf16.mxu0 0
        %3461 = vmatpush2.bf16.msra.mxu0 0
        %3462 = vmatprep.subr.bf16.mxu0 0
        %3463 = vmatpush2.bf16.msra.mxu0 0
        %3464 = vmatprep.subr.bf16.mxu0 0
        %3465 = vmatpush2.bf16.msra.mxu0 0
        %3466 = vmatprep.mubr.bf16.mxu0 0
        %3467 = vmatmul.mubr.bf16.gmra.mxu0 %v1852
        %v3468 = vpop.f32.mrf.mxu0
        %v3469 = vadd.f32 %v3317, %v3468
        %v3470 = vpop.f32.mrf.mxu0
        %v3471 = vadd.f32 %v3321, %v3470
        %v3472 = vpop.f32.mrf.mxu0
        %v3473 = vpop.f32.mrf.mxu0
        %3474 = vdwg.mxu0
        %3475 = vmatprep.subr.bf16.mxu0 0
        %3476 = vmatpush1.bf16.msra.mxu0 0
        %3477 = vmatprep.subr.bf16.mxu0 0
        %3478 = vmatpush1.bf16.msra.mxu0 0
        %3479 = vmatprep.subr.bf16.mxu0 0
        %3480 = vmatpush1.bf16.msra.mxu0 0
        %3481 = vmatprep.subr.bf16.mxu0 0
        %3482 = vmatpush1.bf16.msra.mxu0 0
        %3483 = vmatprep.subr.bf16.mxu0 0
        %3484 = vmatpush1.bf16.msra.mxu0 0
        %3485 = vmatprep.subr.bf16.mxu0 0
        %3486 = vmatpush1.bf16.msra.mxu0 0
        %3487 = vmatprep.subr.bf16.mxu0 %v3413
        %3488 = vmatpush1.bf16.msra.mxu0 %v3412
        %3489 = vmatprep.subr.bf16.mxu0 %v3405
        %3490 = vmatpush1.bf16.msra.mxu0 %v3404
        %3491 = vmatprep.subr.bf16.mxu0 0
        %3492 = vmatpush2.bf16.msra.mxu0 0
        %3493 = vmatprep.subr.bf16.mxu0 0
        %3494 = vmatpush2.bf16.msra.mxu0 0
        %3495 = vmatprep.subr.bf16.mxu0 0
        %3496 = vmatpush2.bf16.msra.mxu0 0
        %3497 = vmatprep.subr.bf16.mxu0 0
        %3498 = vmatpush2.bf16.msra.mxu0 0
        %3499 = vmatprep.subr.bf16.mxu0 0
        %3500 = vmatpush2.bf16.msra.mxu0 0
        %3501 = vmatprep.subr.bf16.mxu0 0
        %3502 = vmatpush2.bf16.msra.mxu0 0
        %3503 = vmatprep.subr.bf16.mxu0 0
        %3504 = vmatpush2.bf16.msra.mxu0 0
        %3505 = vmatprep.subr.bf16.mxu0 0
        %3506 = vmatpush2.bf16.msra.mxu0 0
        %3507 = vmatprep.mubr.bf16.mxu0 0
        %3508 = vmatmul.mubr.bf16.gmra.mxu0 %v1852
        %v3509 = vpop.f32.mrf.mxu0
        %v3510 = vadd.f32 %v3325, %v3509
        %v3511 = vpop.f32.mrf.mxu0
        %v3512 = vadd.f32 %v3329, %v3511
        %v3513 = vpop.f32.mrf.mxu0
        %v3514 = vpop.f32.mrf.mxu0
        %3515 = vdwg.mxu0
        %3516 = vmatprep.subr.bf16.mxu0 0
        %3517 = vmatpush1.bf16.msra.mxu0 0
        %3518 = vmatprep.subr.bf16.mxu0 0
        %3519 = vmatpush1.bf16.msra.mxu0 0
        %3520 = vmatprep.subr.bf16.mxu0 0
        %3521 = vmatpush1.bf16.msra.mxu0 0
        %3522 = vmatprep.subr.bf16.mxu0 0
        %3523 = vmatpush1.bf16.msra.mxu0 0
        %3524 = vmatprep.subr.bf16.mxu0 0
        %3525 = vmatpush1.bf16.msra.mxu0 0
        %3526 = vmatprep.subr.bf16.mxu0 0
        %3527 = vmatpush1.bf16.msra.mxu0 0
        %3528 = vmatprep.subr.bf16.mxu0 %v3415
        %3529 = vmatpush1.bf16.msra.mxu0 %v3414
        %3530 = vmatprep.subr.bf16.mxu0 %v3407
        %3531 = vmatpush1.bf16.msra.mxu0 %v3406
        %3532 = vmatprep.subr.bf16.mxu0 0
        %3533 = vmatpush2.bf16.msra.mxu0 0
        %3534 = vmatprep.subr.bf16.mxu0 0
        %3535 = vmatpush2.bf16.msra.mxu0 0
        %3536 = vmatprep.subr.bf16.mxu0 0
        %3537 = vmatpush2.bf16.msra.mxu0 0
        %3538 = vmatprep.subr.bf16.mxu0 0
        %3539 = vmatpush2.bf16.msra.mxu0 0
        %3540 = vmatprep.subr.bf16.mxu0 0
        %3541 = vmatpush2.bf16.msra.mxu0 0
        %3542 = vmatprep.subr.bf16.mxu0 0
        %3543 = vmatpush2.bf16.msra.mxu0 0
        %3544 = vmatprep.subr.bf16.mxu0 0
        %3545 = vmatpush2.bf16.msra.mxu0 0
        %3546 = vmatprep.subr.bf16.mxu0 0
        %3547 = vmatpush2.bf16.msra.mxu0 0
        %3548 = vmatprep.mubr.bf16.mxu0 0
        %3549 = vmatmul.mubr.bf16.gmra.mxu0 %v1852
        %v3550 = vpop.f32.mrf.mxu0
        %v3551 = vadd.f32 %v3333, %v3550
        %v3552 = vpop.f32.mrf.mxu0
        %v3553 = vadd.f32 %v3337, %v3552
        %v3554 = vpop.f32.mrf.mxu0
        %v3555 = vpop.f32.mrf.mxu0
        %3556 = vdwg.mxu0
        %3557 = vmatprep.subr.bf16.mxu0 0
        %3558 = vmatpush1.bf16.msra.mxu0 0
        %3559 = vmatprep.subr.bf16.mxu0 0
        %3560 = vmatpush1.bf16.msra.mxu0 0
        %3561 = vmatprep.subr.bf16.mxu0 0
        %3562 = vmatpush1.bf16.msra.mxu0 0
        %3563 = vmatprep.subr.bf16.mxu0 0
        %3564 = vmatpush1.bf16.msra.mxu0 0
        %3565 = vmatprep.subr.bf16.mxu0 0
        %3566 = vmatpush1.bf16.msra.mxu0 0
        %3567 = vmatprep.subr.bf16.mxu0 0
        %3568 = vmatpush1.bf16.msra.mxu0 0
        %3569 = vmatprep.subr.bf16.mxu0 %v3417
        %3570 = vmatpush1.bf16.msra.mxu0 %v3416
        %3571 = vmatprep.subr.bf16.mxu0 %v3409
        %3572 = vmatpush1.bf16.msra.mxu0 %v3408
        %3573 = vmatprep.subr.bf16.mxu0 0
        %3574 = vmatpush2.bf16.msra.mxu0 0
        %3575 = vmatprep.subr.bf16.mxu0 0
        %3576 = vmatpush2.bf16.msra.mxu0 0
        %3577 = vmatprep.subr.bf16.mxu0 0
        %3578 = vmatpush2.bf16.msra.mxu0 0
        %3579 = vmatprep.subr.bf16.mxu0 0
        %3580 = vmatpush2.bf16.msra.mxu0 0
        %3581 = vmatprep.subr.bf16.mxu0 0
        %3582 = vmatpush2.bf16.msra.mxu0 0
        %3583 = vmatprep.subr.bf16.mxu0 0
        %3584 = vmatpush2.bf16.msra.mxu0 0
        %3585 = vmatprep.subr.bf16.mxu0 0
        %3586 = vmatpush2.bf16.msra.mxu0 0
        %3587 = vmatprep.subr.bf16.mxu0 0
        %3588 = vmatpush2.bf16.msra.mxu0 0
        %3589 = vmatprep.mubr.bf16.mxu0 0
        %3590 = vmatmul.mubr.bf16.gmra.mxu0 %v1852
        %v3591 = vpop.f32.mrf.mxu0
        %v3592 = vadd.f32 %v3341, %v3591
        %v3593 = vpop.f32.mrf.mxu0
        %v3594 = vadd.f32 %v3345, %v3593
        %v3595 = vpop.f32.mrf.mxu0
        %v3596 = vpop.f32.mrf.mxu0
        %3597 = vdwg.mxu0
        %v3598 = vpack.c.bf16 %v3469, %v3469
        %v3599 = vpack.c.bf16 %v3471, %v3471
        %v3600 = vpack.c.bf16 %v3510, %v3510
        %v3601 = vpack.c.bf16 %v3512, %v3512
        %v3602 = vpack.c.bf16 %v3551, %v3551
        %v3603 = vpack.c.bf16 %v3553, %v3553
        %v3604 = vpack.c.bf16 %v3592, %v3592
        %v3605 = vpack.c.bf16 %v3594, %v3594
        %3606 = vmatprep.subr.bf16.mxu0 0
        %3607 = vmatpush1.bf16.xpose.msra.mxu0 0
        %3608 = vmatprep.subr.bf16.mxu0 0
        %3609 = vmatpush1.bf16.xpose.msra.mxu0 0
        %3610 = vmatprep.subr.bf16.mxu0 0
        %3611 = vmatpush1.bf16.xpose.msra.mxu0 0
        %3612 = vmatprep.subr.bf16.mxu0 0
        %3613 = vmatpush1.bf16.xpose.msra.mxu0 0
        %3614 = vmatprep.subr.bf16.mxu0 0
        %3615 = vmatpush1.bf16.xpose.msra.mxu0 0
        %3616 = vmatprep.subr.bf16.mxu0 0
        %3617 = vmatpush1.bf16.xpose.msra.mxu0 0
        %3618 = vmatprep.subr.bf16.mxu0 0
        %3619 = vmatpush1.bf16.xpose.msra.mxu0 0
        %3620 = vmatprep.subr.bf16.mxu0 0
        %3621 = vmatpush1.bf16.xpose.msra.mxu0 %v3598
        %3622 = vmatprep.subr.bf16.mxu0 0
        %3623 = vmatpush2.bf16.xpose.msra.mxu0 0
        %3624 = vmatprep.subr.bf16.mxu0 0
        %3625 = vmatpush2.bf16.xpose.msra.mxu0 0
        %3626 = vmatprep.subr.bf16.mxu0 0
        %3627 = vmatpush2.bf16.xpose.msra.mxu0 0
        %3628 = vmatprep.subr.bf16.mxu0 0
        %3629 = vmatpush2.bf16.xpose.msra.mxu0 0
        %3630 = vmatprep.subr.bf16.mxu0 0
        %3631 = vmatpush2.bf16.xpose.msra.mxu0 0
        %3632 = vmatprep.subr.bf16.mxu0 0
        %3633 = vmatpush2.bf16.xpose.msra.mxu0 0
        %3634 = vmatprep.subr.bf16.mxu0 0
        %3635 = vmatpush2.bf16.xpose.msra.mxu0 0
        %3636 = vmatprep.subr.bf16.mxu0 0
        %3637 = vmatpush2.bf16.xpose.msra.mxu0 0
        %3638 = vmatprep.mubr.bf16.mxu0 0
        %3639 = vmatmul.mubr.bf16.gmra.mxu0 %v3292
        %v3640 = vpop.f32.mrf.mxu0
        %v3641 = vadd.f32 0.0, %v3640
        %v3642 = vpop.f32.mrf.mxu0
        %v3643 = vpop.f32.mrf.mxu0
        %v3644 = vpop.f32.mrf.mxu0
        %3645 = vdwg.mxu0
        %v3646 = vsel %vm2066, %v3641, -inf
        %3647 = vmax.xlane.f32.xlu0 %v3646
        %v3648 = vpop.xlane.xlu0 %3647
        %v3649 = vsub.f32 %v3641, %v3648
        %v3650 = vmul.f32 %v3649, 1.442695
        %v3651 = vpow.pop %v3650
        %v3652 = vsel %vm2066, %v3651, 0.0
        %3653 = vadd.xlane.f32.xlu0 %v3652
        %v3654 = vpop.xlane.xlu0 %3653
        %v3655 = vrcp.pop %v3654
        %v3656 = vmul.f32 %v3651, %v3655
        %v3657 = vpack.c.bf16 %v3656, %v3656
        %v3659 = vsel %vm2079, %v3657, 0
        %v3662 = vsel %vm2083, %v3602, 0
        %3664 = vmatprep.subr.bf16.mxu0 0
        %3665 = vmatpush1.bf16.msra.mxu0 0
        %3666 = vmatprep.subr.bf16.mxu0 0
        %3667 = vmatpush1.bf16.msra.mxu0 0
        %3668 = vmatprep.subr.bf16.mxu0 0
        %3669 = vmatpush1.bf16.msra.mxu0 0
        %3670 = vmatprep.subr.bf16.mxu0 0
        %3671 = vmatpush1.bf16.msra.mxu0 0
        %3672 = vmatprep.subr.bf16.mxu0 0
        %3673 = vmatpush1.bf16.msra.mxu0 0
        %3674 = vmatprep.subr.bf16.mxu0 0
        %3675 = vmatpush1.bf16.msra.mxu0 0
        %3676 = vmatprep.subr.bf16.mxu0 0
        %3677 = vmatpush1.bf16.msra.mxu0 0
        %3678 = vmatprep.subr.bf16.mxu0 0
        %3679 = vmatpush1.bf16.msra.mxu0 %v3662
        %3680 = vmatprep.subr.bf16.mxu0 0
        %3681 = vmatpush2.bf16.msra.mxu0 0
        %3682 = vmatprep.subr.bf16.mxu0 0
        %3683 = vmatpush2.bf16.msra.mxu0 0
        %3684 = vmatprep.subr.bf16.mxu0 0
        %3685 = vmatpush2.bf16.msra.mxu0 0
        %3686 = vmatprep.subr.bf16.mxu0 0
        %3687 = vmatpush2.bf16.msra.mxu0 0
        %3688 = vmatprep.subr.bf16.mxu0 0
        %3689 = vmatpush2.bf16.msra.mxu0 0
        %3690 = vmatprep.subr.bf16.mxu0 0
        %3691 = vmatpush2.bf16.msra.mxu0 0
        %3692 = vmatprep.subr.bf16.mxu0 0
        %3693 = vmatpush2.bf16.msra.mxu0 0
        %3694 = vmatprep.subr.bf16.mxu0 0
        %3695 = vmatpush2.bf16.msra.mxu0 0
        %3696 = vmatprep.mubr.bf16.mxu0 0
        %3697 = vmatmul.mubr.bf16.gmra.mxu0 %v3659
        %v3698 = vpop.f32.mrf.mxu0
        %v3699 = vadd.f32 0.0, %v3698
        %v3700 = vpop.f32.mrf.mxu0
        %v3701 = vpop.f32.mrf.mxu0
        %v3702 = vpop.f32.mrf.mxu0
        %3703 = vdwg.mxu0
        %3704 = vst.msk [vmem:[#allocation2] sm:$0x1] %vm2130, %v3699
        %3705 = vmatprep.subr.bf16.mxu0 0
        %3706 = vmatpush1.bf16.xpose.msra.mxu0 0
        %3707 = vmatprep.subr.bf16.mxu0 0
        %3708 = vmatpush1.bf16.xpose.msra.mxu0 0
        %3709 = vmatprep.subr.bf16.mxu0 0
        %3710 = vmatpush1.bf16.xpose.msra.mxu0 0
        %3711 = vmatprep.subr.bf16.mxu0 0
        %3712 = vmatpush1.bf16.xpose.msra.mxu0 0
        %3713 = vmatprep.subr.bf16.mxu0 0
        %3714 = vmatpush1.bf16.xpose.msra.mxu0 0
        %3715 = vmatprep.subr.bf16.mxu0 0
        %3716 = vmatpush1.bf16.xpose.msra.mxu0 0
        %3717 = vmatprep.subr.bf16.mxu0 0
        %3718 = vmatpush1.bf16.xpose.msra.mxu0 0
        %3719 = vmatprep.subr.bf16.mxu0 0
        %3720 = vmatpush1.bf16.xpose.msra.mxu0 %v3599
        %3721 = vmatprep.subr.bf16.mxu0 0
        %3722 = vmatpush2.bf16.xpose.msra.mxu0 0
        %3723 = vmatprep.subr.bf16.mxu0 0
        %3724 = vmatpush2.bf16.xpose.msra.mxu0 0
        %3725 = vmatprep.subr.bf16.mxu0 0
        %3726 = vmatpush2.bf16.xpose.msra.mxu0 0
        %3727 = vmatprep.subr.bf16.mxu0 0
        %3728 = vmatpush2.bf16.xpose.msra.mxu0 0
        %3729 = vmatprep.subr.bf16.mxu0 0
        %3730 = vmatpush2.bf16.xpose.msra.mxu0 0
        %3731 = vmatprep.subr.bf16.mxu0 0
        %3732 = vmatpush2.bf16.xpose.msra.mxu0 0
        %3733 = vmatprep.subr.bf16.mxu0 0
        %3734 = vmatpush2.bf16.xpose.msra.mxu0 0
        %3735 = vmatprep.subr.bf16.mxu0 0
        %3736 = vmatpush2.bf16.xpose.msra.mxu0 0
        %3737 = vmatprep.mubr.bf16.mxu0 0
        %3738 = vmatmul.mubr.bf16.gmra.mxu0 %v3293
        %v3739 = vpop.f32.mrf.mxu0
        %v3740 = vadd.f32 0.0, %v3739
        %v3741 = vpop.f32.mrf.mxu0
        %v3742 = vpop.f32.mrf.mxu0
        %v3743 = vpop.f32.mrf.mxu0
        %3744 = vdwg.mxu0
        %v3745 = vsel %vm2066, %v3740, -inf
        %3746 = vmax.xlane.f32.xlu0 %v3745
        %v3747 = vpop.xlane.xlu0 %3746
        %v3748 = vsub.f32 %v3740, %v3747
        %v3749 = vmul.f32 %v3748, 1.442695
        %v3750 = vpow.pop %v3749
        %v3751 = vsel %vm2066, %v3750, 0.0
        %3752 = vadd.xlane.f32.xlu0 %v3751
        %v3753 = vpop.xlane.xlu0 %3752
        %v3754 = vrcp.pop %v3753
        %v3755 = vmul.f32 %v3750, %v3754
        %v3756 = vpack.c.bf16 %v3755, %v3755
        %v3758 = vsel %vm2079, %v3756, 0
        %v3761 = vsel %vm2083, %v3603, 0
        %3763 = vmatprep.subr.bf16.mxu0 0
        %3764 = vmatpush1.bf16.msra.mxu0 0
        %3765 = vmatprep.subr.bf16.mxu0 0
        %3766 = vmatpush1.bf16.msra.mxu0 0
        %3767 = vmatprep.subr.bf16.mxu0 0
        %3768 = vmatpush1.bf16.msra.mxu0 0
        %3769 = vmatprep.subr.bf16.mxu0 0
        %3770 = vmatpush1.bf16.msra.mxu0 0
        %3771 = vmatprep.subr.bf16.mxu0 0
        %3772 = vmatpush1.bf16.msra.mxu0 0
        %3773 = vmatprep.subr.bf16.mxu0 0
        %3774 = vmatpush1.bf16.msra.mxu0 0
        %3775 = vmatprep.subr.bf16.mxu0 0
        %3776 = vmatpush1.bf16.msra.mxu0 0
        %3777 = vmatprep.subr.bf16.mxu0 0
        %3778 = vmatpush1.bf16.msra.mxu0 %v3761
        %3779 = vmatprep.subr.bf16.mxu0 0
        %3780 = vmatpush2.bf16.msra.mxu0 0
        %3781 = vmatprep.subr.bf16.mxu0 0
        %3782 = vmatpush2.bf16.msra.mxu0 0
        %3783 = vmatprep.subr.bf16.mxu0 0
        %3784 = vmatpush2.bf16.msra.mxu0 0
        %3785 = vmatprep.subr.bf16.mxu0 0
        %3786 = vmatpush2.bf16.msra.mxu0 0
        %3787 = vmatprep.subr.bf16.mxu0 0
        %3788 = vmatpush2.bf16.msra.mxu0 0
        %3789 = vmatprep.subr.bf16.mxu0 0
        %3790 = vmatpush2.bf16.msra.mxu0 0
        %3791 = vmatprep.subr.bf16.mxu0 0
        %3792 = vmatpush2.bf16.msra.mxu0 0
        %3793 = vmatprep.subr.bf16.mxu0 0
        %3794 = vmatpush2.bf16.msra.mxu0 0
        %3795 = vmatprep.mubr.bf16.mxu0 0
        %3796 = vmatmul.mubr.bf16.gmra.mxu0 %v3758
        %v3797 = vpop.f32.mrf.mxu0
        %v3798 = vadd.f32 0.0, %v3797
        %v3799 = vpop.f32.mrf.mxu0
        %v3800 = vpop.f32.mrf.mxu0
        %v3801 = vpop.f32.mrf.mxu0
        %3802 = vdwg.mxu0
        %3803 = vst.msk [vmem:[#allocation2 + $0x1] sm:$0x1] %vm2130, %v3798
        %3804 = vmatprep.subr.bf16.mxu0 0
        %3805 = vmatpush1.bf16.xpose.msra.mxu0 0
        %3806 = vmatprep.subr.bf16.mxu0 0
        %3807 = vmatpush1.bf16.xpose.msra.mxu0 0
        %3808 = vmatprep.subr.bf16.mxu0 0
        %3809 = vmatpush1.bf16.xpose.msra.mxu0 0
        %3810 = vmatprep.subr.bf16.mxu0 0
        %3811 = vmatpush1.bf16.xpose.msra.mxu0 0
        %3812 = vmatprep.subr.bf16.mxu0 0
        %3813 = vmatpush1.bf16.xpose.msra.mxu0 0
        %3814 = vmatprep.subr.bf16.mxu0 0
        %3815 = vmatpush1.bf16.xpose.msra.mxu0 0
        %3816 = vmatprep.subr.bf16.mxu0 0
        %3817 = vmatpush1.bf16.xpose.msra.mxu0 0
        %3818 = vmatprep.subr.bf16.mxu0 0
        %3819 = vmatpush1.bf16.xpose.msra.mxu0 %v3600
        %3820 = vmatprep.subr.bf16.mxu0 0
        %3821 = vmatpush2.bf16.xpose.msra.mxu0 0
        %3822 = vmatprep.subr.bf16.mxu0 0
        %3823 = vmatpush2.bf16.xpose.msra.mxu0 0
        %3824 = vmatprep.subr.bf16.mxu0 0
        %3825 = vmatpush2.bf16.xpose.msra.mxu0 0
        %3826 = vmatprep.subr.bf16.mxu0 0
        %3827 = vmatpush2.bf16.xpose.msra.mxu0 0
        %3828 = vmatprep.subr.bf16.mxu0 0
        %3829 = vmatpush2.bf16.xpose.msra.mxu0 0
        %3830 = vmatprep.subr.bf16.mxu0 0
        %3831 = vmatpush2.bf16.xpose.msra.mxu0 0
        %3832 = vmatprep.subr.bf16.mxu0 0
        %3833 = vmatpush2.bf16.xpose.msra.mxu0 0
        %3834 = vmatprep.subr.bf16.mxu0 0
        %3835 = vmatpush2.bf16.xpose.msra.mxu0 0
        %3836 = vmatprep.mubr.bf16.mxu0 0
        %3837 = vmatmul.mubr.bf16.gmra.mxu0 %v3294
        %v3838 = vpop.f32.mrf.mxu0
        %v3839 = vadd.f32 0.0, %v3838
        %v3840 = vpop.f32.mrf.mxu0
        %v3841 = vpop.f32.mrf.mxu0
        %v3842 = vpop.f32.mrf.mxu0
        %3843 = vdwg.mxu0
        %v3844 = vsel %vm2066, %v3839, -inf
        %3845 = vmax.xlane.f32.xlu0 %v3844
        %v3846 = vpop.xlane.xlu0 %3845
        %v3847 = vsub.f32 %v3839, %v3846
        %v3848 = vmul.f32 %v3847, 1.442695
        %v3849 = vpow.pop %v3848
        %v3850 = vsel %vm2066, %v3849, 0.0
        %3851 = vadd.xlane.f32.xlu0 %v3850
        %v3852 = vpop.xlane.xlu0 %3851
        %v3853 = vrcp.pop %v3852
        %v3854 = vmul.f32 %v3849, %v3853
        %v3855 = vpack.c.bf16 %v3854, %v3854
        %v3857 = vsel %vm2079, %v3855, 0
        %v3860 = vsel %vm2083, %v3604, 0
        %3862 = vmatprep.subr.bf16.mxu0 0
        %3863 = vmatpush1.bf16.msra.mxu0 0
        %3864 = vmatprep.subr.bf16.mxu0 0
        %3865 = vmatpush1.bf16.msra.mxu0 0
        %3866 = vmatprep.subr.bf16.mxu0 0
        %3867 = vmatpush1.bf16.msra.mxu0 0
        %3868 = vmatprep.subr.bf16.mxu0 0
        %3869 = vmatpush1.bf16.msra.mxu0 0
        %3870 = vmatprep.subr.bf16.mxu0 0
        %3871 = vmatpush1.bf16.msra.mxu0 0
        %3872 = vmatprep.subr.bf16.mxu0 0
        %3873 = vmatpush1.bf16.msra.mxu0 0
        %3874 = vmatprep.subr.bf16.mxu0 0
        %3875 = vmatpush1.bf16.msra.mxu0 0
        %3876 = vmatprep.subr.bf16.mxu0 0
        %3877 = vmatpush1.bf16.msra.mxu0 %v3860
        %3878 = vmatprep.subr.bf16.mxu0 0
        %3879 = vmatpush2.bf16.msra.mxu0 0
        %3880 = vmatprep.subr.bf16.mxu0 0
        %3881 = vmatpush2.bf16.msra.mxu0 0
        %3882 = vmatprep.subr.bf16.mxu0 0
        %3883 = vmatpush2.bf16.msra.mxu0 0
        %3884 = vmatprep.subr.bf16.mxu0 0
        %3885 = vmatpush2.bf16.msra.mxu0 0
        %3886 = vmatprep.subr.bf16.mxu0 0
        %3887 = vmatpush2.bf16.msra.mxu0 0
        %3888 = vmatprep.subr.bf16.mxu0 0
        %3889 = vmatpush2.bf16.msra.mxu0 0
        %3890 = vmatprep.subr.bf16.mxu0 0
        %3891 = vmatpush2.bf16.msra.mxu0 0
        %3892 = vmatprep.subr.bf16.mxu0 0
        %3893 = vmatpush2.bf16.msra.mxu0 0
        %3894 = vmatprep.mubr.bf16.mxu0 0
        %3895 = vmatmul.mubr.bf16.gmra.mxu0 %v3857
        %v3896 = vpop.f32.mrf.mxu0
        %v3897 = vadd.f32 0.0, %v3896
        %v3898 = vpop.f32.mrf.mxu0
        %v3899 = vpop.f32.mrf.mxu0
        %v3900 = vpop.f32.mrf.mxu0
        %3901 = vdwg.mxu0
        %3902 = vst.msk [vmem:[#allocation2 + $0x2] sm:$0x1] %vm2130, %v3897
        %3903 = vmatprep.subr.bf16.mxu0 0
        %3904 = vmatpush1.bf16.xpose.msra.mxu0 0
        %3905 = vmatprep.subr.bf16.mxu0 0
        %3906 = vmatpush1.bf16.xpose.msra.mxu0 0
        %3907 = vmatprep.subr.bf16.mxu0 0
        %3908 = vmatpush1.bf16.xpose.msra.mxu0 0
        %3909 = vmatprep.subr.bf16.mxu0 0
        %3910 = vmatpush1.bf16.xpose.msra.mxu0 0
        %3911 = vmatprep.subr.bf16.mxu0 0
        %3912 = vmatpush1.bf16.xpose.msra.mxu0 0
        %3913 = vmatprep.subr.bf16.mxu0 0
        %3914 = vmatpush1.bf16.xpose.msra.mxu0 0
        %3915 = vmatprep.subr.bf16.mxu0 0
        %3916 = vmatpush1.bf16.xpose.msra.mxu0 0
        %3917 = vmatprep.subr.bf16.mxu0 0
        %3918 = vmatpush1.bf16.xpose.msra.mxu0 %v3601
        %3919 = vmatprep.subr.bf16.mxu0 0
        %3920 = vmatpush2.bf16.xpose.msra.mxu0 0
        %3921 = vmatprep.subr.bf16.mxu0 0
        %3922 = vmatpush2.bf16.xpose.msra.mxu0 0
        %3923 = vmatprep.subr.bf16.mxu0 0
        %3924 = vmatpush2.bf16.xpose.msra.mxu0 0
        %3925 = vmatprep.subr.bf16.mxu0 0
        %3926 = vmatpush2.bf16.xpose.msra.mxu0 0
        %3927 = vmatprep.subr.bf16.mxu0 0
        %3928 = vmatpush2.bf16.xpose.msra.mxu0 0
        %3929 = vmatprep.subr.bf16.mxu0 0
        %3930 = vmatpush2.bf16.xpose.msra.mxu0 0
        %3931 = vmatprep.subr.bf16.mxu0 0
        %3932 = vmatpush2.bf16.xpose.msra.mxu0 0
        %3933 = vmatprep.subr.bf16.mxu0 0
        %3934 = vmatpush2.bf16.xpose.msra.mxu0 0
        %3935 = vmatprep.mubr.bf16.mxu0 0
        %3936 = vmatmul.mubr.bf16.gmra.mxu0 %v3295
        %v3937 = vpop.f32.mrf.mxu0
        %v3938 = vadd.f32 0.0, %v3937
        %v3939 = vpop.f32.mrf.mxu0
        %v3940 = vpop.f32.mrf.mxu0
        %v3941 = vpop.f32.mrf.mxu0
        %3942 = vdwg.mxu0
        %v3943 = vsel %vm2066, %v3938, -inf
        %3944 = vmax.xlane.f32.xlu0 %v3943
        %v3945 = vpop.xlane.xlu0 %3944
        %v3946 = vsub.f32 %v3938, %v3945
        %v3947 = vmul.f32 %v3946, 1.442695
        %v3948 = vpow.pop %v3947
        %v3949 = vsel %vm2066, %v3948, 0.0
        %3950 = vadd.xlane.f32.xlu0 %v3949
        %v3951 = vpop.xlane.xlu0 %3950
        %v3952 = vrcp.pop %v3951
        %v3953 = vmul.f32 %v3948, %v3952
        %v3954 = vpack.c.bf16 %v3953, %v3953
        %v3956 = vsel %vm2079, %v3954, 0
        %v3959 = vsel %vm2083, %v3605, 0
        %3961 = vmatprep.subr.bf16.mxu0 0
        %3962 = vmatpush1.bf16.msra.mxu0 0
        %3963 = vmatprep.subr.bf16.mxu0 0
        %3964 = vmatpush1.bf16.msra.mxu0 0
        %3965 = vmatprep.subr.bf16.mxu0 0
        %3966 = vmatpush1.bf16.msra.mxu0 0
        %3967 = vmatprep.subr.bf16.mxu0 0
        %3968 = vmatpush1.bf16.msra.mxu0 0
        %3969 = vmatprep.subr.bf16.mxu0 0
        %3970 = vmatpush1.bf16.msra.mxu0 0
        %3971 = vmatprep.subr.bf16.mxu0 0
        %3972 = vmatpush1.bf16.msra.mxu0 0
        %3973 = vmatprep.subr.bf16.mxu0 0
        %3974 = vmatpush1.bf16.msra.mxu0 0
        %3975 = vmatprep.subr.bf16.mxu0 0
        %3976 = vmatpush1.bf16.msra.mxu0 %v3959
        %3977 = vmatprep.subr.bf16.mxu0 0
        %3978 = vmatpush2.bf16.msra.mxu0 0
        %3979 = vmatprep.subr.bf16.mxu0 0
        %3980 = vmatpush2.bf16.msra.mxu0 0
        %3981 = vmatprep.subr.bf16.mxu0 0
        %3982 = vmatpush2.bf16.msra.mxu0 0
        %3983 = vmatprep.subr.bf16.mxu0 0
        %3984 = vmatpush2.bf16.msra.mxu0 0
        %3985 = vmatprep.subr.bf16.mxu0 0
        %3986 = vmatpush2.bf16.msra.mxu0 0
        %3987 = vmatprep.subr.bf16.mxu0 0
        %3988 = vmatpush2.bf16.msra.mxu0 0
        %3989 = vmatprep.subr.bf16.mxu0 0
        %3990 = vmatpush2.bf16.msra.mxu0 0
        %3991 = vmatprep.subr.bf16.mxu0 0
        %3992 = vmatpush2.bf16.msra.mxu0 0
        %3993 = vmatprep.mubr.bf16.mxu0 0
        %3994 = vmatmul.mubr.bf16.gmra.mxu0 %v3956
        %v3995 = vpop.f32.mrf.mxu0
        %v3996 = vadd.f32 0.0, %v3995
        %v3997 = vpop.f32.mrf.mxu0
        %v3998 = vpop.f32.mrf.mxu0
        %v3999 = vpop.f32.mrf.mxu0
        %4000 = vdwg.mxu0
        %4001 = vst.msk [vmem:[#allocation2 + $0x3] sm:$0x1] %vm2130, %v3996
        %v4002 = vld [vmem:[#allocation2] sm:$0xf]
        %v4003 = vld [vmem:[%s63] sm:$0xf]
        %v4004 = vld [vmem:[%s63 + $0x4] sm:$0xf]
        %v4005 = vld [vmem:[%s63 + $0x8] sm:$0xf]
        %v4006 = vld [vmem:[%s63 + $0xc] sm:$0xf]
        %v4007 = vld [vmem:[%s63 + $0x10] sm:$0xf]
        %v4008 = vld [vmem:[%s63 + $0x14] sm:$0xf]
        %v4009 = vld [vmem:[%s63 + $0x18] sm:$0xf]
        %v4010 = vld [vmem:[%s63 + $0x1c] sm:$0xf]
        %v4011 = vld [vmem:[%s63 + $0x20] sm:$0xf]
        %v4012 = vld [vmem:[%s63 + $0x24] sm:$0xf]
        %v4013 = vld [vmem:[%s63 + $0x28] sm:$0xf]
        %v4014 = vld [vmem:[%s63 + $0x2c] sm:$0xf]
        %v4015 = vld [vmem:[%s63 + $0x30] sm:$0xf]
        %v4016 = vld [vmem:[%s63 + $0x34] sm:$0xf]
        %v4017 = vld [vmem:[%s63 + $0x38] sm:$0xf]
        %v4018 = vld [vmem:[%s63 + $0x3c] sm:$0xf]
        %v4019 = vld [vmem:[%s63 + $0x40] sm:$0xf]
        %v4020 = vld [vmem:[%s63 + $0x44] sm:$0xf]
        %v4021 = vld [vmem:[%s63 + $0x48] sm:$0xf]
        %v4022 = vld [vmem:[%s63 + $0x4c] sm:$0xf]
        %v4023 = vld [vmem:[%s63 + $0x50] sm:$0xf]
        %v4024 = vld [vmem:[%s63 + $0x54] sm:$0xf]
        %v4025 = vld [vmem:[%s63 + $0x58] sm:$0xf]
        %v4026 = vld [vmem:[%s63 + $0x5c] sm:$0xf]
        %v4027 = vld [vmem:[%s63 + $0x60] sm:$0xf]
        %v4028 = vld [vmem:[%s63 + $0x64] sm:$0xf]
        %v4029 = vld [vmem:[%s63 + $0x68] sm:$0xf]
        %v4030 = vld [vmem:[%s63 + $0x6c] sm:$0xf]
        %v4031 = vld [vmem:[%s63 + $0x70] sm:$0xf]
        %v4032 = vld [vmem:[%s63 + $0x74] sm:$0xf]
        %v4033 = vld [vmem:[%s63 + $0x78] sm:$0xf]
        %v4034 = vld [vmem:[%s63 + $0x7c] sm:$0xf]
        %v4035 = vld [vmem:[%s63 + $0x80] sm:$0xf]
        %v4036 = vld [vmem:[%s63 + $0x84] sm:$0xf]
        %v4037 = vld [vmem:[%s63 + $0x88] sm:$0xf]
        %v4038 = vld [vmem:[%s63 + $0x8c] sm:$0xf]
        %v4039 = vld [vmem:[%s63 + $0x90] sm:$0xf]
        %v4040 = vld [vmem:[%s63 + $0x94] sm:$0xf]
        %v4041 = vld [vmem:[%s63 + $0x98] sm:$0xf]
        %v4042 = vld [vmem:[%s63 + $0x9c] sm:$0xf]
        %v4043 = vld [vmem:[%s63 + $0xa0] sm:$0xf]
        %v4044 = vld [vmem:[%s63 + $0xa4] sm:$0xf]
        %v4045 = vld [vmem:[%s63 + $0xa8] sm:$0xf]
        %v4046 = vld [vmem:[%s63 + $0xac] sm:$0xf]
        %v4047 = vld [vmem:[%s63 + $0xb0] sm:$0xf]
        %v4048 = vld [vmem:[%s63 + $0xb4] sm:$0xf]
        %v4049 = vld [vmem:[%s63 + $0xb8] sm:$0xf]
        %v4050 = vld [vmem:[%s63 + $0xbc] sm:$0xf]
        %v4051 = vld [vmem:[%s63 + $0xc0] sm:$0xf]
        %v4052 = vld [vmem:[%s63 + $0xc4] sm:$0xf]
        %v4053 = vld [vmem:[%s63 + $0xc8] sm:$0xf]
        %v4054 = vld [vmem:[%s63 + $0xcc] sm:$0xf]
        %v4055 = vld [vmem:[%s63 + $0xd0] sm:$0xf]
        %v4056 = vld [vmem:[%s63 + $0xd4] sm:$0xf]
        %v4057 = vld [vmem:[%s63 + $0xd8] sm:$0xf]
        %v4058 = vld [vmem:[%s63 + $0xdc] sm:$0xf]
        %v4059 = vld [vmem:[%s63 + $0xe0] sm:$0xf]
        %v4060 = vld [vmem:[%s63 + $0xe4] sm:$0xf]
        %v4061 = vld [vmem:[%s63 + $0xe8] sm:$0xf]
        %v4062 = vld [vmem:[%s63 + $0xec] sm:$0xf]
        %v4063 = vld [vmem:[%s63 + $0xf0] sm:$0xf]
        %v4064 = vld [vmem:[%s63 + $0xf4] sm:$0xf]
        %v4065 = vld [vmem:[%s63 + $0xf8] sm:$0xf]
        %v4066 = vld [vmem:[%s63 + $0xfc] sm:$0xf]
        %v4067 = vld [vmem:[%s65] sm:$0x1]
        %v4069 = vlaneseq
        %v4070 = vshrl.u32 %v4069, 7
        %v4071 = vsub.s32 0, %v4070
        %v4072 = vrot.slane %v4002, %v4071
        %v4073 = vlaneseq
        %v4074 = vshrl.u32 %v4073, 7
        %v4075 = vsub.s32 1, %v4074
        %v4076 = vrot.slane %v4002, %v4075
        %v4077 = vlaneseq
        %v4078 = vshrl.u32 %v4077, 7
        %v4079 = vsub.s32 2, %v4078
        %v4080 = vrot.slane %v4002, %v4079
        %v4081 = vlaneseq
        %v4082 = vshrl.u32 %v4081, 7
        %v4083 = vsub.s32 3, %v4082
        %v4084 = vrot.slane %v4002, %v4083
        %v4089 = vpack.c.bf16 %v4072, %v4072
        %v4090 = vpack.c.bf16 %v4076, %v4076
        %v4091 = vpack.c.bf16 %v4080, %v4080
        %v4092 = vpack.c.bf16 %v4084, %v4084
        %v4157 = vunpack.c.l.b16 %v4003
        %v4158 = vunpack.c.l.b16 %v4004
        %v4159 = vunpack.c.l.b16 %v4005
        %v4160 = vunpack.c.l.b16 %v4006
        %v4161 = vunpack.c.l.b16 %v4007
        %v4162 = vunpack.c.l.b16 %v4008
        %v4163 = vunpack.c.l.b16 %v4009
        %v4164 = vunpack.c.l.b16 %v4010
        %v4165 = vunpack.c.l.b16 %v4011
        %v4166 = vunpack.c.l.b16 %v4012
        %v4167 = vunpack.c.l.b16 %v4013
        %v4168 = vunpack.c.l.b16 %v4014
        %v4169 = vunpack.c.l.b16 %v4015
        %v4170 = vunpack.c.l.b16 %v4016
        %v4171 = vunpack.c.l.b16 %v4017
        %v4172 = vunpack.c.l.b16 %v4018
        %v4173 = vunpack.c.l.b16 %v4019
        %v4174 = vunpack.c.l.b16 %v4020
        %v4175 = vunpack.c.l.b16 %v4021
        %v4176 = vunpack.c.l.b16 %v4022
        %v4177 = vunpack.c.l.b16 %v4023
        %v4178 = vunpack.c.l.b16 %v4024
        %v4179 = vunpack.c.l.b16 %v4025
        %v4180 = vunpack.c.l.b16 %v4026
        %v4181 = vunpack.c.l.b16 %v4027
        %v4182 = vunpack.c.l.b16 %v4028
        %v4183 = vunpack.c.l.b16 %v4029
        %v4184 = vunpack.c.l.b16 %v4030
        %v4185 = vunpack.c.l.b16 %v4031
        %v4186 = vunpack.c.l.b16 %v4032
        %v4187 = vunpack.c.l.b16 %v4033
        %v4188 = vunpack.c.l.b16 %v4034
        %v4189 = vunpack.c.l.b16 %v4035
        %v4190 = vunpack.c.l.b16 %v4036
        %v4191 = vunpack.c.l.b16 %v4037
        %v4192 = vunpack.c.l.b16 %v4038
        %v4193 = vunpack.c.l.b16 %v4039
        %v4194 = vunpack.c.l.b16 %v4040
        %v4195 = vunpack.c.l.b16 %v4041
        %v4196 = vunpack.c.l.b16 %v4042
        %v4197 = vunpack.c.l.b16 %v4043
        %v4198 = vunpack.c.l.b16 %v4044
        %v4199 = vunpack.c.l.b16 %v4045
        %v4200 = vunpack.c.l.b16 %v4046
        %v4201 = vunpack.c.l.b16 %v4047
        %v4202 = vunpack.c.l.b16 %v4048
        %v4203 = vunpack.c.l.b16 %v4049
        %v4204 = vunpack.c.l.b16 %v4050
        %v4205 = vunpack.c.l.b16 %v4051
        %v4206 = vunpack.c.l.b16 %v4052
        %v4207 = vunpack.c.l.b16 %v4053
        %v4208 = vunpack.c.l.b16 %v4054
        %v4209 = vunpack.c.l.b16 %v4055
        %v4210 = vunpack.c.l.b16 %v4056
        %v4211 = vunpack.c.l.b16 %v4057
        %v4212 = vunpack.c.l.b16 %v4058
        %v4213 = vunpack.c.l.b16 %v4059
        %v4214 = vunpack.c.l.b16 %v4060
        %v4215 = vunpack.c.l.b16 %v4061
        %v4216 = vunpack.c.l.b16 %v4062
        %v4217 = vunpack.c.l.b16 %v4063
        %v4218 = vunpack.c.l.b16 %v4064
        %v4219 = vunpack.c.l.b16 %v4065
        %v4220 = vunpack.c.l.b16 %v4066
        %v4221 = vpack.c.b16 %v4158, %v4157
        %v4222 = vpack.c.b16 %v4160, %v4159
        %v4223 = vpack.c.b16 %v4162, %v4161
        %v4224 = vpack.c.b16 %v4164, %v4163
        %v4225 = vpack.c.b16 %v4166, %v4165
        %v4226 = vpack.c.b16 %v4168, %v4167
        %v4227 = vpack.c.b16 %v4170, %v4169
        %v4228 = vpack.c.b16 %v4172, %v4171
        %v4229 = vpack.c.b16 %v4174, %v4173
        %v4230 = vpack.c.b16 %v4176, %v4175
        %v4231 = vpack.c.b16 %v4178, %v4177
        %v4232 = vpack.c.b16 %v4180, %v4179
        %v4233 = vpack.c.b16 %v4182, %v4181
        %v4234 = vpack.c.b16 %v4184, %v4183
        %v4235 = vpack.c.b16 %v4186, %v4185
        %v4236 = vpack.c.b16 %v4188, %v4187
        %v4237 = vpack.c.b16 %v4190, %v4189
        %v4238 = vpack.c.b16 %v4192, %v4191
        %v4239 = vpack.c.b16 %v4194, %v4193
        %v4240 = vpack.c.b16 %v4196, %v4195
        %v4241 = vpack.c.b16 %v4198, %v4197
        %v4242 = vpack.c.b16 %v4200, %v4199
        %v4243 = vpack.c.b16 %v4202, %v4201
        %v4244 = vpack.c.b16 %v4204, %v4203
        %v4245 = vpack.c.b16 %v4206, %v4205
        %v4246 = vpack.c.b16 %v4208, %v4207
        %v4247 = vpack.c.b16 %v4210, %v4209
        %v4248 = vpack.c.b16 %v4212, %v4211
        %v4249 = vpack.c.b16 %v4214, %v4213
        %v4250 = vpack.c.b16 %v4216, %v4215
        %v4251 = vpack.c.b16 %v4218, %v4217
        %v4252 = vpack.c.b16 %v4220, %v4219
        %4285 = vmatprep.subr.bf16.mxu0 0
        %4286 = vmatpush1.bf16.msra.mxu0 %v4228
        %4287 = vmatprep.subr.bf16.mxu0 0
        %4288 = vmatpush1.bf16.msra.mxu0 %v4227
        %4289 = vmatprep.subr.bf16.mxu0 0
        %4290 = vmatpush1.bf16.msra.mxu0 %v4226
        %4291 = vmatprep.subr.bf16.mxu0 0
        %4292 = vmatpush1.bf16.msra.mxu0 %v4225
        %4293 = vmatprep.subr.bf16.mxu0 0
        %4294 = vmatpush1.bf16.msra.mxu0 %v4224
        %4295 = vmatprep.subr.bf16.mxu0 0
        %4296 = vmatpush1.bf16.msra.mxu0 %v4223
        %4297 = vmatprep.subr.bf16.mxu0 0
        %4298 = vmatpush1.bf16.msra.mxu0 %v4222
        %4299 = vmatprep.subr.bf16.mxu0 0
        %4300 = vmatpush1.bf16.msra.mxu0 %v4221
        %4301 = vmatprep.subr.bf16.mxu0 0
        %4302 = vmatpush2.bf16.msra.mxu0 %v4236
        %4303 = vmatprep.subr.bf16.mxu0 0
        %4304 = vmatpush2.bf16.msra.mxu0 %v4235
        %4305 = vmatprep.subr.bf16.mxu0 0
        %4306 = vmatpush2.bf16.msra.mxu0 %v4234
        %4307 = vmatprep.subr.bf16.mxu0 0
        %4308 = vmatpush2.bf16.msra.mxu0 %v4233
        %4309 = vmatprep.subr.bf16.mxu0 0
        %4310 = vmatpush2.bf16.msra.mxu0 %v4232
        %4311 = vmatprep.subr.bf16.mxu0 0
        %4312 = vmatpush2.bf16.msra.mxu0 %v4231
        %4313 = vmatprep.subr.bf16.mxu0 0
        %4314 = vmatpush2.bf16.msra.mxu0 %v4230
        %4315 = vmatprep.subr.bf16.mxu0 0
        %4316 = vmatpush2.bf16.msra.mxu0 %v4229
        %4317 = vmatprep.mubr.bf16.mxu0 %v4090
        %4318 = vmatmul.mubr.bf16.gmra.mxu0 %v4089
        %v4319 = vpop.f32.mrf.mxu0
        %v4320 = vadd.f32 %v4067, %v4319
        %v4321 = vpop.f32.mrf.mxu0
        %v4322 = vpop.f32.mrf.mxu0
        %v4323 = vpop.f32.mrf.mxu0
        %4324 = vdwg.mxu0
        %4325 = vmatprep.subr.bf16.mxu0 0
        %4326 = vmatpush1.bf16.msra.mxu0 %v4244
        %4327 = vmatprep.subr.bf16.mxu0 0
        %4328 = vmatpush1.bf16.msra.mxu0 %v4243
        %4329 = vmatprep.subr.bf16.mxu0 0
        %4330 = vmatpush1.bf16.msra.mxu0 %v4242
        %4331 = vmatprep.subr.bf16.mxu0 0
        %4332 = vmatpush1.bf16.msra.mxu0 %v4241
        %4333 = vmatprep.subr.bf16.mxu0 0
        %4334 = vmatpush1.bf16.msra.mxu0 %v4240
        %4335 = vmatprep.subr.bf16.mxu0 0
        %4336 = vmatpush1.bf16.msra.mxu0 %v4239
        %4337 = vmatprep.subr.bf16.mxu0 0
        %4338 = vmatpush1.bf16.msra.mxu0 %v4238
        %4339 = vmatprep.subr.bf16.mxu0 0
        %4340 = vmatpush1.bf16.msra.mxu0 %v4237
        %4341 = vmatprep.subr.bf16.mxu0 0
        %4342 = vmatpush2.bf16.msra.mxu0 %v4252
        %4343 = vmatprep.subr.bf16.mxu0 0
        %4344 = vmatpush2.bf16.msra.mxu0 %v4251
        %4345 = vmatprep.subr.bf16.mxu0 0
        %4346 = vmatpush2.bf16.msra.mxu0 %v4250
        %4347 = vmatprep.subr.bf16.mxu0 0
        %4348 = vmatpush2.bf16.msra.mxu0 %v4249
        %4349 = vmatprep.subr.bf16.mxu0 0
        %4350 = vmatpush2.bf16.msra.mxu0 %v4248
        %4351 = vmatprep.subr.bf16.mxu0 0
        %4352 = vmatpush2.bf16.msra.mxu0 %v4247
        %4353 = vmatprep.subr.bf16.mxu0 0
        %4354 = vmatpush2.bf16.msra.mxu0 %v4246
        %4355 = vmatprep.subr.bf16.mxu0 0
        %4356 = vmatpush2.bf16.msra.mxu0 %v4245
        %4357 = vmatprep.mubr.bf16.mxu0 %v4092
        %4358 = vmatmul.mubr.bf16.gmra.mxu0 %v4091
        %v4359 = vpop.f32.mrf.mxu0
        %v4360 = vadd.f32 %v4320, %v4359
        %v4361 = vpop.f32.mrf.mxu0
        %v4362 = vpop.f32.mrf.mxu0
        %v4363 = vpop.f32.mrf.mxu0
        %4364 = vdwg.mxu0
        %v4365 = vadd.f32 %v3135, %v4360
        %v4366 = vld [vmem:[%s67] sm:$0x1]
        %v4367 = vld [vmem:[%s69] sm:$0x1]
        %v4368 = vsel %vm1536, %v4365, 0.0
        %4369 = vadd.xlane.f32.xlu0 %v4368
        %v4370 = vpop.xlane.xlu0 %4369
        %v4371 = vmul.f32 %v4370, %v1540
        %v4372 = vsub.f32 %v4365, %v4371
        %v4373 = vmul.f32 %v4372, %v4372
        %v4374 = vsel %vm1536, %v4373, 0.0
        %4375 = vadd.xlane.f32.xlu0 %v4374
        %v4376 = vpop.xlane.xlu0 %4375
        %v4377 = vmul.f32 %v4376, %v1540
        %v4378 = vadd.f32 %v4377, 1e-05
        %v4379 = vrsqrt.pop %v4378
        %v4380 = vmul.f32 %v4372, %v4379
        %v4381 = vmul.f32 %v4380, %v4366
        %v4382 = vadd.f32 %v4381, %v4367
        %v4383 = vld [vmem:[%s71] sm:$0xf]
        %v4384 = vld [vmem:[%s71 + $0x4] sm:$0xf]
        %v4385 = vld [vmem:[%s71 + $0x8] sm:$0xf]
        %v4386 = vld [vmem:[%s71 + $0xc] sm:$0xf]
        %v4387 = vld [vmem:[%s73] sm:$0x1]
        %v4388 = vpack.c.bf16 %v4382, %v4382
        %v4393 = vunpack.c.l.b16 %v4383
        %v4394 = vunpack.c.l.b16 %v4384
        %v4395 = vunpack.c.l.b16 %v4385
        %v4396 = vunpack.c.l.b16 %v4386
        %v4397 = vpack.c.b16 %v4394, %v4393
        %v4398 = vpack.c.b16 %v4396, %v4395
        %v4402 = vsel %vm1428, %v4388, 0
        %4404 = vmatprep.subr.bf16.mxu0 0
        %4405 = vmatpush1.bf16.msra.mxu0 0
        %4406 = vmatprep.subr.bf16.mxu0 0
        %4407 = vmatpush1.bf16.msra.mxu0 0
        %4408 = vmatprep.subr.bf16.mxu0 0
        %4409 = vmatpush1.bf16.msra.mxu0 0
        %4410 = vmatprep.subr.bf16.mxu0 0
        %4411 = vmatpush1.bf16.msra.mxu0 0
        %4412 = vmatprep.subr.bf16.mxu0 0
        %4413 = vmatpush1.bf16.msra.mxu0 0
        %4414 = vmatprep.subr.bf16.mxu0 0
        %4415 = vmatpush1.bf16.msra.mxu0 0
        %4416 = vmatprep.subr.bf16.mxu0 0
        %4417 = vmatpush1.bf16.msra.mxu0 %v4398
        %4418 = vmatprep.subr.bf16.mxu0 0
        %4419 = vmatpush1.bf16.msra.mxu0 %v4397
        %4420 = vmatprep.subr.bf16.mxu0 0
        %4421 = vmatpush2.bf16.msra.mxu0 0
        %4422 = vmatprep.subr.bf16.mxu0 0
        %4423 = vmatpush2.bf16.msra.mxu0 0
        %4424 = vmatprep.subr.bf16.mxu0 0
        %4425 = vmatpush2.bf16.msra.mxu0 0
        %4426 = vmatprep.subr.bf16.mxu0 0
        %4427 = vmatpush2.bf16.msra.mxu0 0
        %4428 = vmatprep.subr.bf16.mxu0 0
        %4429 = vmatpush2.bf16.msra.mxu0 0
        %4430 = vmatprep.subr.bf16.mxu0 0
        %4431 = vmatpush2.bf16.msra.mxu0 0
        %4432 = vmatprep.subr.bf16.mxu0 0
        %4433 = vmatpush2.bf16.msra.mxu0 0
        %4434 = vmatprep.subr.bf16.mxu0 0
        %4435 = vmatpush2.bf16.msra.mxu0 0
        %4436 = vmatprep.mubr.bf16.mxu0 0
        %4437 = vmatmul.mubr.bf16.gmra.mxu0 %v4402
        %v4438 = vpop.f32.mrf.mxu0
        %v4439 = vadd.f32 %v4387, %v4438
        %v4440 = vpop.f32.mrf.mxu0
        %v4441 = vpop.f32.mrf.mxu0
        %v4442 = vpop.f32.mrf.mxu0
        %4443 = vdwg.mxu0
        %v4444 = vmax.f32 %v4439, 0.0
        %v4445 = vld [vmem:[%s75] sm:$0xf]
        %v4446 = vld [vmem:[%s75 + $0x4] sm:$0xf]
        %v4447 = vld [vmem:[%s75 + $0x8] sm:$0xf]
        %v4448 = vld [vmem:[%s75 + $0xc] sm:$0xf]
        %v4449 = vld [vmem:[%s75 + $0x10] sm:$0xf]
        %v4450 = vld [vmem:[%s75 + $0x14] sm:$0xf]
        %v4451 = vld [vmem:[%s75 + $0x18] sm:$0xf]
        %v4452 = vld [vmem:[%s75 + $0x1c] sm:$0xf]
        %v4453 = vld [vmem:[%s75 + $0x20] sm:$0xf]
        %v4454 = vld [vmem:[%s75 + $0x24] sm:$0xf]
        %v4455 = vld [vmem:[%s75 + $0x28] sm:$0xf]
        %v4456 = vld [vmem:[%s75 + $0x2c] sm:$0xf]
        %v4457 = vld [vmem:[%s75 + $0x30] sm:$0xf]
        %v4458 = vld [vmem:[%s75 + $0x34] sm:$0xf]
        %v4459 = vld [vmem:[%s75 + $0x38] sm:$0xf]
        %v4460 = vld [vmem:[%s75 + $0x3c] sm:$0xf]
        %v4461 = vld [vmem:[#allocation4] sm:$0x1]
        %v4462 = vpack.c.bf16 %v4444, %v4444
        %v4479 = vunpack.c.l.b16 %v4445
        %v4480 = vunpack.c.l.b16 %v4446
        %v4481 = vunpack.c.l.b16 %v4447
        %v4482 = vunpack.c.l.b16 %v4448
        %v4483 = vunpack.c.l.b16 %v4449
        %v4484 = vunpack.c.l.b16 %v4450
        %v4485 = vunpack.c.l.b16 %v4451
        %v4486 = vunpack.c.l.b16 %v4452
        %v4487 = vunpack.c.l.b16 %v4453
        %v4488 = vunpack.c.l.b16 %v4454
        %v4489 = vunpack.c.l.b16 %v4455
        %v4490 = vunpack.c.l.b16 %v4456
        %v4491 = vunpack.c.l.b16 %v4457
        %v4492 = vunpack.c.l.b16 %v4458
        %v4493 = vunpack.c.l.b16 %v4459
        %v4494 = vunpack.c.l.b16 %v4460
        %v4495 = vpack.c.b16 %v4480, %v4479
        %v4496 = vpack.c.b16 %v4482, %v4481
        %v4497 = vpack.c.b16 %v4484, %v4483
        %v4498 = vpack.c.b16 %v4486, %v4485
        %v4499 = vpack.c.b16 %v4488, %v4487
        %v4500 = vpack.c.b16 %v4490, %v4489
        %v4501 = vpack.c.b16 %v4492, %v4491
        %v4502 = vpack.c.b16 %v4494, %v4493
        %4511 = vmatprep.subr.bf16.mxu0 0
        %4512 = vmatpush1.bf16.msra.mxu0 %v4502
        %4513 = vmatprep.subr.bf16.mxu0 0
        %4514 = vmatpush1.bf16.msra.mxu0 %v4501
        %4515 = vmatprep.subr.bf16.mxu0 0
        %4516 = vmatpush1.bf16.msra.mxu0 %v4500
        %4517 = vmatprep.subr.bf16.mxu0 0
        %4518 = vmatpush1.bf16.msra.mxu0 %v4499
        %4519 = vmatprep.subr.bf16.mxu0 0
        %4520 = vmatpush1.bf16.msra.mxu0 %v4498
        %4521 = vmatprep.subr.bf16.mxu0 0
        %4522 = vmatpush1.bf16.msra.mxu0 %v4497
        %4523 = vmatprep.subr.bf16.mxu0 0
        %4524 = vmatpush1.bf16.msra.mxu0 %v4496
        %4525 = vmatprep.subr.bf16.mxu0 0
        %4526 = vmatpush1.bf16.msra.mxu0 %v4495
        %4527 = vmatprep.subr.bf16.mxu0 0
        %4528 = vmatpush2.bf16.msra.mxu0 0
        %4529 = vmatprep.subr.bf16.mxu0 0
        %4530 = vmatpush2.bf16.msra.mxu0 0
        %4531 = vmatprep.subr.bf16.mxu0 0
        %4532 = vmatpush2.bf16.msra.mxu0 0
        %4533 = vmatprep.subr.bf16.mxu0 0
        %4534 = vmatpush2.bf16.msra.mxu0 0
        %4535 = vmatprep.subr.bf16.mxu0 0
        %4536 = vmatpush2.bf16.msra.mxu0 0
        %4537 = vmatprep.subr.bf16.mxu0 0
        %4538 = vmatpush2.bf16.msra.mxu0 0
        %4539 = vmatprep.subr.bf16.mxu0 0
        %4540 = vmatpush2.bf16.msra.mxu0 0
        %4541 = vmatprep.subr.bf16.mxu0 0
        %4542 = vmatpush2.bf16.msra.mxu0 0
        %4543 = vmatprep.mubr.bf16.mxu0 0
        %4544 = vmatmul.mubr.bf16.gmra.mxu0 %v4462
        %v4545 = vpop.f32.mrf.mxu0
        %v4546 = vadd.f32 %v4461, %v4545
        %v4547 = vpop.f32.mrf.mxu0
        %v4548 = vpop.f32.mrf.mxu0
        %v4549 = vpop.f32.mrf.mxu0
        %4550 = vdwg.mxu0
        %v4551 = vadd.f32 %v4382, %v4546
        %v4552 = vld [vmem:[#allocation6] sm:$0x1]
        %v4553 = vld [vmem:[#allocation8] sm:$0x1]
        %v4554 = vsel %vm1536, %v4551, 0.0
        %4555 = vadd.xlane.f32.xlu0 %v4554
        %v4556 = vpop.xlane.xlu0 %4555
        %v4557 = vmul.f32 %v4556, %v1540
        %v4558 = vsub.f32 %v4551, %v4557
        %v4559 = vmul.f32 %v4558, %v4558
        %v4560 = vsel %vm1536, %v4559, 0.0
        %4561 = vadd.xlane.f32.xlu0 %v4560
        %v4562 = vpop.xlane.xlu0 %4561
        %v4563 = vmul.f32 %v4562, %v1540
        %v4564 = vadd.f32 %v4563, 1e-05
        %v4565 = vrsqrt.pop %v4564
        %v4566 = vmul.f32 %v4558, %v4565
        %v4567 = vmul.f32 %v4566, %v4552
        %v4568 = vadd.f32 %v4567, %v4553
        %v4569 = vld [vmem:[#allocation9] sm:$0x1]
        %v4570 = vld [vmem:[#allocation11] sm:$0x1]
        %v4571 = vsel %vm1536, %v4568, 0.0
        %4572 = vadd.xlane.f32.xlu0 %v4571
        %v4573 = vpop.xlane.xlu0 %4572
        %v4574 = vmul.f32 %v4573, %v1540
        %v4575 = vsub.f32 %v4568, %v4574
        %v4576 = vmul.f32 %v4575, %v4575
        %v4577 = vsel %vm1536, %v4576, 0.0
        %4578 = vadd.xlane.f32.xlu0 %v4577
        %v4579 = vpop.xlane.xlu0 %4578
        %v4580 = vmul.f32 %v4579, %v1540
        %v4581 = vadd.f32 %v4580, 1e-05
        %v4582 = vrsqrt.pop %v4581
        %v4583 = vmul.f32 %v4575, %v4582
        %v4584 = vmul.f32 %v4583, %v4569
        %v4585 = vadd.f32 %v4584, %v4570
        %v4586 = vld [vmem:[%s87] sm:$0xf]
        %v4587 = vld [vmem:[%s87 + $0x4] sm:$0xf]
        %v4588 = vld [vmem:[%s87 + $0x8] sm:$0xf]
        %v4589 = vld [vmem:[%s87 + $0xc] sm:$0xf]
        %v4590 = vld [vmem:[#allocation3] sm:$0x1]
        %v4591 = vpack.c.bf16 %v4585, %v4585
        %v4596 = vunpack.c.l.b16 %v4586
        %v4597 = vunpack.c.l.b16 %v4587
        %v4598 = vunpack.c.l.b16 %v4588
        %v4599 = vunpack.c.l.b16 %v4589
        %v4600 = vpack.c.b16 %v4597, %v4596
        %v4601 = vpack.c.b16 %v4599, %v4598
        %v4605 = vsel %vm1428, %v4591, 0
        %4607 = vmatprep.subr.bf16.mxu0 0
        %4608 = vmatpush1.bf16.msra.mxu0 0
        %4609 = vmatprep.subr.bf16.mxu0 0
        %4610 = vmatpush1.bf16.msra.mxu0 0
        %4611 = vmatprep.subr.bf16.mxu0 0
        %4612 = vmatpush1.bf16.msra.mxu0 0
        %4613 = vmatprep.subr.bf16.mxu0 0
        %4614 = vmatpush1.bf16.msra.mxu0 0
        %4615 = vmatprep.subr.bf16.mxu0 0
        %4616 = vmatpush1.bf16.msra.mxu0 0
        %4617 = vmatprep.subr.bf16.mxu0 0
        %4618 = vmatpush1.bf16.msra.mxu0 0
        %4619 = vmatprep.subr.bf16.mxu0 0
        %4620 = vmatpush1.bf16.msra.mxu0 %v4601
        %4621 = vmatprep.subr.bf16.mxu0 0
        %4622 = vmatpush1.bf16.msra.mxu0 %v4600
        %4623 = vmatprep.subr.bf16.mxu0 0
        %4624 = vmatpush2.bf16.msra.mxu0 0
        %4625 = vmatprep.subr.bf16.mxu0 0
        %4626 = vmatpush2.bf16.msra.mxu0 0
        %4627 = vmatprep.subr.bf16.mxu0 0
        %4628 = vmatpush2.bf16.msra.mxu0 0
        %4629 = vmatprep.subr.bf16.mxu0 0
        %4630 = vmatpush2.bf16.msra.mxu0 0
        %4631 = vmatprep.subr.bf16.mxu0 0
        %4632 = vmatpush2.bf16.msra.mxu0 0
        %4633 = vmatprep.subr.bf16.mxu0 0
        %4634 = vmatpush2.bf16.msra.mxu0 0
        %4635 = vmatprep.subr.bf16.mxu0 0
        %4636 = vmatpush2.bf16.msra.mxu0 0
        %4637 = vmatprep.subr.bf16.mxu0 0
        %4638 = vmatpush2.bf16.msra.mxu0 0
        %4639 = vmatprep.mubr.bf16.mxu0 0
        %4640 = vmatmul.mubr.bf16.gmra.mxu0 %v4605
        %v4641 = vpop.f32.mrf.mxu0
        %v4642 = vadd.f32 %v4590, %v4641
        %v4643 = vpop.f32.mrf.mxu0
        %v4644 = vpop.f32.mrf.mxu0
        %v4645 = vpop.f32.mrf.mxu0
        %4646 = vdwg.mxu0
        %v4647 = vmul.f32 %v4642, 0.5
        %v4648 = vtanh.pop %v4647
        %v4649 = vadd.f32 %v4648, 1.0
        %v4650 = vmul.f32 %v4649, 0.5
        %vm4651 = vcmask 0
        %4652 = vst.msk [vmem:[%s1408] sm:$0x1] %vm4651, %v4650
        %p4653 = scmp.lt.s32.totalorder %s107, 1
        %s4654 = scalar_select %p4653, %s107, 1
        %s4655 = scalar_lea.vmem %s91, %s4654
        // Predicated region
        $region221: #{unresolved_bert_forward.7} parent=199 // pred_check
          %p4656 = pneg %p1075
        $region222: #{unresolved_bert_forward.7} parent=199 // pred_check_branch
          %4658 = sbr.rel (%p4656) target = $region224
        $region223: #{unresolved_bert_forward.7} parent=199 // pred_region
          _
        $region224: #{unresolved_bert_forward.7} parent=199 // pred_fallthru
          _
      $region200: #{unresolved_bert_forward.7} parent=5 // pred_fallthru
        _
      %p4659 = scmp.le.s32.totalorder 2, %s102
      // Predicated region
      $region225: #{unresolved_bert_forward.7} parent=5 // pred_check
        %p4660 = pneg %p4659
      $region226: #{unresolved_bert_forward.7} parent=5 // pred_check_branch
        %4662 = sbr.rel (%p4660) target = $region228
      $region227: #{unresolved_bert_forward.7} parent=5 // pred_region
        %s4663 = ssub.s32 %s102, 2
        // Predicated region
        $region229: #{unresolved_bert_forward.7} parent=227 // pred_check
          %p4664 = pneg %p1081
        $region230: #{unresolved_bert_forward.7} parent=227 // pred_check_branch
          %4666 = sbr.rel (%p4664) target = $region232
        $region231: #{unresolved_bert_forward.7} parent=227 // pred_region
          %p4667 = scmp.lt.s32.totalorder %s108, 1
          %s4668 = scalar_select %p4667, %s108, 1
          %s4669 = scalar_lea.vmem %s91, %s4668
        $region232: #{unresolved_bert_forward.7} parent=227 // pred_fallthru
          _
      $region228: #{unresolved_bert_forward.7} parent=5 // pred_fallthru
        _
    $region6: #{unresolved_bert_forward.7} parent=1 // loop_footer
      %s106 = sadd.s32 1, %s102
    $region7: #{unresolved_bert_forward.7} parent=1 // loop_footer_branch
      %101 = sbr.rel target = $region3
    $region8: #{unresolved_bert_forward.7} parent=1 // loop_exit
      _
    %4670 = vsyncpa [#allocation5], 1
    %s4671 = scalar_lea.sflag [#allocation5], 1
    %4672 = vsyncpa %s4671, 1
    %4673 = vsyncpa [#allocation7], 1
    %4674 = vsyncpa [#allocation10], 1

</llo_original>
